<compile_context>
chip_gen: v7x
topology: tpu7x:2x2x1
jax: 0.10.0
libtpu: 0.0.40
codegen_flags: <defaults>
</compile_context>

<pallas_src>
import functools

import jax
import jax.numpy as jnp
import numpy as np
from jax.experimental import pallas as pl
from jax.experimental.pallas import tpu as pltpu

EPS = 1e-5
PAD = 8  # guard rows at each end of the padded scratches (sublane-aligned)


def _bn_tanh(y, gamma, beta):
    """Training-mode BatchNorm over merged (N*L) rows, then tanh.  y: (M, C)."""
    m = jnp.mean(y, axis=0, keepdims=True)
    v = jnp.mean((y - m) ** 2, axis=0, keepdims=True)            # biased variance
    return jnp.tanh((y - m) * jax.lax.rsqrt(v + EPS) * gamma + beta)


def _fused_kernel(xcol_ref, w1_ref, g1_ref, b1_ref, w2_ref, g2_ref, b2_ref,
                  wfc_ref, bfc_ref, wh_ref, bh_ref, out_ref,
                  xs_ref, h1s_ref, h2s_ref, flat_ref,
                  *, n_batch: int, length: int):
    f32 = jnp.float32
    c1 = w1_ref.shape[1]
    c2 = w2_ref.shape[2]
    l1, l2 = length // 2, length // 4
    nl, nl1 = n_batch * length, n_batch * (length // 2)

    # ---- conv1 (Cin=1, k=3, 'same') on the VPU; bias omitted (cancels in BN) ----
    # Copy the merged input column into a guard-padded scratch so all three taps are
    # plain shifted slices; per-sample edges are handled with an iota mask.
    xs_ref[0:PAD, :] = jnp.zeros((PAD, 1), f32)
    xs_ref[PAD:PAD + nl, :] = xcol_ref[...]
    xs_ref[PAD + nl:PAD + nl + PAD, :] = jnp.zeros((PAD, 1), f32)

    pos = jax.lax.broadcasted_iota(jnp.int32, (nl, 1), 0) % length
    t_left = jnp.where(pos == 0, 0.0, xs_ref[pl.ds(PAD - 1, nl), :])
    t_mid = xs_ref[pl.ds(PAD, nl), :]
    t_right = jnp.where(pos == length - 1, 0.0, xs_ref[pl.ds(PAD + 1, nl), :])
    y1 = (t_left * w1_ref[0:1, :]
          + t_mid * w1_ref[1:2, :]
          + t_right * w1_ref[2:3, :])                            # (N*L, C1)

    h1s_ref[0:PAD, :] = jnp.zeros((PAD, c1), f32)
    h1s_ref[PAD:PAD + nl, :] = _bn_tanh(y1, g1_ref[...], b1_ref[...])
    h1s_ref[PAD + nl:PAD + nl + PAD, :] = jnp.zeros((PAD, c1), f32)

    # ---- pool1 + conv2 taps: merged stride-2 maxes over the guarded scratch ----
    pool1 = lambda s: jnp.maximum(h1s_ref[pl.ds(s, nl1, 2), :],
                                  h1s_ref[pl.ds(s + 1, nl1, 2), :])
    upos = jax.lax.broadcasted_iota(jnp.int32, (nl1, 1), 0) % l1
    p1 = pool1(PAD)                                              # pooled[t]
    p1_left = jnp.where(upos == 0, 0.0, pool1(PAD - 2))          # pooled[t-1]
    p1_right = jnp.where(upos == l1 - 1, 0.0, pool1(PAD + 2))    # pooled[t+1]

    # ---- conv2 (C1->C2, k=3, 'same'): three accumulated MXU matmuls; bias cancels ----
    y2 = (jnp.dot(p1_left, w2_ref[0], preferred_element_type=f32)
          + jnp.dot(p1, w2_ref[1], preferred_element_type=f32)
          + jnp.dot(p1_right, w2_ref[2], preferred_element_type=f32))   # (N*L1, C2)
    h2s_ref[...] = _bn_tanh(y2, g2_ref[...], b2_ref[...])

    # ---- pool2 fused with the flatten into a lane-dense (N, L2*C2) slab ----
    # flat[n, l*C2 + c] = max(h2[n, 2l, c], h2[n, 2l+1, c]); the fc1 weight rows were
    # pre-permuted once to this (l*C2 + c) order.  Static loop, no carried values.
    for l in range(l2):
        a = h2s_ref[pl.ds(2 * l, n_batch, 2 * l2), :]
        b = h2s_ref[pl.ds(2 * l + 1, n_batch, 2 * l2), :]
        flat_ref[:, l * c2:(l + 1) * c2] = jnp.maximum(a, b)

    # ---- Linear(1000,600)+tanh, then both prediction heads as one (600,2) matmul ----
    shared = jnp.tanh(
        jnp.dot(flat_ref[...], wfc_ref[...], preferred_element_type=f32) + bfc_ref[...])
    out_ref[...] = jnp.dot(shared, wh_ref[...], preferred_element_type=f32) + bh_ref[...]


def prepare_params(params):
    """One-time weight plumbing (permutations / transposes) -- off the hot path."""
    f32 = jnp.float32
    c1 = params["conv1_w"].shape[0]
    c2 = params["conv2_w"].shape[0]
    hidden, feat = params["fc1_w"].shape
    l2 = feat // c2
    row = lambda v: v.reshape(1, -1).astype(f32)
    # fc1 rows permuted from PyTorch's (c*L2 + l) flatten order to the kernel's
    # (l*C2 + c) order.
    wfc = (params["fc1_w"].astype(f32).T
           .reshape(c2, l2, hidden).transpose(1, 0, 2).reshape(l2 * c2, hidden))
    return {
        "w1": params["conv1_w"][:, 0, :].T.astype(f32),                  # (3, C1)
        "g1": row(params["bn1_g"]), "b1": row(params["bn1_b"]),
        "w2": jnp.transpose(params["conv2_w"], (2, 1, 0)).astype(f32),   # (3, C1, C2)
        "g2": row(params["bn2_g"]), "b2": row(params["bn2_b"]),
        "wfc": wfc, "bfc": row(params["fc1_b"]),
        "wh": jnp.concatenate([params["sys_w"], params["dia_w"]], axis=0).astype(f32).T,
        "bh": jnp.concatenate([params["sys_b"], params["dia_b"]]).reshape(1, 2).astype(f32),
    }


def cnn_1d_mod_forward(x, pp):
    """x: (N, 1, L) float32, L % 4 == 0.  Returns (systolic, diastolic), each (N, 1)."""
    n, c_in, length = x.shape
    assert c_in == 1 and length % 4 == 0
    c1 = pp["w1"].shape[1]
    c2 = pp["w2"].shape[2]
    l1, l2 = length // 2, length // 4
    assert pp["wfc"].shape[0] == c2 * l2
    f32 = jnp.float32

    xcol = x.astype(f32).reshape(n * length, 1)                  # free contiguous view
    vmem = pl.BlockSpec(memory_space=pltpu.MemorySpace.VMEM)

    out2 = pl.pallas_call(
        functools.partial(_fused_kernel, n_batch=n, length=length),
        out_shape=jax.ShapeDtypeStruct((n, 2), f32),
        in_specs=[vmem] * 11,
        out_specs=vmem,
        scratch_shapes=[
            pltpu.VMEM((n * length + 2 * PAD, 1), f32),          # guard-padded input col
            pltpu.VMEM((n * length + 2 * PAD, c1), f32),         # bn1/tanh output
            pltpu.VMEM((n * l1, c2), f32),                       # bn2/tanh output
            pltpu.VMEM((n, l2 * c2), f32),                       # lane-dense flatten
        ],
    )(xcol, pp["w1"], pp["g1"], pp["b1"], pp["w2"], pp["g2"], pp["b2"],
      pp["wfc"], pp["bfc"], pp["wh"], pp["bh"])
    return out2[:, 0:1], out2[:, 1:2]


# ----------------------------- pure-JAX reference -----------------------------
def cnn_1d_mod_ref(x, params):
    f32 = jnp.float32
    hp = jax.lax.Precision.HIGHEST
    dn = ("NCH", "OIH", "NCH")

    def conv_same(a, w, b):
        return (jax.lax.conv_general_dilated(a, w, (1,), [(1, 1)],
                                             dimension_numbers=dn, precision=hp)
                + b[None, :, None])

    def bn_train(a, g, b):
        m = jnp.mean(a, axis=(0, 2), keepdims=True)
        var = jnp.mean((a - m) ** 2, axis=(0, 2), keepdims=True)
        return (a - m) / jnp.sqrt(var + EPS) * g[None, :, None] + b[None, :, None]

    def maxpool2(a):
        nb, c, l = a.shape
        return jnp.max(a.reshape(nb, c, l // 2, 2), axis=-1)

    v = x.astype(f32)
    v = maxpool2(jnp.tanh(bn_train(conv_same(v, params["conv1_w"], params["conv1_b"]),
                                   params["bn1_g"], params["bn1_b"])))
    v = maxpool2(jnp.tanh(bn_train(conv_same(v, params["conv2_w"], params["conv2_b"]),
                                   params["bn2_g"], params["bn2_b"])))
    flat = v.reshape(v.shape[0], -1)                      # PyTorch Flatten: (c*L + l) order
    shared = jnp.tanh(jnp.dot(flat, params["fc1_w"].T, precision=hp) + params["fc1_b"])
    sys = jnp.dot(shared, params["sys_w"].T, precision=hp) + params["sys_b"]
    dia = jnp.dot(shared, params["dia_w"].T, precision=hp) + params["dia_b"]
    return sys, dia


if __name__ == "__main__":
    # Linear(1000, 600) with 20 channels after two MaxPool1d(2) => L/4 * 20 = 1000 => L = 200.
    N, L = 2, 200
    C1, C2, H = 10, 20, 600
    f32 = jnp.float32
    keys = jax.random.split(jax.random.PRNGKey(0), 15)
    params = {
        "conv1_w": 0.3 * jax.random.normal(keys[0], (C1, 1, 3), f32),
        "conv1_b": 0.1 * jax.random.normal(keys[1], (C1,), f32),
        "bn1_g": 1.0 + 0.1 * jax.random.normal(keys[2], (C1,), f32),
        "bn1_b": 0.1 * jax.random.normal(keys[3], (C1,), f32),
        "conv2_w": 0.3 * jax.random.normal(keys[4], (C2, C1, 3), f32),
        "conv2_b": 0.1 * jax.random.normal(keys[5], (C2,), f32),
        "bn2_g": 1.0 + 0.1 * jax.random.normal(keys[6], (C2,), f32),
        "bn2_b": 0.1 * jax.random.normal(keys[7], (C2,), f32),
        "fc1_w": 0.05 * jax.random.normal(keys[8], (H, C2 * (L // 4)), f32),
        "fc1_b": 0.1 * jax.random.normal(keys[9], (H,), f32),
        "sys_w": 0.1 * jax.random.normal(keys[10], (1, H), f32),
        "sys_b": 0.1 * jax.random.normal(keys[11], (1,), f32),
        "dia_w": 0.1 * jax.random.normal(keys[12], (1, H), f32),
        "dia_b": 0.1 * jax.random.normal(keys[13], (1,), f32),
    }
    x = jax.random.normal(keys[14], (N, 1, L), f32)

    prepped = jax.tree_util.tree_map(jax.block_until_ready, prepare_params(params))
    fwd = jax.jit(cnn_1d_mod_forward)

    sys_out, dia_out = fwd(x, prepped)
    sys_out = jax.block_until_ready(sys_out)
    dia_out = jax.block_until_ready(dia_out)

    sys_ref, dia_ref = cnn_1d_mod_ref(x, params)
    assert sys_out.shape == (N, 1) and dia_out.shape == (N, 1)
    np.testing.assert_allclose(np.asarray(sys_out), np.asarray(sys_ref), rtol=2e-3, atol=2e-3)
    np.testing.assert_allclose(np.asarray(dia_out), np.asarray(dia_ref), rtol=2e-3, atol=2e-3)
    print("KERNEL_OK")
</pallas_src>

<mosaic_0001>
module attributes {stable_mosaic.version = 11 : i64} {
  func.func @_fused_kernel(%arg0: memref<400x1xf32, #tpu.memory_space<vmem>>, %arg1: memref<3x10xf32, #tpu.memory_space<vmem>>, %arg2: memref<1x10xf32, #tpu.memory_space<vmem>>, %arg3: memref<1x10xf32, #tpu.memory_space<vmem>>, %arg4: memref<3x10x20xf32, #tpu.memory_space<vmem>>, %arg5: memref<1x20xf32, #tpu.memory_space<vmem>>, %arg6: memref<1x20xf32, #tpu.memory_space<vmem>>, %arg7: memref<1000x600xf32, #tpu.memory_space<vmem>>, %arg8: memref<1x600xf32, #tpu.memory_space<vmem>>, %arg9: memref<600x2xf32, #tpu.memory_space<vmem>>, %arg10: memref<1x2xf32, #tpu.memory_space<vmem>>, %arg11: memref<2x2xf32, #tpu.memory_space<vmem>>, %arg12: memref<416x1xf32, #tpu.memory_space<vmem>>, %arg13: memref<416x10xf32, #tpu.memory_space<vmem>>, %arg14: memref<200x20xf32, #tpu.memory_space<vmem>>, %arg15: memref<2x1000xf32, #tpu.memory_space<vmem>>) attributes {dimension_semantics = [], scalar_prefetch = 0 : i64, scratch_operands = 4 : i64, tpu.core_type = #tpu.core_type<tc>} {
    %cst = arith.constant 0.000000e+00 : f32
    %0 = vector.broadcast %cst : f32 to vector<8x1xf32>
    %c0 = arith.constant 0 : index
    %c0_0 = arith.constant 0 : index
    %1 = vector.load %arg12[%c0, %c0_0] : memref<416x1xf32, #tpu.memory_space<vmem>>, vector<8x1xf32>
    tpu.vector_store %arg12[%c0, %c0_0], %0 {strides = array<i32>} : memref<416x1xf32, #tpu.memory_space<vmem>>, vector<8x1xf32>,
    %c0_1 = arith.constant 0 : index
    %c0_2 = arith.constant 0 : index
    %2 = vector.load %arg0[%c0_1, %c0_2] : memref<400x1xf32, #tpu.memory_space<vmem>>, vector<400x1xf32>
    %c8 = arith.constant 8 : index
    %c0_3 = arith.constant 0 : index
    %3 = vector.load %arg12[%c8, %c0_3] : memref<416x1xf32, #tpu.memory_space<vmem>>, vector<400x1xf32>
    tpu.vector_store %arg12[%c8, %c0_3], %2 {strides = array<i32>} : memref<416x1xf32, #tpu.memory_space<vmem>>, vector<400x1xf32>,
    %cst_4 = arith.constant 0.000000e+00 : f32
    %4 = vector.broadcast %cst_4 : f32 to vector<8x1xf32>
    %c408 = arith.constant 408 : index
    %c0_5 = arith.constant 0 : index
    %5 = vector.load %arg12[%c408, %c0_5] : memref<416x1xf32, #tpu.memory_space<vmem>>, vector<8x1xf32>
    tpu.vector_store %arg12[%c408, %c0_5], %4 {strides = array<i32>} : memref<416x1xf32, #tpu.memory_space<vmem>>, vector<8x1xf32>,
    %6 = tpu.iota {dimensions = array<i32: 0>} : vector<400x1xi32>
    %c200_i32 = arith.constant 200 : i32
    %c0_i32 = arith.constant 0 : i32
    %7 = arith.cmpi eq, %c200_i32, %c0_i32 : i32
    %c1_i32 = arith.constant 1 : i32
    %8 = arith.select %7, %c1_i32, %c200_i32 : i32
    %9 = vector.broadcast %8 : i32 to vector<400x1xi32>
    %10 = arith.remsi %6, %9 : vector<400x1xi32>
    %c0_i32_6 = arith.constant 0 : i32
    %11 = vector.broadcast %c0_i32_6 : i32 to vector<400x1xi32>
    %12 = arith.cmpi ne, %10, %11 : vector<400x1xi32>
    %c0_i32_7 = arith.constant 0 : i32
    %13 = vector.broadcast %c0_i32_7 : i32 to vector<400x1xi32>
    %14 = arith.cmpi slt, %10, %13 : vector<400x1xi32>
    %c0_i32_8 = arith.constant 0 : i32
    %15 = arith.cmpi slt, %8, %c0_i32_8 : i32
    %16 = vector.broadcast %15 : i1 to vector<400x1xi1>
    %17 = vector.broadcast %16 : vector<400x1xi1> to vector<400x1xi1>
    %18 = arith.xori %14, %17 : vector<400x1xi1>
    %19 = arith.andi %18, %12 : vector<400x1xi1>
    %20 = vector.broadcast %8 : i32 to vector<400x1xi32>
    %21 = arith.addi %10, %20 : vector<400x1xi32>
    %22 = arith.select %19, %21, %10 : vector<400x1xi1>, vector<400x1xi32>
    %c0_i32_9 = arith.constant 0 : i32
    %23 = vector.broadcast %c0_i32_9 : i32 to vector<400x1xi32>
    %24 = arith.cmpi eq, %22, %23 : vector<400x1xi32>
    %c7 = arith.constant 7 : index
    %c0_10 = arith.constant 0 : index
    %25 = vector.load %arg12[%c7, %c0_10] : memref<416x1xf32, #tpu.memory_space<vmem>>, vector<400x1xf32>
    %cst_11 = arith.constant 0.000000e+00 : f32
    %26 = vector.broadcast %cst_11 : f32 to vector<400x1xf32>
    %27 = arith.select %24, %26, %25 : vector<400x1xi1>, vector<400x1xf32>
    %c8_12 = arith.constant 8 : index
    %c0_13 = arith.constant 0 : index
    %28 = vector.load %arg12[%c8_12, %c0_13] : memref<416x1xf32, #tpu.memory_space<vmem>>, vector<400x1xf32>
    %c199_i32 = arith.constant 199 : i32
    %29 = vector.broadcast %c199_i32 : i32 to vector<400x1xi32>
    %30 = arith.cmpi eq, %22, %29 : vector<400x1xi32>
    %c9 = arith.constant 9 : index
    %c0_14 = arith.constant 0 : index
    %31 = vector.load %arg12[%c9, %c0_14] : memref<416x1xf32, #tpu.memory_space<vmem>>, vector<400x1xf32>
    %cst_15 = arith.constant 0.000000e+00 : f32
    %32 = vector.broadcast %cst_15 : f32 to vector<400x1xf32>
    %33 = arith.select %30, %32, %31 : vector<400x1xi1>, vector<400x1xf32>
    %c0_16 = arith.constant 0 : index
    %c0_17 = arith.constant 0 : index
    %34 = vector.load %arg1[%c0_16, %c0_17] : memref<3x10xf32, #tpu.memory_space<vmem>>, vector<1x10xf32>
    %35 = vector.broadcast %27 : vector<400x1xf32> to vector<400x10xf32>
    %36 = vector.broadcast %34 : vector<1x10xf32> to vector<400x10xf32>
    %37 = arith.mulf %35, %36 : vector<400x10xf32>
    %c1 = arith.constant 1 : index
    %c0_18 = arith.constant 0 : index
    %38 = vector.load %arg1[%c1, %c0_18] : memref<3x10xf32, #tpu.memory_space<vmem>>, vector<1x10xf32>
    %39 = vector.broadcast %28 : vector<400x1xf32> to vector<400x10xf32>
    %40 = vector.broadcast %38 : vector<1x10xf32> to vector<400x10xf32>
    %41 = arith.mulf %39, %40 : vector<400x10xf32>
    %42 = arith.addf %37, %41 : vector<400x10xf32>
    %c2 = arith.constant 2 : index
    %c0_19 = arith.constant 0 : index
    %43 = vector.load %arg1[%c2, %c0_19] : memref<3x10xf32, #tpu.memory_space<vmem>>, vector<1x10xf32>
    %44 = vector.broadcast %33 : vector<400x1xf32> to vector<400x10xf32>
    %45 = vector.broadcast %43 : vector<1x10xf32> to vector<400x10xf32>
    %46 = arith.mulf %44, %45 : vector<400x10xf32>
    %47 = arith.addf %42, %46 : vector<400x10xf32>
    %cst_20 = arith.constant 0.000000e+00 : f32
    %48 = vector.broadcast %cst_20 : f32 to vector<8x10xf32>
    %c0_21 = arith.constant 0 : index
    %c0_22 = arith.constant 0 : index
    %49 = vector.load %arg13[%c0_21, %c0_22] : memref<416x10xf32, #tpu.memory_space<vmem>>, vector<8x10xf32>
    tpu.vector_store %arg13[%c0_21, %c0_22], %48 {strides = array<i32>} : memref<416x10xf32, #tpu.memory_space<vmem>>, vector<8x10xf32>,
    %c0_23 = arith.constant 0 : index
    %c0_24 = arith.constant 0 : index
    %50 = vector.load %arg2[%c0_23, %c0_24] : memref<1x10xf32, #tpu.memory_space<vmem>>, vector<1x10xf32>
    %c0_25 = arith.constant 0 : index
    %c0_26 = arith.constant 0 : index
    %51 = vector.load %arg3[%c0_25, %c0_26] : memref<1x10xf32, #tpu.memory_space<vmem>>, vector<1x10xf32>
    %cst_27 = arith.constant dense<0.000000e+00> : vector<10xf32>
    %52 = vector.multi_reduction <add>, %47, %cst_27 [0] : vector<400x10xf32> to vector<10xf32>
    %53 = vector.shape_cast %52 : vector<10xf32> to vector<1x10xf32>
    %cst_28 = arith.constant 4.000000e+02 : f32
    %54 = vector.broadcast %cst_28 : f32 to vector<1x10xf32>
    %55 = arith.divf %53, %54 : vector<1x10xf32>
    %56 = vector.broadcast %55 : vector<1x10xf32> to vector<400x10xf32>
    %57 = arith.subf %47, %56 : vector<400x10xf32>
    %58 = arith.mulf %57, %57 : vector<400x10xf32>
    %cst_29 = arith.constant dense<0.000000e+00> : vector<10xf32>
    %59 = vector.multi_reduction <add>, %58, %cst_29 [0] : vector<400x10xf32> to vector<10xf32>
    %60 = vector.shape_cast %59 : vector<10xf32> to vector<1x10xf32>
    %cst_30 = arith.constant 4.000000e+02 : f32
    %61 = vector.broadcast %cst_30 : f32 to vector<1x10xf32>
    %62 = arith.divf %60, %61 : vector<1x10xf32>
    %63 = vector.broadcast %55 : vector<1x10xf32> to vector<400x10xf32>
    %64 = arith.subf %47, %63 : vector<400x10xf32>
    %cst_31 = arith.constant 9.99999974E-6 : f32
    %65 = vector.broadcast %cst_31 : f32 to vector<1x10xf32>
    %66 = arith.addf %62, %65 : vector<1x10xf32>
    %67 = math.rsqrt %66 : vector<1x10xf32>
    %68 = vector.broadcast %67 : vector<1x10xf32> to vector<400x10xf32>
    %69 = arith.mulf %64, %68 : vector<400x10xf32>
    %70 = vector.broadcast %50 : vector<1x10xf32> to vector<400x10xf32>
    %71 = arith.mulf %69, %70 : vector<400x10xf32>
    %72 = vector.broadcast %51 : vector<1x10xf32> to vector<400x10xf32>
    %73 = arith.addf %71, %72 : vector<400x10xf32>
    %74 = math.tanh %73 : vector<400x10xf32>
    %c8_32 = arith.constant 8 : index
    %c0_33 = arith.constant 0 : index
    %75 = vector.load %arg13[%c8_32, %c0_33] : memref<416x10xf32, #tpu.memory_space<vmem>>, vector<400x10xf32>
    tpu.vector_store %arg13[%c8_32, %c0_33], %74 {strides = array<i32>} : memref<416x10xf32, #tpu.memory_space<vmem>>, vector<400x10xf32>,
    %cst_34 = arith.constant 0.000000e+00 : f32
    %76 = vector.broadcast %cst_34 : f32 to vector<8x10xf32>
    %c408_35 = arith.constant 408 : index
    %c0_36 = arith.constant 0 : index
    %77 = vector.load %arg13[%c408_35, %c0_36] : memref<416x10xf32, #tpu.memory_space<vmem>>, vector<8x10xf32>
    tpu.vector_store %arg13[%c408_35, %c0_36], %76 {strides = array<i32>} : memref<416x10xf32, #tpu.memory_space<vmem>>, vector<8x10xf32>,
    %78 = tpu.iota {dimensions = array<i32: 0>} : vector<200x1xi32>
    %c100_i32 = arith.constant 100 : i32
    %c0_i32_37 = arith.constant 0 : i32
    %79 = arith.cmpi eq, %c100_i32, %c0_i32_37 : i32
    %c1_i32_38 = arith.constant 1 : i32
    %80 = arith.select %79, %c1_i32_38, %c100_i32 : i32
    %81 = vector.broadcast %80 : i32 to vector<200x1xi32>
    %82 = arith.remsi %78, %81 : vector<200x1xi32>
    %c0_i32_39 = arith.constant 0 : i32
    %83 = vector.broadcast %c0_i32_39 : i32 to vector<200x1xi32>
    %84 = arith.cmpi ne, %82, %83 : vector<200x1xi32>
    %c0_i32_40 = arith.constant 0 : i32
    %85 = vector.broadcast %c0_i32_40 : i32 to vector<200x1xi32>
    %86 = arith.cmpi slt, %82, %85 : vector<200x1xi32>
    %c0_i32_41 = arith.constant 0 : i32
    %87 = arith.cmpi slt, %80, %c0_i32_41 : i32
    %88 = vector.broadcast %87 : i1 to vector<200x1xi1>
    %89 = vector.broadcast %88 : vector<200x1xi1> to vector<200x1xi1>
    %90 = arith.xori %86, %89 : vector<200x1xi1>
    %91 = arith.andi %90, %84 : vector<200x1xi1>
    %92 = vector.broadcast %80 : i32 to vector<200x1xi32>
    %93 = arith.addi %82, %92 : vector<200x1xi32>
    %94 = arith.select %91, %93, %82 : vector<200x1xi1>, vector<200x1xi32>
    %c8_42 = arith.constant 8 : index
    %c0_43 = arith.constant 0 : index
    %95 = tpu.strided_load %arg13[%c8_42, %c0_43] {strides = array<i32: 2, 1>} : memref<416x10xf32, #tpu.memory_space<vmem>>, vector<200x10xf32>
    %c9_44 = arith.constant 9 : index
    %c0_45 = arith.constant 0 : index
    %96 = tpu.strided_load %arg13[%c9_44, %c0_45] {strides = array<i32: 2, 1>} : memref<416x10xf32, #tpu.memory_space<vmem>>, vector<200x10xf32>
    %97 = arith.maximumf %95, %96 : vector<200x10xf32>
    %c0_i32_46 = arith.constant 0 : i32
    %98 = vector.broadcast %c0_i32_46 : i32 to vector<200x1xi32>
    %99 = arith.cmpi eq, %94, %98 : vector<200x1xi32>
    %c6 = arith.constant 6 : index
    %c0_47 = arith.constant 0 : index
    %100 = tpu.strided_load %arg13[%c6, %c0_47] {strides = array<i32: 2, 1>} : memref<416x10xf32, #tpu.memory_space<vmem>>, vector<200x10xf32>
    %c7_48 = arith.constant 7 : index
    %c0_49 = arith.constant 0 : index
    %101 = tpu.strided_load %arg13[%c7_48, %c0_49] {strides = array<i32: 2, 1>} : memref<416x10xf32, #tpu.memory_space<vmem>>, vector<200x10xf32>
    %102 = arith.maximumf %100, %101 : vector<200x10xf32>
    %cst_50 = arith.constant 0.000000e+00 : f32
    %103 = vector.shape_cast %99 : vector<200x1xi1> to vector<200x1xi1>
    %104 = vector.broadcast %103 : vector<200x1xi1> to vector<200x10xi1>
    %105 = vector.broadcast %cst_50 : f32 to vector<200x10xf32>
    %106 = arith.select %104, %105, %102 : vector<200x10xi1>, vector<200x10xf32>
    %c99_i32 = arith.constant 99 : i32
    %107 = vector.broadcast %c99_i32 : i32 to vector<200x1xi32>
    %108 = arith.cmpi eq, %94, %107 : vector<200x1xi32>
    %c10 = arith.constant 10 : index
    %c0_51 = arith.constant 0 : index
    %109 = tpu.strided_load %arg13[%c10, %c0_51] {strides = array<i32: 2, 1>} : memref<416x10xf32, #tpu.memory_space<vmem>>, vector<200x10xf32>
    %c11 = arith.constant 11 : index
    %c0_52 = arith.constant 0 : index
    %110 = tpu.strided_load %arg13[%c11, %c0_52] {strides = array<i32: 2, 1>} : memref<416x10xf32, #tpu.memory_space<vmem>>, vector<200x10xf32>
    %111 = arith.maximumf %109, %110 : vector<200x10xf32>
    %cst_53 = arith.constant 0.000000e+00 : f32
    %112 = vector.shape_cast %108 : vector<200x1xi1> to vector<200x1xi1>
    %113 = vector.broadcast %112 : vector<200x1xi1> to vector<200x10xi1>
    %114 = vector.broadcast %cst_53 : f32 to vector<200x10xf32>
    %115 = arith.select %113, %114, %111 : vector<200x10xi1>, vector<200x10xf32>
    %c0_54 = arith.constant 0 : index
    %c0_55 = arith.constant 0 : index
    %c0_56 = arith.constant 0 : index
    %116 = vector.load %arg4[%c0_54, %c0_55, %c0_56] : memref<3x10x20xf32, #tpu.memory_space<vmem>>, vector<1x10x20xf32>
    %117 = vector.shape_cast %116 : vector<1x10x20xf32> to vector<10x20xf32>
    %cst_57 = arith.constant dense<0.000000e+00> : vector<200x20xf32>
    %118 = tpu.matmul %106, %117, %cst_57 {dimension_numbers = #tpu.dot_dimension_numbers<[1], [0], [0], [1], [0, 0, 1, 1], [], []>} : vector<200x10xf32>, vector<10x20xf32>, vector<200x20xf32> -> vector<200x20xf32>
    %c1_58 = arith.constant 1 : index
    %c0_59 = arith.constant 0 : index
    %c0_60 = arith.constant 0 : index
    %119 = vector.load %arg4[%c1_58, %c0_59, %c0_60] : memref<3x10x20xf32, #tpu.memory_space<vmem>>, vector<1x10x20xf32>
    %120 = vector.shape_cast %119 : vector<1x10x20xf32> to vector<10x20xf32>
    %cst_61 = arith.constant dense<0.000000e+00> : vector<200x20xf32>
    %121 = tpu.matmul %97, %120, %cst_61 {dimension_numbers = #tpu.dot_dimension_numbers<[1], [0], [0], [1], [0, 0, 1, 1], [], []>} : vector<200x10xf32>, vector<10x20xf32>, vector<200x20xf32> -> vector<200x20xf32>
    %122 = arith.addf %118, %121 : vector<200x20xf32>
    %c2_62 = arith.constant 2 : index
    %c0_63 = arith.constant 0 : index
    %c0_64 = arith.constant 0 : index
    %123 = vector.load %arg4[%c2_62, %c0_63, %c0_64] : memref<3x10x20xf32, #tpu.memory_space<vmem>>, vector<1x10x20xf32>
    %124 = vector.shape_cast %123 : vector<1x10x20xf32> to vector<10x20xf32>
    %cst_65 = arith.constant dense<0.000000e+00> : vector<200x20xf32>
    %125 = tpu.matmul %115, %124, %cst_65 {dimension_numbers = #tpu.dot_dimension_numbers<[1], [0], [0], [1], [0, 0, 1, 1], [], []>} : vector<200x10xf32>, vector<10x20xf32>, vector<200x20xf32> -> vector<200x20xf32>
    %126 = arith.addf %122, %125 : vector<200x20xf32>
    %c0_66 = arith.constant 0 : index
    %c0_67 = arith.constant 0 : index
    %127 = vector.load %arg5[%c0_66, %c0_67] : memref<1x20xf32, #tpu.memory_space<vmem>>, vector<1x20xf32>
    %c0_68 = arith.constant 0 : index
    %c0_69 = arith.constant 0 : index
    %128 = vector.load %arg6[%c0_68, %c0_69] : memref<1x20xf32, #tpu.memory_space<vmem>>, vector<1x20xf32>
    %cst_70 = arith.constant dense<0.000000e+00> : vector<20xf32>
    %129 = vector.multi_reduction <add>, %126, %cst_70 [0] : vector<200x20xf32> to vector<20xf32>
    %130 = vector.shape_cast %129 : vector<20xf32> to vector<1x20xf32>
    %cst_71 = arith.constant 2.000000e+02 : f32
    %131 = vector.broadcast %cst_71 : f32 to vector<1x20xf32>
    %132 = arith.divf %130, %131 : vector<1x20xf32>
    %133 = vector.broadcast %132 : vector<1x20xf32> to vector<200x20xf32>
    %134 = arith.subf %126, %133 : vector<200x20xf32>
    %135 = arith.mulf %134, %134 : vector<200x20xf32>
    %cst_72 = arith.constant dense<0.000000e+00> : vector<20xf32>
    %136 = vector.multi_reduction <add>, %135, %cst_72 [0] : vector<200x20xf32> to vector<20xf32>
    %137 = vector.shape_cast %136 : vector<20xf32> to vector<1x20xf32>
    %cst_73 = arith.constant 2.000000e+02 : f32
    %138 = vector.broadcast %cst_73 : f32 to vector<1x20xf32>
    %139 = arith.divf %137, %138 : vector<1x20xf32>
    %140 = vector.broadcast %132 : vector<1x20xf32> to vector<200x20xf32>
    %141 = arith.subf %126, %140 : vector<200x20xf32>
    %cst_74 = arith.constant 9.99999974E-6 : f32
    %142 = vector.broadcast %cst_74 : f32 to vector<1x20xf32>
    %143 = arith.addf %139, %142 : vector<1x20xf32>
    %144 = math.rsqrt %143 : vector<1x20xf32>
    %145 = vector.broadcast %144 : vector<1x20xf32> to vector<200x20xf32>
    %146 = arith.mulf %141, %145 : vector<200x20xf32>
    %147 = vector.broadcast %127 : vector<1x20xf32> to vector<200x20xf32>
    %148 = arith.mulf %146, %147 : vector<200x20xf32>
    %149 = vector.broadcast %128 : vector<1x20xf32> to vector<200x20xf32>
    %150 = arith.addf %148, %149 : vector<200x20xf32>
    %151 = math.tanh %150 : vector<200x20xf32>
    %c0_75 = arith.constant 0 : index
    %c0_76 = arith.constant 0 : index
    %152 = vector.load %arg14[%c0_75, %c0_76] : memref<200x20xf32, #tpu.memory_space<vmem>>, vector<200x20xf32>
    tpu.vector_store %arg14[%c0_75, %c0_76], %151 {strides = array<i32>} : memref<200x20xf32, #tpu.memory_space<vmem>>, vector<200x20xf32>,
    %c0_77 = arith.constant 0 : index
    %c0_78 = arith.constant 0 : index
    %153 = tpu.strided_load %arg14[%c0_77, %c0_78] {strides = array<i32: 100, 1>} : memref<200x20xf32, #tpu.memory_space<vmem>>, vector<2x20xf32>
    %c1_79 = arith.constant 1 : index
    %c0_80 = arith.constant 0 : index
    %154 = tpu.strided_load %arg14[%c1_79, %c0_80] {strides = array<i32: 100, 1>} : memref<200x20xf32, #tpu.memory_space<vmem>>, vector<2x20xf32>
    %155 = arith.maximumf %153, %154 : vector<2x20xf32>
    %c0_81 = arith.constant 0 : index
    %c0_82 = arith.constant 0 : index
    %156 = vector.load %arg15[%c0_81, %c0_82] : memref<2x1000xf32, #tpu.memory_space<vmem>>, vector<2x20xf32>
    tpu.vector_store %arg15[%c0_81, %c0_82], %155 {strides = array<i32>} : memref<2x1000xf32, #tpu.memory_space<vmem>>, vector<2x20xf32>,
    %c2_83 = arith.constant 2 : index
    %c0_84 = arith.constant 0 : index
    %157 = tpu.strided_load %arg14[%c2_83, %c0_84] {strides = array<i32: 100, 1>} : memref<200x20xf32, #tpu.memory_space<vmem>>, vector<2x20xf32>
    %c3 = arith.constant 3 : index
    %c0_85 = arith.constant 0 : index
    %158 = tpu.strided_load %arg14[%c3, %c0_85] {strides = array<i32: 100, 1>} : memref<200x20xf32, #tpu.memory_space<vmem>>, vector<2x20xf32>
    %159 = arith.maximumf %157, %158 : vector<2x20xf32>
    %c0_86 = arith.constant 0 : index
    %c20 = arith.constant 20 : index
    %160 = vector.load %arg15[%c0_86, %c20] : memref<2x1000xf32, #tpu.memory_space<vmem>>, vector<2x20xf32>
    tpu.vector_store %arg15[%c0_86, %c20], %159 {strides = array<i32>} : memref<2x1000xf32, #tpu.memory_space<vmem>>, vector<2x20xf32>,
    %c4 = arith.constant 4 : index
    %c0_87 = arith.constant 0 : index
    %161 = tpu.strided_load %arg14[%c4, %c0_87] {strides = array<i32: 100, 1>} : memref<200x20xf32, #tpu.memory_space<vmem>>, vector<2x20xf32>
    %c5 = arith.constant 5 : index
    %c0_88 = arith.constant 0 : index
    %162 = tpu.strided_load %arg14[%c5, %c0_88] {strides = array<i32: 100, 1>} : memref<200x20xf32, #tpu.memory_space<vmem>>, vector<2x20xf32>
    %163 = arith.maximumf %161, %162 : vector<2x20xf32>
    %c0_89 = arith.constant 0 : index
    %c40 = arith.constant 40 : index
    %164 = vector.load %arg15[%c0_89, %c40] : memref<2x1000xf32, #tpu.memory_space<vmem>>, vector<2x20xf32>
    tpu.vector_store %arg15[%c0_89, %c40], %163 {strides = array<i32>} : memref<2x1000xf32, #tpu.memory_space<vmem>>, vector<2x20xf32>,
    %c6_90 = arith.constant 6 : index
    %c0_91 = arith.constant 0 : index
    %165 = tpu.strided_load %arg14[%c6_90, %c0_91] {strides = array<i32: 100, 1>} : memref<200x20xf32, #tpu.memory_space<vmem>>, vector<2x20xf32>
    %c7_92 = arith.constant 7 : index
    %c0_93 = arith.constant 0 : index
    %166 = tpu.strided_load %arg14[%c7_92, %c0_93] {strides = array<i32: 100, 1>} : memref<200x20xf32, #tpu.memory_space<vmem>>, vector<2x20xf32>
    %167 = arith.maximumf %165, %166 : vector<2x20xf32>
    %c0_94 = arith.constant 0 : index
    %c60 = arith.constant 60 : index
    %168 = vector.load %arg15[%c0_94, %c60] : memref<2x1000xf32, #tpu.memory_space<vmem>>, vector<2x20xf32>
    tpu.vector_store %arg15[%c0_94, %c60], %167 {strides = array<i32>} : memref<2x1000xf32, #tpu.memory_space<vmem>>, vector<2x20xf32>,
    %c8_95 = arith.constant 8 : index
    %c0_96 = arith.constant 0 : index
    %169 = tpu.strided_load %arg14[%c8_95, %c0_96] {strides = array<i32: 100, 1>} : memref<200x20xf32, #tpu.memory_space<vmem>>, vector<2x20xf32>
    %c9_97 = arith.constant 9 : index
    %c0_98 = arith.constant 0 : index
    %170 = tpu.strided_load %arg14[%c9_97, %c0_98] {strides = array<i32: 100, 1>} : memref<200x20xf32, #tpu.memory_space<vmem>>, vector<2x20xf32>
    %171 = arith.maximumf %169, %170 : vector<2x20xf32>
    %c0_99 = arith.constant 0 : index
    %c80 = arith.constant 80 : index
    %172 = vector.load %arg15[%c0_99, %c80] : memref<2x1000xf32, #tpu.memory_space<vmem>>, vector<2x20xf32>
    tpu.vector_store %arg15[%c0_99, %c80], %171 {strides = array<i32>} : memref<2x1000xf32, #tpu.memory_space<vmem>>, vector<2x20xf32>,
    %c10_100 = arith.constant 10 : index
    %c0_101 = arith.constant 0 : index
    %173 = tpu.strided_load %arg14[%c10_100, %c0_101] {strides = array<i32: 100, 1>} : memref<200x20xf32, #tpu.memory_space<vmem>>, vector<2x20xf32>
    %c11_102 = arith.constant 11 : index
    %c0_103 = arith.constant 0 : index
    %174 = tpu.strided_load %arg14[%c11_102, %c0_103] {strides = array<i32: 100, 1>} : memref<200x20xf32, #tpu.memory_space<vmem>>, vector<2x20xf32>
    %175 = arith.maximumf %173, %174 : vector<2x20xf32>
    %c0_104 = arith.constant 0 : index
    %c100 = arith.constant 100 : index
    %176 = vector.load %arg15[%c0_104, %c100] : memref<2x1000xf32, #tpu.memory_space<vmem>>, vector<2x20xf32>
    tpu.vector_store %arg15[%c0_104, %c100], %175 {strides = array<i32>} : memref<2x1000xf32, #tpu.memory_space<vmem>>, vector<2x20xf32>,
    %c12 = arith.constant 12 : index
    %c0_105 = arith.constant 0 : index
    %177 = tpu.strided_load %arg14[%c12, %c0_105] {strides = array<i32: 100, 1>} : memref<200x20xf32, #tpu.memory_space<vmem>>, vector<2x20xf32>
    %c13 = arith.constant 13 : index
    %c0_106 = arith.constant 0 : index
    %178 = tpu.strided_load %arg14[%c13, %c0_106] {strides = array<i32: 100, 1>} : memref<200x20xf32, #tpu.memory_space<vmem>>, vector<2x20xf32>
    %179 = arith.maximumf %177, %178 : vector<2x20xf32>
    %c0_107 = arith.constant 0 : index
    %c120 = arith.constant 120 : index
    %180 = vector.load %arg15[%c0_107, %c120] : memref<2x1000xf32, #tpu.memory_space<vmem>>, vector<2x20xf32>
    tpu.vector_store %arg15[%c0_107, %c120], %179 {strides = array<i32>} : memref<2x1000xf32, #tpu.memory_space<vmem>>, vector<2x20xf32>,
    %c14 = arith.constant 14 : index
    %c0_108 = arith.constant 0 : index
    %181 = tpu.strided_load %arg14[%c14, %c0_108] {strides = array<i32: 100, 1>} : memref<200x20xf32, #tpu.memory_space<vmem>>, vector<2x20xf32>
    %c15 = arith.constant 15 : index
    %c0_109 = arith.constant 0 : index
    %182 = tpu.strided_load %arg14[%c15, %c0_109] {strides = array<i32: 100, 1>} : memref<200x20xf32, #tpu.memory_space<vmem>>, vector<2x20xf32>
    %183 = arith.maximumf %181, %182 : vector<2x20xf32>
    %c0_110 = arith.constant 0 : index
    %c140 = arith.constant 140 : index
    %184 = vector.load %arg15[%c0_110, %c140] : memref<2x1000xf32, #tpu.memory_space<vmem>>, vector<2x20xf32>
    tpu.vector_store %arg15[%c0_110, %c140], %183 {strides = array<i32>} : memref<2x1000xf32, #tpu.memory_space<vmem>>, vector<2x20xf32>,
    %c16 = arith.constant 16 : index
    %c0_111 = arith.constant 0 : index
    %185 = tpu.strided_load %arg14[%c16, %c0_111] {strides = array<i32: 100, 1>} : memref<200x20xf32, #tpu.memory_space<vmem>>, vector<2x20xf32>
    %c17 = arith.constant 17 : index
    %c0_112 = arith.constant 0 : index
    %186 = tpu.strided_load %arg14[%c17, %c0_112] {strides = array<i32: 100, 1>} : memref<200x20xf32, #tpu.memory_space<vmem>>, vector<2x20xf32>
    %187 = arith.maximumf %185, %186 : vector<2x20xf32>
    %c0_113 = arith.constant 0 : index
    %c160 = arith.constant 160 : index
    %188 = vector.load %arg15[%c0_113, %c160] : memref<2x1000xf32, #tpu.memory_space<vmem>>, vector<2x20xf32>
    tpu.vector_store %arg15[%c0_113, %c160], %187 {strides = array<i32>} : memref<2x1000xf32, #tpu.memory_space<vmem>>, vector<2x20xf32>,
    %c18 = arith.constant 18 : index
    %c0_114 = arith.constant 0 : index
    %189 = tpu.strided_load %arg14[%c18, %c0_114] {strides = array<i32: 100, 1>} : memref<200x20xf32, #tpu.memory_space<vmem>>, vector<2x20xf32>
    %c19 = arith.constant 19 : index
    %c0_115 = arith.constant 0 : index
    %190 = tpu.strided_load %arg14[%c19, %c0_115] {strides = array<i32: 100, 1>} : memref<200x20xf32, #tpu.memory_space<vmem>>, vector<2x20xf32>
    %191 = arith.maximumf %189, %190 : vector<2x20xf32>
    %c0_116 = arith.constant 0 : index
    %c180 = arith.constant 180 : index
    %192 = vector.load %arg15[%c0_116, %c180] : memref<2x1000xf32, #tpu.memory_space<vmem>>, vector<2x20xf32>
    tpu.vector_store %arg15[%c0_116, %c180], %191 {strides = array<i32>} : memref<2x1000xf32, #tpu.memory_space<vmem>>, vector<2x20xf32>,
    %c20_117 = arith.constant 20 : index
    %c0_118 = arith.constant 0 : index
    %193 = tpu.strided_load %arg14[%c20_117, %c0_118] {strides = array<i32: 100, 1>} : memref<200x20xf32, #tpu.memory_space<vmem>>, vector<2x20xf32>
    %c21 = arith.constant 21 : index
    %c0_119 = arith.constant 0 : index
    %194 = tpu.strided_load %arg14[%c21, %c0_119] {strides = array<i32: 100, 1>} : memref<200x20xf32, #tpu.memory_space<vmem>>, vector<2x20xf32>
    %195 = arith.maximumf %193, %194 : vector<2x20xf32>
    %c0_120 = arith.constant 0 : index
    %c200 = arith.constant 200 : index
    %196 = vector.load %arg15[%c0_120, %c200] : memref<2x1000xf32, #tpu.memory_space<vmem>>, vector<2x20xf32>
    tpu.vector_store %arg15[%c0_120, %c200], %195 {strides = array<i32>} : memref<2x1000xf32, #tpu.memory_space<vmem>>, vector<2x20xf32>,
    %c22 = arith.constant 22 : index
    %c0_121 = arith.constant 0 : index
    %197 = tpu.strided_load %arg14[%c22, %c0_121] {strides = array<i32: 100, 1>} : memref<200x20xf32, #tpu.memory_space<vmem>>, vector<2x20xf32>
    %c23 = arith.constant 23 : index
    %c0_122 = arith.constant 0 : index
    %198 = tpu.strided_load %arg14[%c23, %c0_122] {strides = array<i32: 100, 1>} : memref<200x20xf32, #tpu.memory_space<vmem>>, vector<2x20xf32>
    %199 = arith.maximumf %197, %198 : vector<2x20xf32>
    %c0_123 = arith.constant 0 : index
    %c220 = arith.constant 220 : index
    %200 = vector.load %arg15[%c0_123, %c220] : memref<2x1000xf32, #tpu.memory_space<vmem>>, vector<2x20xf32>
    tpu.vector_store %arg15[%c0_123, %c220], %199 {strides = array<i32>} : memref<2x1000xf32, #tpu.memory_space<vmem>>, vector<2x20xf32>,
    %c24 = arith.constant 24 : index
    %c0_124 = arith.constant 0 : index
    %201 = tpu.strided_load %arg14[%c24, %c0_124] {strides = array<i32: 100, 1>} : memref<200x20xf32, #tpu.memory_space<vmem>>, vector<2x20xf32>
    %c25 = arith.constant 25 : index
    %c0_125 = arith.constant 0 : index
    %202 = tpu.strided_load %arg14[%c25, %c0_125] {strides = array<i32: 100, 1>} : memref<200x20xf32, #tpu.memory_space<vmem>>, vector<2x20xf32>
    %203 = arith.maximumf %201, %202 : vector<2x20xf32>
    %c0_126 = arith.constant 0 : index
    %c240 = arith.constant 240 : index
    %204 = vector.load %arg15[%c0_126, %c240] : memref<2x1000xf32, #tpu.memory_space<vmem>>, vector<2x20xf32>
    tpu.vector_store %arg15[%c0_126, %c240], %203 {strides = array<i32>} : memref<2x1000xf32, #tpu.memory_space<vmem>>, vector<2x20xf32>,
    %c26 = arith.constant 26 : index
    %c0_127 = arith.constant 0 : index
    %205 = tpu.strided_load %arg14[%c26, %c0_127] {strides = array<i32: 100, 1>} : memref<200x20xf32, #tpu.memory_space<vmem>>, vector<2x20xf32>
    %c27 = arith.constant 27 : index
    %c0_128 = arith.constant 0 : index
    %206 = tpu.strided_load %arg14[%c27, %c0_128] {strides = array<i32: 100, 1>} : memref<200x20xf32, #tpu.memory_space<vmem>>, vector<2x20xf32>
    %207 = arith.maximumf %205, %206 : vector<2x20xf32>
    %c0_129 = arith.constant 0 : index
    %c260 = arith.constant 260 : index
    %208 = vector.load %arg15[%c0_129, %c260] : memref<2x1000xf32, #tpu.memory_space<vmem>>, vector<2x20xf32>
    tpu.vector_store %arg15[%c0_129, %c260], %207 {strides = array<i32>} : memref<2x1000xf32, #tpu.memory_space<vmem>>, vector<2x20xf32>,
    %c28 = arith.constant 28 : index
    %c0_130 = arith.constant 0 : index
    %209 = tpu.strided_load %arg14[%c28, %c0_130] {strides = array<i32: 100, 1>} : memref<200x20xf32, #tpu.memory_space<vmem>>, vector<2x20xf32>
    %c29 = arith.constant 29 : index
    %c0_131 = arith.constant 0 : index
    %210 = tpu.strided_load %arg14[%c29, %c0_131] {strides = array<i32: 100, 1>} : memref<200x20xf32, #tpu.memory_space<vmem>>, vector<2x20xf32>
    %211 = arith.maximumf %209, %210 : vector<2x20xf32>
    %c0_132 = arith.constant 0 : index
    %c280 = arith.constant 280 : index
    %212 = vector.load %arg15[%c0_132, %c280] : memref<2x1000xf32, #tpu.memory_space<vmem>>, vector<2x20xf32>
    tpu.vector_store %arg15[%c0_132, %c280], %211 {strides = array<i32>} : memref<2x1000xf32, #tpu.memory_space<vmem>>, vector<2x20xf32>,
    %c30 = arith.constant 30 : index
    %c0_133 = arith.constant 0 : index
    %213 = tpu.strided_load %arg14[%c30, %c0_133] {strides = array<i32: 100, 1>} : memref<200x20xf32, #tpu.memory_space<vmem>>, vector<2x20xf32>
    %c31 = arith.constant 31 : index
    %c0_134 = arith.constant 0 : index
    %214 = tpu.strided_load %arg14[%c31, %c0_134] {strides = array<i32: 100, 1>} : memref<200x20xf32, #tpu.memory_space<vmem>>, vector<2x20xf32>
    %215 = arith.maximumf %213, %214 : vector<2x20xf32>
    %c0_135 = arith.constant 0 : index
    %c300 = arith.constant 300 : index
    %216 = vector.load %arg15[%c0_135, %c300] : memref<2x1000xf32, #tpu.memory_space<vmem>>, vector<2x20xf32>
    tpu.vector_store %arg15[%c0_135, %c300], %215 {strides = array<i32>} : memref<2x1000xf32, #tpu.memory_space<vmem>>, vector<2x20xf32>,
    %c32 = arith.constant 32 : index
    %c0_136 = arith.constant 0 : index
    %217 = tpu.strided_load %arg14[%c32, %c0_136] {strides = array<i32: 100, 1>} : memref<200x20xf32, #tpu.memory_space<vmem>>, vector<2x20xf32>
    %c33 = arith.constant 33 : index
    %c0_137 = arith.constant 0 : index
    %218 = tpu.strided_load %arg14[%c33, %c0_137] {strides = array<i32: 100, 1>} : memref<200x20xf32, #tpu.memory_space<vmem>>, vector<2x20xf32>
    %219 = arith.maximumf %217, %218 : vector<2x20xf32>
    %c0_138 = arith.constant 0 : index
    %c320 = arith.constant 320 : index
    %220 = vector.load %arg15[%c0_138, %c320] : memref<2x1000xf32, #tpu.memory_space<vmem>>, vector<2x20xf32>
    tpu.vector_store %arg15[%c0_138, %c320], %219 {strides = array<i32>} : memref<2x1000xf32, #tpu.memory_space<vmem>>, vector<2x20xf32>,
    %c34 = arith.constant 34 : index
    %c0_139 = arith.constant 0 : index
    %221 = tpu.strided_load %arg14[%c34, %c0_139] {strides = array<i32: 100, 1>} : memref<200x20xf32, #tpu.memory_space<vmem>>, vector<2x20xf32>
    %c35 = arith.constant 35 : index
    %c0_140 = arith.constant 0 : index
    %222 = tpu.strided_load %arg14[%c35, %c0_140] {strides = array<i32: 100, 1>} : memref<200x20xf32, #tpu.memory_space<vmem>>, vector<2x20xf32>
    %223 = arith.maximumf %221, %222 : vector<2x20xf32>
    %c0_141 = arith.constant 0 : index
    %c340 = arith.constant 340 : index
    %224 = vector.load %arg15[%c0_141, %c340] : memref<2x1000xf32, #tpu.memory_space<vmem>>, vector<2x20xf32>
    tpu.vector_store %arg15[%c0_141, %c340], %223 {strides = array<i32>} : memref<2x1000xf32, #tpu.memory_space<vmem>>, vector<2x20xf32>,
    %c36 = arith.constant 36 : index
    %c0_142 = arith.constant 0 : index
    %225 = tpu.strided_load %arg14[%c36, %c0_142] {strides = array<i32: 100, 1>} : memref<200x20xf32, #tpu.memory_space<vmem>>, vector<2x20xf32>
    %c37 = arith.constant 37 : index
    %c0_143 = arith.constant 0 : index
    %226 = tpu.strided_load %arg14[%c37, %c0_143] {strides = array<i32: 100, 1>} : memref<200x20xf32, #tpu.memory_space<vmem>>, vector<2x20xf32>
    %227 = arith.maximumf %225, %226 : vector<2x20xf32>
    %c0_144 = arith.constant 0 : index
    %c360 = arith.constant 360 : index
    %228 = vector.load %arg15[%c0_144, %c360] : memref<2x1000xf32, #tpu.memory_space<vmem>>, vector<2x20xf32>
    tpu.vector_store %arg15[%c0_144, %c360], %227 {strides = array<i32>} : memref<2x1000xf32, #tpu.memory_space<vmem>>, vector<2x20xf32>,
    %c38 = arith.constant 38 : index
    %c0_145 = arith.constant 0 : index
    %229 = tpu.strided_load %arg14[%c38, %c0_145] {strides = array<i32: 100, 1>} : memref<200x20xf32, #tpu.memory_space<vmem>>, vector<2x20xf32>
    %c39 = arith.constant 39 : index
    %c0_146 = arith.constant 0 : index
    %230 = tpu.strided_load %arg14[%c39, %c0_146] {strides = array<i32: 100, 1>} : memref<200x20xf32, #tpu.memory_space<vmem>>, vector<2x20xf32>
    %231 = arith.maximumf %229, %230 : vector<2x20xf32>
    %c0_147 = arith.constant 0 : index
    %c380 = arith.constant 380 : index
    %232 = vector.load %arg15[%c0_147, %c380] : memref<2x1000xf32, #tpu.memory_space<vmem>>, vector<2x20xf32>
    tpu.vector_store %arg15[%c0_147, %c380], %231 {strides = array<i32>} : memref<2x1000xf32, #tpu.memory_space<vmem>>, vector<2x20xf32>,
    %c40_148 = arith.constant 40 : index
    %c0_149 = arith.constant 0 : index
    %233 = tpu.strided_load %arg14[%c40_148, %c0_149] {strides = array<i32: 100, 1>} : memref<200x20xf32, #tpu.memory_space<vmem>>, vector<2x20xf32>
    %c41 = arith.constant 41 : index
    %c0_150 = arith.constant 0 : index
    %234 = tpu.strided_load %arg14[%c41, %c0_150] {strides = array<i32: 100, 1>} : memref<200x20xf32, #tpu.memory_space<vmem>>, vector<2x20xf32>
    %235 = arith.maximumf %233, %234 : vector<2x20xf32>
    %c0_151 = arith.constant 0 : index
    %c400 = arith.constant 400 : index
    %236 = vector.load %arg15[%c0_151, %c400] : memref<2x1000xf32, #tpu.memory_space<vmem>>, vector<2x20xf32>
    tpu.vector_store %arg15[%c0_151, %c400], %235 {strides = array<i32>} : memref<2x1000xf32, #tpu.memory_space<vmem>>, vector<2x20xf32>,
    %c42 = arith.constant 42 : index
    %c0_152 = arith.constant 0 : index
    %237 = tpu.strided_load %arg14[%c42, %c0_152] {strides = array<i32: 100, 1>} : memref<200x20xf32, #tpu.memory_space<vmem>>, vector<2x20xf32>
    %c43 = arith.constant 43 : index
    %c0_153 = arith.constant 0 : index
    %238 = tpu.strided_load %arg14[%c43, %c0_153] {strides = array<i32: 100, 1>} : memref<200x20xf32, #tpu.memory_space<vmem>>, vector<2x20xf32>
    %239 = arith.maximumf %237, %238 : vector<2x20xf32>
    %c0_154 = arith.constant 0 : index
    %c420 = arith.constant 420 : index
    %240 = vector.load %arg15[%c0_154, %c420] : memref<2x1000xf32, #tpu.memory_space<vmem>>, vector<2x20xf32>
    tpu.vector_store %arg15[%c0_154, %c420], %239 {strides = array<i32>} : memref<2x1000xf32, #tpu.memory_space<vmem>>, vector<2x20xf32>,
    %c44 = arith.constant 44 : index
    %c0_155 = arith.constant 0 : index
    %241 = tpu.strided_load %arg14[%c44, %c0_155] {strides = array<i32: 100, 1>} : memref<200x20xf32, #tpu.memory_space<vmem>>, vector<2x20xf32>
    %c45 = arith.constant 45 : index
    %c0_156 = arith.constant 0 : index
    %242 = tpu.strided_load %arg14[%c45, %c0_156] {strides = array<i32: 100, 1>} : memref<200x20xf32, #tpu.memory_space<vmem>>, vector<2x20xf32>
    %243 = arith.maximumf %241, %242 : vector<2x20xf32>
    %c0_157 = arith.constant 0 : index
    %c440 = arith.constant 440 : index
    %244 = vector.load %arg15[%c0_157, %c440] : memref<2x1000xf32, #tpu.memory_space<vmem>>, vector<2x20xf32>
    tpu.vector_store %arg15[%c0_157, %c440], %243 {strides = array<i32>} : memref<2x1000xf32, #tpu.memory_space<vmem>>, vector<2x20xf32>,
    %c46 = arith.constant 46 : index
    %c0_158 = arith.constant 0 : index
    %245 = tpu.strided_load %arg14[%c46, %c0_158] {strides = array<i32: 100, 1>} : memref<200x20xf32, #tpu.memory_space<vmem>>, vector<2x20xf32>
    %c47 = arith.constant 47 : index
    %c0_159 = arith.constant 0 : index
    %246 = tpu.strided_load %arg14[%c47, %c0_159] {strides = array<i32: 100, 1>} : memref<200x20xf32, #tpu.memory_space<vmem>>, vector<2x20xf32>
    %247 = arith.maximumf %245, %246 : vector<2x20xf32>
    %c0_160 = arith.constant 0 : index
    %c460 = arith.constant 460 : index
    %248 = vector.load %arg15[%c0_160, %c460] : memref<2x1000xf32, #tpu.memory_space<vmem>>, vector<2x20xf32>
    tpu.vector_store %arg15[%c0_160, %c460], %247 {strides = array<i32>} : memref<2x1000xf32, #tpu.memory_space<vmem>>, vector<2x20xf32>,
    %c48 = arith.constant 48 : index
    %c0_161 = arith.constant 0 : index
    %249 = tpu.strided_load %arg14[%c48, %c0_161] {strides = array<i32: 100, 1>} : memref<200x20xf32, #tpu.memory_space<vmem>>, vector<2x20xf32>
    %c49 = arith.constant 49 : index
    %c0_162 = arith.constant 0 : index
    %250 = tpu.strided_load %arg14[%c49, %c0_162] {strides = array<i32: 100, 1>} : memref<200x20xf32, #tpu.memory_space<vmem>>, vector<2x20xf32>
    %251 = arith.maximumf %249, %250 : vector<2x20xf32>
    %c0_163 = arith.constant 0 : index
    %c480 = arith.constant 480 : index
    %252 = vector.load %arg15[%c0_163, %c480] : memref<2x1000xf32, #tpu.memory_space<vmem>>, vector<2x20xf32>
    tpu.vector_store %arg15[%c0_163, %c480], %251 {strides = array<i32>} : memref<2x1000xf32, #tpu.memory_space<vmem>>, vector<2x20xf32>,
    %c50 = arith.constant 50 : index
    %c0_164 = arith.constant 0 : index
    %253 = tpu.strided_load %arg14[%c50, %c0_164] {strides = array<i32: 100, 1>} : memref<200x20xf32, #tpu.memory_space<vmem>>, vector<2x20xf32>
    %c51 = arith.constant 51 : index
    %c0_165 = arith.constant 0 : index
    %254 = tpu.strided_load %arg14[%c51, %c0_165] {strides = array<i32: 100, 1>} : memref<200x20xf32, #tpu.memory_space<vmem>>, vector<2x20xf32>
    %255 = arith.maximumf %253, %254 : vector<2x20xf32>
    %c0_166 = arith.constant 0 : index
    %c500 = arith.constant 500 : index
    %256 = vector.load %arg15[%c0_166, %c500] : memref<2x1000xf32, #tpu.memory_space<vmem>>, vector<2x20xf32>
    tpu.vector_store %arg15[%c0_166, %c500], %255 {strides = array<i32>} : memref<2x1000xf32, #tpu.memory_space<vmem>>, vector<2x20xf32>,
    %c52 = arith.constant 52 : index
    %c0_167 = arith.constant 0 : index
    %257 = tpu.strided_load %arg14[%c52, %c0_167] {strides = array<i32: 100, 1>} : memref<200x20xf32, #tpu.memory_space<vmem>>, vector<2x20xf32>
    %c53 = arith.constant 53 : index
    %c0_168 = arith.constant 0 : index
    %258 = tpu.strided_load %arg14[%c53, %c0_168] {strides = array<i32: 100, 1>} : memref<200x20xf32, #tpu.memory_space<vmem>>, vector<2x20xf32>
    %259 = arith.maximumf %257, %258 : vector<2x20xf32>
    %c0_169 = arith.constant 0 : index
    %c520 = arith.constant 520 : index
    %260 = vector.load %arg15[%c0_169, %c520] : memref<2x1000xf32, #tpu.memory_space<vmem>>, vector<2x20xf32>
    tpu.vector_store %arg15[%c0_169, %c520], %259 {strides = array<i32>} : memref<2x1000xf32, #tpu.memory_space<vmem>>, vector<2x20xf32>,
    %c54 = arith.constant 54 : index
    %c0_170 = arith.constant 0 : index
    %261 = tpu.strided_load %arg14[%c54, %c0_170] {strides = array<i32: 100, 1>} : memref<200x20xf32, #tpu.memory_space<vmem>>, vector<2x20xf32>
    %c55 = arith.constant 55 : index
    %c0_171 = arith.constant 0 : index
    %262 = tpu.strided_load %arg14[%c55, %c0_171] {strides = array<i32: 100, 1>} : memref<200x20xf32, #tpu.memory_space<vmem>>, vector<2x20xf32>
    %263 = arith.maximumf %261, %262 : vector<2x20xf32>
    %c0_172 = arith.constant 0 : index
    %c540 = arith.constant 540 : index
    %264 = vector.load %arg15[%c0_172, %c540] : memref<2x1000xf32, #tpu.memory_space<vmem>>, vector<2x20xf32>
    tpu.vector_store %arg15[%c0_172, %c540], %263 {strides = array<i32>} : memref<2x1000xf32, #tpu.memory_space<vmem>>, vector<2x20xf32>,
    %c56 = arith.constant 56 : index
    %c0_173 = arith.constant 0 : index
    %265 = tpu.strided_load %arg14[%c56, %c0_173] {strides = array<i32: 100, 1>} : memref<200x20xf32, #tpu.memory_space<vmem>>, vector<2x20xf32>
    %c57 = arith.constant 57 : index
    %c0_174 = arith.constant 0 : index
    %266 = tpu.strided_load %arg14[%c57, %c0_174] {strides = array<i32: 100, 1>} : memref<200x20xf32, #tpu.memory_space<vmem>>, vector<2x20xf32>
    %267 = arith.maximumf %265, %266 : vector<2x20xf32>
    %c0_175 = arith.constant 0 : index
    %c560 = arith.constant 560 : index
    %268 = vector.load %arg15[%c0_175, %c560] : memref<2x1000xf32, #tpu.memory_space<vmem>>, vector<2x20xf32>
    tpu.vector_store %arg15[%c0_175, %c560], %267 {strides = array<i32>} : memref<2x1000xf32, #tpu.memory_space<vmem>>, vector<2x20xf32>,
    %c58 = arith.constant 58 : index
    %c0_176 = arith.constant 0 : index
    %269 = tpu.strided_load %arg14[%c58, %c0_176] {strides = array<i32: 100, 1>} : memref<200x20xf32, #tpu.memory_space<vmem>>, vector<2x20xf32>
    %c59 = arith.constant 59 : index
    %c0_177 = arith.constant 0 : index
    %270 = tpu.strided_load %arg14[%c59, %c0_177] {strides = array<i32: 100, 1>} : memref<200x20xf32, #tpu.memory_space<vmem>>, vector<2x20xf32>
    %271 = arith.maximumf %269, %270 : vector<2x20xf32>
    %c0_178 = arith.constant 0 : index
    %c580 = arith.constant 580 : index
    %272 = vector.load %arg15[%c0_178, %c580] : memref<2x1000xf32, #tpu.memory_space<vmem>>, vector<2x20xf32>
    tpu.vector_store %arg15[%c0_178, %c580], %271 {strides = array<i32>} : memref<2x1000xf32, #tpu.memory_space<vmem>>, vector<2x20xf32>,
    %c60_179 = arith.constant 60 : index
    %c0_180 = arith.constant 0 : index
    %273 = tpu.strided_load %arg14[%c60_179, %c0_180] {strides = array<i32: 100, 1>} : memref<200x20xf32, #tpu.memory_space<vmem>>, vector<2x20xf32>
    %c61 = arith.constant 61 : index
    %c0_181 = arith.constant 0 : index
    %274 = tpu.strided_load %arg14[%c61, %c0_181] {strides = array<i32: 100, 1>} : memref<200x20xf32, #tpu.memory_space<vmem>>, vector<2x20xf32>
    %275 = arith.maximumf %273, %274 : vector<2x20xf32>
    %c0_182 = arith.constant 0 : index
    %c600 = arith.constant 600 : index
    %276 = vector.load %arg15[%c0_182, %c600] : memref<2x1000xf32, #tpu.memory_space<vmem>>, vector<2x20xf32>
    tpu.vector_store %arg15[%c0_182, %c600], %275 {strides = array<i32>} : memref<2x1000xf32, #tpu.memory_space<vmem>>, vector<2x20xf32>,
    %c62 = arith.constant 62 : index
    %c0_183 = arith.constant 0 : index
    %277 = tpu.strided_load %arg14[%c62, %c0_183] {strides = array<i32: 100, 1>} : memref<200x20xf32, #tpu.memory_space<vmem>>, vector<2x20xf32>
    %c63 = arith.constant 63 : index
    %c0_184 = arith.constant 0 : index
    %278 = tpu.strided_load %arg14[%c63, %c0_184] {strides = array<i32: 100, 1>} : memref<200x20xf32, #tpu.memory_space<vmem>>, vector<2x20xf32>
    %279 = arith.maximumf %277, %278 : vector<2x20xf32>
    %c0_185 = arith.constant 0 : index
    %c620 = arith.constant 620 : index
    %280 = vector.load %arg15[%c0_185, %c620] : memref<2x1000xf32, #tpu.memory_space<vmem>>, vector<2x20xf32>
    tpu.vector_store %arg15[%c0_185, %c620], %279 {strides = array<i32>} : memref<2x1000xf32, #tpu.memory_space<vmem>>, vector<2x20xf32>,
    %c64 = arith.constant 64 : index
    %c0_186 = arith.constant 0 : index
    %281 = tpu.strided_load %arg14[%c64, %c0_186] {strides = array<i32: 100, 1>} : memref<200x20xf32, #tpu.memory_space<vmem>>, vector<2x20xf32>
    %c65 = arith.constant 65 : index
    %c0_187 = arith.constant 0 : index
    %282 = tpu.strided_load %arg14[%c65, %c0_187] {strides = array<i32: 100, 1>} : memref<200x20xf32, #tpu.memory_space<vmem>>, vector<2x20xf32>
    %283 = arith.maximumf %281, %282 : vector<2x20xf32>
    %c0_188 = arith.constant 0 : index
    %c640 = arith.constant 640 : index
    %284 = vector.load %arg15[%c0_188, %c640] : memref<2x1000xf32, #tpu.memory_space<vmem>>, vector<2x20xf32>
    tpu.vector_store %arg15[%c0_188, %c640], %283 {strides = array<i32>} : memref<2x1000xf32, #tpu.memory_space<vmem>>, vector<2x20xf32>,
    %c66 = arith.constant 66 : index
    %c0_189 = arith.constant 0 : index
    %285 = tpu.strided_load %arg14[%c66, %c0_189] {strides = array<i32: 100, 1>} : memref<200x20xf32, #tpu.memory_space<vmem>>, vector<2x20xf32>
    %c67 = arith.constant 67 : index
    %c0_190 = arith.constant 0 : index
    %286 = tpu.strided_load %arg14[%c67, %c0_190] {strides = array<i32: 100, 1>} : memref<200x20xf32, #tpu.memory_space<vmem>>, vector<2x20xf32>
    %287 = arith.maximumf %285, %286 : vector<2x20xf32>
    %c0_191 = arith.constant 0 : index
    %c660 = arith.constant 660 : index
    %288 = vector.load %arg15[%c0_191, %c660] : memref<2x1000xf32, #tpu.memory_space<vmem>>, vector<2x20xf32>
    tpu.vector_store %arg15[%c0_191, %c660], %287 {strides = array<i32>} : memref<2x1000xf32, #tpu.memory_space<vmem>>, vector<2x20xf32>,
    %c68 = arith.constant 68 : index
    %c0_192 = arith.constant 0 : index
    %289 = tpu.strided_load %arg14[%c68, %c0_192] {strides = array<i32: 100, 1>} : memref<200x20xf32, #tpu.memory_space<vmem>>, vector<2x20xf32>
    %c69 = arith.constant 69 : index
    %c0_193 = arith.constant 0 : index
    %290 = tpu.strided_load %arg14[%c69, %c0_193] {strides = array<i32: 100, 1>} : memref<200x20xf32, #tpu.memory_space<vmem>>, vector<2x20xf32>
    %291 = arith.maximumf %289, %290 : vector<2x20xf32>
    %c0_194 = arith.constant 0 : index
    %c680 = arith.constant 680 : index
    %292 = vector.load %arg15[%c0_194, %c680] : memref<2x1000xf32, #tpu.memory_space<vmem>>, vector<2x20xf32>
    tpu.vector_store %arg15[%c0_194, %c680], %291 {strides = array<i32>} : memref<2x1000xf32, #tpu.memory_space<vmem>>, vector<2x20xf32>,
    %c70 = arith.constant 70 : index
    %c0_195 = arith.constant 0 : index
    %293 = tpu.strided_load %arg14[%c70, %c0_195] {strides = array<i32: 100, 1>} : memref<200x20xf32, #tpu.memory_space<vmem>>, vector<2x20xf32>
    %c71 = arith.constant 71 : index
    %c0_196 = arith.constant 0 : index
    %294 = tpu.strided_load %arg14[%c71, %c0_196] {strides = array<i32: 100, 1>} : memref<200x20xf32, #tpu.memory_space<vmem>>, vector<2x20xf32>
    %295 = arith.maximumf %293, %294 : vector<2x20xf32>
    %c0_197 = arith.constant 0 : index
    %c700 = arith.constant 700 : index
    %296 = vector.load %arg15[%c0_197, %c700] : memref<2x1000xf32, #tpu.memory_space<vmem>>, vector<2x20xf32>
    tpu.vector_store %arg15[%c0_197, %c700], %295 {strides = array<i32>} : memref<2x1000xf32, #tpu.memory_space<vmem>>, vector<2x20xf32>,
    %c72 = arith.constant 72 : index
    %c0_198 = arith.constant 0 : index
    %297 = tpu.strided_load %arg14[%c72, %c0_198] {strides = array<i32: 100, 1>} : memref<200x20xf32, #tpu.memory_space<vmem>>, vector<2x20xf32>
    %c73 = arith.constant 73 : index
    %c0_199 = arith.constant 0 : index
    %298 = tpu.strided_load %arg14[%c73, %c0_199] {strides = array<i32: 100, 1>} : memref<200x20xf32, #tpu.memory_space<vmem>>, vector<2x20xf32>
    %299 = arith.maximumf %297, %298 : vector<2x20xf32>
    %c0_200 = arith.constant 0 : index
    %c720 = arith.constant 720 : index
    %300 = vector.load %arg15[%c0_200, %c720] : memref<2x1000xf32, #tpu.memory_space<vmem>>, vector<2x20xf32>
    tpu.vector_store %arg15[%c0_200, %c720], %299 {strides = array<i32>} : memref<2x1000xf32, #tpu.memory_space<vmem>>, vector<2x20xf32>,
    %c74 = arith.constant 74 : index
    %c0_201 = arith.constant 0 : index
    %301 = tpu.strided_load %arg14[%c74, %c0_201] {strides = array<i32: 100, 1>} : memref<200x20xf32, #tpu.memory_space<vmem>>, vector<2x20xf32>
    %c75 = arith.constant 75 : index
    %c0_202 = arith.constant 0 : index
    %302 = tpu.strided_load %arg14[%c75, %c0_202] {strides = array<i32: 100, 1>} : memref<200x20xf32, #tpu.memory_space<vmem>>, vector<2x20xf32>
    %303 = arith.maximumf %301, %302 : vector<2x20xf32>
    %c0_203 = arith.constant 0 : index
    %c740 = arith.constant 740 : index
    %304 = vector.load %arg15[%c0_203, %c740] : memref<2x1000xf32, #tpu.memory_space<vmem>>, vector<2x20xf32>
    tpu.vector_store %arg15[%c0_203, %c740], %303 {strides = array<i32>} : memref<2x1000xf32, #tpu.memory_space<vmem>>, vector<2x20xf32>,
    %c76 = arith.constant 76 : index
    %c0_204 = arith.constant 0 : index
    %305 = tpu.strided_load %arg14[%c76, %c0_204] {strides = array<i32: 100, 1>} : memref<200x20xf32, #tpu.memory_space<vmem>>, vector<2x20xf32>
    %c77 = arith.constant 77 : index
    %c0_205 = arith.constant 0 : index
    %306 = tpu.strided_load %arg14[%c77, %c0_205] {strides = array<i32: 100, 1>} : memref<200x20xf32, #tpu.memory_space<vmem>>, vector<2x20xf32>
    %307 = arith.maximumf %305, %306 : vector<2x20xf32>
    %c0_206 = arith.constant 0 : index
    %c760 = arith.constant 760 : index
    %308 = vector.load %arg15[%c0_206, %c760] : memref<2x1000xf32, #tpu.memory_space<vmem>>, vector<2x20xf32>
    tpu.vector_store %arg15[%c0_206, %c760], %307 {strides = array<i32>} : memref<2x1000xf32, #tpu.memory_space<vmem>>, vector<2x20xf32>,
    %c78 = arith.constant 78 : index
    %c0_207 = arith.constant 0 : index
    %309 = tpu.strided_load %arg14[%c78, %c0_207] {strides = array<i32: 100, 1>} : memref<200x20xf32, #tpu.memory_space<vmem>>, vector<2x20xf32>
    %c79 = arith.constant 79 : index
    %c0_208 = arith.constant 0 : index
    %310 = tpu.strided_load %arg14[%c79, %c0_208] {strides = array<i32: 100, 1>} : memref<200x20xf32, #tpu.memory_space<vmem>>, vector<2x20xf32>
    %311 = arith.maximumf %309, %310 : vector<2x20xf32>
    %c0_209 = arith.constant 0 : index
    %c780 = arith.constant 780 : index
    %312 = vector.load %arg15[%c0_209, %c780] : memref<2x1000xf32, #tpu.memory_space<vmem>>, vector<2x20xf32>
    tpu.vector_store %arg15[%c0_209, %c780], %311 {strides = array<i32>} : memref<2x1000xf32, #tpu.memory_space<vmem>>, vector<2x20xf32>,
    %c80_210 = arith.constant 80 : index
    %c0_211 = arith.constant 0 : index
    %313 = tpu.strided_load %arg14[%c80_210, %c0_211] {strides = array<i32: 100, 1>} : memref<200x20xf32, #tpu.memory_space<vmem>>, vector<2x20xf32>
    %c81 = arith.constant 81 : index
    %c0_212 = arith.constant 0 : index
    %314 = tpu.strided_load %arg14[%c81, %c0_212] {strides = array<i32: 100, 1>} : memref<200x20xf32, #tpu.memory_space<vmem>>, vector<2x20xf32>
    %315 = arith.maximumf %313, %314 : vector<2x20xf32>
    %c0_213 = arith.constant 0 : index
    %c800 = arith.constant 800 : index
    %316 = vector.load %arg15[%c0_213, %c800] : memref<2x1000xf32, #tpu.memory_space<vmem>>, vector<2x20xf32>
    tpu.vector_store %arg15[%c0_213, %c800], %315 {strides = array<i32>} : memref<2x1000xf32, #tpu.memory_space<vmem>>, vector<2x20xf32>,
    %c82 = arith.constant 82 : index
    %c0_214 = arith.constant 0 : index
    %317 = tpu.strided_load %arg14[%c82, %c0_214] {strides = array<i32: 100, 1>} : memref<200x20xf32, #tpu.memory_space<vmem>>, vector<2x20xf32>
    %c83 = arith.constant 83 : index
    %c0_215 = arith.constant 0 : index
    %318 = tpu.strided_load %arg14[%c83, %c0_215] {strides = array<i32: 100, 1>} : memref<200x20xf32, #tpu.memory_space<vmem>>, vector<2x20xf32>
    %319 = arith.maximumf %317, %318 : vector<2x20xf32>
    %c0_216 = arith.constant 0 : index
    %c820 = arith.constant 820 : index
    %320 = vector.load %arg15[%c0_216, %c820] : memref<2x1000xf32, #tpu.memory_space<vmem>>, vector<2x20xf32>
    tpu.vector_store %arg15[%c0_216, %c820], %319 {strides = array<i32>} : memref<2x1000xf32, #tpu.memory_space<vmem>>, vector<2x20xf32>,
    %c84 = arith.constant 84 : index
    %c0_217 = arith.constant 0 : index
    %321 = tpu.strided_load %arg14[%c84, %c0_217] {strides = array<i32: 100, 1>} : memref<200x20xf32, #tpu.memory_space<vmem>>, vector<2x20xf32>
    %c85 = arith.constant 85 : index
    %c0_218 = arith.constant 0 : index
    %322 = tpu.strided_load %arg14[%c85, %c0_218] {strides = array<i32: 100, 1>} : memref<200x20xf32, #tpu.memory_space<vmem>>, vector<2x20xf32>
    %323 = arith.maximumf %321, %322 : vector<2x20xf32>
    %c0_219 = arith.constant 0 : index
    %c840 = arith.constant 840 : index
    %324 = vector.load %arg15[%c0_219, %c840] : memref<2x1000xf32, #tpu.memory_space<vmem>>, vector<2x20xf32>
    tpu.vector_store %arg15[%c0_219, %c840], %323 {strides = array<i32>} : memref<2x1000xf32, #tpu.memory_space<vmem>>, vector<2x20xf32>,
    %c86 = arith.constant 86 : index
    %c0_220 = arith.constant 0 : index
    %325 = tpu.strided_load %arg14[%c86, %c0_220] {strides = array<i32: 100, 1>} : memref<200x20xf32, #tpu.memory_space<vmem>>, vector<2x20xf32>
    %c87 = arith.constant 87 : index
    %c0_221 = arith.constant 0 : index
    %326 = tpu.strided_load %arg14[%c87, %c0_221] {strides = array<i32: 100, 1>} : memref<200x20xf32, #tpu.memory_space<vmem>>, vector<2x20xf32>
    %327 = arith.maximumf %325, %326 : vector<2x20xf32>
    %c0_222 = arith.constant 0 : index
    %c860 = arith.constant 860 : index
    %328 = vector.load %arg15[%c0_222, %c860] : memref<2x1000xf32, #tpu.memory_space<vmem>>, vector<2x20xf32>
    tpu.vector_store %arg15[%c0_222, %c860], %327 {strides = array<i32>} : memref<2x1000xf32, #tpu.memory_space<vmem>>, vector<2x20xf32>,
    %c88 = arith.constant 88 : index
    %c0_223 = arith.constant 0 : index
    %329 = tpu.strided_load %arg14[%c88, %c0_223] {strides = array<i32: 100, 1>} : memref<200x20xf32, #tpu.memory_space<vmem>>, vector<2x20xf32>
    %c89 = arith.constant 89 : index
    %c0_224 = arith.constant 0 : index
    %330 = tpu.strided_load %arg14[%c89, %c0_224] {strides = array<i32: 100, 1>} : memref<200x20xf32, #tpu.memory_space<vmem>>, vector<2x20xf32>
    %331 = arith.maximumf %329, %330 : vector<2x20xf32>
    %c0_225 = arith.constant 0 : index
    %c880 = arith.constant 880 : index
    %332 = vector.load %arg15[%c0_225, %c880] : memref<2x1000xf32, #tpu.memory_space<vmem>>, vector<2x20xf32>
    tpu.vector_store %arg15[%c0_225, %c880], %331 {strides = array<i32>} : memref<2x1000xf32, #tpu.memory_space<vmem>>, vector<2x20xf32>,
    %c90 = arith.constant 90 : index
    %c0_226 = arith.constant 0 : index
    %333 = tpu.strided_load %arg14[%c90, %c0_226] {strides = array<i32: 100, 1>} : memref<200x20xf32, #tpu.memory_space<vmem>>, vector<2x20xf32>
    %c91 = arith.constant 91 : index
    %c0_227 = arith.constant 0 : index
    %334 = tpu.strided_load %arg14[%c91, %c0_227] {strides = array<i32: 100, 1>} : memref<200x20xf32, #tpu.memory_space<vmem>>, vector<2x20xf32>
    %335 = arith.maximumf %333, %334 : vector<2x20xf32>
    %c0_228 = arith.constant 0 : index
    %c900 = arith.constant 900 : index
    %336 = vector.load %arg15[%c0_228, %c900] : memref<2x1000xf32, #tpu.memory_space<vmem>>, vector<2x20xf32>
    tpu.vector_store %arg15[%c0_228, %c900], %335 {strides = array<i32>} : memref<2x1000xf32, #tpu.memory_space<vmem>>, vector<2x20xf32>,
    %c92 = arith.constant 92 : index
    %c0_229 = arith.constant 0 : index
    %337 = tpu.strided_load %arg14[%c92, %c0_229] {strides = array<i32: 100, 1>} : memref<200x20xf32, #tpu.memory_space<vmem>>, vector<2x20xf32>
    %c93 = arith.constant 93 : index
    %c0_230 = arith.constant 0 : index
    %338 = tpu.strided_load %arg14[%c93, %c0_230] {strides = array<i32: 100, 1>} : memref<200x20xf32, #tpu.memory_space<vmem>>, vector<2x20xf32>
    %339 = arith.maximumf %337, %338 : vector<2x20xf32>
    %c0_231 = arith.constant 0 : index
    %c920 = arith.constant 920 : index
    %340 = vector.load %arg15[%c0_231, %c920] : memref<2x1000xf32, #tpu.memory_space<vmem>>, vector<2x20xf32>
    tpu.vector_store %arg15[%c0_231, %c920], %339 {strides = array<i32>} : memref<2x1000xf32, #tpu.memory_space<vmem>>, vector<2x20xf32>,
    %c94 = arith.constant 94 : index
    %c0_232 = arith.constant 0 : index
    %341 = tpu.strided_load %arg14[%c94, %c0_232] {strides = array<i32: 100, 1>} : memref<200x20xf32, #tpu.memory_space<vmem>>, vector<2x20xf32>
    %c95 = arith.constant 95 : index
    %c0_233 = arith.constant 0 : index
    %342 = tpu.strided_load %arg14[%c95, %c0_233] {strides = array<i32: 100, 1>} : memref<200x20xf32, #tpu.memory_space<vmem>>, vector<2x20xf32>
    %343 = arith.maximumf %341, %342 : vector<2x20xf32>
    %c0_234 = arith.constant 0 : index
    %c940 = arith.constant 940 : index
    %344 = vector.load %arg15[%c0_234, %c940] : memref<2x1000xf32, #tpu.memory_space<vmem>>, vector<2x20xf32>
    tpu.vector_store %arg15[%c0_234, %c940], %343 {strides = array<i32>} : memref<2x1000xf32, #tpu.memory_space<vmem>>, vector<2x20xf32>,
    %c96 = arith.constant 96 : index
    %c0_235 = arith.constant 0 : index
    %345 = tpu.strided_load %arg14[%c96, %c0_235] {strides = array<i32: 100, 1>} : memref<200x20xf32, #tpu.memory_space<vmem>>, vector<2x20xf32>
    %c97 = arith.constant 97 : index
    %c0_236 = arith.constant 0 : index
    %346 = tpu.strided_load %arg14[%c97, %c0_236] {strides = array<i32: 100, 1>} : memref<200x20xf32, #tpu.memory_space<vmem>>, vector<2x20xf32>
    %347 = arith.maximumf %345, %346 : vector<2x20xf32>
    %c0_237 = arith.constant 0 : index
    %c960 = arith.constant 960 : index
    %348 = vector.load %arg15[%c0_237, %c960] : memref<2x1000xf32, #tpu.memory_space<vmem>>, vector<2x20xf32>
    tpu.vector_store %arg15[%c0_237, %c960], %347 {strides = array<i32>} : memref<2x1000xf32, #tpu.memory_space<vmem>>, vector<2x20xf32>,
    %c98 = arith.constant 98 : index
    %c0_238 = arith.constant 0 : index
    %349 = tpu.strided_load %arg14[%c98, %c0_238] {strides = array<i32: 100, 1>} : memref<200x20xf32, #tpu.memory_space<vmem>>, vector<2x20xf32>
    %c99 = arith.constant 99 : index
    %c0_239 = arith.constant 0 : index
    %350 = tpu.strided_load %arg14[%c99, %c0_239] {strides = array<i32: 100, 1>} : memref<200x20xf32, #tpu.memory_space<vmem>>, vector<2x20xf32>
    %351 = arith.maximumf %349, %350 : vector<2x20xf32>
    %c0_240 = arith.constant 0 : index
    %c980 = arith.constant 980 : index
    %352 = vector.load %arg15[%c0_240, %c980] : memref<2x1000xf32, #tpu.memory_space<vmem>>, vector<2x20xf32>
    tpu.vector_store %arg15[%c0_240, %c980], %351 {strides = array<i32>} : memref<2x1000xf32, #tpu.memory_space<vmem>>, vector<2x20xf32>,
    %c0_241 = arith.constant 0 : index
    %c0_242 = arith.constant 0 : index
    %353 = vector.load %arg15[%c0_241, %c0_242] : memref<2x1000xf32, #tpu.memory_space<vmem>>, vector<2x1000xf32>
    %c0_243 = arith.constant 0 : index
    %c0_244 = arith.constant 0 : index
    %354 = vector.load %arg7[%c0_243, %c0_244] : memref<1000x600xf32, #tpu.memory_space<vmem>>, vector<1000x600xf32>
    %cst_245 = arith.constant dense<0.000000e+00> : vector<2x600xf32>
    %355 = tpu.matmul %353, %354, %cst_245 {dimension_numbers = #tpu.dot_dimension_numbers<[1], [0], [0], [1], [0, 0, 1, 1], [], []>} : vector<2x1000xf32>, vector<1000x600xf32>, vector<2x600xf32> -> vector<2x600xf32>
    %c0_246 = arith.constant 0 : index
    %c0_247 = arith.constant 0 : index
    %356 = vector.load %arg8[%c0_246, %c0_247] : memref<1x600xf32, #tpu.memory_space<vmem>>, vector<1x600xf32>
    %357 = vector.broadcast %356 : vector<1x600xf32> to vector<2x600xf32>
    %358 = arith.addf %355, %357 : vector<2x600xf32>
    %359 = math.tanh %358 : vector<2x600xf32>
    %c0_248 = arith.constant 0 : index
    %c0_249 = arith.constant 0 : index
    %360 = vector.load %arg9[%c0_248, %c0_249] : memref<600x2xf32, #tpu.memory_space<vmem>>, vector<600x2xf32>
    %cst_250 = arith.constant dense<0.000000e+00> : vector<2x2xf32>
    %361 = tpu.matmul %359, %360, %cst_250 {dimension_numbers = #tpu.dot_dimension_numbers<[1], [0], [0], [1], [0, 0, 1, 1], [], []>} : vector<2x600xf32>, vector<600x2xf32>, vector<2x2xf32> -> vector<2x2xf32>
    %c0_251 = arith.constant 0 : index
    %c0_252 = arith.constant 0 : index
    %362 = vector.load %arg10[%c0_251, %c0_252] : memref<1x2xf32, #tpu.memory_space<vmem>>, vector<1x2xf32>
    %363 = vector.broadcast %362 : vector<1x2xf32> to vector<2x2xf32>
    %364 = arith.addf %361, %363 : vector<2x2xf32>
    %c0_253 = arith.constant 0 : index
    %c0_254 = arith.constant 0 : index
    %365 = vector.load %arg11[%c0_253, %c0_254] : memref<2x2xf32, #tpu.memory_space<vmem>>, vector<2x2xf32>
    tpu.vector_store %arg11[%c0_253, %c0_254], %364 {strides = array<i32>} : memref<2x2xf32, #tpu.memory_space<vmem>>, vector<2x2xf32>,
    return
  }
}

</mosaic_0001>

<llo_original>
// kernel: cnn_1d_mod_forward.1
$region0: #{cnn_1d_mod_forward.1}
  #allocation0 [shape = 'u32[]', space=smem, size = 0x4, offset = 0x4, fixed_abs, tag = 'smem constant byte address 0x4 - core index']
  #allocation1 [shape = 'u32[144,128]{1,0:T(1,128)}', space=vmem, size = 0x12000, scoped, tag = 'internal scratch']
  #allocation2 [shape = 'f32[416,1]{1,0:T(8,128)}', space=vmem, size = 0x34000, scoped, tag = 'scratch operand']
  #allocation3 [shape = 'f32[416,10]{1,0:T(8,128)}', space=vmem, size = 0x34000, scoped, tag = 'scratch operand']
  #allocation4 [shape = 'f32[200,20]{1,0:T(8,128)}', space=vmem, size = 0x19000, scoped, tag = 'scratch operand']
  #allocation5 [shape = 'f32[2,1000]{1,0:T(2,128)}', space=vmem, size = 0x2000, scoped, tag = 'scratch operand']
  %s0 = inlined_call_operand.vmem [shape: f32[400,1], index: 0, kind: input, shape index: {}]
  %s1 = inlined_call_operand.vmem [shape: f32[3,10], index: 1, kind: input, shape index: {}]
  %s2 = inlined_call_operand.vmem [shape: f32[1,10], index: 2, kind: input, shape index: {}]
  %s3 = inlined_call_operand.vmem [shape: f32[1,10], index: 3, kind: input, shape index: {}]
  %s4 = inlined_call_operand.vmem [shape: f32[3,10,20], index: 4, kind: input, shape index: {}]
  %s5 = inlined_call_operand.vmem [shape: f32[1,20], index: 5, kind: input, shape index: {}]
  %s6 = inlined_call_operand.vmem [shape: f32[1,20], index: 6, kind: input, shape index: {}]
  %s7 = inlined_call_operand.vmem [shape: f32[1000,600], index: 7, kind: input, shape index: {}]
  %s8 = inlined_call_operand.vmem [shape: f32[1,600], index: 8, kind: input, shape index: {}]
  %s9 = inlined_call_operand.vmem [shape: f32[600,2], index: 9, kind: input, shape index: {}]
  %s10 = inlined_call_operand.vmem [shape: f32[1,2], index: 10, kind: input, shape index: {}]
  %s11 = inlined_call_operand.vmem [shape: f32[2,2], index: 11, kind: output, shape index: {}]
  %s12 = sld [smem:[#allocation0]]
  $region54: #{cnn_1d_mod_forward.1} parent=0
    _
  %s14 = ssub.s32 1, %s12
  %s15 = scalar_select 0, %s14, %s12
  // Predicated region
  $region2: #{cnn_1d_mod_forward.1} parent=0 // pred_check
    _
  $region3: #{cnn_1d_mod_forward.1} parent=0 // pred_check_branch
    %17 = sbr.rel (0) target = $region5
  $region4: #{cnn_1d_mod_forward.1} parent=0 // pred_region
    _
  $region5: #{cnn_1d_mod_forward.1} parent=0 // pred_fallthru
    _
  // Predicated region
  $region6: #{cnn_1d_mod_forward.1} parent=0 // pred_check
    _
  $region7: #{cnn_1d_mod_forward.1} parent=0 // pred_check_branch
    %19 = sbr.rel (0) target = $region9
  $region8: #{cnn_1d_mod_forward.1} parent=0 // pred_region
    _
  $region9: #{cnn_1d_mod_forward.1} parent=0 // pred_fallthru
    _
  // Predicated region
  $region10: #{cnn_1d_mod_forward.1} parent=0 // pred_check
    _
  $region11: #{cnn_1d_mod_forward.1} parent=0 // pred_check_branch
    %21 = sbr.rel (0) target = $region13
  $region12: #{cnn_1d_mod_forward.1} parent=0 // pred_region
    _
  $region13: #{cnn_1d_mod_forward.1} parent=0 // pred_fallthru
    _
  // Predicated region
  $region14: #{cnn_1d_mod_forward.1} parent=0 // pred_check
    _
  $region15: #{cnn_1d_mod_forward.1} parent=0 // pred_check_branch
    %23 = sbr.rel (0) target = $region17
  $region16: #{cnn_1d_mod_forward.1} parent=0 // pred_region
    _
  $region17: #{cnn_1d_mod_forward.1} parent=0 // pred_fallthru
    _
  // Predicated region
  $region18: #{cnn_1d_mod_forward.1} parent=0 // pred_check
    _
  $region19: #{cnn_1d_mod_forward.1} parent=0 // pred_check_branch
    %25 = sbr.rel (0) target = $region21
  $region20: #{cnn_1d_mod_forward.1} parent=0 // pred_region
    _
  $region21: #{cnn_1d_mod_forward.1} parent=0 // pred_fallthru
    _
  // Predicated region
  $region22: #{cnn_1d_mod_forward.1} parent=0 // pred_check
    _
  $region23: #{cnn_1d_mod_forward.1} parent=0 // pred_check_branch
    %27 = sbr.rel (0) target = $region25
  $region24: #{cnn_1d_mod_forward.1} parent=0 // pred_region
    _
  $region25: #{cnn_1d_mod_forward.1} parent=0 // pred_fallthru
    _
  // Predicated region
  $region26: #{cnn_1d_mod_forward.1} parent=0 // pred_check
    _
  $region27: #{cnn_1d_mod_forward.1} parent=0 // pred_check_branch
    %29 = sbr.rel (0) target = $region29
  $region28: #{cnn_1d_mod_forward.1} parent=0 // pred_region
    _
  $region29: #{cnn_1d_mod_forward.1} parent=0 // pred_fallthru
    _
  // Predicated region
  $region30: #{cnn_1d_mod_forward.1} parent=0 // pred_check
    _
  $region31: #{cnn_1d_mod_forward.1} parent=0 // pred_check_branch
    %31 = sbr.rel (0) target = $region33
  $region32: #{cnn_1d_mod_forward.1} parent=0 // pred_region
    _
  $region33: #{cnn_1d_mod_forward.1} parent=0 // pred_fallthru
    _
  // Predicated region
  $region34: #{cnn_1d_mod_forward.1} parent=0 // pred_check
    _
  $region35: #{cnn_1d_mod_forward.1} parent=0 // pred_check_branch
    %33 = sbr.rel (0) target = $region37
  $region36: #{cnn_1d_mod_forward.1} parent=0 // pred_region
    _
  $region37: #{cnn_1d_mod_forward.1} parent=0 // pred_fallthru
    _
  // Predicated region
  $region38: #{cnn_1d_mod_forward.1} parent=0 // pred_check
    _
  $region39: #{cnn_1d_mod_forward.1} parent=0 // pred_check_branch
    %35 = sbr.rel (0) target = $region41
  $region40: #{cnn_1d_mod_forward.1} parent=0 // pred_region
    _
  $region41: #{cnn_1d_mod_forward.1} parent=0 // pred_fallthru
    _
  // Predicated region
  $region42: #{cnn_1d_mod_forward.1} parent=0 // pred_check
    _
  $region43: #{cnn_1d_mod_forward.1} parent=0 // pred_check_branch
    %37 = sbr.rel (0) target = $region45
  $region44: #{cnn_1d_mod_forward.1} parent=0 // pred_region
    _
  $region45: #{cnn_1d_mod_forward.1} parent=0 // pred_fallthru
    _
  %vm38 = vcmask 7168
  %39 = vst.msk [vmem:[#allocation2] sm:$0xff] %vm38, 0.0
  %v40 = vld [vmem:[%s0] sm:$0xff]
  %v41 = vld [vmem:[%s0 + $0x8] sm:$0xff]
  %v42 = vld [vmem:[%s0 + $0x10] sm:$0xff]
  %v43 = vld [vmem:[%s0 + $0x18] sm:$0xff]
  %v44 = vld [vmem:[%s0 + $0x20] sm:$0xff]
  %v45 = vld [vmem:[%s0 + $0x28] sm:$0xff]
  %v46 = vld [vmem:[%s0 + $0x30] sm:$0xff]
  %v47 = vld [vmem:[%s0 + $0x38] sm:$0xff]
  %v48 = vld [vmem:[%s0 + $0x40] sm:$0xff]
  %v49 = vld [vmem:[%s0 + $0x48] sm:$0xff]
  %v50 = vld [vmem:[%s0 + $0x50] sm:$0xff]
  %v51 = vld [vmem:[%s0 + $0x58] sm:$0xff]
  %v52 = vld [vmem:[%s0 + $0x60] sm:$0xff]
  %v53 = vld [vmem:[%s0 + $0x68] sm:$0xff]
  %v54 = vld [vmem:[%s0 + $0x70] sm:$0xff]
  %v55 = vld [vmem:[%s0 + $0x78] sm:$0xff]
  %v56 = vld [vmem:[%s0 + $0x80] sm:$0xff]
  %v57 = vld [vmem:[%s0 + $0x88] sm:$0xff]
  %v58 = vld [vmem:[%s0 + $0x90] sm:$0xff]
  %v59 = vld [vmem:[%s0 + $0x98] sm:$0xff]
  %v60 = vld [vmem:[%s0 + $0xa0] sm:$0xff]
  %v61 = vld [vmem:[%s0 + $0xa8] sm:$0xff]
  %v62 = vld [vmem:[%s0 + $0xb0] sm:$0xff]
  %v63 = vld [vmem:[%s0 + $0xb8] sm:$0xff]
  %v64 = vld [vmem:[%s0 + $0xc0] sm:$0xff]
  %v65 = vld [vmem:[%s0 + $0xc8] sm:$0xff]
  %v66 = vld [vmem:[%s0 + $0xd0] sm:$0xff]
  %v67 = vld [vmem:[%s0 + $0xd8] sm:$0xff]
  %v68 = vld [vmem:[%s0 + $0xe0] sm:$0xff]
  %v69 = vld [vmem:[%s0 + $0xe8] sm:$0xff]
  %v70 = vld [vmem:[%s0 + $0xf0] sm:$0xff]
  %v71 = vld [vmem:[%s0 + $0xf8] sm:$0xff]
  %v72 = vld [vmem:[%s0 + $0x100] sm:$0xff]
  %v73 = vld [vmem:[%s0 + $0x108] sm:$0xff]
  %v74 = vld [vmem:[%s0 + $0x110] sm:$0xff]
  %v75 = vld [vmem:[%s0 + $0x118] sm:$0xff]
  %v76 = vld [vmem:[%s0 + $0x120] sm:$0xff]
  %v77 = vld [vmem:[%s0 + $0x128] sm:$0xff]
  %v78 = vld [vmem:[%s0 + $0x130] sm:$0xff]
  %v79 = vld [vmem:[%s0 + $0x138] sm:$0xff]
  %v80 = vld [vmem:[%s0 + $0x140] sm:$0xff]
  %v81 = vld [vmem:[%s0 + $0x148] sm:$0xff]
  %v82 = vld [vmem:[%s0 + $0x150] sm:$0xff]
  %v83 = vld [vmem:[%s0 + $0x158] sm:$0xff]
  %v84 = vld [vmem:[%s0 + $0x160] sm:$0xff]
  %v85 = vld [vmem:[%s0 + $0x168] sm:$0xff]
  %v86 = vld [vmem:[%s0 + $0x170] sm:$0xff]
  %v87 = vld [vmem:[%s0 + $0x178] sm:$0xff]
  %v88 = vld [vmem:[%s0 + $0x180] sm:$0xff]
  %v89 = vld [vmem:[%s0 + $0x188] sm:$0xff]
  %90 = vst.msk [vmem:[#allocation2 + $0x8] sm:$0xff] %vm38, %v40
  %91 = vst.msk [vmem:[#allocation2 + $0x10] sm:$0xff] %vm38, %v41
  %92 = vst.msk [vmem:[#allocation2 + $0x18] sm:$0xff] %vm38, %v42
  %93 = vst.msk [vmem:[#allocation2 + $0x20] sm:$0xff] %vm38, %v43
  %94 = vst.msk [vmem:[#allocation2 + $0x28] sm:$0xff] %vm38, %v44
  %95 = vst.msk [vmem:[#allocation2 + $0x30] sm:$0xff] %vm38, %v45
  %96 = vst.msk [vmem:[#allocation2 + $0x38] sm:$0xff] %vm38, %v46
  %97 = vst.msk [vmem:[#allocation2 + $0x40] sm:$0xff] %vm38, %v47
  %98 = vst.msk [vmem:[#allocation2 + $0x48] sm:$0xff] %vm38, %v48
  %99 = vst.msk [vmem:[#allocation2 + $0x50] sm:$0xff] %vm38, %v49
  %100 = vst.msk [vmem:[#allocation2 + $0x58] sm:$0xff] %vm38, %v50
  %101 = vst.msk [vmem:[#allocation2 + $0x60] sm:$0xff] %vm38, %v51
  %102 = vst.msk [vmem:[#allocation2 + $0x68] sm:$0xff] %vm38, %v52
  %103 = vst.msk [vmem:[#allocation2 + $0x70] sm:$0xff] %vm38, %v53
  %104 = vst.msk [vmem:[#allocation2 + $0x78] sm:$0xff] %vm38, %v54
  %105 = vst.msk [vmem:[#allocation2 + $0x80] sm:$0xff] %vm38, %v55
  %106 = vst.msk [vmem:[#allocation2 + $0x88] sm:$0xff] %vm38, %v56
  %107 = vst.msk [vmem:[#allocation2 + $0x90] sm:$0xff] %vm38, %v57
  %108 = vst.msk [vmem:[#allocation2 + $0x98] sm:$0xff] %vm38, %v58
  %109 = vst.msk [vmem:[#allocation2 + $0xa0] sm:$0xff] %vm38, %v59
  %110 = vst.msk [vmem:[#allocation2 + $0xa8] sm:$0xff] %vm38, %v60
  %111 = vst.msk [vmem:[#allocation2 + $0xb0] sm:$0xff] %vm38, %v61
  %112 = vst.msk [vmem:[#allocation2 + $0xb8] sm:$0xff] %vm38, %v62
  %113 = vst.msk [vmem:[#allocation2 + $0xc0] sm:$0xff] %vm38, %v63
  %114 = vst.msk [vmem:[#allocation2 + $0xc8] sm:$0xff] %vm38, %v64
  %115 = vst.msk [vmem:[#allocation2 + $0xd0] sm:$0xff] %vm38, %v65
  %116 = vst.msk [vmem:[#allocation2 + $0xd8] sm:$0xff] %vm38, %v66
  %117 = vst.msk [vmem:[#allocation2 + $0xe0] sm:$0xff] %vm38, %v67
  %118 = vst.msk [vmem:[#allocation2 + $0xe8] sm:$0xff] %vm38, %v68
  %119 = vst.msk [vmem:[#allocation2 + $0xf0] sm:$0xff] %vm38, %v69
  %120 = vst.msk [vmem:[#allocation2 + $0xf8] sm:$0xff] %vm38, %v70
  %121 = vst.msk [vmem:[#allocation2 + $0x100] sm:$0xff] %vm38, %v71
  %122 = vst.msk [vmem:[#allocation2 + $0x108] sm:$0xff] %vm38, %v72
  %123 = vst.msk [vmem:[#allocation2 + $0x110] sm:$0xff] %vm38, %v73
  %124 = vst.msk [vmem:[#allocation2 + $0x118] sm:$0xff] %vm38, %v74
  %125 = vst.msk [vmem:[#allocation2 + $0x120] sm:$0xff] %vm38, %v75
  %126 = vst.msk [vmem:[#allocation2 + $0x128] sm:$0xff] %vm38, %v76
  %127 = vst.msk [vmem:[#allocation2 + $0x130] sm:$0xff] %vm38, %v77
  %128 = vst.msk [vmem:[#allocation2 + $0x138] sm:$0xff] %vm38, %v78
  %129 = vst.msk [vmem:[#allocation2 + $0x140] sm:$0xff] %vm38, %v79
  %130 = vst.msk [vmem:[#allocation2 + $0x148] sm:$0xff] %vm38, %v80
  %131 = vst.msk [vmem:[#allocation2 + $0x150] sm:$0xff] %vm38, %v81
  %132 = vst.msk [vmem:[#allocation2 + $0x158] sm:$0xff] %vm38, %v82
  %133 = vst.msk [vmem:[#allocation2 + $0x160] sm:$0xff] %vm38, %v83
  %134 = vst.msk [vmem:[#allocation2 + $0x168] sm:$0xff] %vm38, %v84
  %135 = vst.msk [vmem:[#allocation2 + $0x170] sm:$0xff] %vm38, %v85
  %136 = vst.msk [vmem:[#allocation2 + $0x178] sm:$0xff] %vm38, %v86
  %137 = vst.msk [vmem:[#allocation2 + $0x180] sm:$0xff] %vm38, %v87
  %138 = vst.msk [vmem:[#allocation2 + $0x188] sm:$0xff] %vm38, %v88
  %139 = vst.msk [vmem:[#allocation2 + $0x190] sm:$0xff] %vm38, %v89
  %140 = vst.msk [vmem:[#allocation2 + $0x198] sm:$0xff] %vm38, 0.0
  %v141 = vlaneseq
  %v142 = vshrl.u32 %v141, 7
  %v143 = vadd.s32 %v142, 8
  %v144 = vadd.s32 %v142, 16
  %v145 = vadd.s32 %v142, 24
  %v146 = vadd.s32 %v142, 32
  %v147 = vadd.s32 %v142, 40
  %v148 = vadd.s32 %v142, 48
  %v149 = vadd.s32 %v142, 56
  %v150 = vadd.s32 %v142, 64
  %v151 = vadd.s32 %v142, 72
  %v152 = vadd.s32 %v142, 80
  %v153 = vadd.s32 %v142, 88
  %v154 = vadd.s32 %v142, 96
  %v155 = vadd.s32 %v142, 104
  %v156 = vadd.s32 %v142, 112
  %v157 = vadd.s32 %v142, 120
  %v158 = vadd.s32 %v142, 128
  %v159 = vadd.s32 %v142, 136
  %v160 = vadd.s32 %v142, 144
  %v161 = vadd.s32 %v142, 152
  %v162 = vadd.s32 %v142, 160
  %v163 = vadd.s32 %v142, 168
  %v164 = vadd.s32 %v142, 176
  %v165 = vadd.s32 %v142, 184
  %v166 = vadd.s32 %v142, 192
  %v167 = vadd.s32 %v142, 200
  %v168 = vadd.s32 %v142, 208
  %v169 = vadd.s32 %v142, 216
  %v170 = vadd.s32 %v142, 224
  %v171 = vadd.s32 %v142, 232
  %v172 = vadd.s32 %v142, 240
  %v173 = vadd.s32 %v142, 248
  %v174 = vadd.s32 %v142, 256
  %v175 = vadd.s32 %v142, 264
  %v176 = vadd.s32 %v142, 272
  %v177 = vadd.s32 %v142, 280
  %v178 = vadd.s32 %v142, 288
  %v179 = vadd.s32 %v142, 296
  %v180 = vadd.s32 %v142, 304
  %v181 = vadd.s32 %v142, 312
  %v182 = vadd.s32 %v142, 320
  %v183 = vadd.s32 %v142, 328
  %v184 = vadd.s32 %v142, 336
  %v185 = vadd.s32 %v142, 344
  %v186 = vadd.s32 %v142, 352
  %v187 = vadd.s32 %v142, 360
  %v188 = vadd.s32 %v142, 368
  %v189 = vadd.s32 %v142, 376
  %v190 = vadd.s32 %v142, 384
  %v191 = vadd.s32 %v142, 392
  %vm192 = vcmp.lt.s32.totalorder %v142, 0
  %v193 = vsub.s32 0, %v142
  %v194 = vsel %vm192, %v193, %v142
  %v195 = vmul.u32.u64.compose %v194, 2748779070
  %v196 = vextract.low.u32 %v195
  %v197 = vextract.high.u32 %v195
  %v198 = vshrl.u32 %v197, 7
  %v199 = vmul.u32 %v198, 200
  %v200 = vsub.s32 %v194, %v199
  %v201 = vsub.s32 0, %v200
  %v202 = vsel %vm192, %v201, %v200
  %vm203 = vcmp.lt.s32.totalorder %v143, 0
  %v204 = vsub.s32 0, %v143
  %v205 = vsel %vm203, %v204, %v143
  %v206 = vmul.u32.u64.compose %v205, 2748779070
  %v207 = vextract.low.u32 %v206
  %v208 = vextract.high.u32 %v206
  %v209 = vshrl.u32 %v208, 7
  %v210 = vmul.u32 %v209, 200
  %v211 = vsub.s32 %v205, %v210
  %v212 = vsub.s32 0, %v211
  %v213 = vsel %vm203, %v212, %v211
  %vm214 = vcmp.lt.s32.totalorder %v144, 0
  %v215 = vsub.s32 0, %v144
  %v216 = vsel %vm214, %v215, %v144
  %v217 = vmul.u32.u64.compose %v216, 2748779070
  %v218 = vextract.low.u32 %v217
  %v219 = vextract.high.u32 %v217
  %v220 = vshrl.u32 %v219, 7
  %v221 = vmul.u32 %v220, 200
  %v222 = vsub.s32 %v216, %v221
  %v223 = vsub.s32 0, %v222
  %v224 = vsel %vm214, %v223, %v222
  %vm225 = vcmp.lt.s32.totalorder %v145, 0
  %v226 = vsub.s32 0, %v145
  %v227 = vsel %vm225, %v226, %v145
  %v228 = vmul.u32.u64.compose %v227, 2748779070
  %v229 = vextract.low.u32 %v228
  %v230 = vextract.high.u32 %v228
  %v231 = vshrl.u32 %v230, 7
  %v232 = vmul.u32 %v231, 200
  %v233 = vsub.s32 %v227, %v232
  %v234 = vsub.s32 0, %v233
  %v235 = vsel %vm225, %v234, %v233
  %vm236 = vcmp.lt.s32.totalorder %v146, 0
  %v237 = vsub.s32 0, %v146
  %v238 = vsel %vm236, %v237, %v146
  %v239 = vmul.u32.u64.compose %v238, 2748779070
  %v240 = vextract.low.u32 %v239
  %v241 = vextract.high.u32 %v239
  %v242 = vshrl.u32 %v241, 7
  %v243 = vmul.u32 %v242, 200
  %v244 = vsub.s32 %v238, %v243
  %v245 = vsub.s32 0, %v244
  %v246 = vsel %vm236, %v245, %v244
  %vm247 = vcmp.lt.s32.totalorder %v147, 0
  %v248 = vsub.s32 0, %v147
  %v249 = vsel %vm247, %v248, %v147
  %v250 = vmul.u32.u64.compose %v249, 2748779070
  %v251 = vextract.low.u32 %v250
  %v252 = vextract.high.u32 %v250
  %v253 = vshrl.u32 %v252, 7
  %v254 = vmul.u32 %v253, 200
  %v255 = vsub.s32 %v249, %v254
  %v256 = vsub.s32 0, %v255
  %v257 = vsel %vm247, %v256, %v255
  %vm258 = vcmp.lt.s32.totalorder %v148, 0
  %v259 = vsub.s32 0, %v148
  %v260 = vsel %vm258, %v259, %v148
  %v261 = vmul.u32.u64.compose %v260, 2748779070
  %v262 = vextract.low.u32 %v261
  %v263 = vextract.high.u32 %v261
  %v264 = vshrl.u32 %v263, 7
  %v265 = vmul.u32 %v264, 200
  %v266 = vsub.s32 %v260, %v265
  %v267 = vsub.s32 0, %v266
  %v268 = vsel %vm258, %v267, %v266
  %vm269 = vcmp.lt.s32.totalorder %v149, 0
  %v270 = vsub.s32 0, %v149
  %v271 = vsel %vm269, %v270, %v149
  %v272 = vmul.u32.u64.compose %v271, 2748779070
  %v273 = vextract.low.u32 %v272
  %v274 = vextract.high.u32 %v272
  %v275 = vshrl.u32 %v274, 7
  %v276 = vmul.u32 %v275, 200
  %v277 = vsub.s32 %v271, %v276
  %v278 = vsub.s32 0, %v277
  %v279 = vsel %vm269, %v278, %v277
  %vm280 = vcmp.lt.s32.totalorder %v150, 0
  %v281 = vsub.s32 0, %v150
  %v282 = vsel %vm280, %v281, %v150
  %v283 = vmul.u32.u64.compose %v282, 2748779070
  %v284 = vextract.low.u32 %v283
  %v285 = vextract.high.u32 %v283
  %v286 = vshrl.u32 %v285, 7
  %v287 = vmul.u32 %v286, 200
  %v288 = vsub.s32 %v282, %v287
  %v289 = vsub.s32 0, %v288
  %v290 = vsel %vm280, %v289, %v288
  %vm291 = vcmp.lt.s32.totalorder %v151, 0
  %v292 = vsub.s32 0, %v151
  %v293 = vsel %vm291, %v292, %v151
  %v294 = vmul.u32.u64.compose %v293, 2748779070
  %v295 = vextract.low.u32 %v294
  %v296 = vextract.high.u32 %v294
  %v297 = vshrl.u32 %v296, 7
  %v298 = vmul.u32 %v297, 200
  %v299 = vsub.s32 %v293, %v298
  %v300 = vsub.s32 0, %v299
  %v301 = vsel %vm291, %v300, %v299
  %vm302 = vcmp.lt.s32.totalorder %v152, 0
  %v303 = vsub.s32 0, %v152
  %v304 = vsel %vm302, %v303, %v152
  %v305 = vmul.u32.u64.compose %v304, 2748779070
  %v306 = vextract.low.u32 %v305
  %v307 = vextract.high.u32 %v305
  %v308 = vshrl.u32 %v307, 7
  %v309 = vmul.u32 %v308, 200
  %v310 = vsub.s32 %v304, %v309
  %v311 = vsub.s32 0, %v310
  %v312 = vsel %vm302, %v311, %v310
  %vm313 = vcmp.lt.s32.totalorder %v153, 0
  %v314 = vsub.s32 0, %v153
  %v315 = vsel %vm313, %v314, %v153
  %v316 = vmul.u32.u64.compose %v315, 2748779070
  %v317 = vextract.low.u32 %v316
  %v318 = vextract.high.u32 %v316
  %v319 = vshrl.u32 %v318, 7
  %v320 = vmul.u32 %v319, 200
  %v321 = vsub.s32 %v315, %v320
  %v322 = vsub.s32 0, %v321
  %v323 = vsel %vm313, %v322, %v321
  %vm324 = vcmp.lt.s32.totalorder %v154, 0
  %v325 = vsub.s32 0, %v154
  %v326 = vsel %vm324, %v325, %v154
  %v327 = vmul.u32.u64.compose %v326, 2748779070
  %v328 = vextract.low.u32 %v327
  %v329 = vextract.high.u32 %v327
  %v330 = vshrl.u32 %v329, 7
  %v331 = vmul.u32 %v330, 200
  %v332 = vsub.s32 %v326, %v331
  %v333 = vsub.s32 0, %v332
  %v334 = vsel %vm324, %v333, %v332
  %vm335 = vcmp.lt.s32.totalorder %v155, 0
  %v336 = vsub.s32 0, %v155
  %v337 = vsel %vm335, %v336, %v155
  %v338 = vmul.u32.u64.compose %v337, 2748779070
  %v339 = vextract.low.u32 %v338
  %v340 = vextract.high.u32 %v338
  %v341 = vshrl.u32 %v340, 7
  %v342 = vmul.u32 %v341, 200
  %v343 = vsub.s32 %v337, %v342
  %v344 = vsub.s32 0, %v343
  %v345 = vsel %vm335, %v344, %v343
  %vm346 = vcmp.lt.s32.totalorder %v156, 0
  %v347 = vsub.s32 0, %v156
  %v348 = vsel %vm346, %v347, %v156
  %v349 = vmul.u32.u64.compose %v348, 2748779070
  %v350 = vextract.low.u32 %v349
  %v351 = vextract.high.u32 %v349
  %v352 = vshrl.u32 %v351, 7
  %v353 = vmul.u32 %v352, 200
  %v354 = vsub.s32 %v348, %v353
  %v355 = vsub.s32 0, %v354
  %v356 = vsel %vm346, %v355, %v354
  %vm357 = vcmp.lt.s32.totalorder %v157, 0
  %v358 = vsub.s32 0, %v157
  %v359 = vsel %vm357, %v358, %v157
  %v360 = vmul.u32.u64.compose %v359, 2748779070
  %v361 = vextract.low.u32 %v360
  %v362 = vextract.high.u32 %v360
  %v363 = vshrl.u32 %v362, 7
  %v364 = vmul.u32 %v363, 200
  %v365 = vsub.s32 %v359, %v364
  %v366 = vsub.s32 0, %v365
  %v367 = vsel %vm357, %v366, %v365
  %vm368 = vcmp.lt.s32.totalorder %v158, 0
  %v369 = vsub.s32 0, %v158
  %v370 = vsel %vm368, %v369, %v158
  %v371 = vmul.u32.u64.compose %v370, 2748779070
  %v372 = vextract.low.u32 %v371
  %v373 = vextract.high.u32 %v371
  %v374 = vshrl.u32 %v373, 7
  %v375 = vmul.u32 %v374, 200
  %v376 = vsub.s32 %v370, %v375
  %v377 = vsub.s32 0, %v376
  %v378 = vsel %vm368, %v377, %v376
  %vm379 = vcmp.lt.s32.totalorder %v159, 0
  %v380 = vsub.s32 0, %v159
  %v381 = vsel %vm379, %v380, %v159
  %v382 = vmul.u32.u64.compose %v381, 2748779070
  %v383 = vextract.low.u32 %v382
  %v384 = vextract.high.u32 %v382
  %v385 = vshrl.u32 %v384, 7
  %v386 = vmul.u32 %v385, 200
  %v387 = vsub.s32 %v381, %v386
  %v388 = vsub.s32 0, %v387
  %v389 = vsel %vm379, %v388, %v387
  %vm390 = vcmp.lt.s32.totalorder %v160, 0
  %v391 = vsub.s32 0, %v160
  %v392 = vsel %vm390, %v391, %v160
  %v393 = vmul.u32.u64.compose %v392, 2748779070
  %v394 = vextract.low.u32 %v393
  %v395 = vextract.high.u32 %v393
  %v396 = vshrl.u32 %v395, 7
  %v397 = vmul.u32 %v396, 200
  %v398 = vsub.s32 %v392, %v397
  %v399 = vsub.s32 0, %v398
  %v400 = vsel %vm390, %v399, %v398
  %vm401 = vcmp.lt.s32.totalorder %v161, 0
  %v402 = vsub.s32 0, %v161
  %v403 = vsel %vm401, %v402, %v161
  %v404 = vmul.u32.u64.compose %v403, 2748779070
  %v405 = vextract.low.u32 %v404
  %v406 = vextract.high.u32 %v404
  %v407 = vshrl.u32 %v406, 7
  %v408 = vmul.u32 %v407, 200
  %v409 = vsub.s32 %v403, %v408
  %v410 = vsub.s32 0, %v409
  %v411 = vsel %vm401, %v410, %v409
  %vm412 = vcmp.lt.s32.totalorder %v162, 0
  %v413 = vsub.s32 0, %v162
  %v414 = vsel %vm412, %v413, %v162
  %v415 = vmul.u32.u64.compose %v414, 2748779070
  %v416 = vextract.low.u32 %v415
  %v417 = vextract.high.u32 %v415
  %v418 = vshrl.u32 %v417, 7
  %v419 = vmul.u32 %v418, 200
  %v420 = vsub.s32 %v414, %v419
  %v421 = vsub.s32 0, %v420
  %v422 = vsel %vm412, %v421, %v420
  %vm423 = vcmp.lt.s32.totalorder %v163, 0
  %v424 = vsub.s32 0, %v163
  %v425 = vsel %vm423, %v424, %v163
  %v426 = vmul.u32.u64.compose %v425, 2748779070
  %v427 = vextract.low.u32 %v426
  %v428 = vextract.high.u32 %v426
  %v429 = vshrl.u32 %v428, 7
  %v430 = vmul.u32 %v429, 200
  %v431 = vsub.s32 %v425, %v430
  %v432 = vsub.s32 0, %v431
  %v433 = vsel %vm423, %v432, %v431
  %vm434 = vcmp.lt.s32.totalorder %v164, 0
  %v435 = vsub.s32 0, %v164
  %v436 = vsel %vm434, %v435, %v164
  %v437 = vmul.u32.u64.compose %v436, 2748779070
  %v438 = vextract.low.u32 %v437
  %v439 = vextract.high.u32 %v437
  %v440 = vshrl.u32 %v439, 7
  %v441 = vmul.u32 %v440, 200
  %v442 = vsub.s32 %v436, %v441
  %v443 = vsub.s32 0, %v442
  %v444 = vsel %vm434, %v443, %v442
  %vm445 = vcmp.lt.s32.totalorder %v165, 0
  %v446 = vsub.s32 0, %v165
  %v447 = vsel %vm445, %v446, %v165
  %v448 = vmul.u32.u64.compose %v447, 2748779070
  %v449 = vextract.low.u32 %v448
  %v450 = vextract.high.u32 %v448
  %v451 = vshrl.u32 %v450, 7
  %v452 = vmul.u32 %v451, 200
  %v453 = vsub.s32 %v447, %v452
  %v454 = vsub.s32 0, %v453
  %v455 = vsel %vm445, %v454, %v453
  %vm456 = vcmp.lt.s32.totalorder %v166, 0
  %v457 = vsub.s32 0, %v166
  %v458 = vsel %vm456, %v457, %v166
  %v459 = vmul.u32.u64.compose %v458, 2748779070
  %v460 = vextract.low.u32 %v459
  %v461 = vextract.high.u32 %v459
  %v462 = vshrl.u32 %v461, 7
  %v463 = vmul.u32 %v462, 200
  %v464 = vsub.s32 %v458, %v463
  %v465 = vsub.s32 0, %v464
  %v466 = vsel %vm456, %v465, %v464
  %vm467 = vcmp.lt.s32.totalorder %v167, 0
  %v468 = vsub.s32 0, %v167
  %v469 = vsel %vm467, %v468, %v167
  %v470 = vmul.u32.u64.compose %v469, 2748779070
  %v471 = vextract.low.u32 %v470
  %v472 = vextract.high.u32 %v470
  %v473 = vshrl.u32 %v472, 7
  %v474 = vmul.u32 %v473, 200
  %v475 = vsub.s32 %v469, %v474
  %v476 = vsub.s32 0, %v475
  %v477 = vsel %vm467, %v476, %v475
  %vm478 = vcmp.lt.s32.totalorder %v168, 0
  %v479 = vsub.s32 0, %v168
  %v480 = vsel %vm478, %v479, %v168
  %v481 = vmul.u32.u64.compose %v480, 2748779070
  %v482 = vextract.low.u32 %v481
  %v483 = vextract.high.u32 %v481
  %v484 = vshrl.u32 %v483, 7
  %v485 = vmul.u32 %v484, 200
  %v486 = vsub.s32 %v480, %v485
  %v487 = vsub.s32 0, %v486
  %v488 = vsel %vm478, %v487, %v486
  %vm489 = vcmp.lt.s32.totalorder %v169, 0
  %v490 = vsub.s32 0, %v169
  %v491 = vsel %vm489, %v490, %v169
  %v492 = vmul.u32.u64.compose %v491, 2748779070
  %v493 = vextract.low.u32 %v492
  %v494 = vextract.high.u32 %v492
  %v495 = vshrl.u32 %v494, 7
  %v496 = vmul.u32 %v495, 200
  %v497 = vsub.s32 %v491, %v496
  %v498 = vsub.s32 0, %v497
  %v499 = vsel %vm489, %v498, %v497
  %vm500 = vcmp.lt.s32.totalorder %v170, 0
  %v501 = vsub.s32 0, %v170
  %v502 = vsel %vm500, %v501, %v170
  %v503 = vmul.u32.u64.compose %v502, 2748779070
  %v504 = vextract.low.u32 %v503
  %v505 = vextract.high.u32 %v503
  %v506 = vshrl.u32 %v505, 7
  %v507 = vmul.u32 %v506, 200
  %v508 = vsub.s32 %v502, %v507
  %v509 = vsub.s32 0, %v508
  %v510 = vsel %vm500, %v509, %v508
  %vm511 = vcmp.lt.s32.totalorder %v171, 0
  %v512 = vsub.s32 0, %v171
  %v513 = vsel %vm511, %v512, %v171
  %v514 = vmul.u32.u64.compose %v513, 2748779070
  %v515 = vextract.low.u32 %v514
  %v516 = vextract.high.u32 %v514
  %v517 = vshrl.u32 %v516, 7
  %v518 = vmul.u32 %v517, 200
  %v519 = vsub.s32 %v513, %v518
  %v520 = vsub.s32 0, %v519
  %v521 = vsel %vm511, %v520, %v519
  %vm522 = vcmp.lt.s32.totalorder %v172, 0
  %v523 = vsub.s32 0, %v172
  %v524 = vsel %vm522, %v523, %v172
  %v525 = vmul.u32.u64.compose %v524, 2748779070
  %v526 = vextract.low.u32 %v525
  %v527 = vextract.high.u32 %v525
  %v528 = vshrl.u32 %v527, 7
  %v529 = vmul.u32 %v528, 200
  %v530 = vsub.s32 %v524, %v529
  %v531 = vsub.s32 0, %v530
  %v532 = vsel %vm522, %v531, %v530
  %vm533 = vcmp.lt.s32.totalorder %v173, 0
  %v534 = vsub.s32 0, %v173
  %v535 = vsel %vm533, %v534, %v173
  %v536 = vmul.u32.u64.compose %v535, 2748779070
  %v537 = vextract.low.u32 %v536
  %v538 = vextract.high.u32 %v536
  %v539 = vshrl.u32 %v538, 7
  %v540 = vmul.u32 %v539, 200
  %v541 = vsub.s32 %v535, %v540
  %v542 = vsub.s32 0, %v541
  %v543 = vsel %vm533, %v542, %v541
  %vm544 = vcmp.lt.s32.totalorder %v174, 0
  %v545 = vsub.s32 0, %v174
  %v546 = vsel %vm544, %v545, %v174
  %v547 = vmul.u32.u64.compose %v546, 2748779070
  %v548 = vextract.low.u32 %v547
  %v549 = vextract.high.u32 %v547
  %v550 = vshrl.u32 %v549, 7
  %v551 = vmul.u32 %v550, 200
  %v552 = vsub.s32 %v546, %v551
  %v553 = vsub.s32 0, %v552
  %v554 = vsel %vm544, %v553, %v552
  %vm555 = vcmp.lt.s32.totalorder %v175, 0
  %v556 = vsub.s32 0, %v175
  %v557 = vsel %vm555, %v556, %v175
  %v558 = vmul.u32.u64.compose %v557, 2748779070
  %v559 = vextract.low.u32 %v558
  %v560 = vextract.high.u32 %v558
  %v561 = vshrl.u32 %v560, 7
  %v562 = vmul.u32 %v561, 200
  %v563 = vsub.s32 %v557, %v562
  %v564 = vsub.s32 0, %v563
  %v565 = vsel %vm555, %v564, %v563
  %vm566 = vcmp.lt.s32.totalorder %v176, 0
  %v567 = vsub.s32 0, %v176
  %v568 = vsel %vm566, %v567, %v176
  %v569 = vmul.u32.u64.compose %v568, 2748779070
  %v570 = vextract.low.u32 %v569
  %v571 = vextract.high.u32 %v569
  %v572 = vshrl.u32 %v571, 7
  %v573 = vmul.u32 %v572, 200
  %v574 = vsub.s32 %v568, %v573
  %v575 = vsub.s32 0, %v574
  %v576 = vsel %vm566, %v575, %v574
  %vm577 = vcmp.lt.s32.totalorder %v177, 0
  %v578 = vsub.s32 0, %v177
  %v579 = vsel %vm577, %v578, %v177
  %v580 = vmul.u32.u64.compose %v579, 2748779070
  %v581 = vextract.low.u32 %v580
  %v582 = vextract.high.u32 %v580
  %v583 = vshrl.u32 %v582, 7
  %v584 = vmul.u32 %v583, 200
  %v585 = vsub.s32 %v579, %v584
  %v586 = vsub.s32 0, %v585
  %v587 = vsel %vm577, %v586, %v585
  %vm588 = vcmp.lt.s32.totalorder %v178, 0
  %v589 = vsub.s32 0, %v178
  %v590 = vsel %vm588, %v589, %v178
  %v591 = vmul.u32.u64.compose %v590, 2748779070
  %v592 = vextract.low.u32 %v591
  %v593 = vextract.high.u32 %v591
  %v594 = vshrl.u32 %v593, 7
  %v595 = vmul.u32 %v594, 200
  %v596 = vsub.s32 %v590, %v595
  %v597 = vsub.s32 0, %v596
  %v598 = vsel %vm588, %v597, %v596
  %vm599 = vcmp.lt.s32.totalorder %v179, 0
  %v600 = vsub.s32 0, %v179
  %v601 = vsel %vm599, %v600, %v179
  %v602 = vmul.u32.u64.compose %v601, 2748779070
  %v603 = vextract.low.u32 %v602
  %v604 = vextract.high.u32 %v602
  %v605 = vshrl.u32 %v604, 7
  %v606 = vmul.u32 %v605, 200
  %v607 = vsub.s32 %v601, %v606
  %v608 = vsub.s32 0, %v607
  %v609 = vsel %vm599, %v608, %v607
  %vm610 = vcmp.lt.s32.totalorder %v180, 0
  %v611 = vsub.s32 0, %v180
  %v612 = vsel %vm610, %v611, %v180
  %v613 = vmul.u32.u64.compose %v612, 2748779070
  %v614 = vextract.low.u32 %v613
  %v615 = vextract.high.u32 %v613
  %v616 = vshrl.u32 %v615, 7
  %v617 = vmul.u32 %v616, 200
  %v618 = vsub.s32 %v612, %v617
  %v619 = vsub.s32 0, %v618
  %v620 = vsel %vm610, %v619, %v618
  %vm621 = vcmp.lt.s32.totalorder %v181, 0
  %v622 = vsub.s32 0, %v181
  %v623 = vsel %vm621, %v622, %v181
  %v624 = vmul.u32.u64.compose %v623, 2748779070
  %v625 = vextract.low.u32 %v624
  %v626 = vextract.high.u32 %v624
  %v627 = vshrl.u32 %v626, 7
  %v628 = vmul.u32 %v627, 200
  %v629 = vsub.s32 %v623, %v628
  %v630 = vsub.s32 0, %v629
  %v631 = vsel %vm621, %v630, %v629
  %vm632 = vcmp.lt.s32.totalorder %v182, 0
  %v633 = vsub.s32 0, %v182
  %v634 = vsel %vm632, %v633, %v182
  %v635 = vmul.u32.u64.compose %v634, 2748779070
  %v636 = vextract.low.u32 %v635
  %v637 = vextract.high.u32 %v635
  %v638 = vshrl.u32 %v637, 7
  %v639 = vmul.u32 %v638, 200
  %v640 = vsub.s32 %v634, %v639
  %v641 = vsub.s32 0, %v640
  %v642 = vsel %vm632, %v641, %v640
  %vm643 = vcmp.lt.s32.totalorder %v183, 0
  %v644 = vsub.s32 0, %v183
  %v645 = vsel %vm643, %v644, %v183
  %v646 = vmul.u32.u64.compose %v645, 2748779070
  %v647 = vextract.low.u32 %v646
  %v648 = vextract.high.u32 %v646
  %v649 = vshrl.u32 %v648, 7
  %v650 = vmul.u32 %v649, 200
  %v651 = vsub.s32 %v645, %v650
  %v652 = vsub.s32 0, %v651
  %v653 = vsel %vm643, %v652, %v651
  %vm654 = vcmp.lt.s32.totalorder %v184, 0
  %v655 = vsub.s32 0, %v184
  %v656 = vsel %vm654, %v655, %v184
  %v657 = vmul.u32.u64.compose %v656, 2748779070
  %v658 = vextract.low.u32 %v657
  %v659 = vextract.high.u32 %v657
  %v660 = vshrl.u32 %v659, 7
  %v661 = vmul.u32 %v660, 200
  %v662 = vsub.s32 %v656, %v661
  %v663 = vsub.s32 0, %v662
  %v664 = vsel %vm654, %v663, %v662
  %vm665 = vcmp.lt.s32.totalorder %v185, 0
  %v666 = vsub.s32 0, %v185
  %v667 = vsel %vm665, %v666, %v185
  %v668 = vmul.u32.u64.compose %v667, 2748779070
  %v669 = vextract.low.u32 %v668
  %v670 = vextract.high.u32 %v668
  %v671 = vshrl.u32 %v670, 7
  %v672 = vmul.u32 %v671, 200
  %v673 = vsub.s32 %v667, %v672
  %v674 = vsub.s32 0, %v673
  %v675 = vsel %vm665, %v674, %v673
  %vm676 = vcmp.lt.s32.totalorder %v186, 0
  %v677 = vsub.s32 0, %v186
  %v678 = vsel %vm676, %v677, %v186
  %v679 = vmul.u32.u64.compose %v678, 2748779070
  %v680 = vextract.low.u32 %v679
  %v681 = vextract.high.u32 %v679
  %v682 = vshrl.u32 %v681, 7
  %v683 = vmul.u32 %v682, 200
  %v684 = vsub.s32 %v678, %v683
  %v685 = vsub.s32 0, %v684
  %v686 = vsel %vm676, %v685, %v684
  %vm687 = vcmp.lt.s32.totalorder %v187, 0
  %v688 = vsub.s32 0, %v187
  %v689 = vsel %vm687, %v688, %v187
  %v690 = vmul.u32.u64.compose %v689, 2748779070
  %v691 = vextract.low.u32 %v690
  %v692 = vextract.high.u32 %v690
  %v693 = vshrl.u32 %v692, 7
  %v694 = vmul.u32 %v693, 200
  %v695 = vsub.s32 %v689, %v694
  %v696 = vsub.s32 0, %v695
  %v697 = vsel %vm687, %v696, %v695
  %vm698 = vcmp.lt.s32.totalorder %v188, 0
  %v699 = vsub.s32 0, %v188
  %v700 = vsel %vm698, %v699, %v188
  %v701 = vmul.u32.u64.compose %v700, 2748779070
  %v702 = vextract.low.u32 %v701
  %v703 = vextract.high.u32 %v701
  %v704 = vshrl.u32 %v703, 7
  %v705 = vmul.u32 %v704, 200
  %v706 = vsub.s32 %v700, %v705
  %v707 = vsub.s32 0, %v706
  %v708 = vsel %vm698, %v707, %v706
  %vm709 = vcmp.lt.s32.totalorder %v189, 0
  %v710 = vsub.s32 0, %v189
  %v711 = vsel %vm709, %v710, %v189
  %v712 = vmul.u32.u64.compose %v711, 2748779070
  %v713 = vextract.low.u32 %v712
  %v714 = vextract.high.u32 %v712
  %v715 = vshrl.u32 %v714, 7
  %v716 = vmul.u32 %v715, 200
  %v717 = vsub.s32 %v711, %v716
  %v718 = vsub.s32 0, %v717
  %v719 = vsel %vm709, %v718, %v717
  %vm720 = vcmp.lt.s32.totalorder %v190, 0
  %v721 = vsub.s32 0, %v190
  %v722 = vsel %vm720, %v721, %v190
  %v723 = vmul.u32.u64.compose %v722, 2748779070
  %v724 = vextract.low.u32 %v723
  %v725 = vextract.high.u32 %v723
  %v726 = vshrl.u32 %v725, 7
  %v727 = vmul.u32 %v726, 200
  %v728 = vsub.s32 %v722, %v727
  %v729 = vsub.s32 0, %v728
  %v730 = vsel %vm720, %v729, %v728
  %vm731 = vcmp.lt.s32.totalorder %v191, 0
  %v732 = vsub.s32 0, %v191
  %v733 = vsel %vm731, %v732, %v191
  %v734 = vmul.u32.u64.compose %v733, 2748779070
  %v735 = vextract.low.u32 %v734
  %v736 = vextract.high.u32 %v734
  %v737 = vshrl.u32 %v736, 7
  %v738 = vmul.u32 %v737, 200
  %v739 = vsub.s32 %v733, %v738
  %v740 = vsub.s32 0, %v739
  %v741 = vsel %vm731, %v740, %v739
  %vm742 = vcmp.ne.s32.totalorder %v202, 0
  %vm743 = vcmp.ne.s32.totalorder %v213, 0
  %vm744 = vcmp.ne.s32.totalorder %v224, 0
  %vm745 = vcmp.ne.s32.totalorder %v235, 0
  %vm746 = vcmp.ne.s32.totalorder %v246, 0
  %vm747 = vcmp.ne.s32.totalorder %v257, 0
  %vm748 = vcmp.ne.s32.totalorder %v268, 0
  %vm749 = vcmp.ne.s32.totalorder %v279, 0
  %vm750 = vcmp.ne.s32.totalorder %v290, 0
  %vm751 = vcmp.ne.s32.totalorder %v301, 0
  %vm752 = vcmp.ne.s32.totalorder %v312, 0
  %vm753 = vcmp.ne.s32.totalorder %v323, 0
  %vm754 = vcmp.ne.s32.totalorder %v334, 0
  %vm755 = vcmp.ne.s32.totalorder %v345, 0
  %vm756 = vcmp.ne.s32.totalorder %v356, 0
  %vm757 = vcmp.ne.s32.totalorder %v367, 0
  %vm758 = vcmp.ne.s32.totalorder %v378, 0
  %vm759 = vcmp.ne.s32.totalorder %v389, 0
  %vm760 = vcmp.ne.s32.totalorder %v400, 0
  %vm761 = vcmp.ne.s32.totalorder %v411, 0
  %vm762 = vcmp.ne.s32.totalorder %v422, 0
  %vm763 = vcmp.ne.s32.totalorder %v433, 0
  %vm764 = vcmp.ne.s32.totalorder %v444, 0
  %vm765 = vcmp.ne.s32.totalorder %v455, 0
  %vm766 = vcmp.ne.s32.totalorder %v466, 0
  %vm767 = vcmp.ne.s32.totalorder %v477, 0
  %vm768 = vcmp.ne.s32.totalorder %v488, 0
  %vm769 = vcmp.ne.s32.totalorder %v499, 0
  %vm770 = vcmp.ne.s32.totalorder %v510, 0
  %vm771 = vcmp.ne.s32.totalorder %v521, 0
  %vm772 = vcmp.ne.s32.totalorder %v532, 0
  %vm773 = vcmp.ne.s32.totalorder %v543, 0
  %vm774 = vcmp.ne.s32.totalorder %v554, 0
  %vm775 = vcmp.ne.s32.totalorder %v565, 0
  %vm776 = vcmp.ne.s32.totalorder %v576, 0
  %vm777 = vcmp.ne.s32.totalorder %v587, 0
  %vm778 = vcmp.ne.s32.totalorder %v598, 0
  %vm779 = vcmp.ne.s32.totalorder %v609, 0
  %vm780 = vcmp.ne.s32.totalorder %v620, 0
  %vm781 = vcmp.ne.s32.totalorder %v631, 0
  %vm782 = vcmp.ne.s32.totalorder %v642, 0
  %vm783 = vcmp.ne.s32.totalorder %v653, 0
  %vm784 = vcmp.ne.s32.totalorder %v664, 0
  %vm785 = vcmp.ne.s32.totalorder %v675, 0
  %vm786 = vcmp.ne.s32.totalorder %v686, 0
  %vm787 = vcmp.ne.s32.totalorder %v697, 0
  %vm788 = vcmp.ne.s32.totalorder %v708, 0
  %vm789 = vcmp.ne.s32.totalorder %v719, 0
  %vm790 = vcmp.ne.s32.totalorder %v730, 0
  %vm791 = vcmp.ne.s32.totalorder %v741, 0
  %vm792 = vcmp.lt.s32.totalorder %v202, 0
  %vm793 = vcmp.lt.s32.totalorder %v213, 0
  %vm794 = vcmp.lt.s32.totalorder %v224, 0
  %vm795 = vcmp.lt.s32.totalorder %v235, 0
  %vm796 = vcmp.lt.s32.totalorder %v246, 0
  %vm797 = vcmp.lt.s32.totalorder %v257, 0
  %vm798 = vcmp.lt.s32.totalorder %v268, 0
  %vm799 = vcmp.lt.s32.totalorder %v279, 0
  %vm800 = vcmp.lt.s32.totalorder %v290, 0
  %vm801 = vcmp.lt.s32.totalorder %v301, 0
  %vm802 = vcmp.lt.s32.totalorder %v312, 0
  %vm803 = vcmp.lt.s32.totalorder %v323, 0
  %vm804 = vcmp.lt.s32.totalorder %v334, 0
  %vm805 = vcmp.lt.s32.totalorder %v345, 0
  %vm806 = vcmp.lt.s32.totalorder %v356, 0
  %vm807 = vcmp.lt.s32.totalorder %v367, 0
  %vm808 = vcmp.lt.s32.totalorder %v378, 0
  %vm809 = vcmp.lt.s32.totalorder %v389, 0
  %vm810 = vcmp.lt.s32.totalorder %v400, 0
  %vm811 = vcmp.lt.s32.totalorder %v411, 0
  %vm812 = vcmp.lt.s32.totalorder %v422, 0
  %vm813 = vcmp.lt.s32.totalorder %v433, 0
  %vm814 = vcmp.lt.s32.totalorder %v444, 0
  %vm815 = vcmp.lt.s32.totalorder %v455, 0
  %vm816 = vcmp.lt.s32.totalorder %v466, 0
  %vm817 = vcmp.lt.s32.totalorder %v477, 0
  %vm818 = vcmp.lt.s32.totalorder %v488, 0
  %vm819 = vcmp.lt.s32.totalorder %v499, 0
  %vm820 = vcmp.lt.s32.totalorder %v510, 0
  %vm821 = vcmp.lt.s32.totalorder %v521, 0
  %vm822 = vcmp.lt.s32.totalorder %v532, 0
  %vm823 = vcmp.lt.s32.totalorder %v543, 0
  %vm824 = vcmp.lt.s32.totalorder %v554, 0
  %vm825 = vcmp.lt.s32.totalorder %v565, 0
  %vm826 = vcmp.lt.s32.totalorder %v576, 0
  %vm827 = vcmp.lt.s32.totalorder %v587, 0
  %vm828 = vcmp.lt.s32.totalorder %v598, 0
  %vm829 = vcmp.lt.s32.totalorder %v609, 0
  %vm830 = vcmp.lt.s32.totalorder %v620, 0
  %vm831 = vcmp.lt.s32.totalorder %v631, 0
  %vm832 = vcmp.lt.s32.totalorder %v642, 0
  %vm833 = vcmp.lt.s32.totalorder %v653, 0
  %vm834 = vcmp.lt.s32.totalorder %v664, 0
  %vm835 = vcmp.lt.s32.totalorder %v675, 0
  %vm836 = vcmp.lt.s32.totalorder %v686, 0
  %vm837 = vcmp.lt.s32.totalorder %v697, 0
  %vm838 = vcmp.lt.s32.totalorder %v708, 0
  %vm839 = vcmp.lt.s32.totalorder %v719, 0
  %vm840 = vcmp.lt.s32.totalorder %v730, 0
  %vm841 = vcmp.lt.s32.totalorder %v741, 0
  %vm842 = vmand %vm792, %vm742
  %vm843 = vmand %vm793, %vm743
  %vm844 = vmand %vm794, %vm744
  %vm845 = vmand %vm795, %vm745
  %vm846 = vmand %vm796, %vm746
  %vm847 = vmand %vm797, %vm747
  %vm848 = vmand %vm798, %vm748
  %vm849 = vmand %vm799, %vm749
  %vm850 = vmand %vm800, %vm750
  %vm851 = vmand %vm801, %vm751
  %vm852 = vmand %vm802, %vm752
  %vm853 = vmand %vm803, %vm753
  %vm854 = vmand %vm804, %vm754
  %vm855 = vmand %vm805, %vm755
  %vm856 = vmand %vm806, %vm756
  %vm857 = vmand %vm807, %vm757
  %vm858 = vmand %vm808, %vm758
  %vm859 = vmand %vm809, %vm759
  %vm860 = vmand %vm810, %vm760
  %vm861 = vmand %vm811, %vm761
  %vm862 = vmand %vm812, %vm762
  %vm863 = vmand %vm813, %vm763
  %vm864 = vmand %vm814, %vm764
  %vm865 = vmand %vm815, %vm765
  %vm866 = vmand %vm816, %vm766
  %vm867 = vmand %vm817, %vm767
  %vm868 = vmand %vm818, %vm768
  %vm869 = vmand %vm819, %vm769
  %vm870 = vmand %vm820, %vm770
  %vm871 = vmand %vm821, %vm771
  %vm872 = vmand %vm822, %vm772
  %vm873 = vmand %vm823, %vm773
  %vm874 = vmand %vm824, %vm774
  %vm875 = vmand %vm825, %vm775
  %vm876 = vmand %vm826, %vm776
  %vm877 = vmand %vm827, %vm777
  %vm878 = vmand %vm828, %vm778
  %vm879 = vmand %vm829, %vm779
  %vm880 = vmand %vm830, %vm780
  %vm881 = vmand %vm831, %vm781
  %vm882 = vmand %vm832, %vm782
  %vm883 = vmand %vm833, %vm783
  %vm884 = vmand %vm834, %vm784
  %vm885 = vmand %vm835, %vm785
  %vm886 = vmand %vm836, %vm786
  %vm887 = vmand %vm837, %vm787
  %vm888 = vmand %vm838, %vm788
  %vm889 = vmand %vm839, %vm789
  %vm890 = vmand %vm840, %vm790
  %vm891 = vmand %vm841, %vm791
  %v892 = vadd.s32 %v202, 200
  %v893 = vadd.s32 %v213, 200
  %v894 = vadd.s32 %v224, 200
  %v895 = vadd.s32 %v235, 200
  %v896 = vadd.s32 %v246, 200
  %v897 = vadd.s32 %v257, 200
  %v898 = vadd.s32 %v268, 200
  %v899 = vadd.s32 %v279, 200
  %v900 = vadd.s32 %v290, 200
  %v901 = vadd.s32 %v301, 200
  %v902 = vadd.s32 %v312, 200
  %v903 = vadd.s32 %v323, 200
  %v904 = vadd.s32 %v334, 200
  %v905 = vadd.s32 %v345, 200
  %v906 = vadd.s32 %v356, 200
  %v907 = vadd.s32 %v367, 200
  %v908 = vadd.s32 %v378, 200
  %v909 = vadd.s32 %v389, 200
  %v910 = vadd.s32 %v400, 200
  %v911 = vadd.s32 %v411, 200
  %v912 = vadd.s32 %v422, 200
  %v913 = vadd.s32 %v433, 200
  %v914 = vadd.s32 %v444, 200
  %v915 = vadd.s32 %v455, 200
  %v916 = vadd.s32 %v466, 200
  %v917 = vadd.s32 %v477, 200
  %v918 = vadd.s32 %v488, 200
  %v919 = vadd.s32 %v499, 200
  %v920 = vadd.s32 %v510, 200
  %v921 = vadd.s32 %v521, 200
  %v922 = vadd.s32 %v532, 200
  %v923 = vadd.s32 %v543, 200
  %v924 = vadd.s32 %v554, 200
  %v925 = vadd.s32 %v565, 200
  %v926 = vadd.s32 %v576, 200
  %v927 = vadd.s32 %v587, 200
  %v928 = vadd.s32 %v598, 200
  %v929 = vadd.s32 %v609, 200
  %v930 = vadd.s32 %v620, 200
  %v931 = vadd.s32 %v631, 200
  %v932 = vadd.s32 %v642, 200
  %v933 = vadd.s32 %v653, 200
  %v934 = vadd.s32 %v664, 200
  %v935 = vadd.s32 %v675, 200
  %v936 = vadd.s32 %v686, 200
  %v937 = vadd.s32 %v697, 200
  %v938 = vadd.s32 %v708, 200
  %v939 = vadd.s32 %v719, 200
  %v940 = vadd.s32 %v730, 200
  %v941 = vadd.s32 %v741, 200
  %v942 = vsel %vm842, %v892, %v202
  %v943 = vsel %vm843, %v893, %v213
  %v944 = vsel %vm844, %v894, %v224
  %v945 = vsel %vm845, %v895, %v235
  %v946 = vsel %vm846, %v896, %v246
  %v947 = vsel %vm847, %v897, %v257
  %v948 = vsel %vm848, %v898, %v268
  %v949 = vsel %vm849, %v899, %v279
  %v950 = vsel %vm850, %v900, %v290
  %v951 = vsel %vm851, %v901, %v301
  %v952 = vsel %vm852, %v902, %v312
  %v953 = vsel %vm853, %v903, %v323
  %v954 = vsel %vm854, %v904, %v334
  %v955 = vsel %vm855, %v905, %v345
  %v956 = vsel %vm856, %v906, %v356
  %v957 = vsel %vm857, %v907, %v367
  %v958 = vsel %vm858, %v908, %v378
  %v959 = vsel %vm859, %v909, %v389
  %v960 = vsel %vm860, %v910, %v400
  %v961 = vsel %vm861, %v911, %v411
  %v962 = vsel %vm862, %v912, %v422
  %v963 = vsel %vm863, %v913, %v433
  %v964 = vsel %vm864, %v914, %v444
  %v965 = vsel %vm865, %v915, %v455
  %v966 = vsel %vm866, %v916, %v466
  %v967 = vsel %vm867, %v917, %v477
  %v968 = vsel %vm868, %v918, %v488
  %v969 = vsel %vm869, %v919, %v499
  %v970 = vsel %vm870, %v920, %v510
  %v971 = vsel %vm871, %v921, %v521
  %v972 = vsel %vm872, %v922, %v532
  %v973 = vsel %vm873, %v923, %v543
  %v974 = vsel %vm874, %v924, %v554
  %v975 = vsel %vm875, %v925, %v565
  %v976 = vsel %vm876, %v926, %v576
  %v977 = vsel %vm877, %v927, %v587
  %v978 = vsel %vm878, %v928, %v598
  %v979 = vsel %vm879, %v929, %v609
  %v980 = vsel %vm880, %v930, %v620
  %v981 = vsel %vm881, %v931, %v631
  %v982 = vsel %vm882, %v932, %v642
  %v983 = vsel %vm883, %v933, %v653
  %v984 = vsel %vm884, %v934, %v664
  %v985 = vsel %vm885, %v935, %v675
  %v986 = vsel %vm886, %v936, %v686
  %v987 = vsel %vm887, %v937, %v697
  %v988 = vsel %vm888, %v938, %v708
  %v989 = vsel %vm889, %v939, %v719
  %v990 = vsel %vm890, %v940, %v730
  %v991 = vsel %vm891, %v941, %v741
  %vm992 = vcmp.eq.s32.totalorder %v942, 0
  %vm993 = vcmp.eq.s32.totalorder %v943, 0
  %vm994 = vcmp.eq.s32.totalorder %v944, 0
  %vm995 = vcmp.eq.s32.totalorder %v945, 0
  %vm996 = vcmp.eq.s32.totalorder %v946, 0
  %vm997 = vcmp.eq.s32.totalorder %v947, 0
  %vm998 = vcmp.eq.s32.totalorder %v948, 0
  %vm999 = vcmp.eq.s32.totalorder %v949, 0
  %vm1000 = vcmp.eq.s32.totalorder %v950, 0
  %vm1001 = vcmp.eq.s32.totalorder %v951, 0
  %vm1002 = vcmp.eq.s32.totalorder %v952, 0
  %vm1003 = vcmp.eq.s32.totalorder %v953, 0
  %vm1004 = vcmp.eq.s32.totalorder %v954, 0
  %vm1005 = vcmp.eq.s32.totalorder %v955, 0
  %vm1006 = vcmp.eq.s32.totalorder %v956, 0
  %vm1007 = vcmp.eq.s32.totalorder %v957, 0
  %vm1008 = vcmp.eq.s32.totalorder %v958, 0
  %vm1009 = vcmp.eq.s32.totalorder %v959, 0
  %vm1010 = vcmp.eq.s32.totalorder %v960, 0
  %vm1011 = vcmp.eq.s32.totalorder %v961, 0
  %vm1012 = vcmp.eq.s32.totalorder %v962, 0
  %vm1013 = vcmp.eq.s32.totalorder %v963, 0
  %vm1014 = vcmp.eq.s32.totalorder %v964, 0
  %vm1015 = vcmp.eq.s32.totalorder %v965, 0
  %vm1016 = vcmp.eq.s32.totalorder %v966, 0
  %vm1017 = vcmp.eq.s32.totalorder %v967, 0
  %vm1018 = vcmp.eq.s32.totalorder %v968, 0
  %vm1019 = vcmp.eq.s32.totalorder %v969, 0
  %vm1020 = vcmp.eq.s32.totalorder %v970, 0
  %vm1021 = vcmp.eq.s32.totalorder %v971, 0
  %vm1022 = vcmp.eq.s32.totalorder %v972, 0
  %vm1023 = vcmp.eq.s32.totalorder %v973, 0
  %vm1024 = vcmp.eq.s32.totalorder %v974, 0
  %vm1025 = vcmp.eq.s32.totalorder %v975, 0
  %vm1026 = vcmp.eq.s32.totalorder %v976, 0
  %vm1027 = vcmp.eq.s32.totalorder %v977, 0
  %vm1028 = vcmp.eq.s32.totalorder %v978, 0
  %vm1029 = vcmp.eq.s32.totalorder %v979, 0
  %vm1030 = vcmp.eq.s32.totalorder %v980, 0
  %vm1031 = vcmp.eq.s32.totalorder %v981, 0
  %vm1032 = vcmp.eq.s32.totalorder %v982, 0
  %vm1033 = vcmp.eq.s32.totalorder %v983, 0
  %vm1034 = vcmp.eq.s32.totalorder %v984, 0
  %vm1035 = vcmp.eq.s32.totalorder %v985, 0
  %vm1036 = vcmp.eq.s32.totalorder %v986, 0
  %vm1037 = vcmp.eq.s32.totalorder %v987, 0
  %vm1038 = vcmp.eq.s32.totalorder %v988, 0
  %vm1039 = vcmp.eq.s32.totalorder %v989, 0
  %vm1040 = vcmp.eq.s32.totalorder %v990, 0
  %vm1041 = vcmp.eq.s32.totalorder %v991, 0
  %v1042 = vld [vmem:[#allocation2 + $0x7] sm:$0xff]
  %v1043 = vld [vmem:[#allocation2 + $0xf] sm:$0xff]
  %v1044 = vld [vmem:[#allocation2 + $0x17] sm:$0xff]
  %v1045 = vld [vmem:[#allocation2 + $0x1f] sm:$0xff]
  %v1046 = vld [vmem:[#allocation2 + $0x27] sm:$0xff]
  %v1047 = vld [vmem:[#allocation2 + $0x2f] sm:$0xff]
  %v1048 = vld [vmem:[#allocation2 + $0x37] sm:$0xff]
  %v1049 = vld [vmem:[#allocation2 + $0x3f] sm:$0xff]
  %v1050 = vld [vmem:[#allocation2 + $0x47] sm:$0xff]
  %v1051 = vld [vmem:[#allocation2 + $0x4f] sm:$0xff]
  %v1052 = vld [vmem:[#allocation2 + $0x57] sm:$0xff]
  %v1053 = vld [vmem:[#allocation2 + $0x5f] sm:$0xff]
  %v1054 = vld [vmem:[#allocation2 + $0x67] sm:$0xff]
  %v1055 = vld [vmem:[#allocation2 + $0x6f] sm:$0xff]
  %v1056 = vld [vmem:[#allocation2 + $0x77] sm:$0xff]
  %v1057 = vld [vmem:[#allocation2 + $0x7f] sm:$0xff]
  %v1058 = vld [vmem:[#allocation2 + $0x87] sm:$0xff]
  %v1059 = vld [vmem:[#allocation2 + $0x8f] sm:$0xff]
  %v1060 = vld [vmem:[#allocation2 + $0x97] sm:$0xff]
  %v1061 = vld [vmem:[#allocation2 + $0x9f] sm:$0xff]
  %v1062 = vld [vmem:[#allocation2 + $0xa7] sm:$0xff]
  %v1063 = vld [vmem:[#allocation2 + $0xaf] sm:$0xff]
  %v1064 = vld [vmem:[#allocation2 + $0xb7] sm:$0xff]
  %v1065 = vld [vmem:[#allocation2 + $0xbf] sm:$0xff]
  %v1066 = vld [vmem:[#allocation2 + $0xc7] sm:$0xff]
  %v1067 = vld [vmem:[#allocation2 + $0xcf] sm:$0xff]
  %v1068 = vld [vmem:[#allocation2 + $0xd7] sm:$0xff]
  %v1069 = vld [vmem:[#allocation2 + $0xdf] sm:$0xff]
  %v1070 = vld [vmem:[#allocation2 + $0xe7] sm:$0xff]
  %v1071 = vld [vmem:[#allocation2 + $0xef] sm:$0xff]
  %v1072 = vld [vmem:[#allocation2 + $0xf7] sm:$0xff]
  %v1073 = vld [vmem:[#allocation2 + $0xff] sm:$0xff]
  %v1074 = vld [vmem:[#allocation2 + $0x107] sm:$0xff]
  %v1075 = vld [vmem:[#allocation2 + $0x10f] sm:$0xff]
  %v1076 = vld [vmem:[#allocation2 + $0x117] sm:$0xff]
  %v1077 = vld [vmem:[#allocation2 + $0x11f] sm:$0xff]
  %v1078 = vld [vmem:[#allocation2 + $0x127] sm:$0xff]
  %v1079 = vld [vmem:[#allocation2 + $0x12f] sm:$0xff]
  %v1080 = vld [vmem:[#allocation2 + $0x137] sm:$0xff]
  %v1081 = vld [vmem:[#allocation2 + $0x13f] sm:$0xff]
  %v1082 = vld [vmem:[#allocation2 + $0x147] sm:$0xff]
  %v1083 = vld [vmem:[#allocation2 + $0x14f] sm:$0xff]
  %v1084 = vld [vmem:[#allocation2 + $0x157] sm:$0xff]
  %v1085 = vld [vmem:[#allocation2 + $0x15f] sm:$0xff]
  %v1086 = vld [vmem:[#allocation2 + $0x167] sm:$0xff]
  %v1087 = vld [vmem:[#allocation2 + $0x16f] sm:$0xff]
  %v1088 = vld [vmem:[#allocation2 + $0x177] sm:$0xff]
  %v1089 = vld [vmem:[#allocation2 + $0x17f] sm:$0xff]
  %v1090 = vld [vmem:[#allocation2 + $0x187] sm:$0xff]
  %v1091 = vld [vmem:[#allocation2 + $0x18f] sm:$0xff]
  %v1092 = vsel %vm992, 0.0, %v1042
  %v1093 = vsel %vm993, 0.0, %v1043
  %v1094 = vsel %vm994, 0.0, %v1044
  %v1095 = vsel %vm995, 0.0, %v1045
  %v1096 = vsel %vm996, 0.0, %v1046
  %v1097 = vsel %vm997, 0.0, %v1047
  %v1098 = vsel %vm998, 0.0, %v1048
  %v1099 = vsel %vm999, 0.0, %v1049
  %v1100 = vsel %vm1000, 0.0, %v1050
  %v1101 = vsel %vm1001, 0.0, %v1051
  %v1102 = vsel %vm1002, 0.0, %v1052
  %v1103 = vsel %vm1003, 0.0, %v1053
  %v1104 = vsel %vm1004, 0.0, %v1054
  %v1105 = vsel %vm1005, 0.0, %v1055
  %v1106 = vsel %vm1006, 0.0, %v1056
  %v1107 = vsel %vm1007, 0.0, %v1057
  %v1108 = vsel %vm1008, 0.0, %v1058
  %v1109 = vsel %vm1009, 0.0, %v1059
  %v1110 = vsel %vm1010, 0.0, %v1060
  %v1111 = vsel %vm1011, 0.0, %v1061
  %v1112 = vsel %vm1012, 0.0, %v1062
  %v1113 = vsel %vm1013, 0.0, %v1063
  %v1114 = vsel %vm1014, 0.0, %v1064
  %v1115 = vsel %vm1015, 0.0, %v1065
  %v1116 = vsel %vm1016, 0.0, %v1066
  %v1117 = vsel %vm1017, 0.0, %v1067
  %v1118 = vsel %vm1018, 0.0, %v1068
  %v1119 = vsel %vm1019, 0.0, %v1069
  %v1120 = vsel %vm1020, 0.0, %v1070
  %v1121 = vsel %vm1021, 0.0, %v1071
  %v1122 = vsel %vm1022, 0.0, %v1072
  %v1123 = vsel %vm1023, 0.0, %v1073
  %v1124 = vsel %vm1024, 0.0, %v1074
  %v1125 = vsel %vm1025, 0.0, %v1075
  %v1126 = vsel %vm1026, 0.0, %v1076
  %v1127 = vsel %vm1027, 0.0, %v1077
  %v1128 = vsel %vm1028, 0.0, %v1078
  %v1129 = vsel %vm1029, 0.0, %v1079
  %v1130 = vsel %vm1030, 0.0, %v1080
  %v1131 = vsel %vm1031, 0.0, %v1081
  %v1132 = vsel %vm1032, 0.0, %v1082
  %v1133 = vsel %vm1033, 0.0, %v1083
  %v1134 = vsel %vm1034, 0.0, %v1084
  %v1135 = vsel %vm1035, 0.0, %v1085
  %v1136 = vsel %vm1036, 0.0, %v1086
  %v1137 = vsel %vm1037, 0.0, %v1087
  %v1138 = vsel %vm1038, 0.0, %v1088
  %v1139 = vsel %vm1039, 0.0, %v1089
  %v1140 = vsel %vm1040, 0.0, %v1090
  %v1141 = vsel %vm1041, 0.0, %v1091
  %v1142 = vld [vmem:[#allocation2 + $0x8] sm:$0xff]
  %v1143 = vld [vmem:[#allocation2 + $0x10] sm:$0xff]
  %v1144 = vld [vmem:[#allocation2 + $0x18] sm:$0xff]
  %v1145 = vld [vmem:[#allocation2 + $0x20] sm:$0xff]
  %v1146 = vld [vmem:[#allocation2 + $0x28] sm:$0xff]
  %v1147 = vld [vmem:[#allocation2 + $0x30] sm:$0xff]
  %v1148 = vld [vmem:[#allocation2 + $0x38] sm:$0xff]
  %v1149 = vld [vmem:[#allocation2 + $0x40] sm:$0xff]
  %v1150 = vld [vmem:[#allocation2 + $0x48] sm:$0xff]
  %v1151 = vld [vmem:[#allocation2 + $0x50] sm:$0xff]
  %v1152 = vld [vmem:[#allocation2 + $0x58] sm:$0xff]
  %v1153 = vld [vmem:[#allocation2 + $0x60] sm:$0xff]
  %v1154 = vld [vmem:[#allocation2 + $0x68] sm:$0xff]
  %v1155 = vld [vmem:[#allocation2 + $0x70] sm:$0xff]
  %v1156 = vld [vmem:[#allocation2 + $0x78] sm:$0xff]
  %v1157 = vld [vmem:[#allocation2 + $0x80] sm:$0xff]
  %v1158 = vld [vmem:[#allocation2 + $0x88] sm:$0xff]
  %v1159 = vld [vmem:[#allocation2 + $0x90] sm:$0xff]
  %v1160 = vld [vmem:[#allocation2 + $0x98] sm:$0xff]
  %v1161 = vld [vmem:[#allocation2 + $0xa0] sm:$0xff]
  %v1162 = vld [vmem:[#allocation2 + $0xa8] sm:$0xff]
  %v1163 = vld [vmem:[#allocation2 + $0xb0] sm:$0xff]
  %v1164 = vld [vmem:[#allocation2 + $0xb8] sm:$0xff]
  %v1165 = vld [vmem:[#allocation2 + $0xc0] sm:$0xff]
  %v1166 = vld [vmem:[#allocation2 + $0xc8] sm:$0xff]
  %v1167 = vld [vmem:[#allocation2 + $0xd0] sm:$0xff]
  %v1168 = vld [vmem:[#allocation2 + $0xd8] sm:$0xff]
  %v1169 = vld [vmem:[#allocation2 + $0xe0] sm:$0xff]
  %v1170 = vld [vmem:[#allocation2 + $0xe8] sm:$0xff]
  %v1171 = vld [vmem:[#allocation2 + $0xf0] sm:$0xff]
  %v1172 = vld [vmem:[#allocation2 + $0xf8] sm:$0xff]
  %v1173 = vld [vmem:[#allocation2 + $0x100] sm:$0xff]
  %v1174 = vld [vmem:[#allocation2 + $0x108] sm:$0xff]
  %v1175 = vld [vmem:[#allocation2 + $0x110] sm:$0xff]
  %v1176 = vld [vmem:[#allocation2 + $0x118] sm:$0xff]
  %v1177 = vld [vmem:[#allocation2 + $0x120] sm:$0xff]
  %v1178 = vld [vmem:[#allocation2 + $0x128] sm:$0xff]
  %v1179 = vld [vmem:[#allocation2 + $0x130] sm:$0xff]
  %v1180 = vld [vmem:[#allocation2 + $0x138] sm:$0xff]
  %v1181 = vld [vmem:[#allocation2 + $0x140] sm:$0xff]
  %v1182 = vld [vmem:[#allocation2 + $0x148] sm:$0xff]
  %v1183 = vld [vmem:[#allocation2 + $0x150] sm:$0xff]
  %v1184 = vld [vmem:[#allocation2 + $0x158] sm:$0xff]
  %v1185 = vld [vmem:[#allocation2 + $0x160] sm:$0xff]
  %v1186 = vld [vmem:[#allocation2 + $0x168] sm:$0xff]
  %v1187 = vld [vmem:[#allocation2 + $0x170] sm:$0xff]
  %v1188 = vld [vmem:[#allocation2 + $0x178] sm:$0xff]
  %v1189 = vld [vmem:[#allocation2 + $0x180] sm:$0xff]
  %v1190 = vld [vmem:[#allocation2 + $0x188] sm:$0xff]
  %v1191 = vld [vmem:[#allocation2 + $0x190] sm:$0xff]
  %vm1192 = vcmp.eq.s32.totalorder %v942, 199
  %vm1193 = vcmp.eq.s32.totalorder %v943, 199
  %vm1194 = vcmp.eq.s32.totalorder %v944, 199
  %vm1195 = vcmp.eq.s32.totalorder %v945, 199
  %vm1196 = vcmp.eq.s32.totalorder %v946, 199
  %vm1197 = vcmp.eq.s32.totalorder %v947, 199
  %vm1198 = vcmp.eq.s32.totalorder %v948, 199
  %vm1199 = vcmp.eq.s32.totalorder %v949, 199
  %vm1200 = vcmp.eq.s32.totalorder %v950, 199
  %vm1201 = vcmp.eq.s32.totalorder %v951, 199
  %vm1202 = vcmp.eq.s32.totalorder %v952, 199
  %vm1203 = vcmp.eq.s32.totalorder %v953, 199
  %vm1204 = vcmp.eq.s32.totalorder %v954, 199
  %vm1205 = vcmp.eq.s32.totalorder %v955, 199
  %vm1206 = vcmp.eq.s32.totalorder %v956, 199
  %vm1207 = vcmp.eq.s32.totalorder %v957, 199
  %vm1208 = vcmp.eq.s32.totalorder %v958, 199
  %vm1209 = vcmp.eq.s32.totalorder %v959, 199
  %vm1210 = vcmp.eq.s32.totalorder %v960, 199
  %vm1211 = vcmp.eq.s32.totalorder %v961, 199
  %vm1212 = vcmp.eq.s32.totalorder %v962, 199
  %vm1213 = vcmp.eq.s32.totalorder %v963, 199
  %vm1214 = vcmp.eq.s32.totalorder %v964, 199
  %vm1215 = vcmp.eq.s32.totalorder %v965, 199
  %vm1216 = vcmp.eq.s32.totalorder %v966, 199
  %vm1217 = vcmp.eq.s32.totalorder %v967, 199
  %vm1218 = vcmp.eq.s32.totalorder %v968, 199
  %vm1219 = vcmp.eq.s32.totalorder %v969, 199
  %vm1220 = vcmp.eq.s32.totalorder %v970, 199
  %vm1221 = vcmp.eq.s32.totalorder %v971, 199
  %vm1222 = vcmp.eq.s32.totalorder %v972, 199
  %vm1223 = vcmp.eq.s32.totalorder %v973, 199
  %vm1224 = vcmp.eq.s32.totalorder %v974, 199
  %vm1225 = vcmp.eq.s32.totalorder %v975, 199
  %vm1226 = vcmp.eq.s32.totalorder %v976, 199
  %vm1227 = vcmp.eq.s32.totalorder %v977, 199
  %vm1228 = vcmp.eq.s32.totalorder %v978, 199
  %vm1229 = vcmp.eq.s32.totalorder %v979, 199
  %vm1230 = vcmp.eq.s32.totalorder %v980, 199
  %vm1231 = vcmp.eq.s32.totalorder %v981, 199
  %vm1232 = vcmp.eq.s32.totalorder %v982, 199
  %vm1233 = vcmp.eq.s32.totalorder %v983, 199
  %vm1234 = vcmp.eq.s32.totalorder %v984, 199
  %vm1235 = vcmp.eq.s32.totalorder %v985, 199
  %vm1236 = vcmp.eq.s32.totalorder %v986, 199
  %vm1237 = vcmp.eq.s32.totalorder %v987, 199
  %vm1238 = vcmp.eq.s32.totalorder %v988, 199
  %vm1239 = vcmp.eq.s32.totalorder %v989, 199
  %vm1240 = vcmp.eq.s32.totalorder %v990, 199
  %vm1241 = vcmp.eq.s32.totalorder %v991, 199
  %v1242 = vld [vmem:[#allocation2 + $0x9] sm:$0xff]
  %v1243 = vld [vmem:[#allocation2 + $0x11] sm:$0xff]
  %v1244 = vld [vmem:[#allocation2 + $0x19] sm:$0xff]
  %v1245 = vld [vmem:[#allocation2 + $0x21] sm:$0xff]
  %v1246 = vld [vmem:[#allocation2 + $0x29] sm:$0xff]
  %v1247 = vld [vmem:[#allocation2 + $0x31] sm:$0xff]
  %v1248 = vld [vmem:[#allocation2 + $0x39] sm:$0xff]
  %v1249 = vld [vmem:[#allocation2 + $0x41] sm:$0xff]
  %v1250 = vld [vmem:[#allocation2 + $0x49] sm:$0xff]
  %v1251 = vld [vmem:[#allocation2 + $0x51] sm:$0xff]
  %v1252 = vld [vmem:[#allocation2 + $0x59] sm:$0xff]
  %v1253 = vld [vmem:[#allocation2 + $0x61] sm:$0xff]
  %v1254 = vld [vmem:[#allocation2 + $0x69] sm:$0xff]
  %v1255 = vld [vmem:[#allocation2 + $0x71] sm:$0xff]
  %v1256 = vld [vmem:[#allocation2 + $0x79] sm:$0xff]
  %v1257 = vld [vmem:[#allocation2 + $0x81] sm:$0xff]
  %v1258 = vld [vmem:[#allocation2 + $0x89] sm:$0xff]
  %v1259 = vld [vmem:[#allocation2 + $0x91] sm:$0xff]
  %v1260 = vld [vmem:[#allocation2 + $0x99] sm:$0xff]
  %v1261 = vld [vmem:[#allocation2 + $0xa1] sm:$0xff]
  %v1262 = vld [vmem:[#allocation2 + $0xa9] sm:$0xff]
  %v1263 = vld [vmem:[#allocation2 + $0xb1] sm:$0xff]
  %v1264 = vld [vmem:[#allocation2 + $0xb9] sm:$0xff]
  %v1265 = vld [vmem:[#allocation2 + $0xc1] sm:$0xff]
  %v1266 = vld [vmem:[#allocation2 + $0xc9] sm:$0xff]
  %v1267 = vld [vmem:[#allocation2 + $0xd1] sm:$0xff]
  %v1268 = vld [vmem:[#allocation2 + $0xd9] sm:$0xff]
  %v1269 = vld [vmem:[#allocation2 + $0xe1] sm:$0xff]
  %v1270 = vld [vmem:[#allocation2 + $0xe9] sm:$0xff]
  %v1271 = vld [vmem:[#allocation2 + $0xf1] sm:$0xff]
  %v1272 = vld [vmem:[#allocation2 + $0xf9] sm:$0xff]
  %v1273 = vld [vmem:[#allocation2 + $0x101] sm:$0xff]
  %v1274 = vld [vmem:[#allocation2 + $0x109] sm:$0xff]
  %v1275 = vld [vmem:[#allocation2 + $0x111] sm:$0xff]
  %v1276 = vld [vmem:[#allocation2 + $0x119] sm:$0xff]
  %v1277 = vld [vmem:[#allocation2 + $0x121] sm:$0xff]
  %v1278 = vld [vmem:[#allocation2 + $0x129] sm:$0xff]
  %v1279 = vld [vmem:[#allocation2 + $0x131] sm:$0xff]
  %v1280 = vld [vmem:[#allocation2 + $0x139] sm:$0xff]
  %v1281 = vld [vmem:[#allocation2 + $0x141] sm:$0xff]
  %v1282 = vld [vmem:[#allocation2 + $0x149] sm:$0xff]
  %v1283 = vld [vmem:[#allocation2 + $0x151] sm:$0xff]
  %v1284 = vld [vmem:[#allocation2 + $0x159] sm:$0xff]
  %v1285 = vld [vmem:[#allocation2 + $0x161] sm:$0xff]
  %v1286 = vld [vmem:[#allocation2 + $0x169] sm:$0xff]
  %v1287 = vld [vmem:[#allocation2 + $0x171] sm:$0xff]
  %v1288 = vld [vmem:[#allocation2 + $0x179] sm:$0xff]
  %v1289 = vld [vmem:[#allocation2 + $0x181] sm:$0xff]
  %v1290 = vld [vmem:[#allocation2 + $0x189] sm:$0xff]
  %v1291 = vld [vmem:[#allocation2 + $0x191] sm:$0xff]
  %v1292 = vsel %vm1192, 0.0, %v1242
  %v1293 = vsel %vm1193, 0.0, %v1243
  %v1294 = vsel %vm1194, 0.0, %v1244
  %v1295 = vsel %vm1195, 0.0, %v1245
  %v1296 = vsel %vm1196, 0.0, %v1246
  %v1297 = vsel %vm1197, 0.0, %v1247
  %v1298 = vsel %vm1198, 0.0, %v1248
  %v1299 = vsel %vm1199, 0.0, %v1249
  %v1300 = vsel %vm1200, 0.0, %v1250
  %v1301 = vsel %vm1201, 0.0, %v1251
  %v1302 = vsel %vm1202, 0.0, %v1252
  %v1303 = vsel %vm1203, 0.0, %v1253
  %v1304 = vsel %vm1204, 0.0, %v1254
  %v1305 = vsel %vm1205, 0.0, %v1255
  %v1306 = vsel %vm1206, 0.0, %v1256
  %v1307 = vsel %vm1207, 0.0, %v1257
  %v1308 = vsel %vm1208, 0.0, %v1258
  %v1309 = vsel %vm1209, 0.0, %v1259
  %v1310 = vsel %vm1210, 0.0, %v1260
  %v1311 = vsel %vm1211, 0.0, %v1261
  %v1312 = vsel %vm1212, 0.0, %v1262
  %v1313 = vsel %vm1213, 0.0, %v1263
  %v1314 = vsel %vm1214, 0.0, %v1264
  %v1315 = vsel %vm1215, 0.0, %v1265
  %v1316 = vsel %vm1216, 0.0, %v1266
  %v1317 = vsel %vm1217, 0.0, %v1267
  %v1318 = vsel %vm1218, 0.0, %v1268
  %v1319 = vsel %vm1219, 0.0, %v1269
  %v1320 = vsel %vm1220, 0.0, %v1270
  %v1321 = vsel %vm1221, 0.0, %v1271
  %v1322 = vsel %vm1222, 0.0, %v1272
  %v1323 = vsel %vm1223, 0.0, %v1273
  %v1324 = vsel %vm1224, 0.0, %v1274
  %v1325 = vsel %vm1225, 0.0, %v1275
  %v1326 = vsel %vm1226, 0.0, %v1276
  %v1327 = vsel %vm1227, 0.0, %v1277
  %v1328 = vsel %vm1228, 0.0, %v1278
  %v1329 = vsel %vm1229, 0.0, %v1279
  %v1330 = vsel %vm1230, 0.0, %v1280
  %v1331 = vsel %vm1231, 0.0, %v1281
  %v1332 = vsel %vm1232, 0.0, %v1282
  %v1333 = vsel %vm1233, 0.0, %v1283
  %v1334 = vsel %vm1234, 0.0, %v1284
  %v1335 = vsel %vm1235, 0.0, %v1285
  %v1336 = vsel %vm1236, 0.0, %v1286
  %v1337 = vsel %vm1237, 0.0, %v1287
  %v1338 = vsel %vm1238, 0.0, %v1288
  %v1339 = vsel %vm1239, 0.0, %v1289
  %v1340 = vsel %vm1240, 0.0, %v1290
  %v1341 = vsel %vm1241, 0.0, %v1291
  %v1342 = vld [vmem:[%s1] sm:$0x1]
  %1344 = vset.pattern.permute.xlu0 0
  %1345 = vperm.xlu0 %1344, %v1092
  %v1346 = vpop.permute.xlu0 %1345
  %1349 = vset.pattern.permute.xlu0 0
  %1350 = vperm.xlu0 %1349, %v1093
  %v1351 = vpop.permute.xlu0 %1350
  %1354 = vset.pattern.permute.xlu0 0
  %1355 = vperm.xlu0 %1354, %v1094
  %v1356 = vpop.permute.xlu0 %1355
  %1359 = vset.pattern.permute.xlu0 0
  %1360 = vperm.xlu0 %1359, %v1095
  %v1361 = vpop.permute.xlu0 %1360
  %1364 = vset.pattern.permute.xlu0 0
  %1365 = vperm.xlu0 %1364, %v1096
  %v1366 = vpop.permute.xlu0 %1365
  %1369 = vset.pattern.permute.xlu0 0
  %1370 = vperm.xlu0 %1369, %v1097
  %v1371 = vpop.permute.xlu0 %1370
  %1374 = vset.pattern.permute.xlu0 0
  %1375 = vperm.xlu0 %1374, %v1098
  %v1376 = vpop.permute.xlu0 %1375
  %1379 = vset.pattern.permute.xlu0 0
  %1380 = vperm.xlu0 %1379, %v1099
  %v1381 = vpop.permute.xlu0 %1380
  %1384 = vset.pattern.permute.xlu0 0
  %1385 = vperm.xlu0 %1384, %v1100
  %v1386 = vpop.permute.xlu0 %1385
  %1389 = vset.pattern.permute.xlu0 0
  %1390 = vperm.xlu0 %1389, %v1101
  %v1391 = vpop.permute.xlu0 %1390
  %1394 = vset.pattern.permute.xlu0 0
  %1395 = vperm.xlu0 %1394, %v1102
  %v1396 = vpop.permute.xlu0 %1395
  %1399 = vset.pattern.permute.xlu0 0
  %1400 = vperm.xlu0 %1399, %v1103
  %v1401 = vpop.permute.xlu0 %1400
  %1404 = vset.pattern.permute.xlu0 0
  %1405 = vperm.xlu0 %1404, %v1104
  %v1406 = vpop.permute.xlu0 %1405
  %1409 = vset.pattern.permute.xlu0 0
  %1410 = vperm.xlu0 %1409, %v1105
  %v1411 = vpop.permute.xlu0 %1410
  %1414 = vset.pattern.permute.xlu0 0
  %1415 = vperm.xlu0 %1414, %v1106
  %v1416 = vpop.permute.xlu0 %1415
  %1419 = vset.pattern.permute.xlu0 0
  %1420 = vperm.xlu0 %1419, %v1107
  %v1421 = vpop.permute.xlu0 %1420
  %1424 = vset.pattern.permute.xlu0 0
  %1425 = vperm.xlu0 %1424, %v1108
  %v1426 = vpop.permute.xlu0 %1425
  %1429 = vset.pattern.permute.xlu0 0
  %1430 = vperm.xlu0 %1429, %v1109
  %v1431 = vpop.permute.xlu0 %1430
  %1434 = vset.pattern.permute.xlu0 0
  %1435 = vperm.xlu0 %1434, %v1110
  %v1436 = vpop.permute.xlu0 %1435
  %1439 = vset.pattern.permute.xlu0 0
  %1440 = vperm.xlu0 %1439, %v1111
  %v1441 = vpop.permute.xlu0 %1440
  %1444 = vset.pattern.permute.xlu0 0
  %1445 = vperm.xlu0 %1444, %v1112
  %v1446 = vpop.permute.xlu0 %1445
  %1449 = vset.pattern.permute.xlu0 0
  %1450 = vperm.xlu0 %1449, %v1113
  %v1451 = vpop.permute.xlu0 %1450
  %1454 = vset.pattern.permute.xlu0 0
  %1455 = vperm.xlu0 %1454, %v1114
  %v1456 = vpop.permute.xlu0 %1455
  %1459 = vset.pattern.permute.xlu0 0
  %1460 = vperm.xlu0 %1459, %v1115
  %v1461 = vpop.permute.xlu0 %1460
  %1464 = vset.pattern.permute.xlu0 0
  %1465 = vperm.xlu0 %1464, %v1116
  %v1466 = vpop.permute.xlu0 %1465
  %1469 = vset.pattern.permute.xlu0 0
  %1470 = vperm.xlu0 %1469, %v1117
  %v1471 = vpop.permute.xlu0 %1470
  %1474 = vset.pattern.permute.xlu0 0
  %1475 = vperm.xlu0 %1474, %v1118
  %v1476 = vpop.permute.xlu0 %1475
  %1479 = vset.pattern.permute.xlu0 0
  %1480 = vperm.xlu0 %1479, %v1119
  %v1481 = vpop.permute.xlu0 %1480
  %1484 = vset.pattern.permute.xlu0 0
  %1485 = vperm.xlu0 %1484, %v1120
  %v1486 = vpop.permute.xlu0 %1485
  %1489 = vset.pattern.permute.xlu0 0
  %1490 = vperm.xlu0 %1489, %v1121
  %v1491 = vpop.permute.xlu0 %1490
  %1494 = vset.pattern.permute.xlu0 0
  %1495 = vperm.xlu0 %1494, %v1122
  %v1496 = vpop.permute.xlu0 %1495
  %1499 = vset.pattern.permute.xlu0 0
  %1500 = vperm.xlu0 %1499, %v1123
  %v1501 = vpop.permute.xlu0 %1500
  %1504 = vset.pattern.permute.xlu0 0
  %1505 = vperm.xlu0 %1504, %v1124
  %v1506 = vpop.permute.xlu0 %1505
  %1509 = vset.pattern.permute.xlu0 0
  %1510 = vperm.xlu0 %1509, %v1125
  %v1511 = vpop.permute.xlu0 %1510
  %1514 = vset.pattern.permute.xlu0 0
  %1515 = vperm.xlu0 %1514, %v1126
  %v1516 = vpop.permute.xlu0 %1515
  %1519 = vset.pattern.permute.xlu0 0
  %1520 = vperm.xlu0 %1519, %v1127
  %v1521 = vpop.permute.xlu0 %1520
  %1524 = vset.pattern.permute.xlu0 0
  %1525 = vperm.xlu0 %1524, %v1128
  %v1526 = vpop.permute.xlu0 %1525
  %1529 = vset.pattern.permute.xlu0 0
  %1530 = vperm.xlu0 %1529, %v1129
  %v1531 = vpop.permute.xlu0 %1530
  %1534 = vset.pattern.permute.xlu0 0
  %1535 = vperm.xlu0 %1534, %v1130
  %v1536 = vpop.permute.xlu0 %1535
  %1539 = vset.pattern.permute.xlu0 0
  %1540 = vperm.xlu0 %1539, %v1131
  %v1541 = vpop.permute.xlu0 %1540
  %1544 = vset.pattern.permute.xlu0 0
  %1545 = vperm.xlu0 %1544, %v1132
  %v1546 = vpop.permute.xlu0 %1545
  %1549 = vset.pattern.permute.xlu0 0
  %1550 = vperm.xlu0 %1549, %v1133
  %v1551 = vpop.permute.xlu0 %1550
  %1554 = vset.pattern.permute.xlu0 0
  %1555 = vperm.xlu0 %1554, %v1134
  %v1556 = vpop.permute.xlu0 %1555
  %1559 = vset.pattern.permute.xlu0 0
  %1560 = vperm.xlu0 %1559, %v1135
  %v1561 = vpop.permute.xlu0 %1560
  %1564 = vset.pattern.permute.xlu0 0
  %1565 = vperm.xlu0 %1564, %v1136
  %v1566 = vpop.permute.xlu0 %1565
  %1569 = vset.pattern.permute.xlu0 0
  %1570 = vperm.xlu0 %1569, %v1137
  %v1571 = vpop.permute.xlu0 %1570
  %1574 = vset.pattern.permute.xlu0 0
  %1575 = vperm.xlu0 %1574, %v1138
  %v1576 = vpop.permute.xlu0 %1575
  %1579 = vset.pattern.permute.xlu0 0
  %1580 = vperm.xlu0 %1579, %v1139
  %v1581 = vpop.permute.xlu0 %1580
  %1584 = vset.pattern.permute.xlu0 0
  %1585 = vperm.xlu0 %1584, %v1140
  %v1586 = vpop.permute.xlu0 %1585
  %1589 = vset.pattern.permute.xlu0 0
  %1590 = vperm.xlu0 %1589, %v1141
  %v1591 = vpop.permute.xlu0 %1590
  %v1593 = vlaneseq
  %v1594 = vshrl.u32 %v1593, 7
  %v1595 = vsub.s32 0, %v1594
  %v1596 = vrot.slane %v1342, %v1595
  %v1597 = vmul.f32 %v1346, %v1596
  %v1598 = vmul.f32 %v1351, %v1596
  %v1599 = vmul.f32 %v1356, %v1596
  %v1600 = vmul.f32 %v1361, %v1596
  %v1601 = vmul.f32 %v1366, %v1596
  %v1602 = vmul.f32 %v1371, %v1596
  %v1603 = vmul.f32 %v1376, %v1596
  %v1604 = vmul.f32 %v1381, %v1596
  %v1605 = vmul.f32 %v1386, %v1596
  %v1606 = vmul.f32 %v1391, %v1596
  %v1607 = vmul.f32 %v1396, %v1596
  %v1608 = vmul.f32 %v1401, %v1596
  %v1609 = vmul.f32 %v1406, %v1596
  %v1610 = vmul.f32 %v1411, %v1596
  %v1611 = vmul.f32 %v1416, %v1596
  %v1612 = vmul.f32 %v1421, %v1596
  %v1613 = vmul.f32 %v1426, %v1596
  %v1614 = vmul.f32 %v1431, %v1596
  %v1615 = vmul.f32 %v1436, %v1596
  %v1616 = vmul.f32 %v1441, %v1596
  %v1617 = vmul.f32 %v1446, %v1596
  %v1618 = vmul.f32 %v1451, %v1596
  %v1619 = vmul.f32 %v1456, %v1596
  %v1620 = vmul.f32 %v1461, %v1596
  %v1621 = vmul.f32 %v1466, %v1596
  %v1622 = vmul.f32 %v1471, %v1596
  %v1623 = vmul.f32 %v1476, %v1596
  %v1624 = vmul.f32 %v1481, %v1596
  %v1625 = vmul.f32 %v1486, %v1596
  %v1626 = vmul.f32 %v1491, %v1596
  %v1627 = vmul.f32 %v1496, %v1596
  %v1628 = vmul.f32 %v1501, %v1596
  %v1629 = vmul.f32 %v1506, %v1596
  %v1630 = vmul.f32 %v1511, %v1596
  %v1631 = vmul.f32 %v1516, %v1596
  %v1632 = vmul.f32 %v1521, %v1596
  %v1633 = vmul.f32 %v1526, %v1596
  %v1634 = vmul.f32 %v1531, %v1596
  %v1635 = vmul.f32 %v1536, %v1596
  %v1636 = vmul.f32 %v1541, %v1596
  %v1637 = vmul.f32 %v1546, %v1596
  %v1638 = vmul.f32 %v1551, %v1596
  %v1639 = vmul.f32 %v1556, %v1596
  %v1640 = vmul.f32 %v1561, %v1596
  %v1641 = vmul.f32 %v1566, %v1596
  %v1642 = vmul.f32 %v1571, %v1596
  %v1643 = vmul.f32 %v1576, %v1596
  %v1644 = vmul.f32 %v1581, %v1596
  %v1645 = vmul.f32 %v1586, %v1596
  %v1646 = vmul.f32 %v1591, %v1596
  %v1647 = vld [vmem:[%s1 + $0x1] sm:$0x1]
  %1649 = vset.pattern.permute.xlu0 0
  %1650 = vperm.xlu0 %1649, %v1142
  %v1651 = vpop.permute.xlu0 %1650
  %1654 = vset.pattern.permute.xlu0 0
  %1655 = vperm.xlu0 %1654, %v1143
  %v1656 = vpop.permute.xlu0 %1655
  %1659 = vset.pattern.permute.xlu0 0
  %1660 = vperm.xlu0 %1659, %v1144
  %v1661 = vpop.permute.xlu0 %1660
  %1664 = vset.pattern.permute.xlu0 0
  %1665 = vperm.xlu0 %1664, %v1145
  %v1666 = vpop.permute.xlu0 %1665
  %1669 = vset.pattern.permute.xlu0 0
  %1670 = vperm.xlu0 %1669, %v1146
  %v1671 = vpop.permute.xlu0 %1670
  %1674 = vset.pattern.permute.xlu0 0
  %1675 = vperm.xlu0 %1674, %v1147
  %v1676 = vpop.permute.xlu0 %1675
  %1679 = vset.pattern.permute.xlu0 0
  %1680 = vperm.xlu0 %1679, %v1148
  %v1681 = vpop.permute.xlu0 %1680
  %1684 = vset.pattern.permute.xlu0 0
  %1685 = vperm.xlu0 %1684, %v1149
  %v1686 = vpop.permute.xlu0 %1685
  %1689 = vset.pattern.permute.xlu0 0
  %1690 = vperm.xlu0 %1689, %v1150
  %v1691 = vpop.permute.xlu0 %1690
  %1694 = vset.pattern.permute.xlu0 0
  %1695 = vperm.xlu0 %1694, %v1151
  %v1696 = vpop.permute.xlu0 %1695
  %1699 = vset.pattern.permute.xlu0 0
  %1700 = vperm.xlu0 %1699, %v1152
  %v1701 = vpop.permute.xlu0 %1700
  %1704 = vset.pattern.permute.xlu0 0
  %1705 = vperm.xlu0 %1704, %v1153
  %v1706 = vpop.permute.xlu0 %1705
  %1709 = vset.pattern.permute.xlu0 0
  %1710 = vperm.xlu0 %1709, %v1154
  %v1711 = vpop.permute.xlu0 %1710
  %1714 = vset.pattern.permute.xlu0 0
  %1715 = vperm.xlu0 %1714, %v1155
  %v1716 = vpop.permute.xlu0 %1715
  %1719 = vset.pattern.permute.xlu0 0
  %1720 = vperm.xlu0 %1719, %v1156
  %v1721 = vpop.permute.xlu0 %1720
  %1724 = vset.pattern.permute.xlu0 0
  %1725 = vperm.xlu0 %1724, %v1157
  %v1726 = vpop.permute.xlu0 %1725
  %1729 = vset.pattern.permute.xlu0 0
  %1730 = vperm.xlu0 %1729, %v1158
  %v1731 = vpop.permute.xlu0 %1730
  %1734 = vset.pattern.permute.xlu0 0
  %1735 = vperm.xlu0 %1734, %v1159
  %v1736 = vpop.permute.xlu0 %1735
  %1739 = vset.pattern.permute.xlu0 0
  %1740 = vperm.xlu0 %1739, %v1160
  %v1741 = vpop.permute.xlu0 %1740
  %1744 = vset.pattern.permute.xlu0 0
  %1745 = vperm.xlu0 %1744, %v1161
  %v1746 = vpop.permute.xlu0 %1745
  %1749 = vset.pattern.permute.xlu0 0
  %1750 = vperm.xlu0 %1749, %v1162
  %v1751 = vpop.permute.xlu0 %1750
  %1754 = vset.pattern.permute.xlu0 0
  %1755 = vperm.xlu0 %1754, %v1163
  %v1756 = vpop.permute.xlu0 %1755
  %1759 = vset.pattern.permute.xlu0 0
  %1760 = vperm.xlu0 %1759, %v1164
  %v1761 = vpop.permute.xlu0 %1760
  %1764 = vset.pattern.permute.xlu0 0
  %1765 = vperm.xlu0 %1764, %v1165
  %v1766 = vpop.permute.xlu0 %1765
  %1769 = vset.pattern.permute.xlu0 0
  %1770 = vperm.xlu0 %1769, %v1166
  %v1771 = vpop.permute.xlu0 %1770
  %1774 = vset.pattern.permute.xlu0 0
  %1775 = vperm.xlu0 %1774, %v1167
  %v1776 = vpop.permute.xlu0 %1775
  %1779 = vset.pattern.permute.xlu0 0
  %1780 = vperm.xlu0 %1779, %v1168
  %v1781 = vpop.permute.xlu0 %1780
  %1784 = vset.pattern.permute.xlu0 0
  %1785 = vperm.xlu0 %1784, %v1169
  %v1786 = vpop.permute.xlu0 %1785
  %1789 = vset.pattern.permute.xlu0 0
  %1790 = vperm.xlu0 %1789, %v1170
  %v1791 = vpop.permute.xlu0 %1790
  %1794 = vset.pattern.permute.xlu0 0
  %1795 = vperm.xlu0 %1794, %v1171
  %v1796 = vpop.permute.xlu0 %1795
  %1799 = vset.pattern.permute.xlu0 0
  %1800 = vperm.xlu0 %1799, %v1172
  %v1801 = vpop.permute.xlu0 %1800
  %1804 = vset.pattern.permute.xlu0 0
  %1805 = vperm.xlu0 %1804, %v1173
  %v1806 = vpop.permute.xlu0 %1805
  %1809 = vset.pattern.permute.xlu0 0
  %1810 = vperm.xlu0 %1809, %v1174
  %v1811 = vpop.permute.xlu0 %1810
  %1814 = vset.pattern.permute.xlu0 0
  %1815 = vperm.xlu0 %1814, %v1175
  %v1816 = vpop.permute.xlu0 %1815
  %1819 = vset.pattern.permute.xlu0 0
  %1820 = vperm.xlu0 %1819, %v1176
  %v1821 = vpop.permute.xlu0 %1820
  %1824 = vset.pattern.permute.xlu0 0
  %1825 = vperm.xlu0 %1824, %v1177
  %v1826 = vpop.permute.xlu0 %1825
  %1829 = vset.pattern.permute.xlu0 0
  %1830 = vperm.xlu0 %1829, %v1178
  %v1831 = vpop.permute.xlu0 %1830
  %1834 = vset.pattern.permute.xlu0 0
  %1835 = vperm.xlu0 %1834, %v1179
  %v1836 = vpop.permute.xlu0 %1835
  %1839 = vset.pattern.permute.xlu0 0
  %1840 = vperm.xlu0 %1839, %v1180
  %v1841 = vpop.permute.xlu0 %1840
  %1844 = vset.pattern.permute.xlu0 0
  %1845 = vperm.xlu0 %1844, %v1181
  %v1846 = vpop.permute.xlu0 %1845
  %1849 = vset.pattern.permute.xlu0 0
  %1850 = vperm.xlu0 %1849, %v1182
  %v1851 = vpop.permute.xlu0 %1850
  %1854 = vset.pattern.permute.xlu0 0
  %1855 = vperm.xlu0 %1854, %v1183
  %v1856 = vpop.permute.xlu0 %1855
  %1859 = vset.pattern.permute.xlu0 0
  %1860 = vperm.xlu0 %1859, %v1184
  %v1861 = vpop.permute.xlu0 %1860
  %1864 = vset.pattern.permute.xlu0 0
  %1865 = vperm.xlu0 %1864, %v1185
  %v1866 = vpop.permute.xlu0 %1865
  %1869 = vset.pattern.permute.xlu0 0
  %1870 = vperm.xlu0 %1869, %v1186
  %v1871 = vpop.permute.xlu0 %1870
  %1874 = vset.pattern.permute.xlu0 0
  %1875 = vperm.xlu0 %1874, %v1187
  %v1876 = vpop.permute.xlu0 %1875
  %1879 = vset.pattern.permute.xlu0 0
  %1880 = vperm.xlu0 %1879, %v1188
  %v1881 = vpop.permute.xlu0 %1880
  %1884 = vset.pattern.permute.xlu0 0
  %1885 = vperm.xlu0 %1884, %v1189
  %v1886 = vpop.permute.xlu0 %1885
  %1889 = vset.pattern.permute.xlu0 0
  %1890 = vperm.xlu0 %1889, %v1190
  %v1891 = vpop.permute.xlu0 %1890
  %1894 = vset.pattern.permute.xlu0 0
  %1895 = vperm.xlu0 %1894, %v1191
  %v1896 = vpop.permute.xlu0 %1895
  %v1898 = vlaneseq
  %v1899 = vshrl.u32 %v1898, 7
  %v1900 = vsub.s32 0, %v1899
  %v1901 = vrot.slane %v1647, %v1900
  %v1902 = vmul.f32 %v1651, %v1901
  %v1903 = vmul.f32 %v1656, %v1901
  %v1904 = vmul.f32 %v1661, %v1901
  %v1905 = vmul.f32 %v1666, %v1901
  %v1906 = vmul.f32 %v1671, %v1901
  %v1907 = vmul.f32 %v1676, %v1901
  %v1908 = vmul.f32 %v1681, %v1901
  %v1909 = vmul.f32 %v1686, %v1901
  %v1910 = vmul.f32 %v1691, %v1901
  %v1911 = vmul.f32 %v1696, %v1901
  %v1912 = vmul.f32 %v1701, %v1901
  %v1913 = vmul.f32 %v1706, %v1901
  %v1914 = vmul.f32 %v1711, %v1901
  %v1915 = vmul.f32 %v1716, %v1901
  %v1916 = vmul.f32 %v1721, %v1901
  %v1917 = vmul.f32 %v1726, %v1901
  %v1918 = vmul.f32 %v1731, %v1901
  %v1919 = vmul.f32 %v1736, %v1901
  %v1920 = vmul.f32 %v1741, %v1901
  %v1921 = vmul.f32 %v1746, %v1901
  %v1922 = vmul.f32 %v1751, %v1901
  %v1923 = vmul.f32 %v1756, %v1901
  %v1924 = vmul.f32 %v1761, %v1901
  %v1925 = vmul.f32 %v1766, %v1901
  %v1926 = vmul.f32 %v1771, %v1901
  %v1927 = vmul.f32 %v1776, %v1901
  %v1928 = vmul.f32 %v1781, %v1901
  %v1929 = vmul.f32 %v1786, %v1901
  %v1930 = vmul.f32 %v1791, %v1901
  %v1931 = vmul.f32 %v1796, %v1901
  %v1932 = vmul.f32 %v1801, %v1901
  %v1933 = vmul.f32 %v1806, %v1901
  %v1934 = vmul.f32 %v1811, %v1901
  %v1935 = vmul.f32 %v1816, %v1901
  %v1936 = vmul.f32 %v1821, %v1901
  %v1937 = vmul.f32 %v1826, %v1901
  %v1938 = vmul.f32 %v1831, %v1901
  %v1939 = vmul.f32 %v1836, %v1901
  %v1940 = vmul.f32 %v1841, %v1901
  %v1941 = vmul.f32 %v1846, %v1901
  %v1942 = vmul.f32 %v1851, %v1901
  %v1943 = vmul.f32 %v1856, %v1901
  %v1944 = vmul.f32 %v1861, %v1901
  %v1945 = vmul.f32 %v1866, %v1901
  %v1946 = vmul.f32 %v1871, %v1901
  %v1947 = vmul.f32 %v1876, %v1901
  %v1948 = vmul.f32 %v1881, %v1901
  %v1949 = vmul.f32 %v1886, %v1901
  %v1950 = vmul.f32 %v1891, %v1901
  %v1951 = vmul.f32 %v1896, %v1901
  %v1952 = vadd.f32 %v1597, %v1902
  %v1953 = vadd.f32 %v1598, %v1903
  %v1954 = vadd.f32 %v1599, %v1904
  %v1955 = vadd.f32 %v1600, %v1905
  %v1956 = vadd.f32 %v1601, %v1906
  %v1957 = vadd.f32 %v1602, %v1907
  %v1958 = vadd.f32 %v1603, %v1908
  %v1959 = vadd.f32 %v1604, %v1909
  %v1960 = vadd.f32 %v1605, %v1910
  %v1961 = vadd.f32 %v1606, %v1911
  %v1962 = vadd.f32 %v1607, %v1912
  %v1963 = vadd.f32 %v1608, %v1913
  %v1964 = vadd.f32 %v1609, %v1914
  %v1965 = vadd.f32 %v1610, %v1915
  %v1966 = vadd.f32 %v1611, %v1916
  %v1967 = vadd.f32 %v1612, %v1917
  %v1968 = vadd.f32 %v1613, %v1918
  %v1969 = vadd.f32 %v1614, %v1919
  %v1970 = vadd.f32 %v1615, %v1920
  %v1971 = vadd.f32 %v1616, %v1921
  %v1972 = vadd.f32 %v1617, %v1922
  %v1973 = vadd.f32 %v1618, %v1923
  %v1974 = vadd.f32 %v1619, %v1924
  %v1975 = vadd.f32 %v1620, %v1925
  %v1976 = vadd.f32 %v1621, %v1926
  %v1977 = vadd.f32 %v1622, %v1927
  %v1978 = vadd.f32 %v1623, %v1928
  %v1979 = vadd.f32 %v1624, %v1929
  %v1980 = vadd.f32 %v1625, %v1930
  %v1981 = vadd.f32 %v1626, %v1931
  %v1982 = vadd.f32 %v1627, %v1932
  %v1983 = vadd.f32 %v1628, %v1933
  %v1984 = vadd.f32 %v1629, %v1934
  %v1985 = vadd.f32 %v1630, %v1935
  %v1986 = vadd.f32 %v1631, %v1936
  %v1987 = vadd.f32 %v1632, %v1937
  %v1988 = vadd.f32 %v1633, %v1938
  %v1989 = vadd.f32 %v1634, %v1939
  %v1990 = vadd.f32 %v1635, %v1940
  %v1991 = vadd.f32 %v1636, %v1941
  %v1992 = vadd.f32 %v1637, %v1942
  %v1993 = vadd.f32 %v1638, %v1943
  %v1994 = vadd.f32 %v1639, %v1944
  %v1995 = vadd.f32 %v1640, %v1945
  %v1996 = vadd.f32 %v1641, %v1946
  %v1997 = vadd.f32 %v1642, %v1947
  %v1998 = vadd.f32 %v1643, %v1948
  %v1999 = vadd.f32 %v1644, %v1949
  %v2000 = vadd.f32 %v1645, %v1950
  %v2001 = vadd.f32 %v1646, %v1951
  %v2002 = vld [vmem:[%s1 + $0x2] sm:$0x1]
  %2004 = vset.pattern.permute.xlu0 0
  %2005 = vperm.xlu0 %2004, %v1292
  %v2006 = vpop.permute.xlu0 %2005
  %2009 = vset.pattern.permute.xlu0 0
  %2010 = vperm.xlu0 %2009, %v1293
  %v2011 = vpop.permute.xlu0 %2010
  %2014 = vset.pattern.permute.xlu0 0
  %2015 = vperm.xlu0 %2014, %v1294
  %v2016 = vpop.permute.xlu0 %2015
  %2019 = vset.pattern.permute.xlu0 0
  %2020 = vperm.xlu0 %2019, %v1295
  %v2021 = vpop.permute.xlu0 %2020
  %2024 = vset.pattern.permute.xlu0 0
  %2025 = vperm.xlu0 %2024, %v1296
  %v2026 = vpop.permute.xlu0 %2025
  %2029 = vset.pattern.permute.xlu0 0
  %2030 = vperm.xlu0 %2029, %v1297
  %v2031 = vpop.permute.xlu0 %2030
  %2034 = vset.pattern.permute.xlu0 0
  %2035 = vperm.xlu0 %2034, %v1298
  %v2036 = vpop.permute.xlu0 %2035
  %2039 = vset.pattern.permute.xlu0 0
  %2040 = vperm.xlu0 %2039, %v1299
  %v2041 = vpop.permute.xlu0 %2040
  %2044 = vset.pattern.permute.xlu0 0
  %2045 = vperm.xlu0 %2044, %v1300
  %v2046 = vpop.permute.xlu0 %2045
  %2049 = vset.pattern.permute.xlu0 0
  %2050 = vperm.xlu0 %2049, %v1301
  %v2051 = vpop.permute.xlu0 %2050
  %2054 = vset.pattern.permute.xlu0 0
  %2055 = vperm.xlu0 %2054, %v1302
  %v2056 = vpop.permute.xlu0 %2055
  %2059 = vset.pattern.permute.xlu0 0
  %2060 = vperm.xlu0 %2059, %v1303
  %v2061 = vpop.permute.xlu0 %2060
  %2064 = vset.pattern.permute.xlu0 0
  %2065 = vperm.xlu0 %2064, %v1304
  %v2066 = vpop.permute.xlu0 %2065
  %2069 = vset.pattern.permute.xlu0 0
  %2070 = vperm.xlu0 %2069, %v1305
  %v2071 = vpop.permute.xlu0 %2070
  %2074 = vset.pattern.permute.xlu0 0
  %2075 = vperm.xlu0 %2074, %v1306
  %v2076 = vpop.permute.xlu0 %2075
  %2079 = vset.pattern.permute.xlu0 0
  %2080 = vperm.xlu0 %2079, %v1307
  %v2081 = vpop.permute.xlu0 %2080
  %2084 = vset.pattern.permute.xlu0 0
  %2085 = vperm.xlu0 %2084, %v1308
  %v2086 = vpop.permute.xlu0 %2085
  %2089 = vset.pattern.permute.xlu0 0
  %2090 = vperm.xlu0 %2089, %v1309
  %v2091 = vpop.permute.xlu0 %2090
  %2094 = vset.pattern.permute.xlu0 0
  %2095 = vperm.xlu0 %2094, %v1310
  %v2096 = vpop.permute.xlu0 %2095
  %2099 = vset.pattern.permute.xlu0 0
  %2100 = vperm.xlu0 %2099, %v1311
  %v2101 = vpop.permute.xlu0 %2100
  %2104 = vset.pattern.permute.xlu0 0
  %2105 = vperm.xlu0 %2104, %v1312
  %v2106 = vpop.permute.xlu0 %2105
  %2109 = vset.pattern.permute.xlu0 0
  %2110 = vperm.xlu0 %2109, %v1313
  %v2111 = vpop.permute.xlu0 %2110
  %2114 = vset.pattern.permute.xlu0 0
  %2115 = vperm.xlu0 %2114, %v1314
  %v2116 = vpop.permute.xlu0 %2115
  %2119 = vset.pattern.permute.xlu0 0
  %2120 = vperm.xlu0 %2119, %v1315
  %v2121 = vpop.permute.xlu0 %2120
  %2124 = vset.pattern.permute.xlu0 0
  %2125 = vperm.xlu0 %2124, %v1316
  %v2126 = vpop.permute.xlu0 %2125
  %2129 = vset.pattern.permute.xlu0 0
  %2130 = vperm.xlu0 %2129, %v1317
  %v2131 = vpop.permute.xlu0 %2130
  %2134 = vset.pattern.permute.xlu0 0
  %2135 = vperm.xlu0 %2134, %v1318
  %v2136 = vpop.permute.xlu0 %2135
  %2139 = vset.pattern.permute.xlu0 0
  %2140 = vperm.xlu0 %2139, %v1319
  %v2141 = vpop.permute.xlu0 %2140
  %2144 = vset.pattern.permute.xlu0 0
  %2145 = vperm.xlu0 %2144, %v1320
  %v2146 = vpop.permute.xlu0 %2145
  %2149 = vset.pattern.permute.xlu0 0
  %2150 = vperm.xlu0 %2149, %v1321
  %v2151 = vpop.permute.xlu0 %2150
  %2154 = vset.pattern.permute.xlu0 0
  %2155 = vperm.xlu0 %2154, %v1322
  %v2156 = vpop.permute.xlu0 %2155
  %2159 = vset.pattern.permute.xlu0 0
  %2160 = vperm.xlu0 %2159, %v1323
  %v2161 = vpop.permute.xlu0 %2160
  %2164 = vset.pattern.permute.xlu0 0
  %2165 = vperm.xlu0 %2164, %v1324
  %v2166 = vpop.permute.xlu0 %2165
  %2169 = vset.pattern.permute.xlu0 0
  %2170 = vperm.xlu0 %2169, %v1325
  %v2171 = vpop.permute.xlu0 %2170
  %2174 = vset.pattern.permute.xlu0 0
  %2175 = vperm.xlu0 %2174, %v1326
  %v2176 = vpop.permute.xlu0 %2175
  %2179 = vset.pattern.permute.xlu0 0
  %2180 = vperm.xlu0 %2179, %v1327
  %v2181 = vpop.permute.xlu0 %2180
  %2184 = vset.pattern.permute.xlu0 0
  %2185 = vperm.xlu0 %2184, %v1328
  %v2186 = vpop.permute.xlu0 %2185
  %2189 = vset.pattern.permute.xlu0 0
  %2190 = vperm.xlu0 %2189, %v1329
  %v2191 = vpop.permute.xlu0 %2190
  %2194 = vset.pattern.permute.xlu0 0
  %2195 = vperm.xlu0 %2194, %v1330
  %v2196 = vpop.permute.xlu0 %2195
  %2199 = vset.pattern.permute.xlu0 0
  %2200 = vperm.xlu0 %2199, %v1331
  %v2201 = vpop.permute.xlu0 %2200
  %2204 = vset.pattern.permute.xlu0 0
  %2205 = vperm.xlu0 %2204, %v1332
  %v2206 = vpop.permute.xlu0 %2205
  %2209 = vset.pattern.permute.xlu0 0
  %2210 = vperm.xlu0 %2209, %v1333
  %v2211 = vpop.permute.xlu0 %2210
  %2214 = vset.pattern.permute.xlu0 0
  %2215 = vperm.xlu0 %2214, %v1334
  %v2216 = vpop.permute.xlu0 %2215
  %2219 = vset.pattern.permute.xlu0 0
  %2220 = vperm.xlu0 %2219, %v1335
  %v2221 = vpop.permute.xlu0 %2220
  %2224 = vset.pattern.permute.xlu0 0
  %2225 = vperm.xlu0 %2224, %v1336
  %v2226 = vpop.permute.xlu0 %2225
  %2229 = vset.pattern.permute.xlu0 0
  %2230 = vperm.xlu0 %2229, %v1337
  %v2231 = vpop.permute.xlu0 %2230
  %2234 = vset.pattern.permute.xlu0 0
  %2235 = vperm.xlu0 %2234, %v1338
  %v2236 = vpop.permute.xlu0 %2235
  %2239 = vset.pattern.permute.xlu0 0
  %2240 = vperm.xlu0 %2239, %v1339
  %v2241 = vpop.permute.xlu0 %2240
  %2244 = vset.pattern.permute.xlu0 0
  %2245 = vperm.xlu0 %2244, %v1340
  %v2246 = vpop.permute.xlu0 %2245
  %2249 = vset.pattern.permute.xlu0 0
  %2250 = vperm.xlu0 %2249, %v1341
  %v2251 = vpop.permute.xlu0 %2250
  %v2253 = vlaneseq
  %v2254 = vshrl.u32 %v2253, 7
  %v2255 = vsub.s32 0, %v2254
  %v2256 = vrot.slane %v2002, %v2255
  %v2257 = vmul.f32 %v2006, %v2256
  %v2258 = vmul.f32 %v2011, %v2256
  %v2259 = vmul.f32 %v2016, %v2256
  %v2260 = vmul.f32 %v2021, %v2256
  %v2261 = vmul.f32 %v2026, %v2256
  %v2262 = vmul.f32 %v2031, %v2256
  %v2263 = vmul.f32 %v2036, %v2256
  %v2264 = vmul.f32 %v2041, %v2256
  %v2265 = vmul.f32 %v2046, %v2256
  %v2266 = vmul.f32 %v2051, %v2256
  %v2267 = vmul.f32 %v2056, %v2256
  %v2268 = vmul.f32 %v2061, %v2256
  %v2269 = vmul.f32 %v2066, %v2256
  %v2270 = vmul.f32 %v2071, %v2256
  %v2271 = vmul.f32 %v2076, %v2256
  %v2272 = vmul.f32 %v2081, %v2256
  %v2273 = vmul.f32 %v2086, %v2256
  %v2274 = vmul.f32 %v2091, %v2256
  %v2275 = vmul.f32 %v2096, %v2256
  %v2276 = vmul.f32 %v2101, %v2256
  %v2277 = vmul.f32 %v2106, %v2256
  %v2278 = vmul.f32 %v2111, %v2256
  %v2279 = vmul.f32 %v2116, %v2256
  %v2280 = vmul.f32 %v2121, %v2256
  %v2281 = vmul.f32 %v2126, %v2256
  %v2282 = vmul.f32 %v2131, %v2256
  %v2283 = vmul.f32 %v2136, %v2256
  %v2284 = vmul.f32 %v2141, %v2256
  %v2285 = vmul.f32 %v2146, %v2256
  %v2286 = vmul.f32 %v2151, %v2256
  %v2287 = vmul.f32 %v2156, %v2256
  %v2288 = vmul.f32 %v2161, %v2256
  %v2289 = vmul.f32 %v2166, %v2256
  %v2290 = vmul.f32 %v2171, %v2256
  %v2291 = vmul.f32 %v2176, %v2256
  %v2292 = vmul.f32 %v2181, %v2256
  %v2293 = vmul.f32 %v2186, %v2256
  %v2294 = vmul.f32 %v2191, %v2256
  %v2295 = vmul.f32 %v2196, %v2256
  %v2296 = vmul.f32 %v2201, %v2256
  %v2297 = vmul.f32 %v2206, %v2256
  %v2298 = vmul.f32 %v2211, %v2256
  %v2299 = vmul.f32 %v2216, %v2256
  %v2300 = vmul.f32 %v2221, %v2256
  %v2301 = vmul.f32 %v2226, %v2256
  %v2302 = vmul.f32 %v2231, %v2256
  %v2303 = vmul.f32 %v2236, %v2256
  %v2304 = vmul.f32 %v2241, %v2256
  %v2305 = vmul.f32 %v2246, %v2256
  %v2306 = vmul.f32 %v2251, %v2256
  %v2307 = vadd.f32 %v1952, %v2257
  %v2308 = vadd.f32 %v1953, %v2258
  %v2309 = vadd.f32 %v1954, %v2259
  %v2310 = vadd.f32 %v1955, %v2260
  %v2311 = vadd.f32 %v1956, %v2261
  %v2312 = vadd.f32 %v1957, %v2262
  %v2313 = vadd.f32 %v1958, %v2263
  %v2314 = vadd.f32 %v1959, %v2264
  %v2315 = vadd.f32 %v1960, %v2265
  %v2316 = vadd.f32 %v1961, %v2266
  %v2317 = vadd.f32 %v1962, %v2267
  %v2318 = vadd.f32 %v1963, %v2268
  %v2319 = vadd.f32 %v1964, %v2269
  %v2320 = vadd.f32 %v1965, %v2270
  %v2321 = vadd.f32 %v1966, %v2271
  %v2322 = vadd.f32 %v1967, %v2272
  %v2323 = vadd.f32 %v1968, %v2273
  %v2324 = vadd.f32 %v1969, %v2274
  %v2325 = vadd.f32 %v1970, %v2275
  %v2326 = vadd.f32 %v1971, %v2276
  %v2327 = vadd.f32 %v1972, %v2277
  %v2328 = vadd.f32 %v1973, %v2278
  %v2329 = vadd.f32 %v1974, %v2279
  %v2330 = vadd.f32 %v1975, %v2280
  %v2331 = vadd.f32 %v1976, %v2281
  %v2332 = vadd.f32 %v1977, %v2282
  %v2333 = vadd.f32 %v1978, %v2283
  %v2334 = vadd.f32 %v1979, %v2284
  %v2335 = vadd.f32 %v1980, %v2285
  %v2336 = vadd.f32 %v1981, %v2286
  %v2337 = vadd.f32 %v1982, %v2287
  %v2338 = vadd.f32 %v1983, %v2288
  %v2339 = vadd.f32 %v1984, %v2289
  %v2340 = vadd.f32 %v1985, %v2290
  %v2341 = vadd.f32 %v1986, %v2291
  %v2342 = vadd.f32 %v1987, %v2292
  %v2343 = vadd.f32 %v1988, %v2293
  %v2344 = vadd.f32 %v1989, %v2294
  %v2345 = vadd.f32 %v1990, %v2295
  %v2346 = vadd.f32 %v1991, %v2296
  %v2347 = vadd.f32 %v1992, %v2297
  %v2348 = vadd.f32 %v1993, %v2298
  %v2349 = vadd.f32 %v1994, %v2299
  %v2350 = vadd.f32 %v1995, %v2300
  %v2351 = vadd.f32 %v1996, %v2301
  %v2352 = vadd.f32 %v1997, %v2302
  %v2353 = vadd.f32 %v1998, %v2303
  %v2354 = vadd.f32 %v1999, %v2304
  %v2355 = vadd.f32 %v2000, %v2305
  %v2356 = vadd.f32 %v2001, %v2306
  %vm2357 = vcmask 80896
  %2358 = vst.msk [vmem:[#allocation3] sm:$0xff] %vm2357, 0.0
  %v2359 = vld [vmem:[%s2] sm:$0x1]
  %v2360 = vld [vmem:[%s3] sm:$0x1]
  %v2361 = vsel %vm2357, %v2307, 0.0
  %v2362 = vsel %vm2357, %v2308, 0.0
  %v2363 = vadd.f32 %v2361, %v2362
  %v2364 = vsel %vm2357, %v2309, 0.0
  %v2365 = vadd.f32 %v2363, %v2364
  %v2366 = vsel %vm2357, %v2310, 0.0
  %v2367 = vadd.f32 %v2365, %v2366
  %v2368 = vsel %vm2357, %v2311, 0.0
  %v2369 = vadd.f32 %v2367, %v2368
  %v2370 = vsel %vm2357, %v2312, 0.0
  %v2371 = vadd.f32 %v2369, %v2370
  %v2372 = vsel %vm2357, %v2313, 0.0
  %v2373 = vadd.f32 %v2371, %v2372
  %v2374 = vsel %vm2357, %v2314, 0.0
  %v2375 = vadd.f32 %v2373, %v2374
  %v2376 = vsel %vm2357, %v2315, 0.0
  %v2377 = vadd.f32 %v2375, %v2376
  %v2378 = vsel %vm2357, %v2316, 0.0
  %v2379 = vadd.f32 %v2377, %v2378
  %v2380 = vsel %vm2357, %v2317, 0.0
  %v2381 = vadd.f32 %v2379, %v2380
  %v2382 = vsel %vm2357, %v2318, 0.0
  %v2383 = vadd.f32 %v2381, %v2382
  %v2384 = vsel %vm2357, %v2319, 0.0
  %v2385 = vadd.f32 %v2383, %v2384
  %v2386 = vsel %vm2357, %v2320, 0.0
  %v2387 = vadd.f32 %v2385, %v2386
  %v2388 = vsel %vm2357, %v2321, 0.0
  %v2389 = vadd.f32 %v2387, %v2388
  %v2390 = vsel %vm2357, %v2322, 0.0
  %v2391 = vadd.f32 %v2389, %v2390
  %v2392 = vsel %vm2357, %v2323, 0.0
  %v2393 = vadd.f32 %v2391, %v2392
  %v2394 = vsel %vm2357, %v2324, 0.0
  %v2395 = vadd.f32 %v2393, %v2394
  %v2396 = vsel %vm2357, %v2325, 0.0
  %v2397 = vadd.f32 %v2395, %v2396
  %v2398 = vsel %vm2357, %v2326, 0.0
  %v2399 = vadd.f32 %v2397, %v2398
  %v2400 = vsel %vm2357, %v2327, 0.0
  %v2401 = vadd.f32 %v2399, %v2400
  %v2402 = vsel %vm2357, %v2328, 0.0
  %v2403 = vadd.f32 %v2401, %v2402
  %v2404 = vsel %vm2357, %v2329, 0.0
  %v2405 = vadd.f32 %v2403, %v2404
  %v2406 = vsel %vm2357, %v2330, 0.0
  %v2407 = vadd.f32 %v2405, %v2406
  %v2408 = vsel %vm2357, %v2331, 0.0
  %v2409 = vadd.f32 %v2407, %v2408
  %v2410 = vsel %vm2357, %v2332, 0.0
  %v2411 = vadd.f32 %v2409, %v2410
  %v2412 = vsel %vm2357, %v2333, 0.0
  %v2413 = vadd.f32 %v2411, %v2412
  %v2414 = vsel %vm2357, %v2334, 0.0
  %v2415 = vadd.f32 %v2413, %v2414
  %v2416 = vsel %vm2357, %v2335, 0.0
  %v2417 = vadd.f32 %v2415, %v2416
  %v2418 = vsel %vm2357, %v2336, 0.0
  %v2419 = vadd.f32 %v2417, %v2418
  %v2420 = vsel %vm2357, %v2337, 0.0
  %v2421 = vadd.f32 %v2419, %v2420
  %v2422 = vsel %vm2357, %v2338, 0.0
  %v2423 = vadd.f32 %v2421, %v2422
  %v2424 = vsel %vm2357, %v2339, 0.0
  %v2425 = vadd.f32 %v2423, %v2424
  %v2426 = vsel %vm2357, %v2340, 0.0
  %v2427 = vadd.f32 %v2425, %v2426
  %v2428 = vsel %vm2357, %v2341, 0.0
  %v2429 = vadd.f32 %v2427, %v2428
  %v2430 = vsel %vm2357, %v2342, 0.0
  %v2431 = vadd.f32 %v2429, %v2430
  %v2432 = vsel %vm2357, %v2343, 0.0
  %v2433 = vadd.f32 %v2431, %v2432
  %v2434 = vsel %vm2357, %v2344, 0.0
  %v2435 = vadd.f32 %v2433, %v2434
  %v2436 = vsel %vm2357, %v2345, 0.0
  %v2437 = vadd.f32 %v2435, %v2436
  %v2438 = vsel %vm2357, %v2346, 0.0
  %v2439 = vadd.f32 %v2437, %v2438
  %v2440 = vsel %vm2357, %v2347, 0.0
  %v2441 = vadd.f32 %v2439, %v2440
  %v2442 = vsel %vm2357, %v2348, 0.0
  %v2443 = vadd.f32 %v2441, %v2442
  %v2444 = vsel %vm2357, %v2349, 0.0
  %v2445 = vadd.f32 %v2443, %v2444
  %v2446 = vsel %vm2357, %v2350, 0.0
  %v2447 = vadd.f32 %v2445, %v2446
  %v2448 = vsel %vm2357, %v2351, 0.0
  %v2449 = vadd.f32 %v2447, %v2448
  %v2450 = vsel %vm2357, %v2352, 0.0
  %v2451 = vadd.f32 %v2449, %v2450
  %v2452 = vsel %vm2357, %v2353, 0.0
  %v2453 = vadd.f32 %v2451, %v2452
  %v2454 = vsel %vm2357, %v2354, 0.0
  %v2455 = vadd.f32 %v2453, %v2454
  %v2456 = vsel %vm2357, %v2355, 0.0
  %v2457 = vadd.f32 %v2455, %v2456
  %v2458 = vsel %vm2357, %v2356, 0.0
  %v2459 = vadd.f32 %v2457, %v2458
  %v2460 = vrot.slane %v2459, 4
  %v2461 = vadd.f32 %v2459, %v2460
  %v2462 = vrot.slane %v2461, 2
  %v2463 = vadd.f32 %v2461, %v2462
  %v2464 = vrot.slane %v2463, 1
  %v2465 = vadd.f32 %v2463, %v2464
  %v2466 = vrcp.pop 400.0
  %v2467 = vmul.f32 %v2465, %v2466
  %v2468 = vsub.f32 %v2307, %v2467
  %v2469 = vsub.f32 %v2308, %v2467
  %v2470 = vsub.f32 %v2309, %v2467
  %v2471 = vsub.f32 %v2310, %v2467
  %v2472 = vsub.f32 %v2311, %v2467
  %v2473 = vsub.f32 %v2312, %v2467
  %v2474 = vsub.f32 %v2313, %v2467
  %v2475 = vsub.f32 %v2314, %v2467
  %v2476 = vsub.f32 %v2315, %v2467
  %v2477 = vsub.f32 %v2316, %v2467
  %v2478 = vsub.f32 %v2317, %v2467
  %v2479 = vsub.f32 %v2318, %v2467
  %v2480 = vsub.f32 %v2319, %v2467
  %v2481 = vsub.f32 %v2320, %v2467
  %v2482 = vsub.f32 %v2321, %v2467
  %v2483 = vsub.f32 %v2322, %v2467
  %v2484 = vsub.f32 %v2323, %v2467
  %v2485 = vsub.f32 %v2324, %v2467
  %v2486 = vsub.f32 %v2325, %v2467
  %v2487 = vsub.f32 %v2326, %v2467
  %v2488 = vsub.f32 %v2327, %v2467
  %v2489 = vsub.f32 %v2328, %v2467
  %v2490 = vsub.f32 %v2329, %v2467
  %v2491 = vsub.f32 %v2330, %v2467
  %v2492 = vsub.f32 %v2331, %v2467
  %v2493 = vsub.f32 %v2332, %v2467
  %v2494 = vsub.f32 %v2333, %v2467
  %v2495 = vsub.f32 %v2334, %v2467
  %v2496 = vsub.f32 %v2335, %v2467
  %v2497 = vsub.f32 %v2336, %v2467
  %v2498 = vsub.f32 %v2337, %v2467
  %v2499 = vsub.f32 %v2338, %v2467
  %v2500 = vsub.f32 %v2339, %v2467
  %v2501 = vsub.f32 %v2340, %v2467
  %v2502 = vsub.f32 %v2341, %v2467
  %v2503 = vsub.f32 %v2342, %v2467
  %v2504 = vsub.f32 %v2343, %v2467
  %v2505 = vsub.f32 %v2344, %v2467
  %v2506 = vsub.f32 %v2345, %v2467
  %v2507 = vsub.f32 %v2346, %v2467
  %v2508 = vsub.f32 %v2347, %v2467
  %v2509 = vsub.f32 %v2348, %v2467
  %v2510 = vsub.f32 %v2349, %v2467
  %v2511 = vsub.f32 %v2350, %v2467
  %v2512 = vsub.f32 %v2351, %v2467
  %v2513 = vsub.f32 %v2352, %v2467
  %v2514 = vsub.f32 %v2353, %v2467
  %v2515 = vsub.f32 %v2354, %v2467
  %v2516 = vsub.f32 %v2355, %v2467
  %v2517 = vsub.f32 %v2356, %v2467
  %v2518 = vmul.f32 %v2468, %v2468
  %v2519 = vmul.f32 %v2469, %v2469
  %v2520 = vmul.f32 %v2470, %v2470
  %v2521 = vmul.f32 %v2471, %v2471
  %v2522 = vmul.f32 %v2472, %v2472
  %v2523 = vmul.f32 %v2473, %v2473
  %v2524 = vmul.f32 %v2474, %v2474
  %v2525 = vmul.f32 %v2475, %v2475
  %v2526 = vmul.f32 %v2476, %v2476
  %v2527 = vmul.f32 %v2477, %v2477
  %v2528 = vmul.f32 %v2478, %v2478
  %v2529 = vmul.f32 %v2479, %v2479
  %v2530 = vmul.f32 %v2480, %v2480
  %v2531 = vmul.f32 %v2481, %v2481
  %v2532 = vmul.f32 %v2482, %v2482
  %v2533 = vmul.f32 %v2483, %v2483
  %v2534 = vmul.f32 %v2484, %v2484
  %v2535 = vmul.f32 %v2485, %v2485
  %v2536 = vmul.f32 %v2486, %v2486
  %v2537 = vmul.f32 %v2487, %v2487
  %v2538 = vmul.f32 %v2488, %v2488
  %v2539 = vmul.f32 %v2489, %v2489
  %v2540 = vmul.f32 %v2490, %v2490
  %v2541 = vmul.f32 %v2491, %v2491
  %v2542 = vmul.f32 %v2492, %v2492
  %v2543 = vmul.f32 %v2493, %v2493
  %v2544 = vmul.f32 %v2494, %v2494
  %v2545 = vmul.f32 %v2495, %v2495
  %v2546 = vmul.f32 %v2496, %v2496
  %v2547 = vmul.f32 %v2497, %v2497
  %v2548 = vmul.f32 %v2498, %v2498
  %v2549 = vmul.f32 %v2499, %v2499
  %v2550 = vmul.f32 %v2500, %v2500
  %v2551 = vmul.f32 %v2501, %v2501
  %v2552 = vmul.f32 %v2502, %v2502
  %v2553 = vmul.f32 %v2503, %v2503
  %v2554 = vmul.f32 %v2504, %v2504
  %v2555 = vmul.f32 %v2505, %v2505
  %v2556 = vmul.f32 %v2506, %v2506
  %v2557 = vmul.f32 %v2507, %v2507
  %v2558 = vmul.f32 %v2508, %v2508
  %v2559 = vmul.f32 %v2509, %v2509
  %v2560 = vmul.f32 %v2510, %v2510
  %v2561 = vmul.f32 %v2511, %v2511
  %v2562 = vmul.f32 %v2512, %v2512
  %v2563 = vmul.f32 %v2513, %v2513
  %v2564 = vmul.f32 %v2514, %v2514
  %v2565 = vmul.f32 %v2515, %v2515
  %v2566 = vmul.f32 %v2516, %v2516
  %v2567 = vmul.f32 %v2517, %v2517
  %v2568 = vsel %vm2357, %v2518, 0.0
  %v2569 = vsel %vm2357, %v2519, 0.0
  %v2570 = vadd.f32 %v2568, %v2569
  %v2571 = vsel %vm2357, %v2520, 0.0
  %v2572 = vadd.f32 %v2570, %v2571
  %v2573 = vsel %vm2357, %v2521, 0.0
  %v2574 = vadd.f32 %v2572, %v2573
  %v2575 = vsel %vm2357, %v2522, 0.0
  %v2576 = vadd.f32 %v2574, %v2575
  %v2577 = vsel %vm2357, %v2523, 0.0
  %v2578 = vadd.f32 %v2576, %v2577
  %v2579 = vsel %vm2357, %v2524, 0.0
  %v2580 = vadd.f32 %v2578, %v2579
  %v2581 = vsel %vm2357, %v2525, 0.0
  %v2582 = vadd.f32 %v2580, %v2581
  %v2583 = vsel %vm2357, %v2526, 0.0
  %v2584 = vadd.f32 %v2582, %v2583
  %v2585 = vsel %vm2357, %v2527, 0.0
  %v2586 = vadd.f32 %v2584, %v2585
  %v2587 = vsel %vm2357, %v2528, 0.0
  %v2588 = vadd.f32 %v2586, %v2587
  %v2589 = vsel %vm2357, %v2529, 0.0
  %v2590 = vadd.f32 %v2588, %v2589
  %v2591 = vsel %vm2357, %v2530, 0.0
  %v2592 = vadd.f32 %v2590, %v2591
  %v2593 = vsel %vm2357, %v2531, 0.0
  %v2594 = vadd.f32 %v2592, %v2593
  %v2595 = vsel %vm2357, %v2532, 0.0
  %v2596 = vadd.f32 %v2594, %v2595
  %v2597 = vsel %vm2357, %v2533, 0.0
  %v2598 = vadd.f32 %v2596, %v2597
  %v2599 = vsel %vm2357, %v2534, 0.0
  %v2600 = vadd.f32 %v2598, %v2599
  %v2601 = vsel %vm2357, %v2535, 0.0
  %v2602 = vadd.f32 %v2600, %v2601
  %v2603 = vsel %vm2357, %v2536, 0.0
  %v2604 = vadd.f32 %v2602, %v2603
  %v2605 = vsel %vm2357, %v2537, 0.0
  %v2606 = vadd.f32 %v2604, %v2605
  %v2607 = vsel %vm2357, %v2538, 0.0
  %v2608 = vadd.f32 %v2606, %v2607
  %v2609 = vsel %vm2357, %v2539, 0.0
  %v2610 = vadd.f32 %v2608, %v2609
  %v2611 = vsel %vm2357, %v2540, 0.0
  %v2612 = vadd.f32 %v2610, %v2611
  %v2613 = vsel %vm2357, %v2541, 0.0
  %v2614 = vadd.f32 %v2612, %v2613
  %v2615 = vsel %vm2357, %v2542, 0.0
  %v2616 = vadd.f32 %v2614, %v2615
  %v2617 = vsel %vm2357, %v2543, 0.0
  %v2618 = vadd.f32 %v2616, %v2617
  %v2619 = vsel %vm2357, %v2544, 0.0
  %v2620 = vadd.f32 %v2618, %v2619
  %v2621 = vsel %vm2357, %v2545, 0.0
  %v2622 = vadd.f32 %v2620, %v2621
  %v2623 = vsel %vm2357, %v2546, 0.0
  %v2624 = vadd.f32 %v2622, %v2623
  %v2625 = vsel %vm2357, %v2547, 0.0
  %v2626 = vadd.f32 %v2624, %v2625
  %v2627 = vsel %vm2357, %v2548, 0.0
  %v2628 = vadd.f32 %v2626, %v2627
  %v2629 = vsel %vm2357, %v2549, 0.0
  %v2630 = vadd.f32 %v2628, %v2629
  %v2631 = vsel %vm2357, %v2550, 0.0
  %v2632 = vadd.f32 %v2630, %v2631
  %v2633 = vsel %vm2357, %v2551, 0.0
  %v2634 = vadd.f32 %v2632, %v2633
  %v2635 = vsel %vm2357, %v2552, 0.0
  %v2636 = vadd.f32 %v2634, %v2635
  %v2637 = vsel %vm2357, %v2553, 0.0
  %v2638 = vadd.f32 %v2636, %v2637
  %v2639 = vsel %vm2357, %v2554, 0.0
  %v2640 = vadd.f32 %v2638, %v2639
  %v2641 = vsel %vm2357, %v2555, 0.0
  %v2642 = vadd.f32 %v2640, %v2641
  %v2643 = vsel %vm2357, %v2556, 0.0
  %v2644 = vadd.f32 %v2642, %v2643
  %v2645 = vsel %vm2357, %v2557, 0.0
  %v2646 = vadd.f32 %v2644, %v2645
  %v2647 = vsel %vm2357, %v2558, 0.0
  %v2648 = vadd.f32 %v2646, %v2647
  %v2649 = vsel %vm2357, %v2559, 0.0
  %v2650 = vadd.f32 %v2648, %v2649
  %v2651 = vsel %vm2357, %v2560, 0.0
  %v2652 = vadd.f32 %v2650, %v2651
  %v2653 = vsel %vm2357, %v2561, 0.0
  %v2654 = vadd.f32 %v2652, %v2653
  %v2655 = vsel %vm2357, %v2562, 0.0
  %v2656 = vadd.f32 %v2654, %v2655
  %v2657 = vsel %vm2357, %v2563, 0.0
  %v2658 = vadd.f32 %v2656, %v2657
  %v2659 = vsel %vm2357, %v2564, 0.0
  %v2660 = vadd.f32 %v2658, %v2659
  %v2661 = vsel %vm2357, %v2565, 0.0
  %v2662 = vadd.f32 %v2660, %v2661
  %v2663 = vsel %vm2357, %v2566, 0.0
  %v2664 = vadd.f32 %v2662, %v2663
  %v2665 = vsel %vm2357, %v2567, 0.0
  %v2666 = vadd.f32 %v2664, %v2665
  %v2667 = vrot.slane %v2666, 4
  %v2668 = vadd.f32 %v2666, %v2667
  %v2669 = vrot.slane %v2668, 2
  %v2670 = vadd.f32 %v2668, %v2669
  %v2671 = vrot.slane %v2670, 1
  %v2672 = vadd.f32 %v2670, %v2671
  %v2673 = vmul.f32 %v2672, %v2466
  %v2674 = vadd.f32 %v2673, 1e-05
  %v2675 = vrsqrt.pop %v2674
  %v2676 = vmul.f32 %v2468, %v2675
  %v2677 = vmul.f32 %v2469, %v2675
  %v2678 = vmul.f32 %v2470, %v2675
  %v2679 = vmul.f32 %v2471, %v2675
  %v2680 = vmul.f32 %v2472, %v2675
  %v2681 = vmul.f32 %v2473, %v2675
  %v2682 = vmul.f32 %v2474, %v2675
  %v2683 = vmul.f32 %v2475, %v2675
  %v2684 = vmul.f32 %v2476, %v2675
  %v2685 = vmul.f32 %v2477, %v2675
  %v2686 = vmul.f32 %v2478, %v2675
  %v2687 = vmul.f32 %v2479, %v2675
  %v2688 = vmul.f32 %v2480, %v2675
  %v2689 = vmul.f32 %v2481, %v2675
  %v2690 = vmul.f32 %v2482, %v2675
  %v2691 = vmul.f32 %v2483, %v2675
  %v2692 = vmul.f32 %v2484, %v2675
  %v2693 = vmul.f32 %v2485, %v2675
  %v2694 = vmul.f32 %v2486, %v2675
  %v2695 = vmul.f32 %v2487, %v2675
  %v2696 = vmul.f32 %v2488, %v2675
  %v2697 = vmul.f32 %v2489, %v2675
  %v2698 = vmul.f32 %v2490, %v2675
  %v2699 = vmul.f32 %v2491, %v2675
  %v2700 = vmul.f32 %v2492, %v2675
  %v2701 = vmul.f32 %v2493, %v2675
  %v2702 = vmul.f32 %v2494, %v2675
  %v2703 = vmul.f32 %v2495, %v2675
  %v2704 = vmul.f32 %v2496, %v2675
  %v2705 = vmul.f32 %v2497, %v2675
  %v2706 = vmul.f32 %v2498, %v2675
  %v2707 = vmul.f32 %v2499, %v2675
  %v2708 = vmul.f32 %v2500, %v2675
  %v2709 = vmul.f32 %v2501, %v2675
  %v2710 = vmul.f32 %v2502, %v2675
  %v2711 = vmul.f32 %v2503, %v2675
  %v2712 = vmul.f32 %v2504, %v2675
  %v2713 = vmul.f32 %v2505, %v2675
  %v2714 = vmul.f32 %v2506, %v2675
  %v2715 = vmul.f32 %v2507, %v2675
  %v2716 = vmul.f32 %v2508, %v2675
  %v2717 = vmul.f32 %v2509, %v2675
  %v2718 = vmul.f32 %v2510, %v2675
  %v2719 = vmul.f32 %v2511, %v2675
  %v2720 = vmul.f32 %v2512, %v2675
  %v2721 = vmul.f32 %v2513, %v2675
  %v2722 = vmul.f32 %v2514, %v2675
  %v2723 = vmul.f32 %v2515, %v2675
  %v2724 = vmul.f32 %v2516, %v2675
  %v2725 = vmul.f32 %v2517, %v2675
  %v2727 = vlaneseq
  %v2728 = vshrl.u32 %v2727, 7
  %v2729 = vsub.s32 0, %v2728
  %v2730 = vrot.slane %v2359, %v2729
  %v2732 = vmul.f32 %v2676, %v2730
  %v2733 = vmul.f32 %v2677, %v2730
  %v2734 = vmul.f32 %v2678, %v2730
  %v2735 = vmul.f32 %v2679, %v2730
  %v2736 = vmul.f32 %v2680, %v2730
  %v2737 = vmul.f32 %v2681, %v2730
  %v2738 = vmul.f32 %v2682, %v2730
  %v2739 = vmul.f32 %v2683, %v2730
  %v2740 = vmul.f32 %v2684, %v2730
  %v2741 = vmul.f32 %v2685, %v2730
  %v2742 = vmul.f32 %v2686, %v2730
  %v2743 = vmul.f32 %v2687, %v2730
  %v2744 = vmul.f32 %v2688, %v2730
  %v2745 = vmul.f32 %v2689, %v2730
  %v2746 = vmul.f32 %v2690, %v2730
  %v2747 = vmul.f32 %v2691, %v2730
  %v2748 = vmul.f32 %v2692, %v2730
  %v2749 = vmul.f32 %v2693, %v2730
  %v2750 = vmul.f32 %v2694, %v2730
  %v2751 = vmul.f32 %v2695, %v2730
  %v2752 = vmul.f32 %v2696, %v2730
  %v2753 = vmul.f32 %v2697, %v2730
  %v2754 = vmul.f32 %v2698, %v2730
  %v2755 = vmul.f32 %v2699, %v2730
  %v2756 = vmul.f32 %v2700, %v2730
  %v2757 = vmul.f32 %v2701, %v2730
  %v2758 = vmul.f32 %v2702, %v2730
  %v2759 = vmul.f32 %v2703, %v2730
  %v2760 = vmul.f32 %v2704, %v2730
  %v2761 = vmul.f32 %v2705, %v2730
  %v2762 = vmul.f32 %v2706, %v2730
  %v2763 = vmul.f32 %v2707, %v2730
  %v2764 = vmul.f32 %v2708, %v2730
  %v2765 = vmul.f32 %v2709, %v2730
  %v2766 = vmul.f32 %v2710, %v2730
  %v2767 = vmul.f32 %v2711, %v2730
  %v2768 = vmul.f32 %v2712, %v2730
  %v2769 = vmul.f32 %v2713, %v2730
  %v2770 = vmul.f32 %v2714, %v2730
  %v2771 = vmul.f32 %v2715, %v2730
  %v2772 = vmul.f32 %v2716, %v2730
  %v2773 = vmul.f32 %v2717, %v2730
  %v2774 = vmul.f32 %v2718, %v2730
  %v2775 = vmul.f32 %v2719, %v2730
  %v2776 = vmul.f32 %v2720, %v2730
  %v2777 = vmul.f32 %v2721, %v2730
  %v2778 = vmul.f32 %v2722, %v2730
  %v2779 = vmul.f32 %v2723, %v2730
  %v2780 = vmul.f32 %v2724, %v2730
  %v2781 = vmul.f32 %v2725, %v2730
  %v2783 = vlaneseq
  %v2784 = vshrl.u32 %v2783, 7
  %v2785 = vsub.s32 0, %v2784
  %v2786 = vrot.slane %v2360, %v2785
  %v2788 = vadd.f32 %v2732, %v2786
  %v2789 = vadd.f32 %v2733, %v2786
  %v2790 = vadd.f32 %v2734, %v2786
  %v2791 = vadd.f32 %v2735, %v2786
  %v2792 = vadd.f32 %v2736, %v2786
  %v2793 = vadd.f32 %v2737, %v2786
  %v2794 = vadd.f32 %v2738, %v2786
  %v2795 = vadd.f32 %v2739, %v2786
  %v2796 = vadd.f32 %v2740, %v2786
  %v2797 = vadd.f32 %v2741, %v2786
  %v2798 = vadd.f32 %v2742, %v2786
  %v2799 = vadd.f32 %v2743, %v2786
  %v2800 = vadd.f32 %v2744, %v2786
  %v2801 = vadd.f32 %v2745, %v2786
  %v2802 = vadd.f32 %v2746, %v2786
  %v2803 = vadd.f32 %v2747, %v2786
  %v2804 = vadd.f32 %v2748, %v2786
  %v2805 = vadd.f32 %v2749, %v2786
  %v2806 = vadd.f32 %v2750, %v2786
  %v2807 = vadd.f32 %v2751, %v2786
  %v2808 = vadd.f32 %v2752, %v2786
  %v2809 = vadd.f32 %v2753, %v2786
  %v2810 = vadd.f32 %v2754, %v2786
  %v2811 = vadd.f32 %v2755, %v2786
  %v2812 = vadd.f32 %v2756, %v2786
  %v2813 = vadd.f32 %v2757, %v2786
  %v2814 = vadd.f32 %v2758, %v2786
  %v2815 = vadd.f32 %v2759, %v2786
  %v2816 = vadd.f32 %v2760, %v2786
  %v2817 = vadd.f32 %v2761, %v2786
  %v2818 = vadd.f32 %v2762, %v2786
  %v2819 = vadd.f32 %v2763, %v2786
  %v2820 = vadd.f32 %v2764, %v2786
  %v2821 = vadd.f32 %v2765, %v2786
  %v2822 = vadd.f32 %v2766, %v2786
  %v2823 = vadd.f32 %v2767, %v2786
  %v2824 = vadd.f32 %v2768, %v2786
  %v2825 = vadd.f32 %v2769, %v2786
  %v2826 = vadd.f32 %v2770, %v2786
  %v2827 = vadd.f32 %v2771, %v2786
  %v2828 = vadd.f32 %v2772, %v2786
  %v2829 = vadd.f32 %v2773, %v2786
  %v2830 = vadd.f32 %v2774, %v2786
  %v2831 = vadd.f32 %v2775, %v2786
  %v2832 = vadd.f32 %v2776, %v2786
  %v2833 = vadd.f32 %v2777, %v2786
  %v2834 = vadd.f32 %v2778, %v2786
  %v2835 = vadd.f32 %v2779, %v2786
  %v2836 = vadd.f32 %v2780, %v2786
  %v2837 = vadd.f32 %v2781, %v2786
  %v2838 = vtanh.pop %v2788
  %v2839 = vtanh.pop %v2789
  %v2840 = vtanh.pop %v2790
  %v2841 = vtanh.pop %v2791
  %v2842 = vtanh.pop %v2792
  %v2843 = vtanh.pop %v2793
  %v2844 = vtanh.pop %v2794
  %v2845 = vtanh.pop %v2795
  %v2846 = vtanh.pop %v2796
  %v2847 = vtanh.pop %v2797
  %v2848 = vtanh.pop %v2798
  %v2849 = vtanh.pop %v2799
  %v2850 = vtanh.pop %v2800
  %v2851 = vtanh.pop %v2801
  %v2852 = vtanh.pop %v2802
  %v2853 = vtanh.pop %v2803
  %v2854 = vtanh.pop %v2804
  %v2855 = vtanh.pop %v2805
  %v2856 = vtanh.pop %v2806
  %v2857 = vtanh.pop %v2807
  %v2858 = vtanh.pop %v2808
  %v2859 = vtanh.pop %v2809
  %v2860 = vtanh.pop %v2810
  %v2861 = vtanh.pop %v2811
  %v2862 = vtanh.pop %v2812
  %v2863 = vtanh.pop %v2813
  %v2864 = vtanh.pop %v2814
  %v2865 = vtanh.pop %v2815
  %v2866 = vtanh.pop %v2816
  %v2867 = vtanh.pop %v2817
  %v2868 = vtanh.pop %v2818
  %v2869 = vtanh.pop %v2819
  %v2870 = vtanh.pop %v2820
  %v2871 = vtanh.pop %v2821
  %v2872 = vtanh.pop %v2822
  %v2873 = vtanh.pop %v2823
  %v2874 = vtanh.pop %v2824
  %v2875 = vtanh.pop %v2825
  %v2876 = vtanh.pop %v2826
  %v2877 = vtanh.pop %v2827
  %v2878 = vtanh.pop %v2828
  %v2879 = vtanh.pop %v2829
  %v2880 = vtanh.pop %v2830
  %v2881 = vtanh.pop %v2831
  %v2882 = vtanh.pop %v2832
  %v2883 = vtanh.pop %v2833
  %v2884 = vtanh.pop %v2834
  %v2885 = vtanh.pop %v2835
  %v2886 = vtanh.pop %v2836
  %v2887 = vtanh.pop %v2837
  %2888 = vst.msk [vmem:[#allocation3 + $0x8] sm:$0xff] %vm2357, %v2838
  %2889 = vst.msk [vmem:[#allocation3 + $0x10] sm:$0xff] %vm2357, %v2839
  %2890 = vst.msk [vmem:[#allocation3 + $0x18] sm:$0xff] %vm2357, %v2840
  %2891 = vst.msk [vmem:[#allocation3 + $0x20] sm:$0xff] %vm2357, %v2841
  %2892 = vst.msk [vmem:[#allocation3 + $0x28] sm:$0xff] %vm2357, %v2842
  %2893 = vst.msk [vmem:[#allocation3 + $0x30] sm:$0xff] %vm2357, %v2843
  %2894 = vst.msk [vmem:[#allocation3 + $0x38] sm:$0xff] %vm2357, %v2844
  %2895 = vst.msk [vmem:[#allocation3 + $0x40] sm:$0xff] %vm2357, %v2845
  %2896 = vst.msk [vmem:[#allocation3 + $0x48] sm:$0xff] %vm2357, %v2846
  %2897 = vst.msk [vmem:[#allocation3 + $0x50] sm:$0xff] %vm2357, %v2847
  %2898 = vst.msk [vmem:[#allocation3 + $0x58] sm:$0xff] %vm2357, %v2848
  %2899 = vst.msk [vmem:[#allocation3 + $0x60] sm:$0xff] %vm2357, %v2849
  %2900 = vst.msk [vmem:[#allocation3 + $0x68] sm:$0xff] %vm2357, %v2850
  %2901 = vst.msk [vmem:[#allocation3 + $0x70] sm:$0xff] %vm2357, %v2851
  %2902 = vst.msk [vmem:[#allocation3 + $0x78] sm:$0xff] %vm2357, %v2852
  %2903 = vst.msk [vmem:[#allocation3 + $0x80] sm:$0xff] %vm2357, %v2853
  %2904 = vst.msk [vmem:[#allocation3 + $0x88] sm:$0xff] %vm2357, %v2854
  %2905 = vst.msk [vmem:[#allocation3 + $0x90] sm:$0xff] %vm2357, %v2855
  %2906 = vst.msk [vmem:[#allocation3 + $0x98] sm:$0xff] %vm2357, %v2856
  %2907 = vst.msk [vmem:[#allocation3 + $0xa0] sm:$0xff] %vm2357, %v2857
  %2908 = vst.msk [vmem:[#allocation3 + $0xa8] sm:$0xff] %vm2357, %v2858
  %2909 = vst.msk [vmem:[#allocation3 + $0xb0] sm:$0xff] %vm2357, %v2859
  %2910 = vst.msk [vmem:[#allocation3 + $0xb8] sm:$0xff] %vm2357, %v2860
  %2911 = vst.msk [vmem:[#allocation3 + $0xc0] sm:$0xff] %vm2357, %v2861
  %2912 = vst.msk [vmem:[#allocation3 + $0xc8] sm:$0xff] %vm2357, %v2862
  %2913 = vst.msk [vmem:[#allocation3 + $0xd0] sm:$0xff] %vm2357, %v2863
  %2914 = vst.msk [vmem:[#allocation3 + $0xd8] sm:$0xff] %vm2357, %v2864
  %2915 = vst.msk [vmem:[#allocation3 + $0xe0] sm:$0xff] %vm2357, %v2865
  %2916 = vst.msk [vmem:[#allocation3 + $0xe8] sm:$0xff] %vm2357, %v2866
  %2917 = vst.msk [vmem:[#allocation3 + $0xf0] sm:$0xff] %vm2357, %v2867
  %2918 = vst.msk [vmem:[#allocation3 + $0xf8] sm:$0xff] %vm2357, %v2868
  %2919 = vst.msk [vmem:[#allocation3 + $0x100] sm:$0xff] %vm2357, %v2869
  %2920 = vst.msk [vmem:[#allocation3 + $0x108] sm:$0xff] %vm2357, %v2870
  %2921 = vst.msk [vmem:[#allocation3 + $0x110] sm:$0xff] %vm2357, %v2871
  %2922 = vst.msk [vmem:[#allocation3 + $0x118] sm:$0xff] %vm2357, %v2872
  %2923 = vst.msk [vmem:[#allocation3 + $0x120] sm:$0xff] %vm2357, %v2873
  %2924 = vst.msk [vmem:[#allocation3 + $0x128] sm:$0xff] %vm2357, %v2874
  %2925 = vst.msk [vmem:[#allocation3 + $0x130] sm:$0xff] %vm2357, %v2875
  %2926 = vst.msk [vmem:[#allocation3 + $0x138] sm:$0xff] %vm2357, %v2876
  %2927 = vst.msk [vmem:[#allocation3 + $0x140] sm:$0xff] %vm2357, %v2877
  %2928 = vst.msk [vmem:[#allocation3 + $0x148] sm:$0xff] %vm2357, %v2878
  %2929 = vst.msk [vmem:[#allocation3 + $0x150] sm:$0xff] %vm2357, %v2879
  %2930 = vst.msk [vmem:[#allocation3 + $0x158] sm:$0xff] %vm2357, %v2880
  %2931 = vst.msk [vmem:[#allocation3 + $0x160] sm:$0xff] %vm2357, %v2881
  %2932 = vst.msk [vmem:[#allocation3 + $0x168] sm:$0xff] %vm2357, %v2882
  %2933 = vst.msk [vmem:[#allocation3 + $0x170] sm:$0xff] %vm2357, %v2883
  %2934 = vst.msk [vmem:[#allocation3 + $0x178] sm:$0xff] %vm2357, %v2884
  %2935 = vst.msk [vmem:[#allocation3 + $0x180] sm:$0xff] %vm2357, %v2885
  %2936 = vst.msk [vmem:[#allocation3 + $0x188] sm:$0xff] %vm2357, %v2886
  %2937 = vst.msk [vmem:[#allocation3 + $0x190] sm:$0xff] %vm2357, %v2887
  %2938 = vst.msk [vmem:[#allocation3 + $0x198] sm:$0xff] %vm2357, 0.0
  %vm2939 = vcmp.lt.s32.totalorder %v142, 0
  %v2940 = vsub.s32 0, %v142
  %v2941 = vsel %vm2939, %v2940, %v142
  %v2942 = vmul.u32.u64.compose %v2941, 2748779070
  %v2943 = vextract.low.u32 %v2942
  %v2944 = vextract.high.u32 %v2942
  %v2945 = vshrl.u32 %v2944, 6
  %v2946 = vmul.u32 %v2945, 100
  %v2947 = vsub.s32 %v2941, %v2946
  %v2948 = vsub.s32 0, %v2947
  %v2949 = vsel %vm2939, %v2948, %v2947
  %vm2950 = vcmp.lt.s32.totalorder %v143, 0
  %v2951 = vsub.s32 0, %v143
  %v2952 = vsel %vm2950, %v2951, %v143
  %v2953 = vmul.u32.u64.compose %v2952, 2748779070
  %v2954 = vextract.low.u32 %v2953
  %v2955 = vextract.high.u32 %v2953
  %v2956 = vshrl.u32 %v2955, 6
  %v2957 = vmul.u32 %v2956, 100
  %v2958 = vsub.s32 %v2952, %v2957
  %v2959 = vsub.s32 0, %v2958
  %v2960 = vsel %vm2950, %v2959, %v2958
  %vm2961 = vcmp.lt.s32.totalorder %v144, 0
  %v2962 = vsub.s32 0, %v144
  %v2963 = vsel %vm2961, %v2962, %v144
  %v2964 = vmul.u32.u64.compose %v2963, 2748779070
  %v2965 = vextract.low.u32 %v2964
  %v2966 = vextract.high.u32 %v2964
  %v2967 = vshrl.u32 %v2966, 6
  %v2968 = vmul.u32 %v2967, 100
  %v2969 = vsub.s32 %v2963, %v2968
  %v2970 = vsub.s32 0, %v2969
  %v2971 = vsel %vm2961, %v2970, %v2969
  %vm2972 = vcmp.lt.s32.totalorder %v145, 0
  %v2973 = vsub.s32 0, %v145
  %v2974 = vsel %vm2972, %v2973, %v145
  %v2975 = vmul.u32.u64.compose %v2974, 2748779070
  %v2976 = vextract.low.u32 %v2975
  %v2977 = vextract.high.u32 %v2975
  %v2978 = vshrl.u32 %v2977, 6
  %v2979 = vmul.u32 %v2978, 100
  %v2980 = vsub.s32 %v2974, %v2979
  %v2981 = vsub.s32 0, %v2980
  %v2982 = vsel %vm2972, %v2981, %v2980
  %vm2983 = vcmp.lt.s32.totalorder %v146, 0
  %v2984 = vsub.s32 0, %v146
  %v2985 = vsel %vm2983, %v2984, %v146
  %v2986 = vmul.u32.u64.compose %v2985, 2748779070
  %v2987 = vextract.low.u32 %v2986
  %v2988 = vextract.high.u32 %v2986
  %v2989 = vshrl.u32 %v2988, 6
  %v2990 = vmul.u32 %v2989, 100
  %v2991 = vsub.s32 %v2985, %v2990
  %v2992 = vsub.s32 0, %v2991
  %v2993 = vsel %vm2983, %v2992, %v2991
  %vm2994 = vcmp.lt.s32.totalorder %v147, 0
  %v2995 = vsub.s32 0, %v147
  %v2996 = vsel %vm2994, %v2995, %v147
  %v2997 = vmul.u32.u64.compose %v2996, 2748779070
  %v2998 = vextract.low.u32 %v2997
  %v2999 = vextract.high.u32 %v2997
  %v3000 = vshrl.u32 %v2999, 6
  %v3001 = vmul.u32 %v3000, 100
  %v3002 = vsub.s32 %v2996, %v3001
  %v3003 = vsub.s32 0, %v3002
  %v3004 = vsel %vm2994, %v3003, %v3002
  %vm3005 = vcmp.lt.s32.totalorder %v148, 0
  %v3006 = vsub.s32 0, %v148
  %v3007 = vsel %vm3005, %v3006, %v148
  %v3008 = vmul.u32.u64.compose %v3007, 2748779070
  %v3009 = vextract.low.u32 %v3008
  %v3010 = vextract.high.u32 %v3008
  %v3011 = vshrl.u32 %v3010, 6
  %v3012 = vmul.u32 %v3011, 100
  %v3013 = vsub.s32 %v3007, %v3012
  %v3014 = vsub.s32 0, %v3013
  %v3015 = vsel %vm3005, %v3014, %v3013
  %vm3016 = vcmp.lt.s32.totalorder %v149, 0
  %v3017 = vsub.s32 0, %v149
  %v3018 = vsel %vm3016, %v3017, %v149
  %v3019 = vmul.u32.u64.compose %v3018, 2748779070
  %v3020 = vextract.low.u32 %v3019
  %v3021 = vextract.high.u32 %v3019
  %v3022 = vshrl.u32 %v3021, 6
  %v3023 = vmul.u32 %v3022, 100
  %v3024 = vsub.s32 %v3018, %v3023
  %v3025 = vsub.s32 0, %v3024
  %v3026 = vsel %vm3016, %v3025, %v3024
  %vm3027 = vcmp.lt.s32.totalorder %v150, 0
  %v3028 = vsub.s32 0, %v150
  %v3029 = vsel %vm3027, %v3028, %v150
  %v3030 = vmul.u32.u64.compose %v3029, 2748779070
  %v3031 = vextract.low.u32 %v3030
  %v3032 = vextract.high.u32 %v3030
  %v3033 = vshrl.u32 %v3032, 6
  %v3034 = vmul.u32 %v3033, 100
  %v3035 = vsub.s32 %v3029, %v3034
  %v3036 = vsub.s32 0, %v3035
  %v3037 = vsel %vm3027, %v3036, %v3035
  %vm3038 = vcmp.lt.s32.totalorder %v151, 0
  %v3039 = vsub.s32 0, %v151
  %v3040 = vsel %vm3038, %v3039, %v151
  %v3041 = vmul.u32.u64.compose %v3040, 2748779070
  %v3042 = vextract.low.u32 %v3041
  %v3043 = vextract.high.u32 %v3041
  %v3044 = vshrl.u32 %v3043, 6
  %v3045 = vmul.u32 %v3044, 100
  %v3046 = vsub.s32 %v3040, %v3045
  %v3047 = vsub.s32 0, %v3046
  %v3048 = vsel %vm3038, %v3047, %v3046
  %vm3049 = vcmp.lt.s32.totalorder %v152, 0
  %v3050 = vsub.s32 0, %v152
  %v3051 = vsel %vm3049, %v3050, %v152
  %v3052 = vmul.u32.u64.compose %v3051, 2748779070
  %v3053 = vextract.low.u32 %v3052
  %v3054 = vextract.high.u32 %v3052
  %v3055 = vshrl.u32 %v3054, 6
  %v3056 = vmul.u32 %v3055, 100
  %v3057 = vsub.s32 %v3051, %v3056
  %v3058 = vsub.s32 0, %v3057
  %v3059 = vsel %vm3049, %v3058, %v3057
  %vm3060 = vcmp.lt.s32.totalorder %v153, 0
  %v3061 = vsub.s32 0, %v153
  %v3062 = vsel %vm3060, %v3061, %v153
  %v3063 = vmul.u32.u64.compose %v3062, 2748779070
  %v3064 = vextract.low.u32 %v3063
  %v3065 = vextract.high.u32 %v3063
  %v3066 = vshrl.u32 %v3065, 6
  %v3067 = vmul.u32 %v3066, 100
  %v3068 = vsub.s32 %v3062, %v3067
  %v3069 = vsub.s32 0, %v3068
  %v3070 = vsel %vm3060, %v3069, %v3068
  %vm3071 = vcmp.lt.s32.totalorder %v154, 0
  %v3072 = vsub.s32 0, %v154
  %v3073 = vsel %vm3071, %v3072, %v154
  %v3074 = vmul.u32.u64.compose %v3073, 2748779070
  %v3075 = vextract.low.u32 %v3074
  %v3076 = vextract.high.u32 %v3074
  %v3077 = vshrl.u32 %v3076, 6
  %v3078 = vmul.u32 %v3077, 100
  %v3079 = vsub.s32 %v3073, %v3078
  %v3080 = vsub.s32 0, %v3079
  %v3081 = vsel %vm3071, %v3080, %v3079
  %vm3082 = vcmp.lt.s32.totalorder %v155, 0
  %v3083 = vsub.s32 0, %v155
  %v3084 = vsel %vm3082, %v3083, %v155
  %v3085 = vmul.u32.u64.compose %v3084, 2748779070
  %v3086 = vextract.low.u32 %v3085
  %v3087 = vextract.high.u32 %v3085
  %v3088 = vshrl.u32 %v3087, 6
  %v3089 = vmul.u32 %v3088, 100
  %v3090 = vsub.s32 %v3084, %v3089
  %v3091 = vsub.s32 0, %v3090
  %v3092 = vsel %vm3082, %v3091, %v3090
  %vm3093 = vcmp.lt.s32.totalorder %v156, 0
  %v3094 = vsub.s32 0, %v156
  %v3095 = vsel %vm3093, %v3094, %v156
  %v3096 = vmul.u32.u64.compose %v3095, 2748779070
  %v3097 = vextract.low.u32 %v3096
  %v3098 = vextract.high.u32 %v3096
  %v3099 = vshrl.u32 %v3098, 6
  %v3100 = vmul.u32 %v3099, 100
  %v3101 = vsub.s32 %v3095, %v3100
  %v3102 = vsub.s32 0, %v3101
  %v3103 = vsel %vm3093, %v3102, %v3101
  %vm3104 = vcmp.lt.s32.totalorder %v157, 0
  %v3105 = vsub.s32 0, %v157
  %v3106 = vsel %vm3104, %v3105, %v157
  %v3107 = vmul.u32.u64.compose %v3106, 2748779070
  %v3108 = vextract.low.u32 %v3107
  %v3109 = vextract.high.u32 %v3107
  %v3110 = vshrl.u32 %v3109, 6
  %v3111 = vmul.u32 %v3110, 100
  %v3112 = vsub.s32 %v3106, %v3111
  %v3113 = vsub.s32 0, %v3112
  %v3114 = vsel %vm3104, %v3113, %v3112
  %vm3115 = vcmp.lt.s32.totalorder %v158, 0
  %v3116 = vsub.s32 0, %v158
  %v3117 = vsel %vm3115, %v3116, %v158
  %v3118 = vmul.u32.u64.compose %v3117, 2748779070
  %v3119 = vextract.low.u32 %v3118
  %v3120 = vextract.high.u32 %v3118
  %v3121 = vshrl.u32 %v3120, 6
  %v3122 = vmul.u32 %v3121, 100
  %v3123 = vsub.s32 %v3117, %v3122
  %v3124 = vsub.s32 0, %v3123
  %v3125 = vsel %vm3115, %v3124, %v3123
  %vm3126 = vcmp.lt.s32.totalorder %v159, 0
  %v3127 = vsub.s32 0, %v159
  %v3128 = vsel %vm3126, %v3127, %v159
  %v3129 = vmul.u32.u64.compose %v3128, 2748779070
  %v3130 = vextract.low.u32 %v3129
  %v3131 = vextract.high.u32 %v3129
  %v3132 = vshrl.u32 %v3131, 6
  %v3133 = vmul.u32 %v3132, 100
  %v3134 = vsub.s32 %v3128, %v3133
  %v3135 = vsub.s32 0, %v3134
  %v3136 = vsel %vm3126, %v3135, %v3134
  %vm3137 = vcmp.lt.s32.totalorder %v160, 0
  %v3138 = vsub.s32 0, %v160
  %v3139 = vsel %vm3137, %v3138, %v160
  %v3140 = vmul.u32.u64.compose %v3139, 2748779070
  %v3141 = vextract.low.u32 %v3140
  %v3142 = vextract.high.u32 %v3140
  %v3143 = vshrl.u32 %v3142, 6
  %v3144 = vmul.u32 %v3143, 100
  %v3145 = vsub.s32 %v3139, %v3144
  %v3146 = vsub.s32 0, %v3145
  %v3147 = vsel %vm3137, %v3146, %v3145
  %vm3148 = vcmp.lt.s32.totalorder %v161, 0
  %v3149 = vsub.s32 0, %v161
  %v3150 = vsel %vm3148, %v3149, %v161
  %v3151 = vmul.u32.u64.compose %v3150, 2748779070
  %v3152 = vextract.low.u32 %v3151
  %v3153 = vextract.high.u32 %v3151
  %v3154 = vshrl.u32 %v3153, 6
  %v3155 = vmul.u32 %v3154, 100
  %v3156 = vsub.s32 %v3150, %v3155
  %v3157 = vsub.s32 0, %v3156
  %v3158 = vsel %vm3148, %v3157, %v3156
  %vm3159 = vcmp.lt.s32.totalorder %v162, 0
  %v3160 = vsub.s32 0, %v162
  %v3161 = vsel %vm3159, %v3160, %v162
  %v3162 = vmul.u32.u64.compose %v3161, 2748779070
  %v3163 = vextract.low.u32 %v3162
  %v3164 = vextract.high.u32 %v3162
  %v3165 = vshrl.u32 %v3164, 6
  %v3166 = vmul.u32 %v3165, 100
  %v3167 = vsub.s32 %v3161, %v3166
  %v3168 = vsub.s32 0, %v3167
  %v3169 = vsel %vm3159, %v3168, %v3167
  %vm3170 = vcmp.lt.s32.totalorder %v163, 0
  %v3171 = vsub.s32 0, %v163
  %v3172 = vsel %vm3170, %v3171, %v163
  %v3173 = vmul.u32.u64.compose %v3172, 2748779070
  %v3174 = vextract.low.u32 %v3173
  %v3175 = vextract.high.u32 %v3173
  %v3176 = vshrl.u32 %v3175, 6
  %v3177 = vmul.u32 %v3176, 100
  %v3178 = vsub.s32 %v3172, %v3177
  %v3179 = vsub.s32 0, %v3178
  %v3180 = vsel %vm3170, %v3179, %v3178
  %vm3181 = vcmp.lt.s32.totalorder %v164, 0
  %v3182 = vsub.s32 0, %v164
  %v3183 = vsel %vm3181, %v3182, %v164
  %v3184 = vmul.u32.u64.compose %v3183, 2748779070
  %v3185 = vextract.low.u32 %v3184
  %v3186 = vextract.high.u32 %v3184
  %v3187 = vshrl.u32 %v3186, 6
  %v3188 = vmul.u32 %v3187, 100
  %v3189 = vsub.s32 %v3183, %v3188
  %v3190 = vsub.s32 0, %v3189
  %v3191 = vsel %vm3181, %v3190, %v3189
  %vm3192 = vcmp.lt.s32.totalorder %v165, 0
  %v3193 = vsub.s32 0, %v165
  %v3194 = vsel %vm3192, %v3193, %v165
  %v3195 = vmul.u32.u64.compose %v3194, 2748779070
  %v3196 = vextract.low.u32 %v3195
  %v3197 = vextract.high.u32 %v3195
  %v3198 = vshrl.u32 %v3197, 6
  %v3199 = vmul.u32 %v3198, 100
  %v3200 = vsub.s32 %v3194, %v3199
  %v3201 = vsub.s32 0, %v3200
  %v3202 = vsel %vm3192, %v3201, %v3200
  %vm3203 = vcmp.lt.s32.totalorder %v166, 0
  %v3204 = vsub.s32 0, %v166
  %v3205 = vsel %vm3203, %v3204, %v166
  %v3206 = vmul.u32.u64.compose %v3205, 2748779070
  %v3207 = vextract.low.u32 %v3206
  %v3208 = vextract.high.u32 %v3206
  %v3209 = vshrl.u32 %v3208, 6
  %v3210 = vmul.u32 %v3209, 100
  %v3211 = vsub.s32 %v3205, %v3210
  %v3212 = vsub.s32 0, %v3211
  %v3213 = vsel %vm3203, %v3212, %v3211
  %vm3214 = vcmp.ne.s32.totalorder %v2949, 0
  %vm3215 = vcmp.ne.s32.totalorder %v2960, 0
  %vm3216 = vcmp.ne.s32.totalorder %v2971, 0
  %vm3217 = vcmp.ne.s32.totalorder %v2982, 0
  %vm3218 = vcmp.ne.s32.totalorder %v2993, 0
  %vm3219 = vcmp.ne.s32.totalorder %v3004, 0
  %vm3220 = vcmp.ne.s32.totalorder %v3015, 0
  %vm3221 = vcmp.ne.s32.totalorder %v3026, 0
  %vm3222 = vcmp.ne.s32.totalorder %v3037, 0
  %vm3223 = vcmp.ne.s32.totalorder %v3048, 0
  %vm3224 = vcmp.ne.s32.totalorder %v3059, 0
  %vm3225 = vcmp.ne.s32.totalorder %v3070, 0
  %vm3226 = vcmp.ne.s32.totalorder %v3081, 0
  %vm3227 = vcmp.ne.s32.totalorder %v3092, 0
  %vm3228 = vcmp.ne.s32.totalorder %v3103, 0
  %vm3229 = vcmp.ne.s32.totalorder %v3114, 0
  %vm3230 = vcmp.ne.s32.totalorder %v3125, 0
  %vm3231 = vcmp.ne.s32.totalorder %v3136, 0
  %vm3232 = vcmp.ne.s32.totalorder %v3147, 0
  %vm3233 = vcmp.ne.s32.totalorder %v3158, 0
  %vm3234 = vcmp.ne.s32.totalorder %v3169, 0
  %vm3235 = vcmp.ne.s32.totalorder %v3180, 0
  %vm3236 = vcmp.ne.s32.totalorder %v3191, 0
  %vm3237 = vcmp.ne.s32.totalorder %v3202, 0
  %vm3238 = vcmp.ne.s32.totalorder %v3213, 0
  %vm3239 = vcmp.lt.s32.totalorder %v2949, 0
  %vm3240 = vcmp.lt.s32.totalorder %v2960, 0
  %vm3241 = vcmp.lt.s32.totalorder %v2971, 0
  %vm3242 = vcmp.lt.s32.totalorder %v2982, 0
  %vm3243 = vcmp.lt.s32.totalorder %v2993, 0
  %vm3244 = vcmp.lt.s32.totalorder %v3004, 0
  %vm3245 = vcmp.lt.s32.totalorder %v3015, 0
  %vm3246 = vcmp.lt.s32.totalorder %v3026, 0
  %vm3247 = vcmp.lt.s32.totalorder %v3037, 0
  %vm3248 = vcmp.lt.s32.totalorder %v3048, 0
  %vm3249 = vcmp.lt.s32.totalorder %v3059, 0
  %vm3250 = vcmp.lt.s32.totalorder %v3070, 0
  %vm3251 = vcmp.lt.s32.totalorder %v3081, 0
  %vm3252 = vcmp.lt.s32.totalorder %v3092, 0
  %vm3253 = vcmp.lt.s32.totalorder %v3103, 0
  %vm3254 = vcmp.lt.s32.totalorder %v3114, 0
  %vm3255 = vcmp.lt.s32.totalorder %v3125, 0
  %vm3256 = vcmp.lt.s32.totalorder %v3136, 0
  %vm3257 = vcmp.lt.s32.totalorder %v3147, 0
  %vm3258 = vcmp.lt.s32.totalorder %v3158, 0
  %vm3259 = vcmp.lt.s32.totalorder %v3169, 0
  %vm3260 = vcmp.lt.s32.totalorder %v3180, 0
  %vm3261 = vcmp.lt.s32.totalorder %v3191, 0
  %vm3262 = vcmp.lt.s32.totalorder %v3202, 0
  %vm3263 = vcmp.lt.s32.totalorder %v3213, 0
  %vm3264 = vmand %vm3239, %vm3214
  %vm3265 = vmand %vm3240, %vm3215
  %vm3266 = vmand %vm3241, %vm3216
  %vm3267 = vmand %vm3242, %vm3217
  %vm3268 = vmand %vm3243, %vm3218
  %vm3269 = vmand %vm3244, %vm3219
  %vm3270 = vmand %vm3245, %vm3220
  %vm3271 = vmand %vm3246, %vm3221
  %vm3272 = vmand %vm3247, %vm3222
  %vm3273 = vmand %vm3248, %vm3223
  %vm3274 = vmand %vm3249, %vm3224
  %vm3275 = vmand %vm3250, %vm3225
  %vm3276 = vmand %vm3251, %vm3226
  %vm3277 = vmand %vm3252, %vm3227
  %vm3278 = vmand %vm3253, %vm3228
  %vm3279 = vmand %vm3254, %vm3229
  %vm3280 = vmand %vm3255, %vm3230
  %vm3281 = vmand %vm3256, %vm3231
  %vm3282 = vmand %vm3257, %vm3232
  %vm3283 = vmand %vm3258, %vm3233
  %vm3284 = vmand %vm3259, %vm3234
  %vm3285 = vmand %vm3260, %vm3235
  %vm3286 = vmand %vm3261, %vm3236
  %vm3287 = vmand %vm3262, %vm3237
  %vm3288 = vmand %vm3263, %vm3238
  %v3289 = vadd.s32 %v2949, 100
  %v3290 = vadd.s32 %v2960, 100
  %v3291 = vadd.s32 %v2971, 100
  %v3292 = vadd.s32 %v2982, 100
  %v3293 = vadd.s32 %v2993, 100
  %v3294 = vadd.s32 %v3004, 100
  %v3295 = vadd.s32 %v3015, 100
  %v3296 = vadd.s32 %v3026, 100
  %v3297 = vadd.s32 %v3037, 100
  %v3298 = vadd.s32 %v3048, 100
  %v3299 = vadd.s32 %v3059, 100
  %v3300 = vadd.s32 %v3070, 100
  %v3301 = vadd.s32 %v3081, 100
  %v3302 = vadd.s32 %v3092, 100
  %v3303 = vadd.s32 %v3103, 100
  %v3304 = vadd.s32 %v3114, 100
  %v3305 = vadd.s32 %v3125, 100
  %v3306 = vadd.s32 %v3136, 100
  %v3307 = vadd.s32 %v3147, 100
  %v3308 = vadd.s32 %v3158, 100
  %v3309 = vadd.s32 %v3169, 100
  %v3310 = vadd.s32 %v3180, 100
  %v3311 = vadd.s32 %v3191, 100
  %v3312 = vadd.s32 %v3202, 100
  %v3313 = vadd.s32 %v3213, 100
  %v3314 = vsel %vm3264, %v3289, %v2949
  %v3315 = vsel %vm3265, %v3290, %v2960
  %v3316 = vsel %vm3266, %v3291, %v2971
  %v3317 = vsel %vm3267, %v3292, %v2982
  %v3318 = vsel %vm3268, %v3293, %v2993
  %v3319 = vsel %vm3269, %v3294, %v3004
  %v3320 = vsel %vm3270, %v3295, %v3015
  %v3321 = vsel %vm3271, %v3296, %v3026
  %v3322 = vsel %vm3272, %v3297, %v3037
  %v3323 = vsel %vm3273, %v3298, %v3048
  %v3324 = vsel %vm3274, %v3299, %v3059
  %v3325 = vsel %vm3275, %v3300, %v3070
  %v3326 = vsel %vm3276, %v3301, %v3081
  %v3327 = vsel %vm3277, %v3302, %v3092
  %v3328 = vsel %vm3278, %v3303, %v3103
  %v3329 = vsel %vm3279, %v3304, %v3114
  %v3330 = vsel %vm3280, %v3305, %v3125
  %v3331 = vsel %vm3281, %v3306, %v3136
  %v3332 = vsel %vm3282, %v3307, %v3147
  %v3333 = vsel %vm3283, %v3308, %v3158
  %v3334 = vsel %vm3284, %v3309, %v3169
  %v3335 = vsel %vm3285, %v3310, %v3180
  %v3336 = vsel %vm3286, %v3311, %v3191
  %v3337 = vsel %vm3287, %v3312, %v3202
  %v3338 = vsel %vm3288, %v3313, %v3213
  %s3339 = scalar_lea.vmem [#allocation3], 8
  %v3340 = vld [vmem:[%s3339] ss:$2 sm:$0xff]
  %s3341 = scalar_lea.vmem [#allocation3], 24
  %v3342 = vld [vmem:[%s3341] ss:$2 sm:$0xff]
  %s3343 = scalar_lea.vmem [#allocation3], 40
  %v3344 = vld [vmem:[%s3343] ss:$2 sm:$0xff]
  %s3345 = scalar_lea.vmem [#allocation3], 56
  %v3346 = vld [vmem:[%s3345] ss:$2 sm:$0xff]
  %s3347 = scalar_lea.vmem [#allocation3], 72
  %v3348 = vld [vmem:[%s3347] ss:$2 sm:$0xff]
  %s3349 = scalar_lea.vmem [#allocation3], 88
  %v3350 = vld [vmem:[%s3349] ss:$2 sm:$0xff]
  %s3351 = scalar_lea.vmem [#allocation3], 104
  %v3352 = vld [vmem:[%s3351] ss:$2 sm:$0xff]
  %s3353 = scalar_lea.vmem [#allocation3], 120
  %v3354 = vld [vmem:[%s3353] ss:$2 sm:$0xff]
  %s3355 = scalar_lea.vmem [#allocation3], 136
  %v3356 = vld [vmem:[%s3355] ss:$2 sm:$0xff]
  %s3357 = scalar_lea.vmem [#allocation3], 152
  %v3358 = vld [vmem:[%s3357] ss:$2 sm:$0xff]
  %s3359 = scalar_lea.vmem [#allocation3], 168
  %v3360 = vld [vmem:[%s3359] ss:$2 sm:$0xff]
  %s3361 = scalar_lea.vmem [#allocation3], 184
  %v3362 = vld [vmem:[%s3361] ss:$2 sm:$0xff]
  %s3363 = scalar_lea.vmem [#allocation3], 200
  %v3364 = vld [vmem:[%s3363] ss:$2 sm:$0xff]
  %s3365 = scalar_lea.vmem [#allocation3], 216
  %v3366 = vld [vmem:[%s3365] ss:$2 sm:$0xff]
  %s3367 = scalar_lea.vmem [#allocation3], 232
  %v3368 = vld [vmem:[%s3367] ss:$2 sm:$0xff]
  %s3369 = scalar_lea.vmem [#allocation3], 248
  %v3370 = vld [vmem:[%s3369] ss:$2 sm:$0xff]
  %s3371 = scalar_lea.vmem [#allocation3], 264
  %v3372 = vld [vmem:[%s3371] ss:$2 sm:$0xff]
  %s3373 = scalar_lea.vmem [#allocation3], 280
  %v3374 = vld [vmem:[%s3373] ss:$2 sm:$0xff]
  %s3375 = scalar_lea.vmem [#allocation3], 296
  %v3376 = vld [vmem:[%s3375] ss:$2 sm:$0xff]
  %s3377 = scalar_lea.vmem [#allocation3], 312
  %v3378 = vld [vmem:[%s3377] ss:$2 sm:$0xff]
  %s3379 = scalar_lea.vmem [#allocation3], 328
  %v3380 = vld [vmem:[%s3379] ss:$2 sm:$0xff]
  %s3381 = scalar_lea.vmem [#allocation3], 344
  %v3382 = vld [vmem:[%s3381] ss:$2 sm:$0xff]
  %s3383 = scalar_lea.vmem [#allocation3], 360
  %v3384 = vld [vmem:[%s3383] ss:$2 sm:$0xff]
  %s3385 = scalar_lea.vmem [#allocation3], 376
  %v3386 = vld [vmem:[%s3385] ss:$2 sm:$0xff]
  %s3387 = scalar_lea.vmem [#allocation3], 392
  %v3388 = vld [vmem:[%s3387] ss:$2 sm:$0xff]
  %s3389 = scalar_lea.vmem [#allocation3], 9
  %v3390 = vld [vmem:[%s3389] ss:$2 sm:$0xff]
  %s3391 = scalar_lea.vmem [#allocation3], 25
  %v3392 = vld [vmem:[%s3391] ss:$2 sm:$0xff]
  %s3393 = scalar_lea.vmem [#allocation3], 41
  %v3394 = vld [vmem:[%s3393] ss:$2 sm:$0xff]
  %s3395 = scalar_lea.vmem [#allocation3], 57
  %v3396 = vld [vmem:[%s3395] ss:$2 sm:$0xff]
  %s3397 = scalar_lea.vmem [#allocation3], 73
  %v3398 = vld [vmem:[%s3397] ss:$2 sm:$0xff]
  %s3399 = scalar_lea.vmem [#allocation3], 89
  %v3400 = vld [vmem:[%s3399] ss:$2 sm:$0xff]
  %s3401 = scalar_lea.vmem [#allocation3], 105
  %v3402 = vld [vmem:[%s3401] ss:$2 sm:$0xff]
  %s3403 = scalar_lea.vmem [#allocation3], 121
  %v3404 = vld [vmem:[%s3403] ss:$2 sm:$0xff]
  %s3405 = scalar_lea.vmem [#allocation3], 137
  %v3406 = vld [vmem:[%s3405] ss:$2 sm:$0xff]
  %s3407 = scalar_lea.vmem [#allocation3], 153
  %v3408 = vld [vmem:[%s3407] ss:$2 sm:$0xff]
  %s3409 = scalar_lea.vmem [#allocation3], 169
  %v3410 = vld [vmem:[%s3409] ss:$2 sm:$0xff]
  %s3411 = scalar_lea.vmem [#allocation3], 185
  %v3412 = vld [vmem:[%s3411] ss:$2 sm:$0xff]
  %s3413 = scalar_lea.vmem [#allocation3], 201
  %v3414 = vld [vmem:[%s3413] ss:$2 sm:$0xff]
  %s3415 = scalar_lea.vmem [#allocation3], 217
  %v3416 = vld [vmem:[%s3415] ss:$2 sm:$0xff]
  %s3417 = scalar_lea.vmem [#allocation3], 233
  %v3418 = vld [vmem:[%s3417] ss:$2 sm:$0xff]
  %s3419 = scalar_lea.vmem [#allocation3], 249
  %v3420 = vld [vmem:[%s3419] ss:$2 sm:$0xff]
  %s3421 = scalar_lea.vmem [#allocation3], 265
  %v3422 = vld [vmem:[%s3421] ss:$2 sm:$0xff]
  %s3423 = scalar_lea.vmem [#allocation3], 281
  %v3424 = vld [vmem:[%s3423] ss:$2 sm:$0xff]
  %s3425 = scalar_lea.vmem [#allocation3], 297
  %v3426 = vld [vmem:[%s3425] ss:$2 sm:$0xff]
  %s3427 = scalar_lea.vmem [#allocation3], 313
  %v3428 = vld [vmem:[%s3427] ss:$2 sm:$0xff]
  %s3429 = scalar_lea.vmem [#allocation3], 329
  %v3430 = vld [vmem:[%s3429] ss:$2 sm:$0xff]
  %s3431 = scalar_lea.vmem [#allocation3], 345
  %v3432 = vld [vmem:[%s3431] ss:$2 sm:$0xff]
  %s3433 = scalar_lea.vmem [#allocation3], 361
  %v3434 = vld [vmem:[%s3433] ss:$2 sm:$0xff]
  %s3435 = scalar_lea.vmem [#allocation3], 377
  %v3436 = vld [vmem:[%s3435] ss:$2 sm:$0xff]
  %s3437 = scalar_lea.vmem [#allocation3], 393
  %v3438 = vld [vmem:[%s3437] ss:$2 sm:$0xff]
  %v3439 = vmax.f32 %v3340, %v3390
  %v3440 = vmax.f32 %v3342, %v3392
  %v3441 = vmax.f32 %v3344, %v3394
  %v3442 = vmax.f32 %v3346, %v3396
  %v3443 = vmax.f32 %v3348, %v3398
  %v3444 = vmax.f32 %v3350, %v3400
  %v3445 = vmax.f32 %v3352, %v3402
  %v3446 = vmax.f32 %v3354, %v3404
  %v3447 = vmax.f32 %v3356, %v3406
  %v3448 = vmax.f32 %v3358, %v3408
  %v3449 = vmax.f32 %v3360, %v3410
  %v3450 = vmax.f32 %v3362, %v3412
  %v3451 = vmax.f32 %v3364, %v3414
  %v3452 = vmax.f32 %v3366, %v3416
  %v3453 = vmax.f32 %v3368, %v3418
  %v3454 = vmax.f32 %v3370, %v3420
  %v3455 = vmax.f32 %v3372, %v3422
  %v3456 = vmax.f32 %v3374, %v3424
  %v3457 = vmax.f32 %v3376, %v3426
  %v3458 = vmax.f32 %v3378, %v3428
  %v3459 = vmax.f32 %v3380, %v3430
  %v3460 = vmax.f32 %v3382, %v3432
  %v3461 = vmax.f32 %v3384, %v3434
  %v3462 = vmax.f32 %v3386, %v3436
  %v3463 = vmax.f32 %v3388, %v3438
  %vm3464 = vcmp.eq.s32.totalorder %v3314, 0
  %vm3465 = vcmp.eq.s32.totalorder %v3315, 0
  %vm3466 = vcmp.eq.s32.totalorder %v3316, 0
  %vm3467 = vcmp.eq.s32.totalorder %v3317, 0
  %vm3468 = vcmp.eq.s32.totalorder %v3318, 0
  %vm3469 = vcmp.eq.s32.totalorder %v3319, 0
  %vm3470 = vcmp.eq.s32.totalorder %v3320, 0
  %vm3471 = vcmp.eq.s32.totalorder %v3321, 0
  %vm3472 = vcmp.eq.s32.totalorder %v3322, 0
  %vm3473 = vcmp.eq.s32.totalorder %v3323, 0
  %vm3474 = vcmp.eq.s32.totalorder %v3324, 0
  %vm3475 = vcmp.eq.s32.totalorder %v3325, 0
  %vm3476 = vcmp.eq.s32.totalorder %v3326, 0
  %vm3477 = vcmp.eq.s32.totalorder %v3327, 0
  %vm3478 = vcmp.eq.s32.totalorder %v3328, 0
  %vm3479 = vcmp.eq.s32.totalorder %v3329, 0
  %vm3480 = vcmp.eq.s32.totalorder %v3330, 0
  %vm3481 = vcmp.eq.s32.totalorder %v3331, 0
  %vm3482 = vcmp.eq.s32.totalorder %v3332, 0
  %vm3483 = vcmp.eq.s32.totalorder %v3333, 0
  %vm3484 = vcmp.eq.s32.totalorder %v3334, 0
  %vm3485 = vcmp.eq.s32.totalorder %v3335, 0
  %vm3486 = vcmp.eq.s32.totalorder %v3336, 0
  %vm3487 = vcmp.eq.s32.totalorder %v3337, 0
  %vm3488 = vcmp.eq.s32.totalorder %v3338, 0
  %s3489 = scalar_lea.vmem [#allocation3], 6
  %v3490 = vld [vmem:[%s3489] ss:$2 sm:$0xff]
  %s3491 = scalar_lea.vmem [#allocation3], 22
  %v3492 = vld [vmem:[%s3491] ss:$2 sm:$0xff]
  %s3493 = scalar_lea.vmem [#allocation3], 38
  %v3494 = vld [vmem:[%s3493] ss:$2 sm:$0xff]
  %s3495 = scalar_lea.vmem [#allocation3], 54
  %v3496 = vld [vmem:[%s3495] ss:$2 sm:$0xff]
  %s3497 = scalar_lea.vmem [#allocation3], 70
  %v3498 = vld [vmem:[%s3497] ss:$2 sm:$0xff]
  %s3499 = scalar_lea.vmem [#allocation3], 86
  %v3500 = vld [vmem:[%s3499] ss:$2 sm:$0xff]
  %s3501 = scalar_lea.vmem [#allocation3], 102
  %v3502 = vld [vmem:[%s3501] ss:$2 sm:$0xff]
  %s3503 = scalar_lea.vmem [#allocation3], 118
  %v3504 = vld [vmem:[%s3503] ss:$2 sm:$0xff]
  %s3505 = scalar_lea.vmem [#allocation3], 134
  %v3506 = vld [vmem:[%s3505] ss:$2 sm:$0xff]
  %s3507 = scalar_lea.vmem [#allocation3], 150
  %v3508 = vld [vmem:[%s3507] ss:$2 sm:$0xff]
  %s3509 = scalar_lea.vmem [#allocation3], 166
  %v3510 = vld [vmem:[%s3509] ss:$2 sm:$0xff]
  %s3511 = scalar_lea.vmem [#allocation3], 182
  %v3512 = vld [vmem:[%s3511] ss:$2 sm:$0xff]
  %s3513 = scalar_lea.vmem [#allocation3], 198
  %v3514 = vld [vmem:[%s3513] ss:$2 sm:$0xff]
  %s3515 = scalar_lea.vmem [#allocation3], 214
  %v3516 = vld [vmem:[%s3515] ss:$2 sm:$0xff]
  %s3517 = scalar_lea.vmem [#allocation3], 230
  %v3518 = vld [vmem:[%s3517] ss:$2 sm:$0xff]
  %s3519 = scalar_lea.vmem [#allocation3], 246
  %v3520 = vld [vmem:[%s3519] ss:$2 sm:$0xff]
  %s3521 = scalar_lea.vmem [#allocation3], 262
  %v3522 = vld [vmem:[%s3521] ss:$2 sm:$0xff]
  %s3523 = scalar_lea.vmem [#allocation3], 278
  %v3524 = vld [vmem:[%s3523] ss:$2 sm:$0xff]
  %s3525 = scalar_lea.vmem [#allocation3], 294
  %v3526 = vld [vmem:[%s3525] ss:$2 sm:$0xff]
  %s3527 = scalar_lea.vmem [#allocation3], 310
  %v3528 = vld [vmem:[%s3527] ss:$2 sm:$0xff]
  %s3529 = scalar_lea.vmem [#allocation3], 326
  %v3530 = vld [vmem:[%s3529] ss:$2 sm:$0xff]
  %s3531 = scalar_lea.vmem [#allocation3], 342
  %v3532 = vld [vmem:[%s3531] ss:$2 sm:$0xff]
  %s3533 = scalar_lea.vmem [#allocation3], 358
  %v3534 = vld [vmem:[%s3533] ss:$2 sm:$0xff]
  %s3535 = scalar_lea.vmem [#allocation3], 374
  %v3536 = vld [vmem:[%s3535] ss:$2 sm:$0xff]
  %s3537 = scalar_lea.vmem [#allocation3], 390
  %v3538 = vld [vmem:[%s3537] ss:$2 sm:$0xff]
  %s3539 = scalar_lea.vmem [#allocation3], 7
  %v3540 = vld [vmem:[%s3539] ss:$2 sm:$0xff]
  %s3541 = scalar_lea.vmem [#allocation3], 23
  %v3542 = vld [vmem:[%s3541] ss:$2 sm:$0xff]
  %s3543 = scalar_lea.vmem [#allocation3], 39
  %v3544 = vld [vmem:[%s3543] ss:$2 sm:$0xff]
  %s3545 = scalar_lea.vmem [#allocation3], 55
  %v3546 = vld [vmem:[%s3545] ss:$2 sm:$0xff]
  %s3547 = scalar_lea.vmem [#allocation3], 71
  %v3548 = vld [vmem:[%s3547] ss:$2 sm:$0xff]
  %s3549 = scalar_lea.vmem [#allocation3], 87
  %v3550 = vld [vmem:[%s3549] ss:$2 sm:$0xff]
  %s3551 = scalar_lea.vmem [#allocation3], 103
  %v3552 = vld [vmem:[%s3551] ss:$2 sm:$0xff]
  %s3553 = scalar_lea.vmem [#allocation3], 119
  %v3554 = vld [vmem:[%s3553] ss:$2 sm:$0xff]
  %s3555 = scalar_lea.vmem [#allocation3], 135
  %v3556 = vld [vmem:[%s3555] ss:$2 sm:$0xff]
  %s3557 = scalar_lea.vmem [#allocation3], 151
  %v3558 = vld [vmem:[%s3557] ss:$2 sm:$0xff]
  %s3559 = scalar_lea.vmem [#allocation3], 167
  %v3560 = vld [vmem:[%s3559] ss:$2 sm:$0xff]
  %s3561 = scalar_lea.vmem [#allocation3], 183
  %v3562 = vld [vmem:[%s3561] ss:$2 sm:$0xff]
  %s3563 = scalar_lea.vmem [#allocation3], 199
  %v3564 = vld [vmem:[%s3563] ss:$2 sm:$0xff]
  %s3565 = scalar_lea.vmem [#allocation3], 215
  %v3566 = vld [vmem:[%s3565] ss:$2 sm:$0xff]
  %s3567 = scalar_lea.vmem [#allocation3], 231
  %v3568 = vld [vmem:[%s3567] ss:$2 sm:$0xff]
  %s3569 = scalar_lea.vmem [#allocation3], 247
  %v3570 = vld [vmem:[%s3569] ss:$2 sm:$0xff]
  %s3571 = scalar_lea.vmem [#allocation3], 263
  %v3572 = vld [vmem:[%s3571] ss:$2 sm:$0xff]
  %s3573 = scalar_lea.vmem [#allocation3], 279
  %v3574 = vld [vmem:[%s3573] ss:$2 sm:$0xff]
  %s3575 = scalar_lea.vmem [#allocation3], 295
  %v3576 = vld [vmem:[%s3575] ss:$2 sm:$0xff]
  %s3577 = scalar_lea.vmem [#allocation3], 311
  %v3578 = vld [vmem:[%s3577] ss:$2 sm:$0xff]
  %s3579 = scalar_lea.vmem [#allocation3], 327
  %v3580 = vld [vmem:[%s3579] ss:$2 sm:$0xff]
  %s3581 = scalar_lea.vmem [#allocation3], 343
  %v3582 = vld [vmem:[%s3581] ss:$2 sm:$0xff]
  %s3583 = scalar_lea.vmem [#allocation3], 359
  %v3584 = vld [vmem:[%s3583] ss:$2 sm:$0xff]
  %s3585 = scalar_lea.vmem [#allocation3], 375
  %v3586 = vld [vmem:[%s3585] ss:$2 sm:$0xff]
  %s3587 = scalar_lea.vmem [#allocation3], 391
  %v3588 = vld [vmem:[%s3587] ss:$2 sm:$0xff]
  %v3589 = vmax.f32 %v3490, %v3540
  %v3590 = vmax.f32 %v3492, %v3542
  %v3591 = vmax.f32 %v3494, %v3544
  %v3592 = vmax.f32 %v3496, %v3546
  %v3593 = vmax.f32 %v3498, %v3548
  %v3594 = vmax.f32 %v3500, %v3550
  %v3595 = vmax.f32 %v3502, %v3552
  %v3596 = vmax.f32 %v3504, %v3554
  %v3597 = vmax.f32 %v3506, %v3556
  %v3598 = vmax.f32 %v3508, %v3558
  %v3599 = vmax.f32 %v3510, %v3560
  %v3600 = vmax.f32 %v3512, %v3562
  %v3601 = vmax.f32 %v3514, %v3564
  %v3602 = vmax.f32 %v3516, %v3566
  %v3603 = vmax.f32 %v3518, %v3568
  %v3604 = vmax.f32 %v3520, %v3570
  %v3605 = vmax.f32 %v3522, %v3572
  %v3606 = vmax.f32 %v3524, %v3574
  %v3607 = vmax.f32 %v3526, %v3576
  %v3608 = vmax.f32 %v3528, %v3578
  %v3609 = vmax.f32 %v3530, %v3580
  %v3610 = vmax.f32 %v3532, %v3582
  %v3611 = vmax.f32 %v3534, %v3584
  %v3612 = vmax.f32 %v3536, %v3586
  %v3613 = vmax.f32 %v3538, %v3588
  %v3614 = vsel %vm3464, 1, 0
  %v3615 = vsel %vm3465, 1, 0
  %v3616 = vsel %vm3466, 1, 0
  %v3617 = vsel %vm3467, 1, 0
  %v3618 = vsel %vm3468, 1, 0
  %v3619 = vsel %vm3469, 1, 0
  %v3620 = vsel %vm3470, 1, 0
  %v3621 = vsel %vm3471, 1, 0
  %v3622 = vsel %vm3472, 1, 0
  %v3623 = vsel %vm3473, 1, 0
  %v3624 = vsel %vm3474, 1, 0
  %v3625 = vsel %vm3475, 1, 0
  %v3626 = vsel %vm3476, 1, 0
  %v3627 = vsel %vm3477, 1, 0
  %v3628 = vsel %vm3478, 1, 0
  %v3629 = vsel %vm3479, 1, 0
  %v3630 = vsel %vm3480, 1, 0
  %v3631 = vsel %vm3481, 1, 0
  %v3632 = vsel %vm3482, 1, 0
  %v3633 = vsel %vm3483, 1, 0
  %v3634 = vsel %vm3484, 1, 0
  %v3635 = vsel %vm3485, 1, 0
  %v3636 = vsel %vm3486, 1, 0
  %v3637 = vsel %vm3487, 1, 0
  %v3638 = vsel %vm3488, 1, 0
  %vm3639 = vcmp.eq.s32.totalorder %v3614, 1
  %vm3640 = vcmp.eq.s32.totalorder %v3615, 1
  %vm3641 = vcmp.eq.s32.totalorder %v3616, 1
  %vm3642 = vcmp.eq.s32.totalorder %v3617, 1
  %vm3643 = vcmp.eq.s32.totalorder %v3618, 1
  %vm3644 = vcmp.eq.s32.totalorder %v3619, 1
  %vm3645 = vcmp.eq.s32.totalorder %v3620, 1
  %vm3646 = vcmp.eq.s32.totalorder %v3621, 1
  %vm3647 = vcmp.eq.s32.totalorder %v3622, 1
  %vm3648 = vcmp.eq.s32.totalorder %v3623, 1
  %vm3649 = vcmp.eq.s32.totalorder %v3624, 1
  %vm3650 = vcmp.eq.s32.totalorder %v3625, 1
  %vm3651 = vcmp.eq.s32.totalorder %v3626, 1
  %vm3652 = vcmp.eq.s32.totalorder %v3627, 1
  %vm3653 = vcmp.eq.s32.totalorder %v3628, 1
  %vm3654 = vcmp.eq.s32.totalorder %v3629, 1
  %vm3655 = vcmp.eq.s32.totalorder %v3630, 1
  %vm3656 = vcmp.eq.s32.totalorder %v3631, 1
  %vm3657 = vcmp.eq.s32.totalorder %v3632, 1
  %vm3658 = vcmp.eq.s32.totalorder %v3633, 1
  %vm3659 = vcmp.eq.s32.totalorder %v3634, 1
  %vm3660 = vcmp.eq.s32.totalorder %v3635, 1
  %vm3661 = vcmp.eq.s32.totalorder %v3636, 1
  %vm3662 = vcmp.eq.s32.totalorder %v3637, 1
  %vm3663 = vcmp.eq.s32.totalorder %v3638, 1
  %v3664 = vsel %vm3639, 0.0, %v3589
  %v3665 = vsel %vm3640, 0.0, %v3590
  %v3666 = vsel %vm3641, 0.0, %v3591
  %v3667 = vsel %vm3642, 0.0, %v3592
  %v3668 = vsel %vm3643, 0.0, %v3593
  %v3669 = vsel %vm3644, 0.0, %v3594
  %v3670 = vsel %vm3645, 0.0, %v3595
  %v3671 = vsel %vm3646, 0.0, %v3596
  %v3672 = vsel %vm3647, 0.0, %v3597
  %v3673 = vsel %vm3648, 0.0, %v3598
  %v3674 = vsel %vm3649, 0.0, %v3599
  %v3675 = vsel %vm3650, 0.0, %v3600
  %v3676 = vsel %vm3651, 0.0, %v3601
  %v3677 = vsel %vm3652, 0.0, %v3602
  %v3678 = vsel %vm3653, 0.0, %v3603
  %v3679 = vsel %vm3654, 0.0, %v3604
  %v3680 = vsel %vm3655, 0.0, %v3605
  %v3681 = vsel %vm3656, 0.0, %v3606
  %v3682 = vsel %vm3657, 0.0, %v3607
  %v3683 = vsel %vm3658, 0.0, %v3608
  %v3684 = vsel %vm3659, 0.0, %v3609
  %v3685 = vsel %vm3660, 0.0, %v3610
  %v3686 = vsel %vm3661, 0.0, %v3611
  %v3687 = vsel %vm3662, 0.0, %v3612
  %v3688 = vsel %vm3663, 0.0, %v3613
  %vm3689 = vcmp.eq.s32.totalorder %v3314, 99
  %vm3690 = vcmp.eq.s32.totalorder %v3315, 99
  %vm3691 = vcmp.eq.s32.totalorder %v3316, 99
  %vm3692 = vcmp.eq.s32.totalorder %v3317, 99
  %vm3693 = vcmp.eq.s32.totalorder %v3318, 99
  %vm3694 = vcmp.eq.s32.totalorder %v3319, 99
  %vm3695 = vcmp.eq.s32.totalorder %v3320, 99
  %vm3696 = vcmp.eq.s32.totalorder %v3321, 99
  %vm3697 = vcmp.eq.s32.totalorder %v3322, 99
  %vm3698 = vcmp.eq.s32.totalorder %v3323, 99
  %vm3699 = vcmp.eq.s32.totalorder %v3324, 99
  %vm3700 = vcmp.eq.s32.totalorder %v3325, 99
  %vm3701 = vcmp.eq.s32.totalorder %v3326, 99
  %vm3702 = vcmp.eq.s32.totalorder %v3327, 99
  %vm3703 = vcmp.eq.s32.totalorder %v3328, 99
  %vm3704 = vcmp.eq.s32.totalorder %v3329, 99
  %vm3705 = vcmp.eq.s32.totalorder %v3330, 99
  %vm3706 = vcmp.eq.s32.totalorder %v3331, 99
  %vm3707 = vcmp.eq.s32.totalorder %v3332, 99
  %vm3708 = vcmp.eq.s32.totalorder %v3333, 99
  %vm3709 = vcmp.eq.s32.totalorder %v3334, 99
  %vm3710 = vcmp.eq.s32.totalorder %v3335, 99
  %vm3711 = vcmp.eq.s32.totalorder %v3336, 99
  %vm3712 = vcmp.eq.s32.totalorder %v3337, 99
  %vm3713 = vcmp.eq.s32.totalorder %v3338, 99
  %s3714 = scalar_lea.vmem [#allocation3], 10
  %v3715 = vld [vmem:[%s3714] ss:$2 sm:$0xff]
  %s3716 = scalar_lea.vmem [#allocation3], 26
  %v3717 = vld [vmem:[%s3716] ss:$2 sm:$0xff]
  %s3718 = scalar_lea.vmem [#allocation3], 42
  %v3719 = vld [vmem:[%s3718] ss:$2 sm:$0xff]
  %s3720 = scalar_lea.vmem [#allocation3], 58
  %v3721 = vld [vmem:[%s3720] ss:$2 sm:$0xff]
  %s3722 = scalar_lea.vmem [#allocation3], 74
  %v3723 = vld [vmem:[%s3722] ss:$2 sm:$0xff]
  %s3724 = scalar_lea.vmem [#allocation3], 90
  %v3725 = vld [vmem:[%s3724] ss:$2 sm:$0xff]
  %s3726 = scalar_lea.vmem [#allocation3], 106
  %v3727 = vld [vmem:[%s3726] ss:$2 sm:$0xff]
  %s3728 = scalar_lea.vmem [#allocation3], 122
  %v3729 = vld [vmem:[%s3728] ss:$2 sm:$0xff]
  %s3730 = scalar_lea.vmem [#allocation3], 138
  %v3731 = vld [vmem:[%s3730] ss:$2 sm:$0xff]
  %s3732 = scalar_lea.vmem [#allocation3], 154
  %v3733 = vld [vmem:[%s3732] ss:$2 sm:$0xff]
  %s3734 = scalar_lea.vmem [#allocation3], 170
  %v3735 = vld [vmem:[%s3734] ss:$2 sm:$0xff]
  %s3736 = scalar_lea.vmem [#allocation3], 186
  %v3737 = vld [vmem:[%s3736] ss:$2 sm:$0xff]
  %s3738 = scalar_lea.vmem [#allocation3], 202
  %v3739 = vld [vmem:[%s3738] ss:$2 sm:$0xff]
  %s3740 = scalar_lea.vmem [#allocation3], 218
  %v3741 = vld [vmem:[%s3740] ss:$2 sm:$0xff]
  %s3742 = scalar_lea.vmem [#allocation3], 234
  %v3743 = vld [vmem:[%s3742] ss:$2 sm:$0xff]
  %s3744 = scalar_lea.vmem [#allocation3], 250
  %v3745 = vld [vmem:[%s3744] ss:$2 sm:$0xff]
  %s3746 = scalar_lea.vmem [#allocation3], 266
  %v3747 = vld [vmem:[%s3746] ss:$2 sm:$0xff]
  %s3748 = scalar_lea.vmem [#allocation3], 282
  %v3749 = vld [vmem:[%s3748] ss:$2 sm:$0xff]
  %s3750 = scalar_lea.vmem [#allocation3], 298
  %v3751 = vld [vmem:[%s3750] ss:$2 sm:$0xff]
  %s3752 = scalar_lea.vmem [#allocation3], 314
  %v3753 = vld [vmem:[%s3752] ss:$2 sm:$0xff]
  %s3754 = scalar_lea.vmem [#allocation3], 330
  %v3755 = vld [vmem:[%s3754] ss:$2 sm:$0xff]
  %s3756 = scalar_lea.vmem [#allocation3], 346
  %v3757 = vld [vmem:[%s3756] ss:$2 sm:$0xff]
  %s3758 = scalar_lea.vmem [#allocation3], 362
  %v3759 = vld [vmem:[%s3758] ss:$2 sm:$0xff]
  %s3760 = scalar_lea.vmem [#allocation3], 378
  %v3761 = vld [vmem:[%s3760] ss:$2 sm:$0xff]
  %s3762 = scalar_lea.vmem [#allocation3], 394
  %v3763 = vld [vmem:[%s3762] ss:$2 sm:$0xff]
  %s3764 = scalar_lea.vmem [#allocation3], 11
  %v3765 = vld [vmem:[%s3764] ss:$2 sm:$0xff]
  %s3766 = scalar_lea.vmem [#allocation3], 27
  %v3767 = vld [vmem:[%s3766] ss:$2 sm:$0xff]
  %s3768 = scalar_lea.vmem [#allocation3], 43
  %v3769 = vld [vmem:[%s3768] ss:$2 sm:$0xff]
  %s3770 = scalar_lea.vmem [#allocation3], 59
  %v3771 = vld [vmem:[%s3770] ss:$2 sm:$0xff]
  %s3772 = scalar_lea.vmem [#allocation3], 75
  %v3773 = vld [vmem:[%s3772] ss:$2 sm:$0xff]
  %s3774 = scalar_lea.vmem [#allocation3], 91
  %v3775 = vld [vmem:[%s3774] ss:$2 sm:$0xff]
  %s3776 = scalar_lea.vmem [#allocation3], 107
  %v3777 = vld [vmem:[%s3776] ss:$2 sm:$0xff]
  %s3778 = scalar_lea.vmem [#allocation3], 123
  %v3779 = vld [vmem:[%s3778] ss:$2 sm:$0xff]
  %s3780 = scalar_lea.vmem [#allocation3], 139
  %v3781 = vld [vmem:[%s3780] ss:$2 sm:$0xff]
  %s3782 = scalar_lea.vmem [#allocation3], 155
  %v3783 = vld [vmem:[%s3782] ss:$2 sm:$0xff]
  %s3784 = scalar_lea.vmem [#allocation3], 171
  %v3785 = vld [vmem:[%s3784] ss:$2 sm:$0xff]
  %s3786 = scalar_lea.vmem [#allocation3], 187
  %v3787 = vld [vmem:[%s3786] ss:$2 sm:$0xff]
  %s3788 = scalar_lea.vmem [#allocation3], 203
  %v3789 = vld [vmem:[%s3788] ss:$2 sm:$0xff]
  %s3790 = scalar_lea.vmem [#allocation3], 219
  %v3791 = vld [vmem:[%s3790] ss:$2 sm:$0xff]
  %s3792 = scalar_lea.vmem [#allocation3], 235
  %v3793 = vld [vmem:[%s3792] ss:$2 sm:$0xff]
  %s3794 = scalar_lea.vmem [#allocation3], 251
  %v3795 = vld [vmem:[%s3794] ss:$2 sm:$0xff]
  %s3796 = scalar_lea.vmem [#allocation3], 267
  %v3797 = vld [vmem:[%s3796] ss:$2 sm:$0xff]
  %s3798 = scalar_lea.vmem [#allocation3], 283
  %v3799 = vld [vmem:[%s3798] ss:$2 sm:$0xff]
  %s3800 = scalar_lea.vmem [#allocation3], 299
  %v3801 = vld [vmem:[%s3800] ss:$2 sm:$0xff]
  %s3802 = scalar_lea.vmem [#allocation3], 315
  %v3803 = vld [vmem:[%s3802] ss:$2 sm:$0xff]
  %s3804 = scalar_lea.vmem [#allocation3], 331
  %v3805 = vld [vmem:[%s3804] ss:$2 sm:$0xff]
  %s3806 = scalar_lea.vmem [#allocation3], 347
  %v3807 = vld [vmem:[%s3806] ss:$2 sm:$0xff]
  %s3808 = scalar_lea.vmem [#allocation3], 363
  %v3809 = vld [vmem:[%s3808] ss:$2 sm:$0xff]
  %s3810 = scalar_lea.vmem [#allocation3], 379
  %v3811 = vld [vmem:[%s3810] ss:$2 sm:$0xff]
  %s3812 = scalar_lea.vmem [#allocation3], 395
  %v3813 = vld [vmem:[%s3812] ss:$2 sm:$0xff]
  %v3814 = vmax.f32 %v3715, %v3765
  %v3815 = vmax.f32 %v3717, %v3767
  %v3816 = vmax.f32 %v3719, %v3769
  %v3817 = vmax.f32 %v3721, %v3771
  %v3818 = vmax.f32 %v3723, %v3773
  %v3819 = vmax.f32 %v3725, %v3775
  %v3820 = vmax.f32 %v3727, %v3777
  %v3821 = vmax.f32 %v3729, %v3779
  %v3822 = vmax.f32 %v3731, %v3781
  %v3823 = vmax.f32 %v3733, %v3783
  %v3824 = vmax.f32 %v3735, %v3785
  %v3825 = vmax.f32 %v3737, %v3787
  %v3826 = vmax.f32 %v3739, %v3789
  %v3827 = vmax.f32 %v3741, %v3791
  %v3828 = vmax.f32 %v3743, %v3793
  %v3829 = vmax.f32 %v3745, %v3795
  %v3830 = vmax.f32 %v3747, %v3797
  %v3831 = vmax.f32 %v3749, %v3799
  %v3832 = vmax.f32 %v3751, %v3801
  %v3833 = vmax.f32 %v3753, %v3803
  %v3834 = vmax.f32 %v3755, %v3805
  %v3835 = vmax.f32 %v3757, %v3807
  %v3836 = vmax.f32 %v3759, %v3809
  %v3837 = vmax.f32 %v3761, %v3811
  %v3838 = vmax.f32 %v3763, %v3813
  %v3839 = vsel %vm3689, 1, 0
  %v3840 = vsel %vm3690, 1, 0
  %v3841 = vsel %vm3691, 1, 0
  %v3842 = vsel %vm3692, 1, 0
  %v3843 = vsel %vm3693, 1, 0
  %v3844 = vsel %vm3694, 1, 0
  %v3845 = vsel %vm3695, 1, 0
  %v3846 = vsel %vm3696, 1, 0
  %v3847 = vsel %vm3697, 1, 0
  %v3848 = vsel %vm3698, 1, 0
  %v3849 = vsel %vm3699, 1, 0
  %v3850 = vsel %vm3700, 1, 0
  %v3851 = vsel %vm3701, 1, 0
  %v3852 = vsel %vm3702, 1, 0
  %v3853 = vsel %vm3703, 1, 0
  %v3854 = vsel %vm3704, 1, 0
  %v3855 = vsel %vm3705, 1, 0
  %v3856 = vsel %vm3706, 1, 0
  %v3857 = vsel %vm3707, 1, 0
  %v3858 = vsel %vm3708, 1, 0
  %v3859 = vsel %vm3709, 1, 0
  %v3860 = vsel %vm3710, 1, 0
  %v3861 = vsel %vm3711, 1, 0
  %v3862 = vsel %vm3712, 1, 0
  %v3863 = vsel %vm3713, 1, 0
  %vm3864 = vcmp.eq.s32.totalorder %v3839, 1
  %vm3865 = vcmp.eq.s32.totalorder %v3840, 1
  %vm3866 = vcmp.eq.s32.totalorder %v3841, 1
  %vm3867 = vcmp.eq.s32.totalorder %v3842, 1
  %vm3868 = vcmp.eq.s32.totalorder %v3843, 1
  %vm3869 = vcmp.eq.s32.totalorder %v3844, 1
  %vm3870 = vcmp.eq.s32.totalorder %v3845, 1
  %vm3871 = vcmp.eq.s32.totalorder %v3846, 1
  %vm3872 = vcmp.eq.s32.totalorder %v3847, 1
  %vm3873 = vcmp.eq.s32.totalorder %v3848, 1
  %vm3874 = vcmp.eq.s32.totalorder %v3849, 1
  %vm3875 = vcmp.eq.s32.totalorder %v3850, 1
  %vm3876 = vcmp.eq.s32.totalorder %v3851, 1
  %vm3877 = vcmp.eq.s32.totalorder %v3852, 1
  %vm3878 = vcmp.eq.s32.totalorder %v3853, 1
  %vm3879 = vcmp.eq.s32.totalorder %v3854, 1
  %vm3880 = vcmp.eq.s32.totalorder %v3855, 1
  %vm3881 = vcmp.eq.s32.totalorder %v3856, 1
  %vm3882 = vcmp.eq.s32.totalorder %v3857, 1
  %vm3883 = vcmp.eq.s32.totalorder %v3858, 1
  %vm3884 = vcmp.eq.s32.totalorder %v3859, 1
  %vm3885 = vcmp.eq.s32.totalorder %v3860, 1
  %vm3886 = vcmp.eq.s32.totalorder %v3861, 1
  %vm3887 = vcmp.eq.s32.totalorder %v3862, 1
  %vm3888 = vcmp.eq.s32.totalorder %v3863, 1
  %v3889 = vsel %vm3864, 0.0, %v3814
  %v3890 = vsel %vm3865, 0.0, %v3815
  %v3891 = vsel %vm3866, 0.0, %v3816
  %v3892 = vsel %vm3867, 0.0, %v3817
  %v3893 = vsel %vm3868, 0.0, %v3818
  %v3894 = vsel %vm3869, 0.0, %v3819
  %v3895 = vsel %vm3870, 0.0, %v3820
  %v3896 = vsel %vm3871, 0.0, %v3821
  %v3897 = vsel %vm3872, 0.0, %v3822
  %v3898 = vsel %vm3873, 0.0, %v3823
  %v3899 = vsel %vm3874, 0.0, %v3824
  %v3900 = vsel %vm3875, 0.0, %v3825
  %v3901 = vsel %vm3876, 0.0, %v3826
  %v3902 = vsel %vm3877, 0.0, %v3827
  %v3903 = vsel %vm3878, 0.0, %v3828
  %v3904 = vsel %vm3879, 0.0, %v3829
  %v3905 = vsel %vm3880, 0.0, %v3830
  %v3906 = vsel %vm3881, 0.0, %v3831
  %v3907 = vsel %vm3882, 0.0, %v3832
  %v3908 = vsel %vm3883, 0.0, %v3833
  %v3909 = vsel %vm3884, 0.0, %v3834
  %v3910 = vsel %vm3885, 0.0, %v3835
  %v3911 = vsel %vm3886, 0.0, %v3836
  %v3912 = vsel %vm3887, 0.0, %v3837
  %v3913 = vsel %vm3888, 0.0, %v3838
  %v3914 = vld [vmem:[%s4] sm:$0xff]
  %v3915 = vld [vmem:[%s4 + $0x8] sm:$0x3]
  %s3916 = scalar_lea.vmem %s4, 16
  %v3917 = vld [vmem:[%s3916] sm:$0xff]
  %v3918 = vld [vmem:[%s3916 + $0x8] sm:$0x3]
  %v3920 = vsel %vm2357, %v3439, 0
  %v3923 = vsel %vm2357, %v3440, 0
  %v3926 = vsel %vm2357, %v3441, 0
  %v3929 = vsel %vm2357, %v3442, 0
  %v3932 = vsel %vm2357, %v3443, 0
  %v3935 = vsel %vm2357, %v3444, 0
  %v3938 = vsel %vm2357, %v3445, 0
  %v3941 = vsel %vm2357, %v3446, 0
  %v3944 = vsel %vm2357, %v3447, 0
  %v3947 = vsel %vm2357, %v3448, 0
  %v3950 = vsel %vm2357, %v3449, 0
  %v3953 = vsel %vm2357, %v3450, 0
  %v3956 = vsel %vm2357, %v3451, 0
  %v3959 = vsel %vm2357, %v3452, 0
  %v3962 = vsel %vm2357, %v3453, 0
  %v3965 = vsel %vm2357, %v3454, 0
  %v3968 = vsel %vm2357, %v3455, 0
  %v3971 = vsel %vm2357, %v3456, 0
  %v3974 = vsel %vm2357, %v3457, 0
  %v3977 = vsel %vm2357, %v3458, 0
  %v3980 = vsel %vm2357, %v3459, 0
  %v3983 = vsel %vm2357, %v3460, 0
  %v3986 = vsel %vm2357, %v3461, 0
  %v3989 = vsel %vm2357, %v3462, 0
  %v3992 = vsel %vm2357, %v3463, 0
  %vm3994 = vcmask 1041408
  %v3996 = vsel %vm3994, %v3918, 0
  %3998 = vmatprep.subr.mxu0 0.0
  %3999 = vmatpush1.msra.mxu0 %v3917
  %4000 = vmatprep.subr.mxu0 0.0
  %4001 = vmatpush1.msra.mxu0 %v3996
  %4002 = vmatprep.subr.mxu0 0.0
  %4003 = vmatpush1.msra.mxu0 0.0
  %4004 = vmatprep.subr.mxu0 0.0
  %4005 = vmatpush1.msra.mxu0 0.0
  %4006 = vmatprep.subr.mxu0 0.0
  %4007 = vmatpush1.msra.mxu0 0.0
  %4008 = vmatprep.subr.mxu0 0.0
  %4009 = vmatpush1.msra.mxu0 0.0
  %4010 = vmatprep.subr.mxu0 0.0
  %4011 = vmatpush1.msra.mxu0 0.0
  %4012 = vmatprep.subr.mxu0 0.0
  %4013 = vmatpush1.msra.mxu0 0.0
  %4014 = vmatprep.subr.mxu0 0.0
  %4015 = vmatpush1.msra.mxu0 0.0
  %4016 = vmatprep.subr.mxu0 0.0
  %4017 = vmatpush1.msra.mxu0 0.0
  %4018 = vmatprep.subr.mxu0 0.0
  %4019 = vmatpush1.msra.mxu0 0.0
  %4020 = vmatprep.subr.mxu0 0.0
  %4021 = vmatpush1.msra.mxu0 0.0
  %4022 = vmatprep.subr.mxu0 0.0
  %4023 = vmatpush1.msra.mxu0 0.0
  %4024 = vmatprep.subr.mxu0 0.0
  %4025 = vmatpush1.msra.mxu0 0.0
  %4026 = vmatprep.subr.mxu0 0.0
  %4027 = vmatpush1.msra.mxu0 0.0
  %4028 = vmatprep.subr.mxu0 0.0
  %4029 = vmatpush1.msra.mxu0 0.0
  %4030 = vmatprep.subr.mxu0 0.0
  %4031 = vmatpush1.msra.mxu0 0.0
  %4032 = vmatprep.subr.mxu0 0.0
  %4033 = vmatpush1.msra.mxu0 0.0
  %4034 = vmatprep.subr.mxu0 0.0
  %4035 = vmatpush1.msra.mxu0 0.0
  %4036 = vmatprep.subr.mxu0 0.0
  %4037 = vmatpush1.msra.mxu0 0.0
  %4038 = vmatprep.subr.mxu0 0.0
  %4039 = vmatpush1.msra.mxu0 0.0
  %4040 = vmatprep.subr.mxu0 0.0
  %4041 = vmatpush1.msra.mxu0 0.0
  %4042 = vmatprep.subr.mxu0 0.0
  %4043 = vmatpush1.msra.mxu0 0.0
  %4044 = vmatprep.subr.mxu0 0.0
  %4045 = vmatpush1.msra.mxu0 0.0
  %4046 = vmatprep.subr.mxu0 0.0
  %4047 = vmatpush1.msra.mxu0 0.0
  %4048 = vmatprep.subr.mxu0 0.0
  %4049 = vmatpush1.msra.mxu0 0.0
  %4050 = vmatprep.subr.mxu0 0.0
  %4051 = vmatpush1.msra.mxu0 0.0
  %4052 = vmatprep.subr.mxu0 0.0
  %4053 = vmatpush1.msra.mxu0 0.0
  %4054 = vmatprep.subr.mxu0 0.0
  %4055 = vmatpush1.msra.mxu0 0.0
  %4056 = vmatprep.subr.mxu0 0.0
  %4057 = vmatpush1.msra.mxu0 0.0
  %4058 = vmatprep.subr.mxu0 0.0
  %4059 = vmatpush1.msra.mxu0 0.0
  %4060 = vmatprep.subr.mxu0 0.0
  %4061 = vmatpush1.msra.mxu0 0.0
  %4062 = vmatprep.mubr.f32.mxu0 0.0
  %4063 = vmatmul.mubr.f32.gmra.mrb[0].mxu0 %v3920
  %v4064 = vpop.f32.mrb[0].mxu0
  %v4065 = vadd.f32 0.0, %v4064
  %v4066 = vpop.f32.mrb[0].mxu0
  %4067 = vmatprep.mubr.f32.mxu0 0.0
  %4068 = vmatmul.mubr.f32.gmra.mrb[0].mxu0 %v3923
  %v4069 = vpop.f32.mrb[0].mxu0
  %v4070 = vadd.f32 0.0, %v4069
  %v4071 = vpop.f32.mrb[0].mxu0
  %4072 = vmatprep.mubr.f32.mxu0 0.0
  %4073 = vmatmul.mubr.f32.gmra.mrb[0].mxu0 %v3926
  %v4074 = vpop.f32.mrb[0].mxu0
  %v4075 = vadd.f32 0.0, %v4074
  %v4076 = vpop.f32.mrb[0].mxu0
  %4077 = vmatprep.mubr.f32.mxu0 0.0
  %4078 = vmatmul.mubr.f32.gmra.mrb[0].mxu0 %v3929
  %v4079 = vpop.f32.mrb[0].mxu0
  %v4080 = vadd.f32 0.0, %v4079
  %v4081 = vpop.f32.mrb[0].mxu0
  %4082 = vmatprep.mubr.f32.mxu0 0.0
  %4083 = vmatmul.mubr.f32.gmra.mrb[0].mxu0 %v3932
  %v4084 = vpop.f32.mrb[0].mxu0
  %v4085 = vadd.f32 0.0, %v4084
  %v4086 = vpop.f32.mrb[0].mxu0
  %4087 = vmatprep.mubr.f32.mxu0 0.0
  %4088 = vmatmul.mubr.f32.gmra.mrb[0].mxu0 %v3935
  %v4089 = vpop.f32.mrb[0].mxu0
  %v4090 = vadd.f32 0.0, %v4089
  %v4091 = vpop.f32.mrb[0].mxu0
  %4092 = vmatprep.mubr.f32.mxu0 0.0
  %4093 = vmatmul.mubr.f32.gmra.mrb[0].mxu0 %v3938
  %v4094 = vpop.f32.mrb[0].mxu0
  %v4095 = vadd.f32 0.0, %v4094
  %v4096 = vpop.f32.mrb[0].mxu0
  %4097 = vmatprep.mubr.f32.mxu0 0.0
  %4098 = vmatmul.mubr.f32.gmra.mrb[0].mxu0 %v3941
  %v4099 = vpop.f32.mrb[0].mxu0
  %v4100 = vadd.f32 0.0, %v4099
  %v4101 = vpop.f32.mrb[0].mxu0
  %4102 = vmatprep.mubr.f32.mxu0 0.0
  %4103 = vmatmul.mubr.f32.gmra.mrb[0].mxu0 %v3944
  %v4104 = vpop.f32.mrb[0].mxu0
  %v4105 = vadd.f32 0.0, %v4104
  %v4106 = vpop.f32.mrb[0].mxu0
  %4107 = vmatprep.mubr.f32.mxu0 0.0
  %4108 = vmatmul.mubr.f32.gmra.mrb[0].mxu0 %v3947
  %v4109 = vpop.f32.mrb[0].mxu0
  %v4110 = vadd.f32 0.0, %v4109
  %v4111 = vpop.f32.mrb[0].mxu0
  %4112 = vmatprep.mubr.f32.mxu0 0.0
  %4113 = vmatmul.mubr.f32.gmra.mrb[0].mxu0 %v3950
  %v4114 = vpop.f32.mrb[0].mxu0
  %v4115 = vadd.f32 0.0, %v4114
  %v4116 = vpop.f32.mrb[0].mxu0
  %4117 = vmatprep.mubr.f32.mxu0 0.0
  %4118 = vmatmul.mubr.f32.gmra.mrb[0].mxu0 %v3953
  %v4119 = vpop.f32.mrb[0].mxu0
  %v4120 = vadd.f32 0.0, %v4119
  %v4121 = vpop.f32.mrb[0].mxu0
  %4122 = vmatprep.mubr.f32.mxu0 0.0
  %4123 = vmatmul.mubr.f32.gmra.mrb[0].mxu0 %v3956
  %v4124 = vpop.f32.mrb[0].mxu0
  %v4125 = vadd.f32 0.0, %v4124
  %v4126 = vpop.f32.mrb[0].mxu0
  %4127 = vmatprep.mubr.f32.mxu0 0.0
  %4128 = vmatmul.mubr.f32.gmra.mrb[0].mxu0 %v3959
  %v4129 = vpop.f32.mrb[0].mxu0
  %v4130 = vadd.f32 0.0, %v4129
  %v4131 = vpop.f32.mrb[0].mxu0
  %4132 = vmatprep.mubr.f32.mxu0 0.0
  %4133 = vmatmul.mubr.f32.gmra.mrb[0].mxu0 %v3962
  %v4134 = vpop.f32.mrb[0].mxu0
  %v4135 = vadd.f32 0.0, %v4134
  %v4136 = vpop.f32.mrb[0].mxu0
  %4137 = vmatprep.mubr.f32.mxu0 0.0
  %4138 = vmatmul.mubr.f32.gmra.mrb[0].mxu0 %v3965
  %v4139 = vpop.f32.mrb[0].mxu0
  %v4140 = vadd.f32 0.0, %v4139
  %v4141 = vpop.f32.mrb[0].mxu0
  %4142 = vmatprep.mubr.f32.mxu0 0.0
  %4143 = vmatmul.mubr.f32.gmra.mrb[0].mxu0 %v3968
  %v4144 = vpop.f32.mrb[0].mxu0
  %v4145 = vadd.f32 0.0, %v4144
  %v4146 = vpop.f32.mrb[0].mxu0
  %4147 = vmatprep.mubr.f32.mxu0 0.0
  %4148 = vmatmul.mubr.f32.gmra.mrb[0].mxu0 %v3971
  %v4149 = vpop.f32.mrb[0].mxu0
  %v4150 = vadd.f32 0.0, %v4149
  %v4151 = vpop.f32.mrb[0].mxu0
  %4152 = vmatprep.mubr.f32.mxu0 0.0
  %4153 = vmatmul.mubr.f32.gmra.mrb[0].mxu0 %v3974
  %v4154 = vpop.f32.mrb[0].mxu0
  %v4155 = vadd.f32 0.0, %v4154
  %v4156 = vpop.f32.mrb[0].mxu0
  %4157 = vmatprep.mubr.f32.mxu0 0.0
  %4158 = vmatmul.mubr.f32.gmra.mrb[0].mxu0 %v3977
  %v4159 = vpop.f32.mrb[0].mxu0
  %v4160 = vadd.f32 0.0, %v4159
  %v4161 = vpop.f32.mrb[0].mxu0
  %4162 = vmatprep.mubr.f32.mxu0 0.0
  %4163 = vmatmul.mubr.f32.gmra.mrb[0].mxu0 %v3980
  %v4164 = vpop.f32.mrb[0].mxu0
  %v4165 = vadd.f32 0.0, %v4164
  %v4166 = vpop.f32.mrb[0].mxu0
  %4167 = vmatprep.mubr.f32.mxu0 0.0
  %4168 = vmatmul.mubr.f32.gmra.mrb[0].mxu0 %v3983
  %v4169 = vpop.f32.mrb[0].mxu0
  %v4170 = vadd.f32 0.0, %v4169
  %v4171 = vpop.f32.mrb[0].mxu0
  %4172 = vmatprep.mubr.f32.mxu0 0.0
  %4173 = vmatmul.mubr.f32.gmra.mrb[0].mxu0 %v3986
  %v4174 = vpop.f32.mrb[0].mxu0
  %v4175 = vadd.f32 0.0, %v4174
  %v4176 = vpop.f32.mrb[0].mxu0
  %4177 = vmatprep.mubr.f32.mxu0 0.0
  %4178 = vmatmul.mubr.f32.gmra.mrb[0].mxu0 %v3989
  %v4179 = vpop.f32.mrb[0].mxu0
  %v4180 = vadd.f32 0.0, %v4179
  %v4181 = vpop.f32.mrb[0].mxu0
  %4182 = vmatprep.mubr.f32.mxu0 0.0
  %4183 = vmatmul.mubr.f32.gmra.mrb[0].mxu0 %v3992
  %v4184 = vpop.f32.mrb[0].mxu0
  %v4185 = vadd.f32 0.0, %v4184
  %v4186 = vpop.f32.mrb[0].mxu0
  %4187 = vdwg.mxu0
  %v4189 = vsel %vm2357, %v3664, 0
  %v4192 = vsel %vm2357, %v3665, 0
  %v4195 = vsel %vm2357, %v3666, 0
  %v4198 = vsel %vm2357, %v3667, 0
  %v4201 = vsel %vm2357, %v3668, 0
  %v4204 = vsel %vm2357, %v3669, 0
  %v4207 = vsel %vm2357, %v3670, 0
  %v4210 = vsel %vm2357, %v3671, 0
  %v4213 = vsel %vm2357, %v3672, 0
  %v4216 = vsel %vm2357, %v3673, 0
  %v4219 = vsel %vm2357, %v3674, 0
  %v4222 = vsel %vm2357, %v3675, 0
  %v4225 = vsel %vm2357, %v3676, 0
  %v4228 = vsel %vm2357, %v3677, 0
  %v4231 = vsel %vm2357, %v3678, 0
  %v4234 = vsel %vm2357, %v3679, 0
  %v4237 = vsel %vm2357, %v3680, 0
  %v4240 = vsel %vm2357, %v3681, 0
  %v4243 = vsel %vm2357, %v3682, 0
  %v4246 = vsel %vm2357, %v3683, 0
  %v4249 = vsel %vm2357, %v3684, 0
  %v4252 = vsel %vm2357, %v3685, 0
  %v4255 = vsel %vm2357, %v3686, 0
  %v4258 = vsel %vm2357, %v3687, 0
  %v4261 = vsel %vm2357, %v3688, 0
  %v4264 = vsel %vm3994, %v3915, 0
  %4266 = vmatprep.subr.mxu0 0.0
  %4267 = vmatpush1.msra.mxu0 %v3914
  %4268 = vmatprep.subr.mxu0 0.0
  %4269 = vmatpush1.msra.mxu0 %v4264
  %4270 = vmatprep.subr.mxu0 0.0
  %4271 = vmatpush1.msra.mxu0 0.0
  %4272 = vmatprep.subr.mxu0 0.0
  %4273 = vmatpush1.msra.mxu0 0.0
  %4274 = vmatprep.subr.mxu0 0.0
  %4275 = vmatpush1.msra.mxu0 0.0
  %4276 = vmatprep.subr.mxu0 0.0
  %4277 = vmatpush1.msra.mxu0 0.0
  %4278 = vmatprep.subr.mxu0 0.0
  %4279 = vmatpush1.msra.mxu0 0.0
  %4280 = vmatprep.subr.mxu0 0.0
  %4281 = vmatpush1.msra.mxu0 0.0
  %4282 = vmatprep.subr.mxu0 0.0
  %4283 = vmatpush1.msra.mxu0 0.0
  %4284 = vmatprep.subr.mxu0 0.0
  %4285 = vmatpush1.msra.mxu0 0.0
  %4286 = vmatprep.subr.mxu0 0.0
  %4287 = vmatpush1.msra.mxu0 0.0
  %4288 = vmatprep.subr.mxu0 0.0
  %4289 = vmatpush1.msra.mxu0 0.0
  %4290 = vmatprep.subr.mxu0 0.0
  %4291 = vmatpush1.msra.mxu0 0.0
  %4292 = vmatprep.subr.mxu0 0.0
  %4293 = vmatpush1.msra.mxu0 0.0
  %4294 = vmatprep.subr.mxu0 0.0
  %4295 = vmatpush1.msra.mxu0 0.0
  %4296 = vmatprep.subr.mxu0 0.0
  %4297 = vmatpush1.msra.mxu0 0.0
  %4298 = vmatprep.subr.mxu0 0.0
  %4299 = vmatpush1.msra.mxu0 0.0
  %4300 = vmatprep.subr.mxu0 0.0
  %4301 = vmatpush1.msra.mxu0 0.0
  %4302 = vmatprep.subr.mxu0 0.0
  %4303 = vmatpush1.msra.mxu0 0.0
  %4304 = vmatprep.subr.mxu0 0.0
  %4305 = vmatpush1.msra.mxu0 0.0
  %4306 = vmatprep.subr.mxu0 0.0
  %4307 = vmatpush1.msra.mxu0 0.0
  %4308 = vmatprep.subr.mxu0 0.0
  %4309 = vmatpush1.msra.mxu0 0.0
  %4310 = vmatprep.subr.mxu0 0.0
  %4311 = vmatpush1.msra.mxu0 0.0
  %4312 = vmatprep.subr.mxu0 0.0
  %4313 = vmatpush1.msra.mxu0 0.0
  %4314 = vmatprep.subr.mxu0 0.0
  %4315 = vmatpush1.msra.mxu0 0.0
  %4316 = vmatprep.subr.mxu0 0.0
  %4317 = vmatpush1.msra.mxu0 0.0
  %4318 = vmatprep.subr.mxu0 0.0
  %4319 = vmatpush1.msra.mxu0 0.0
  %4320 = vmatprep.subr.mxu0 0.0
  %4321 = vmatpush1.msra.mxu0 0.0
  %4322 = vmatprep.subr.mxu0 0.0
  %4323 = vmatpush1.msra.mxu0 0.0
  %4324 = vmatprep.subr.mxu0 0.0
  %4325 = vmatpush1.msra.mxu0 0.0
  %4326 = vmatprep.subr.mxu0 0.0
  %4327 = vmatpush1.msra.mxu0 0.0
  %4328 = vmatprep.subr.mxu0 0.0
  %4329 = vmatpush1.msra.mxu0 0.0
  %4330 = vmatprep.mubr.f32.mxu0 0.0
  %4331 = vmatmul.mubr.f32.gmra.mrb[0].mxu0 %v4189
  %v4332 = vpop.f32.mrb[0].mxu0
  %v4333 = vadd.f32 %v4065, %v4332
  %v4334 = vpop.f32.mrb[0].mxu0
  %4335 = vmatprep.mubr.f32.mxu0 0.0
  %4336 = vmatmul.mubr.f32.gmra.mrb[0].mxu0 %v4192
  %v4337 = vpop.f32.mrb[0].mxu0
  %v4338 = vadd.f32 %v4070, %v4337
  %v4339 = vpop.f32.mrb[0].mxu0
  %4340 = vmatprep.mubr.f32.mxu0 0.0
  %4341 = vmatmul.mubr.f32.gmra.mrb[0].mxu0 %v4195
  %v4342 = vpop.f32.mrb[0].mxu0
  %v4343 = vadd.f32 %v4075, %v4342
  %v4344 = vpop.f32.mrb[0].mxu0
  %4345 = vmatprep.mubr.f32.mxu0 0.0
  %4346 = vmatmul.mubr.f32.gmra.mrb[0].mxu0 %v4198
  %v4347 = vpop.f32.mrb[0].mxu0
  %v4348 = vadd.f32 %v4080, %v4347
  %v4349 = vpop.f32.mrb[0].mxu0
  %4350 = vmatprep.mubr.f32.mxu0 0.0
  %4351 = vmatmul.mubr.f32.gmra.mrb[0].mxu0 %v4201
  %v4352 = vpop.f32.mrb[0].mxu0
  %v4353 = vadd.f32 %v4085, %v4352
  %v4354 = vpop.f32.mrb[0].mxu0
  %4355 = vmatprep.mubr.f32.mxu0 0.0
  %4356 = vmatmul.mubr.f32.gmra.mrb[0].mxu0 %v4204
  %v4357 = vpop.f32.mrb[0].mxu0
  %v4358 = vadd.f32 %v4090, %v4357
  %v4359 = vpop.f32.mrb[0].mxu0
  %4360 = vmatprep.mubr.f32.mxu0 0.0
  %4361 = vmatmul.mubr.f32.gmra.mrb[0].mxu0 %v4207
  %v4362 = vpop.f32.mrb[0].mxu0
  %v4363 = vadd.f32 %v4095, %v4362
  %v4364 = vpop.f32.mrb[0].mxu0
  %4365 = vmatprep.mubr.f32.mxu0 0.0
  %4366 = vmatmul.mubr.f32.gmra.mrb[0].mxu0 %v4210
  %v4367 = vpop.f32.mrb[0].mxu0
  %v4368 = vadd.f32 %v4100, %v4367
  %v4369 = vpop.f32.mrb[0].mxu0
  %4370 = vmatprep.mubr.f32.mxu0 0.0
  %4371 = vmatmul.mubr.f32.gmra.mrb[0].mxu0 %v4213
  %v4372 = vpop.f32.mrb[0].mxu0
  %v4373 = vadd.f32 %v4105, %v4372
  %v4374 = vpop.f32.mrb[0].mxu0
  %4375 = vmatprep.mubr.f32.mxu0 0.0
  %4376 = vmatmul.mubr.f32.gmra.mrb[0].mxu0 %v4216
  %v4377 = vpop.f32.mrb[0].mxu0
  %v4378 = vadd.f32 %v4110, %v4377
  %v4379 = vpop.f32.mrb[0].mxu0
  %4380 = vmatprep.mubr.f32.mxu0 0.0
  %4381 = vmatmul.mubr.f32.gmra.mrb[0].mxu0 %v4219
  %v4382 = vpop.f32.mrb[0].mxu0
  %v4383 = vadd.f32 %v4115, %v4382
  %v4384 = vpop.f32.mrb[0].mxu0
  %4385 = vmatprep.mubr.f32.mxu0 0.0
  %4386 = vmatmul.mubr.f32.gmra.mrb[0].mxu0 %v4222
  %v4387 = vpop.f32.mrb[0].mxu0
  %v4388 = vadd.f32 %v4120, %v4387
  %v4389 = vpop.f32.mrb[0].mxu0
  %4390 = vmatprep.mubr.f32.mxu0 0.0
  %4391 = vmatmul.mubr.f32.gmra.mrb[0].mxu0 %v4225
  %v4392 = vpop.f32.mrb[0].mxu0
  %v4393 = vadd.f32 %v4125, %v4392
  %v4394 = vpop.f32.mrb[0].mxu0
  %4395 = vmatprep.mubr.f32.mxu0 0.0
  %4396 = vmatmul.mubr.f32.gmra.mrb[0].mxu0 %v4228
  %v4397 = vpop.f32.mrb[0].mxu0
  %v4398 = vadd.f32 %v4130, %v4397
  %v4399 = vpop.f32.mrb[0].mxu0
  %4400 = vmatprep.mubr.f32.mxu0 0.0
  %4401 = vmatmul.mubr.f32.gmra.mrb[0].mxu0 %v4231
  %v4402 = vpop.f32.mrb[0].mxu0
  %v4403 = vadd.f32 %v4135, %v4402
  %v4404 = vpop.f32.mrb[0].mxu0
  %4405 = vmatprep.mubr.f32.mxu0 0.0
  %4406 = vmatmul.mubr.f32.gmra.mrb[0].mxu0 %v4234
  %v4407 = vpop.f32.mrb[0].mxu0
  %v4408 = vadd.f32 %v4140, %v4407
  %v4409 = vpop.f32.mrb[0].mxu0
  %4410 = vmatprep.mubr.f32.mxu0 0.0
  %4411 = vmatmul.mubr.f32.gmra.mrb[0].mxu0 %v4237
  %v4412 = vpop.f32.mrb[0].mxu0
  %v4413 = vadd.f32 %v4145, %v4412
  %v4414 = vpop.f32.mrb[0].mxu0
  %4415 = vmatprep.mubr.f32.mxu0 0.0
  %4416 = vmatmul.mubr.f32.gmra.mrb[0].mxu0 %v4240
  %v4417 = vpop.f32.mrb[0].mxu0
  %v4418 = vadd.f32 %v4150, %v4417
  %v4419 = vpop.f32.mrb[0].mxu0
  %4420 = vmatprep.mubr.f32.mxu0 0.0
  %4421 = vmatmul.mubr.f32.gmra.mrb[0].mxu0 %v4243
  %v4422 = vpop.f32.mrb[0].mxu0
  %v4423 = vadd.f32 %v4155, %v4422
  %v4424 = vpop.f32.mrb[0].mxu0
  %4425 = vmatprep.mubr.f32.mxu0 0.0
  %4426 = vmatmul.mubr.f32.gmra.mrb[0].mxu0 %v4246
  %v4427 = vpop.f32.mrb[0].mxu0
  %v4428 = vadd.f32 %v4160, %v4427
  %v4429 = vpop.f32.mrb[0].mxu0
  %4430 = vmatprep.mubr.f32.mxu0 0.0
  %4431 = vmatmul.mubr.f32.gmra.mrb[0].mxu0 %v4249
  %v4432 = vpop.f32.mrb[0].mxu0
  %v4433 = vadd.f32 %v4165, %v4432
  %v4434 = vpop.f32.mrb[0].mxu0
  %4435 = vmatprep.mubr.f32.mxu0 0.0
  %4436 = vmatmul.mubr.f32.gmra.mrb[0].mxu0 %v4252
  %v4437 = vpop.f32.mrb[0].mxu0
  %v4438 = vadd.f32 %v4170, %v4437
  %v4439 = vpop.f32.mrb[0].mxu0
  %4440 = vmatprep.mubr.f32.mxu0 0.0
  %4441 = vmatmul.mubr.f32.gmra.mrb[0].mxu0 %v4255
  %v4442 = vpop.f32.mrb[0].mxu0
  %v4443 = vadd.f32 %v4175, %v4442
  %v4444 = vpop.f32.mrb[0].mxu0
  %4445 = vmatprep.mubr.f32.mxu0 0.0
  %4446 = vmatmul.mubr.f32.gmra.mrb[0].mxu0 %v4258
  %v4447 = vpop.f32.mrb[0].mxu0
  %v4448 = vadd.f32 %v4180, %v4447
  %v4449 = vpop.f32.mrb[0].mxu0
  %4450 = vmatprep.mubr.f32.mxu0 0.0
  %4451 = vmatmul.mubr.f32.gmra.mrb[0].mxu0 %v4261
  %v4452 = vpop.f32.mrb[0].mxu0
  %v4453 = vadd.f32 %v4185, %v4452
  %v4454 = vpop.f32.mrb[0].mxu0
  %4455 = vdwg.mxu0
  %s4456 = scalar_lea.vmem %s4, 32
  %v4457 = vld [vmem:[%s4456] sm:$0xff]
  %v4458 = vld [vmem:[%s4456 + $0x8] sm:$0x3]
  %v4460 = vsel %vm2357, %v3889, 0
  %v4463 = vsel %vm2357, %v3890, 0
  %v4466 = vsel %vm2357, %v3891, 0
  %v4469 = vsel %vm2357, %v3892, 0
  %v4472 = vsel %vm2357, %v3893, 0
  %v4475 = vsel %vm2357, %v3894, 0
  %v4478 = vsel %vm2357, %v3895, 0
  %v4481 = vsel %vm2357, %v3896, 0
  %v4484 = vsel %vm2357, %v3897, 0
  %v4487 = vsel %vm2357, %v3898, 0
  %v4490 = vsel %vm2357, %v3899, 0
  %v4493 = vsel %vm2357, %v3900, 0
  %v4496 = vsel %vm2357, %v3901, 0
  %v4499 = vsel %vm2357, %v3902, 0
  %v4502 = vsel %vm2357, %v3903, 0
  %v4505 = vsel %vm2357, %v3904, 0
  %v4508 = vsel %vm2357, %v3905, 0
  %v4511 = vsel %vm2357, %v3906, 0
  %v4514 = vsel %vm2357, %v3907, 0
  %v4517 = vsel %vm2357, %v3908, 0
  %v4520 = vsel %vm2357, %v3909, 0
  %v4523 = vsel %vm2357, %v3910, 0
  %v4526 = vsel %vm2357, %v3911, 0
  %v4529 = vsel %vm2357, %v3912, 0
  %v4532 = vsel %vm2357, %v3913, 0
  %v4535 = vsel %vm3994, %v4458, 0
  %4537 = vmatprep.subr.mxu0 0.0
  %4538 = vmatpush1.msra.mxu0 %v4457
  %4539 = vmatprep.subr.mxu0 0.0
  %4540 = vmatpush1.msra.mxu0 %v4535
  %4541 = vmatprep.subr.mxu0 0.0
  %4542 = vmatpush1.msra.mxu0 0.0
  %4543 = vmatprep.subr.mxu0 0.0
  %4544 = vmatpush1.msra.mxu0 0.0
  %4545 = vmatprep.subr.mxu0 0.0
  %4546 = vmatpush1.msra.mxu0 0.0
  %4547 = vmatprep.subr.mxu0 0.0
  %4548 = vmatpush1.msra.mxu0 0.0
  %4549 = vmatprep.subr.mxu0 0.0
  %4550 = vmatpush1.msra.mxu0 0.0
  %4551 = vmatprep.subr.mxu0 0.0
  %4552 = vmatpush1.msra.mxu0 0.0
  %4553 = vmatprep.subr.mxu0 0.0
  %4554 = vmatpush1.msra.mxu0 0.0
  %4555 = vmatprep.subr.mxu0 0.0
  %4556 = vmatpush1.msra.mxu0 0.0
  %4557 = vmatprep.subr.mxu0 0.0
  %4558 = vmatpush1.msra.mxu0 0.0
  %4559 = vmatprep.subr.mxu0 0.0
  %4560 = vmatpush1.msra.mxu0 0.0
  %4561 = vmatprep.subr.mxu0 0.0
  %4562 = vmatpush1.msra.mxu0 0.0
  %4563 = vmatprep.subr.mxu0 0.0
  %4564 = vmatpush1.msra.mxu0 0.0
  %4565 = vmatprep.subr.mxu0 0.0
  %4566 = vmatpush1.msra.mxu0 0.0
  %4567 = vmatprep.subr.mxu0 0.0
  %4568 = vmatpush1.msra.mxu0 0.0
  %4569 = vmatprep.subr.mxu0 0.0
  %4570 = vmatpush1.msra.mxu0 0.0
  %4571 = vmatprep.subr.mxu0 0.0
  %4572 = vmatpush1.msra.mxu0 0.0
  %4573 = vmatprep.subr.mxu0 0.0
  %4574 = vmatpush1.msra.mxu0 0.0
  %4575 = vmatprep.subr.mxu0 0.0
  %4576 = vmatpush1.msra.mxu0 0.0
  %4577 = vmatprep.subr.mxu0 0.0
  %4578 = vmatpush1.msra.mxu0 0.0
  %4579 = vmatprep.subr.mxu0 0.0
  %4580 = vmatpush1.msra.mxu0 0.0
  %4581 = vmatprep.subr.mxu0 0.0
  %4582 = vmatpush1.msra.mxu0 0.0
  %4583 = vmatprep.subr.mxu0 0.0
  %4584 = vmatpush1.msra.mxu0 0.0
  %4585 = vmatprep.subr.mxu0 0.0
  %4586 = vmatpush1.msra.mxu0 0.0
  %4587 = vmatprep.subr.mxu0 0.0
  %4588 = vmatpush1.msra.mxu0 0.0
  %4589 = vmatprep.subr.mxu0 0.0
  %4590 = vmatpush1.msra.mxu0 0.0
  %4591 = vmatprep.subr.mxu0 0.0
  %4592 = vmatpush1.msra.mxu0 0.0
  %4593 = vmatprep.subr.mxu0 0.0
  %4594 = vmatpush1.msra.mxu0 0.0
  %4595 = vmatprep.subr.mxu0 0.0
  %4596 = vmatpush1.msra.mxu0 0.0
  %4597 = vmatprep.subr.mxu0 0.0
  %4598 = vmatpush1.msra.mxu0 0.0
  %4599 = vmatprep.subr.mxu0 0.0
  %4600 = vmatpush1.msra.mxu0 0.0
  %4601 = vmatprep.mubr.f32.mxu0 0.0
  %4602 = vmatmul.mubr.f32.gmra.mrb[0].mxu0 %v4460
  %v4603 = vpop.f32.mrb[0].mxu0
  %v4604 = vadd.f32 0.0, %v4603
  %v4605 = vpop.f32.mrb[0].mxu0
  %4606 = vmatprep.mubr.f32.mxu0 0.0
  %4607 = vmatmul.mubr.f32.gmra.mrb[0].mxu0 %v4463
  %v4608 = vpop.f32.mrb[0].mxu0
  %v4609 = vadd.f32 0.0, %v4608
  %v4610 = vpop.f32.mrb[0].mxu0
  %4611 = vmatprep.mubr.f32.mxu0 0.0
  %4612 = vmatmul.mubr.f32.gmra.mrb[0].mxu0 %v4466
  %v4613 = vpop.f32.mrb[0].mxu0
  %v4614 = vadd.f32 0.0, %v4613
  %v4615 = vpop.f32.mrb[0].mxu0
  %4616 = vmatprep.mubr.f32.mxu0 0.0
  %4617 = vmatmul.mubr.f32.gmra.mrb[0].mxu0 %v4469
  %v4618 = vpop.f32.mrb[0].mxu0
  %v4619 = vadd.f32 0.0, %v4618
  %v4620 = vpop.f32.mrb[0].mxu0
  %4621 = vmatprep.mubr.f32.mxu0 0.0
  %4622 = vmatmul.mubr.f32.gmra.mrb[0].mxu0 %v4472
  %v4623 = vpop.f32.mrb[0].mxu0
  %v4624 = vadd.f32 0.0, %v4623
  %v4625 = vpop.f32.mrb[0].mxu0
  %4626 = vmatprep.mubr.f32.mxu0 0.0
  %4627 = vmatmul.mubr.f32.gmra.mrb[0].mxu0 %v4475
  %v4628 = vpop.f32.mrb[0].mxu0
  %v4629 = vadd.f32 0.0, %v4628
  %v4630 = vpop.f32.mrb[0].mxu0
  %4631 = vmatprep.mubr.f32.mxu0 0.0
  %4632 = vmatmul.mubr.f32.gmra.mrb[0].mxu0 %v4478
  %v4633 = vpop.f32.mrb[0].mxu0
  %v4634 = vadd.f32 0.0, %v4633
  %v4635 = vpop.f32.mrb[0].mxu0
  %4636 = vmatprep.mubr.f32.mxu0 0.0
  %4637 = vmatmul.mubr.f32.gmra.mrb[0].mxu0 %v4481
  %v4638 = vpop.f32.mrb[0].mxu0
  %v4639 = vadd.f32 0.0, %v4638
  %v4640 = vpop.f32.mrb[0].mxu0
  %4641 = vmatprep.mubr.f32.mxu0 0.0
  %4642 = vmatmul.mubr.f32.gmra.mrb[0].mxu0 %v4484
  %v4643 = vpop.f32.mrb[0].mxu0
  %v4644 = vadd.f32 0.0, %v4643
  %v4645 = vpop.f32.mrb[0].mxu0
  %4646 = vmatprep.mubr.f32.mxu0 0.0
  %4647 = vmatmul.mubr.f32.gmra.mrb[0].mxu0 %v4487
  %v4648 = vpop.f32.mrb[0].mxu0
  %v4649 = vadd.f32 0.0, %v4648
  %v4650 = vpop.f32.mrb[0].mxu0
  %4651 = vmatprep.mubr.f32.mxu0 0.0
  %4652 = vmatmul.mubr.f32.gmra.mrb[0].mxu0 %v4490
  %v4653 = vpop.f32.mrb[0].mxu0
  %v4654 = vadd.f32 0.0, %v4653
  %v4655 = vpop.f32.mrb[0].mxu0
  %4656 = vmatprep.mubr.f32.mxu0 0.0
  %4657 = vmatmul.mubr.f32.gmra.mrb[0].mxu0 %v4493
  %v4658 = vpop.f32.mrb[0].mxu0
  %v4659 = vadd.f32 0.0, %v4658
  %v4660 = vpop.f32.mrb[0].mxu0
  %4661 = vmatprep.mubr.f32.mxu0 0.0
  %4662 = vmatmul.mubr.f32.gmra.mrb[0].mxu0 %v4496
  %v4663 = vpop.f32.mrb[0].mxu0
  %v4664 = vadd.f32 0.0, %v4663
  %v4665 = vpop.f32.mrb[0].mxu0
  %4666 = vmatprep.mubr.f32.mxu0 0.0
  %4667 = vmatmul.mubr.f32.gmra.mrb[0].mxu0 %v4499
  %v4668 = vpop.f32.mrb[0].mxu0
  %v4669 = vadd.f32 0.0, %v4668
  %v4670 = vpop.f32.mrb[0].mxu0
  %4671 = vmatprep.mubr.f32.mxu0 0.0
  %4672 = vmatmul.mubr.f32.gmra.mrb[0].mxu0 %v4502
  %v4673 = vpop.f32.mrb[0].mxu0
  %v4674 = vadd.f32 0.0, %v4673
  %v4675 = vpop.f32.mrb[0].mxu0
  %4676 = vmatprep.mubr.f32.mxu0 0.0
  %4677 = vmatmul.mubr.f32.gmra.mrb[0].mxu0 %v4505
  %v4678 = vpop.f32.mrb[0].mxu0
  %v4679 = vadd.f32 0.0, %v4678
  %v4680 = vpop.f32.mrb[0].mxu0
  %4681 = vmatprep.mubr.f32.mxu0 0.0
  %4682 = vmatmul.mubr.f32.gmra.mrb[0].mxu0 %v4508
  %v4683 = vpop.f32.mrb[0].mxu0
  %v4684 = vadd.f32 0.0, %v4683
  %v4685 = vpop.f32.mrb[0].mxu0
  %4686 = vmatprep.mubr.f32.mxu0 0.0
  %4687 = vmatmul.mubr.f32.gmra.mrb[0].mxu0 %v4511
  %v4688 = vpop.f32.mrb[0].mxu0
  %v4689 = vadd.f32 0.0, %v4688
  %v4690 = vpop.f32.mrb[0].mxu0
  %4691 = vmatprep.mubr.f32.mxu0 0.0
  %4692 = vmatmul.mubr.f32.gmra.mrb[0].mxu0 %v4514
  %v4693 = vpop.f32.mrb[0].mxu0
  %v4694 = vadd.f32 0.0, %v4693
  %v4695 = vpop.f32.mrb[0].mxu0
  %4696 = vmatprep.mubr.f32.mxu0 0.0
  %4697 = vmatmul.mubr.f32.gmra.mrb[0].mxu0 %v4517
  %v4698 = vpop.f32.mrb[0].mxu0
  %v4699 = vadd.f32 0.0, %v4698
  %v4700 = vpop.f32.mrb[0].mxu0
  %4701 = vmatprep.mubr.f32.mxu0 0.0
  %4702 = vmatmul.mubr.f32.gmra.mrb[0].mxu0 %v4520
  %v4703 = vpop.f32.mrb[0].mxu0
  %v4704 = vadd.f32 0.0, %v4703
  %v4705 = vpop.f32.mrb[0].mxu0
  %4706 = vmatprep.mubr.f32.mxu0 0.0
  %4707 = vmatmul.mubr.f32.gmra.mrb[0].mxu0 %v4523
  %v4708 = vpop.f32.mrb[0].mxu0
  %v4709 = vadd.f32 0.0, %v4708
  %v4710 = vpop.f32.mrb[0].mxu0
  %4711 = vmatprep.mubr.f32.mxu0 0.0
  %4712 = vmatmul.mubr.f32.gmra.mrb[0].mxu0 %v4526
  %v4713 = vpop.f32.mrb[0].mxu0
  %v4714 = vadd.f32 0.0, %v4713
  %v4715 = vpop.f32.mrb[0].mxu0
  %4716 = vmatprep.mubr.f32.mxu0 0.0
  %4717 = vmatmul.mubr.f32.gmra.mrb[0].mxu0 %v4529
  %v4718 = vpop.f32.mrb[0].mxu0
  %v4719 = vadd.f32 0.0, %v4718
  %v4720 = vpop.f32.mrb[0].mxu0
  %4721 = vmatprep.mubr.f32.mxu0 0.0
  %4722 = vmatmul.mubr.f32.gmra.mrb[0].mxu0 %v4532
  %v4723 = vpop.f32.mrb[0].mxu0
  %v4724 = vadd.f32 0.0, %v4723
  %v4725 = vpop.f32.mrb[0].mxu0
  %4726 = vdwg.mxu0
  %v4727 = vadd.f32 %v4333, %v4604
  %v4728 = vadd.f32 %v4338, %v4609
  %v4729 = vadd.f32 %v4343, %v4614
  %v4730 = vadd.f32 %v4348, %v4619
  %v4731 = vadd.f32 %v4353, %v4624
  %v4732 = vadd.f32 %v4358, %v4629
  %v4733 = vadd.f32 %v4363, %v4634
  %v4734 = vadd.f32 %v4368, %v4639
  %v4735 = vadd.f32 %v4373, %v4644
  %v4736 = vadd.f32 %v4378, %v4649
  %v4737 = vadd.f32 %v4383, %v4654
  %v4738 = vadd.f32 %v4388, %v4659
  %v4739 = vadd.f32 %v4393, %v4664
  %v4740 = vadd.f32 %v4398, %v4669
  %v4741 = vadd.f32 %v4403, %v4674
  %v4742 = vadd.f32 %v4408, %v4679
  %v4743 = vadd.f32 %v4413, %v4684
  %v4744 = vadd.f32 %v4418, %v4689
  %v4745 = vadd.f32 %v4423, %v4694
  %v4746 = vadd.f32 %v4428, %v4699
  %v4747 = vadd.f32 %v4433, %v4704
  %v4748 = vadd.f32 %v4438, %v4709
  %v4749 = vadd.f32 %v4443, %v4714
  %v4750 = vadd.f32 %v4448, %v4719
  %v4751 = vadd.f32 %v4453, %v4724
  %v4752 = vld [vmem:[%s5] sm:$0x1]
  %v4753 = vld [vmem:[%s6] sm:$0x1]
  %vm4754 = vcmask 162816
  %v4755 = vsel %vm4754, %v4727, 0.0
  %v4756 = vsel %vm4754, %v4728, 0.0
  %v4757 = vadd.f32 %v4755, %v4756
  %v4758 = vsel %vm4754, %v4729, 0.0
  %v4759 = vadd.f32 %v4757, %v4758
  %v4760 = vsel %vm4754, %v4730, 0.0
  %v4761 = vadd.f32 %v4759, %v4760
  %v4762 = vsel %vm4754, %v4731, 0.0
  %v4763 = vadd.f32 %v4761, %v4762
  %v4764 = vsel %vm4754, %v4732, 0.0
  %v4765 = vadd.f32 %v4763, %v4764
  %v4766 = vsel %vm4754, %v4733, 0.0
  %v4767 = vadd.f32 %v4765, %v4766
  %v4768 = vsel %vm4754, %v4734, 0.0
  %v4769 = vadd.f32 %v4767, %v4768
  %v4770 = vsel %vm4754, %v4735, 0.0
  %v4771 = vadd.f32 %v4769, %v4770
  %v4772 = vsel %vm4754, %v4736, 0.0
  %v4773 = vadd.f32 %v4771, %v4772
  %v4774 = vsel %vm4754, %v4737, 0.0
  %v4775 = vadd.f32 %v4773, %v4774
  %v4776 = vsel %vm4754, %v4738, 0.0
  %v4777 = vadd.f32 %v4775, %v4776
  %v4778 = vsel %vm4754, %v4739, 0.0
  %v4779 = vadd.f32 %v4777, %v4778
  %v4780 = vsel %vm4754, %v4740, 0.0
  %v4781 = vadd.f32 %v4779, %v4780
  %v4782 = vsel %vm4754, %v4741, 0.0
  %v4783 = vadd.f32 %v4781, %v4782
  %v4784 = vsel %vm4754, %v4742, 0.0
  %v4785 = vadd.f32 %v4783, %v4784
  %v4786 = vsel %vm4754, %v4743, 0.0
  %v4787 = vadd.f32 %v4785, %v4786
  %v4788 = vsel %vm4754, %v4744, 0.0
  %v4789 = vadd.f32 %v4787, %v4788
  %v4790 = vsel %vm4754, %v4745, 0.0
  %v4791 = vadd.f32 %v4789, %v4790
  %v4792 = vsel %vm4754, %v4746, 0.0
  %v4793 = vadd.f32 %v4791, %v4792
  %v4794 = vsel %vm4754, %v4747, 0.0
  %v4795 = vadd.f32 %v4793, %v4794
  %v4796 = vsel %vm4754, %v4748, 0.0
  %v4797 = vadd.f32 %v4795, %v4796
  %v4798 = vsel %vm4754, %v4749, 0.0
  %v4799 = vadd.f32 %v4797, %v4798
  %v4800 = vsel %vm4754, %v4750, 0.0
  %v4801 = vadd.f32 %v4799, %v4800
  %v4802 = vsel %vm4754, %v4751, 0.0
  %v4803 = vadd.f32 %v4801, %v4802
  %v4804 = vrot.slane %v4803, 4
  %v4805 = vadd.f32 %v4803, %v4804
  %v4806 = vrot.slane %v4805, 2
  %v4807 = vadd.f32 %v4805, %v4806
  %v4808 = vrot.slane %v4807, 1
  %v4809 = vadd.f32 %v4807, %v4808
  %v4810 = vrcp.pop 200.0
  %v4811 = vmul.f32 %v4809, %v4810
  %v4812 = vsub.f32 %v4727, %v4811
  %v4813 = vsub.f32 %v4728, %v4811
  %v4814 = vsub.f32 %v4729, %v4811
  %v4815 = vsub.f32 %v4730, %v4811
  %v4816 = vsub.f32 %v4731, %v4811
  %v4817 = vsub.f32 %v4732, %v4811
  %v4818 = vsub.f32 %v4733, %v4811
  %v4819 = vsub.f32 %v4734, %v4811
  %v4820 = vsub.f32 %v4735, %v4811
  %v4821 = vsub.f32 %v4736, %v4811
  %v4822 = vsub.f32 %v4737, %v4811
  %v4823 = vsub.f32 %v4738, %v4811
  %v4824 = vsub.f32 %v4739, %v4811
  %v4825 = vsub.f32 %v4740, %v4811
  %v4826 = vsub.f32 %v4741, %v4811
  %v4827 = vsub.f32 %v4742, %v4811
  %v4828 = vsub.f32 %v4743, %v4811
  %v4829 = vsub.f32 %v4744, %v4811
  %v4830 = vsub.f32 %v4745, %v4811
  %v4831 = vsub.f32 %v4746, %v4811
  %v4832 = vsub.f32 %v4747, %v4811
  %v4833 = vsub.f32 %v4748, %v4811
  %v4834 = vsub.f32 %v4749, %v4811
  %v4835 = vsub.f32 %v4750, %v4811
  %v4836 = vsub.f32 %v4751, %v4811
  %v4837 = vmul.f32 %v4812, %v4812
  %v4838 = vmul.f32 %v4813, %v4813
  %v4839 = vmul.f32 %v4814, %v4814
  %v4840 = vmul.f32 %v4815, %v4815
  %v4841 = vmul.f32 %v4816, %v4816
  %v4842 = vmul.f32 %v4817, %v4817
  %v4843 = vmul.f32 %v4818, %v4818
  %v4844 = vmul.f32 %v4819, %v4819
  %v4845 = vmul.f32 %v4820, %v4820
  %v4846 = vmul.f32 %v4821, %v4821
  %v4847 = vmul.f32 %v4822, %v4822
  %v4848 = vmul.f32 %v4823, %v4823
  %v4849 = vmul.f32 %v4824, %v4824
  %v4850 = vmul.f32 %v4825, %v4825
  %v4851 = vmul.f32 %v4826, %v4826
  %v4852 = vmul.f32 %v4827, %v4827
  %v4853 = vmul.f32 %v4828, %v4828
  %v4854 = vmul.f32 %v4829, %v4829
  %v4855 = vmul.f32 %v4830, %v4830
  %v4856 = vmul.f32 %v4831, %v4831
  %v4857 = vmul.f32 %v4832, %v4832
  %v4858 = vmul.f32 %v4833, %v4833
  %v4859 = vmul.f32 %v4834, %v4834
  %v4860 = vmul.f32 %v4835, %v4835
  %v4861 = vmul.f32 %v4836, %v4836
  %v4862 = vsel %vm4754, %v4837, 0.0
  %v4863 = vsel %vm4754, %v4838, 0.0
  %v4864 = vadd.f32 %v4862, %v4863
  %v4865 = vsel %vm4754, %v4839, 0.0
  %v4866 = vadd.f32 %v4864, %v4865
  %v4867 = vsel %vm4754, %v4840, 0.0
  %v4868 = vadd.f32 %v4866, %v4867
  %v4869 = vsel %vm4754, %v4841, 0.0
  %v4870 = vadd.f32 %v4868, %v4869
  %v4871 = vsel %vm4754, %v4842, 0.0
  %v4872 = vadd.f32 %v4870, %v4871
  %v4873 = vsel %vm4754, %v4843, 0.0
  %v4874 = vadd.f32 %v4872, %v4873
  %v4875 = vsel %vm4754, %v4844, 0.0
  %v4876 = vadd.f32 %v4874, %v4875
  %v4877 = vsel %vm4754, %v4845, 0.0
  %v4878 = vadd.f32 %v4876, %v4877
  %v4879 = vsel %vm4754, %v4846, 0.0
  %v4880 = vadd.f32 %v4878, %v4879
  %v4881 = vsel %vm4754, %v4847, 0.0
  %v4882 = vadd.f32 %v4880, %v4881
  %v4883 = vsel %vm4754, %v4848, 0.0
  %v4884 = vadd.f32 %v4882, %v4883
  %v4885 = vsel %vm4754, %v4849, 0.0
  %v4886 = vadd.f32 %v4884, %v4885
  %v4887 = vsel %vm4754, %v4850, 0.0
  %v4888 = vadd.f32 %v4886, %v4887
  %v4889 = vsel %vm4754, %v4851, 0.0
  %v4890 = vadd.f32 %v4888, %v4889
  %v4891 = vsel %vm4754, %v4852, 0.0
  %v4892 = vadd.f32 %v4890, %v4891
  %v4893 = vsel %vm4754, %v4853, 0.0
  %v4894 = vadd.f32 %v4892, %v4893
  %v4895 = vsel %vm4754, %v4854, 0.0
  %v4896 = vadd.f32 %v4894, %v4895
  %v4897 = vsel %vm4754, %v4855, 0.0
  %v4898 = vadd.f32 %v4896, %v4897
  %v4899 = vsel %vm4754, %v4856, 0.0
  %v4900 = vadd.f32 %v4898, %v4899
  %v4901 = vsel %vm4754, %v4857, 0.0
  %v4902 = vadd.f32 %v4900, %v4901
  %v4903 = vsel %vm4754, %v4858, 0.0
  %v4904 = vadd.f32 %v4902, %v4903
  %v4905 = vsel %vm4754, %v4859, 0.0
  %v4906 = vadd.f32 %v4904, %v4905
  %v4907 = vsel %vm4754, %v4860, 0.0
  %v4908 = vadd.f32 %v4906, %v4907
  %v4909 = vsel %vm4754, %v4861, 0.0
  %v4910 = vadd.f32 %v4908, %v4909
  %v4911 = vrot.slane %v4910, 4
  %v4912 = vadd.f32 %v4910, %v4911
  %v4913 = vrot.slane %v4912, 2
  %v4914 = vadd.f32 %v4912, %v4913
  %v4915 = vrot.slane %v4914, 1
  %v4916 = vadd.f32 %v4914, %v4915
  %v4917 = vmul.f32 %v4916, %v4810
  %v4918 = vadd.f32 %v4917, 1e-05
  %v4919 = vrsqrt.pop %v4918
  %v4920 = vmul.f32 %v4812, %v4919
  %v4921 = vmul.f32 %v4813, %v4919
  %v4922 = vmul.f32 %v4814, %v4919
  %v4923 = vmul.f32 %v4815, %v4919
  %v4924 = vmul.f32 %v4816, %v4919
  %v4925 = vmul.f32 %v4817, %v4919
  %v4926 = vmul.f32 %v4818, %v4919
  %v4927 = vmul.f32 %v4819, %v4919
  %v4928 = vmul.f32 %v4820, %v4919
  %v4929 = vmul.f32 %v4821, %v4919
  %v4930 = vmul.f32 %v4822, %v4919
  %v4931 = vmul.f32 %v4823, %v4919
  %v4932 = vmul.f32 %v4824, %v4919
  %v4933 = vmul.f32 %v4825, %v4919
  %v4934 = vmul.f32 %v4826, %v4919
  %v4935 = vmul.f32 %v4827, %v4919
  %v4936 = vmul.f32 %v4828, %v4919
  %v4937 = vmul.f32 %v4829, %v4919
  %v4938 = vmul.f32 %v4830, %v4919
  %v4939 = vmul.f32 %v4831, %v4919
  %v4940 = vmul.f32 %v4832, %v4919
  %v4941 = vmul.f32 %v4833, %v4919
  %v4942 = vmul.f32 %v4834, %v4919
  %v4943 = vmul.f32 %v4835, %v4919
  %v4944 = vmul.f32 %v4836, %v4919
  %v4946 = vlaneseq
  %v4947 = vshrl.u32 %v4946, 7
  %v4948 = vsub.s32 0, %v4947
  %v4949 = vrot.slane %v4752, %v4948
  %v4951 = vmul.f32 %v4920, %v4949
  %v4952 = vmul.f32 %v4921, %v4949
  %v4953 = vmul.f32 %v4922, %v4949
  %v4954 = vmul.f32 %v4923, %v4949
  %v4955 = vmul.f32 %v4924, %v4949
  %v4956 = vmul.f32 %v4925, %v4949
  %v4957 = vmul.f32 %v4926, %v4949
  %v4958 = vmul.f32 %v4927, %v4949
  %v4959 = vmul.f32 %v4928, %v4949
  %v4960 = vmul.f32 %v4929, %v4949
  %v4961 = vmul.f32 %v4930, %v4949
  %v4962 = vmul.f32 %v4931, %v4949
  %v4963 = vmul.f32 %v4932, %v4949
  %v4964 = vmul.f32 %v4933, %v4949
  %v4965 = vmul.f32 %v4934, %v4949
  %v4966 = vmul.f32 %v4935, %v4949
  %v4967 = vmul.f32 %v4936, %v4949
  %v4968 = vmul.f32 %v4937, %v4949
  %v4969 = vmul.f32 %v4938, %v4949
  %v4970 = vmul.f32 %v4939, %v4949
  %v4971 = vmul.f32 %v4940, %v4949
  %v4972 = vmul.f32 %v4941, %v4949
  %v4973 = vmul.f32 %v4942, %v4949
  %v4974 = vmul.f32 %v4943, %v4949
  %v4975 = vmul.f32 %v4944, %v4949
  %v4977 = vlaneseq
  %v4978 = vshrl.u32 %v4977, 7
  %v4979 = vsub.s32 0, %v4978
  %v4980 = vrot.slane %v4753, %v4979
  %v4982 = vadd.f32 %v4951, %v4980
  %v4983 = vadd.f32 %v4952, %v4980
  %v4984 = vadd.f32 %v4953, %v4980
  %v4985 = vadd.f32 %v4954, %v4980
  %v4986 = vadd.f32 %v4955, %v4980
  %v4987 = vadd.f32 %v4956, %v4980
  %v4988 = vadd.f32 %v4957, %v4980
  %v4989 = vadd.f32 %v4958, %v4980
  %v4990 = vadd.f32 %v4959, %v4980
  %v4991 = vadd.f32 %v4960, %v4980
  %v4992 = vadd.f32 %v4961, %v4980
  %v4993 = vadd.f32 %v4962, %v4980
  %v4994 = vadd.f32 %v4963, %v4980
  %v4995 = vadd.f32 %v4964, %v4980
  %v4996 = vadd.f32 %v4965, %v4980
  %v4997 = vadd.f32 %v4966, %v4980
  %v4998 = vadd.f32 %v4967, %v4980
  %v4999 = vadd.f32 %v4968, %v4980
  %v5000 = vadd.f32 %v4969, %v4980
  %v5001 = vadd.f32 %v4970, %v4980
  %v5002 = vadd.f32 %v4971, %v4980
  %v5003 = vadd.f32 %v4972, %v4980
  %v5004 = vadd.f32 %v4973, %v4980
  %v5005 = vadd.f32 %v4974, %v4980
  %v5006 = vadd.f32 %v4975, %v4980
  %v5007 = vtanh.pop %v4982
  %v5008 = vtanh.pop %v4983
  %v5009 = vtanh.pop %v4984
  %v5010 = vtanh.pop %v4985
  %v5011 = vtanh.pop %v4986
  %v5012 = vtanh.pop %v4987
  %v5013 = vtanh.pop %v4988
  %v5014 = vtanh.pop %v4989
  %v5015 = vtanh.pop %v4990
  %v5016 = vtanh.pop %v4991
  %v5017 = vtanh.pop %v4992
  %v5018 = vtanh.pop %v4993
  %v5019 = vtanh.pop %v4994
  %v5020 = vtanh.pop %v4995
  %v5021 = vtanh.pop %v4996
  %v5022 = vtanh.pop %v4997
  %v5023 = vtanh.pop %v4998
  %v5024 = vtanh.pop %v4999
  %v5025 = vtanh.pop %v5000
  %v5026 = vtanh.pop %v5001
  %v5027 = vtanh.pop %v5002
  %v5028 = vtanh.pop %v5003
  %v5029 = vtanh.pop %v5004
  %v5030 = vtanh.pop %v5005
  %v5031 = vtanh.pop %v5006
  %5032 = vst.msk [vmem:[#allocation4] sm:$0xff] %vm4754, %v5007
  %5033 = vst.msk [vmem:[#allocation4 + $0x8] sm:$0xff] %vm4754, %v5008
  %5034 = vst.msk [vmem:[#allocation4 + $0x10] sm:$0xff] %vm4754, %v5009
  %5035 = vst.msk [vmem:[#allocation4 + $0x18] sm:$0xff] %vm4754, %v5010
  %5036 = vst.msk [vmem:[#allocation4 + $0x20] sm:$0xff] %vm4754, %v5011
  %5037 = vst.msk [vmem:[#allocation4 + $0x28] sm:$0xff] %vm4754, %v5012
  %5038 = vst.msk [vmem:[#allocation4 + $0x30] sm:$0xff] %vm4754, %v5013
  %5039 = vst.msk [vmem:[#allocation4 + $0x38] sm:$0xff] %vm4754, %v5014
  %5040 = vst.msk [vmem:[#allocation4 + $0x40] sm:$0xff] %vm4754, %v5015
  %5041 = vst.msk [vmem:[#allocation4 + $0x48] sm:$0xff] %vm4754, %v5016
  %5042 = vst.msk [vmem:[#allocation4 + $0x50] sm:$0xff] %vm4754, %v5017
  %5043 = vst.msk [vmem:[#allocation4 + $0x58] sm:$0xff] %vm4754, %v5018
  %5044 = vst.msk [vmem:[#allocation4 + $0x60] sm:$0xff] %vm4754, %v5019
  %5045 = vst.msk [vmem:[#allocation4 + $0x68] sm:$0xff] %vm4754, %v5020
  %5046 = vst.msk [vmem:[#allocation4 + $0x70] sm:$0xff] %vm4754, %v5021
  %5047 = vst.msk [vmem:[#allocation4 + $0x78] sm:$0xff] %vm4754, %v5022
  %5048 = vst.msk [vmem:[#allocation4 + $0x80] sm:$0xff] %vm4754, %v5023
  %5049 = vst.msk [vmem:[#allocation4 + $0x88] sm:$0xff] %vm4754, %v5024
  %5050 = vst.msk [vmem:[#allocation4 + $0x90] sm:$0xff] %vm4754, %v5025
  %5051 = vst.msk [vmem:[#allocation4 + $0x98] sm:$0xff] %vm4754, %v5026
  %5052 = vst.msk [vmem:[#allocation4 + $0xa0] sm:$0xff] %vm4754, %v5027
  %5053 = vst.msk [vmem:[#allocation4 + $0xa8] sm:$0xff] %vm4754, %v5028
  %5054 = vst.msk [vmem:[#allocation4 + $0xb0] sm:$0xff] %vm4754, %v5029
  %5055 = vst.msk [vmem:[#allocation4 + $0xb8] sm:$0xff] %vm4754, %v5030
  %5056 = vst.msk [vmem:[#allocation4 + $0xc0] sm:$0xff] %vm4754, %v5031
  %v5057 = vld [vmem:[#allocation4] ss:$100 sm:$0x3]
  %s5058 = scalar_lea.vmem [#allocation4], 1
  %v5059 = vld [vmem:[%s5058] ss:$100 sm:$0x3]
  %v5060 = vmax.f32 %v5057, %v5059
  %vm5061 = vcmask 156672
  %5062 = vst.msk [vmem:[#allocation5] sm:$0x3] %vm5061, %v5060
  %s5063 = scalar_lea.vmem [#allocation4], 2
  %v5064 = vld [vmem:[%s5063] ss:$100 sm:$0x3]
  %s5065 = scalar_lea.vmem [#allocation4], 3
  %v5066 = vld [vmem:[%s5065] ss:$100 sm:$0x3]
  %v5067 = vmax.f32 %v5064, %v5066
  %v5070 = vunpack.c.l.s4 1983009808
  %v5071 = vunpack.c.0.s8 %v5070
  %v5072 = vlaneseq
  %v5073 = vshrl.u32 %v5072, 7
  %v5074 = vsub.s32 %v5071, %v5073
  %v5075 = vrot.slane %v5067, %v5074
  %5076 = vrot.lane.b32.xlu0 %v5075, 20
  %v5077 = vpop.permute.xlu0 %5076
  %vm5079 = vcmask 320672
  %5080 = vst.msk [vmem:[#allocation5] sm:$0x3] %vm5079, %v5077
  %s5081 = scalar_lea.vmem [#allocation4], 4
  %v5082 = vld [vmem:[%s5081] ss:$100 sm:$0x3]
  %s5083 = scalar_lea.vmem [#allocation4], 5
  %v5084 = vld [vmem:[%s5083] ss:$100 sm:$0x3]
  %v5085 = vmax.f32 %v5082, %v5084
  %v5088 = vunpack.c.l.s4 1983009808
  %v5089 = vunpack.c.0.s8 %v5088
  %v5090 = vlaneseq
  %v5091 = vshrl.u32 %v5090, 7
  %v5092 = vsub.s32 %v5089, %v5091
  %v5093 = vrot.slane %v5085, %v5092
  %5094 = vrot.lane.b32.xlu0 %v5093, 40
  %v5095 = vpop.permute.xlu0 %5094
  %vm5097 = vcmask 484672
  %5098 = vst.msk [vmem:[#allocation5] sm:$0x3] %vm5097, %v5095
  %s5099 = scalar_lea.vmem [#allocation4], 6
  %v5100 = vld [vmem:[%s5099] ss:$100 sm:$0x3]
  %s5101 = scalar_lea.vmem [#allocation4], 7
  %v5102 = vld [vmem:[%s5101] ss:$100 sm:$0x3]
  %v5103 = vmax.f32 %v5100, %v5102
  %v5106 = vunpack.c.l.s4 1983009808
  %v5107 = vunpack.c.0.s8 %v5106
  %v5108 = vlaneseq
  %v5109 = vshrl.u32 %v5108, 7
  %v5110 = vsub.s32 %v5107, %v5109
  %v5111 = vrot.slane %v5103, %v5110
  %5112 = vrot.lane.b32.xlu0 %v5111, 60
  %v5113 = vpop.permute.xlu0 %5112
  %vm5115 = vcmask 648672
  %5116 = vst.msk [vmem:[#allocation5] sm:$0x3] %vm5115, %v5113
  %s5117 = scalar_lea.vmem [#allocation4], 8
  %v5118 = vld [vmem:[%s5117] ss:$100 sm:$0x3]
  %s5119 = scalar_lea.vmem [#allocation4], 9
  %v5120 = vld [vmem:[%s5119] ss:$100 sm:$0x3]
  %v5121 = vmax.f32 %v5118, %v5120
  %v5124 = vunpack.c.l.s4 1983009808
  %v5125 = vunpack.c.0.s8 %v5124
  %v5126 = vlaneseq
  %v5127 = vshrl.u32 %v5126, 7
  %v5128 = vsub.s32 %v5125, %v5127
  %v5129 = vrot.slane %v5121, %v5128
  %5130 = vrot.lane.b32.xlu0 %v5129, 80
  %v5131 = vpop.permute.xlu0 %5130
  %vm5133 = vcmask 812672
  %5134 = vst.msk [vmem:[#allocation5] sm:$0x3] %vm5133, %v5131
  %s5135 = scalar_lea.vmem [#allocation4], 10
  %v5136 = vld [vmem:[%s5135] ss:$100 sm:$0x3]
  %s5137 = scalar_lea.vmem [#allocation4], 11
  %v5138 = vld [vmem:[%s5137] ss:$100 sm:$0x3]
  %v5139 = vmax.f32 %v5136, %v5138
  %v5142 = vunpack.c.l.s4 1983009808
  %v5143 = vunpack.c.0.s8 %v5142
  %v5144 = vlaneseq
  %v5145 = vshrl.u32 %v5144, 7
  %v5146 = vsub.s32 %v5143, %v5145
  %v5147 = vrot.slane %v5139, %v5146
  %5148 = vrot.lane.b32.xlu0 %v5147, 100
  %v5149 = vpop.permute.xlu0 %5148
  %vm5151 = vcmask 976672
  %5152 = vst.msk [vmem:[#allocation5] sm:$0x3] %vm5151, %v5149
  %s5153 = scalar_lea.vmem [#allocation4], 12
  %v5154 = vld [vmem:[%s5153] ss:$100 sm:$0x3]
  %s5155 = scalar_lea.vmem [#allocation4], 13
  %v5156 = vld [vmem:[%s5155] ss:$100 sm:$0x3]
  %v5157 = vmax.f32 %v5154, %v5156
  %v5160 = vunpack.c.l.s4 1983009808
  %v5161 = vunpack.c.0.s8 %v5160
  %v5162 = vlaneseq
  %v5163 = vshrl.u32 %v5162, 7
  %v5164 = vsub.s32 %v5161, %v5163
  %v5165 = vrot.slane %v5157, %v5164
  %5166 = vrot.lane.b32.xlu0 %v5165, 120
  %v5167 = vpop.permute.xlu0 %5166
  %v5168 = vrot.slane %v5167, 6
  %vm5169 = vcmask 982016
  %v5170 = vsel %vm5169, %v5168, %v5167
  %vm5172 = vcmask 1042368
  %vm5173 = vcmask 93186
  %vm5174 = vmor %vm5173, %vm5172
  %5175 = vst.msk [vmem:[#allocation5] sm:$0xf] %vm5174, %v5170
  %s5176 = scalar_lea.vmem [#allocation4], 14
  %v5177 = vld [vmem:[%s5176] ss:$100 sm:$0x3]
  %s5178 = scalar_lea.vmem [#allocation4], 15
  %v5179 = vld [vmem:[%s5178] ss:$100 sm:$0x3]
  %v5180 = vmax.f32 %v5177, %v5179
  %v5183 = vunpack.c.l.s4 1983009808
  %v5184 = vunpack.c.0.s8 %v5183
  %v5185 = vlaneseq
  %v5186 = vshrl.u32 %v5185, 7
  %v5187 = vsub.s32 %v5184, %v5186
  %v5188 = vrot.slane %v5180, %v5187
  %5189 = vrot.lane.b32.xlu0 %v5188, 12
  %v5190 = vpop.permute.xlu0 %5189
  %vm5192 = vcmask 255072
  %5193 = vst.msk [vmem:[#allocation5 + $0x2] sm:$0x3] %vm5192, %v5190
  %s5194 = scalar_lea.vmem [#allocation4], 16
  %v5195 = vld [vmem:[%s5194] ss:$100 sm:$0x3]
  %s5196 = scalar_lea.vmem [#allocation4], 17
  %v5197 = vld [vmem:[%s5196] ss:$100 sm:$0x3]
  %v5198 = vmax.f32 %v5195, %v5197
  %v5201 = vunpack.c.l.s4 1983009808
  %v5202 = vunpack.c.0.s8 %v5201
  %v5203 = vlaneseq
  %v5204 = vshrl.u32 %v5203, 7
  %v5205 = vsub.s32 %v5202, %v5204
  %v5206 = vrot.slane %v5198, %v5205
  %5207 = vrot.lane.b32.xlu0 %v5206, 32
  %v5208 = vpop.permute.xlu0 %5207
  %vm5210 = vcmask 419072
  %5211 = vst.msk [vmem:[#allocation5 + $0x2] sm:$0x3] %vm5210, %v5208
  %s5212 = scalar_lea.vmem [#allocation4], 18
  %v5213 = vld [vmem:[%s5212] ss:$100 sm:$0x3]
  %s5214 = scalar_lea.vmem [#allocation4], 19
  %v5215 = vld [vmem:[%s5214] ss:$100 sm:$0x3]
  %v5216 = vmax.f32 %v5213, %v5215
  %v5219 = vunpack.c.l.s4 1983009808
  %v5220 = vunpack.c.0.s8 %v5219
  %v5221 = vlaneseq
  %v5222 = vshrl.u32 %v5221, 7
  %v5223 = vsub.s32 %v5220, %v5222
  %v5224 = vrot.slane %v5216, %v5223
  %5225 = vrot.lane.b32.xlu0 %v5224, 52
  %v5226 = vpop.permute.xlu0 %5225
  %vm5228 = vcmask 583072
  %5229 = vst.msk [vmem:[#allocation5 + $0x2] sm:$0x3] %vm5228, %v5226
  %s5230 = scalar_lea.vmem [#allocation4], 20
  %v5231 = vld [vmem:[%s5230] ss:$100 sm:$0x3]
  %s5232 = scalar_lea.vmem [#allocation4], 21
  %v5233 = vld [vmem:[%s5232] ss:$100 sm:$0x3]
  %v5234 = vmax.f32 %v5231, %v5233
  %v5237 = vunpack.c.l.s4 1983009808
  %v5238 = vunpack.c.0.s8 %v5237
  %v5239 = vlaneseq
  %v5240 = vshrl.u32 %v5239, 7
  %v5241 = vsub.s32 %v5238, %v5240
  %v5242 = vrot.slane %v5234, %v5241
  %5243 = vrot.lane.b32.xlu0 %v5242, 72
  %v5244 = vpop.permute.xlu0 %5243
  %vm5246 = vcmask 747072
  %5247 = vst.msk [vmem:[#allocation5 + $0x2] sm:$0x3] %vm5246, %v5244
  %s5248 = scalar_lea.vmem [#allocation4], 22
  %v5249 = vld [vmem:[%s5248] ss:$100 sm:$0x3]
  %s5250 = scalar_lea.vmem [#allocation4], 23
  %v5251 = vld [vmem:[%s5250] ss:$100 sm:$0x3]
  %v5252 = vmax.f32 %v5249, %v5251
  %v5255 = vunpack.c.l.s4 1983009808
  %v5256 = vunpack.c.0.s8 %v5255
  %v5257 = vlaneseq
  %v5258 = vshrl.u32 %v5257, 7
  %v5259 = vsub.s32 %v5256, %v5258
  %v5260 = vrot.slane %v5252, %v5259
  %5261 = vrot.lane.b32.xlu0 %v5260, 92
  %v5262 = vpop.permute.xlu0 %5261
  %vm5264 = vcmask 911072
  %5265 = vst.msk [vmem:[#allocation5 + $0x2] sm:$0x3] %vm5264, %v5262
  %s5266 = scalar_lea.vmem [#allocation4], 24
  %v5267 = vld [vmem:[%s5266] ss:$100 sm:$0x3]
  %s5268 = scalar_lea.vmem [#allocation4], 25
  %v5269 = vld [vmem:[%s5268] ss:$100 sm:$0x3]
  %v5270 = vmax.f32 %v5267, %v5269
  %v5273 = vunpack.c.l.s4 1983009808
  %v5274 = vunpack.c.0.s8 %v5273
  %v5275 = vlaneseq
  %v5276 = vshrl.u32 %v5275, 7
  %v5277 = vsub.s32 %v5274, %v5276
  %v5278 = vrot.slane %v5270, %v5277
  %5279 = vrot.lane.b32.xlu0 %v5278, 112
  %v5280 = vpop.permute.xlu0 %5279
  %v5281 = vrot.slane %v5280, 6
  %vm5282 = vcmask 916480
  %v5283 = vsel %vm5282, %v5281, %v5280
  %vm5285 = vcmask 1042304
  %vm5286 = vcmask 27650
  %vm5287 = vmor %vm5286, %vm5285
  %5288 = vst.msk [vmem:[#allocation5 + $0x2] sm:$0xf] %vm5287, %v5283
  %s5289 = scalar_lea.vmem [#allocation4], 26
  %v5290 = vld [vmem:[%s5289] ss:$100 sm:$0x3]
  %s5291 = scalar_lea.vmem [#allocation4], 27
  %v5292 = vld [vmem:[%s5291] ss:$100 sm:$0x3]
  %v5293 = vmax.f32 %v5290, %v5292
  %v5296 = vunpack.c.l.s4 1983009808
  %v5297 = vunpack.c.0.s8 %v5296
  %v5298 = vlaneseq
  %v5299 = vshrl.u32 %v5298, 7
  %v5300 = vsub.s32 %v5297, %v5299
  %v5301 = vrot.slane %v5293, %v5300
  %5302 = vrot.lane.b32.xlu0 %v5301, 4
  %v5303 = vpop.permute.xlu0 %5302
  %vm5305 = vcmask 189472
  %5306 = vst.msk [vmem:[#allocation5 + $0x4] sm:$0x3] %vm5305, %v5303
  %s5307 = scalar_lea.vmem [#allocation4], 28
  %v5308 = vld [vmem:[%s5307] ss:$100 sm:$0x3]
  %s5309 = scalar_lea.vmem [#allocation4], 29
  %v5310 = vld [vmem:[%s5309] ss:$100 sm:$0x3]
  %v5311 = vmax.f32 %v5308, %v5310
  %v5314 = vunpack.c.l.s4 1983009808
  %v5315 = vunpack.c.0.s8 %v5314
  %v5316 = vlaneseq
  %v5317 = vshrl.u32 %v5316, 7
  %v5318 = vsub.s32 %v5315, %v5317
  %v5319 = vrot.slane %v5311, %v5318
  %5320 = vrot.lane.b32.xlu0 %v5319, 24
  %v5321 = vpop.permute.xlu0 %5320
  %vm5323 = vcmask 353472
  %5324 = vst.msk [vmem:[#allocation5 + $0x4] sm:$0x3] %vm5323, %v5321
  %s5325 = scalar_lea.vmem [#allocation4], 30
  %v5326 = vld [vmem:[%s5325] ss:$100 sm:$0x3]
  %s5327 = scalar_lea.vmem [#allocation4], 31
  %v5328 = vld [vmem:[%s5327] ss:$100 sm:$0x3]
  %v5329 = vmax.f32 %v5326, %v5328
  %v5332 = vunpack.c.l.s4 1983009808
  %v5333 = vunpack.c.0.s8 %v5332
  %v5334 = vlaneseq
  %v5335 = vshrl.u32 %v5334, 7
  %v5336 = vsub.s32 %v5333, %v5335
  %v5337 = vrot.slane %v5329, %v5336
  %5338 = vrot.lane.b32.xlu0 %v5337, 44
  %v5339 = vpop.permute.xlu0 %5338
  %vm5341 = vcmask 517472
  %5342 = vst.msk [vmem:[#allocation5 + $0x4] sm:$0x3] %vm5341, %v5339
  %s5343 = scalar_lea.vmem [#allocation4], 32
  %v5344 = vld [vmem:[%s5343] ss:$100 sm:$0x3]
  %s5345 = scalar_lea.vmem [#allocation4], 33
  %v5346 = vld [vmem:[%s5345] ss:$100 sm:$0x3]
  %v5347 = vmax.f32 %v5344, %v5346
  %v5350 = vunpack.c.l.s4 1983009808
  %v5351 = vunpack.c.0.s8 %v5350
  %v5352 = vlaneseq
  %v5353 = vshrl.u32 %v5352, 7
  %v5354 = vsub.s32 %v5351, %v5353
  %v5355 = vrot.slane %v5347, %v5354
  %5356 = vrot.lane.b32.xlu0 %v5355, 64
  %v5357 = vpop.permute.xlu0 %5356
  %vm5359 = vcmask 681472
  %5360 = vst.msk [vmem:[#allocation5 + $0x4] sm:$0x3] %vm5359, %v5357
  %s5361 = scalar_lea.vmem [#allocation4], 34
  %v5362 = vld [vmem:[%s5361] ss:$100 sm:$0x3]
  %s5363 = scalar_lea.vmem [#allocation4], 35
  %v5364 = vld [vmem:[%s5363] ss:$100 sm:$0x3]
  %v5365 = vmax.f32 %v5362, %v5364
  %v5368 = vunpack.c.l.s4 1983009808
  %v5369 = vunpack.c.0.s8 %v5368
  %v5370 = vlaneseq
  %v5371 = vshrl.u32 %v5370, 7
  %v5372 = vsub.s32 %v5369, %v5371
  %v5373 = vrot.slane %v5365, %v5372
  %5374 = vrot.lane.b32.xlu0 %v5373, 84
  %v5375 = vpop.permute.xlu0 %5374
  %vm5377 = vcmask 845472
  %5378 = vst.msk [vmem:[#allocation5 + $0x4] sm:$0x3] %vm5377, %v5375
  %s5379 = scalar_lea.vmem [#allocation4], 36
  %v5380 = vld [vmem:[%s5379] ss:$100 sm:$0x3]
  %s5381 = scalar_lea.vmem [#allocation4], 37
  %v5382 = vld [vmem:[%s5381] ss:$100 sm:$0x3]
  %v5383 = vmax.f32 %v5380, %v5382
  %v5386 = vunpack.c.l.s4 1983009808
  %v5387 = vunpack.c.0.s8 %v5386
  %v5388 = vlaneseq
  %v5389 = vshrl.u32 %v5388, 7
  %v5390 = vsub.s32 %v5387, %v5389
  %v5391 = vrot.slane %v5383, %v5390
  %5392 = vrot.lane.b32.xlu0 %v5391, 104
  %v5393 = vpop.permute.xlu0 %5392
  %vm5395 = vcmask 1009472
  %5396 = vst.msk [vmem:[#allocation5 + $0x4] sm:$0x3] %vm5395, %v5393
  %s5397 = scalar_lea.vmem [#allocation4], 38
  %v5398 = vld [vmem:[%s5397] ss:$100 sm:$0x3]
  %s5399 = scalar_lea.vmem [#allocation4], 39
  %v5400 = vld [vmem:[%s5399] ss:$100 sm:$0x3]
  %v5401 = vmax.f32 %v5398, %v5400
  %v5404 = vunpack.c.l.s4 1983009808
  %v5405 = vunpack.c.0.s8 %v5404
  %v5406 = vlaneseq
  %v5407 = vshrl.u32 %v5406, 7
  %v5408 = vsub.s32 %v5405, %v5407
  %v5409 = vrot.slane %v5401, %v5408
  %5410 = vrot.lane.b32.xlu0 %v5409, 124
  %v5411 = vpop.permute.xlu0 %5410
  %v5412 = vrot.slane %v5411, 6
  %vm5413 = vcmask 1014784
  %v5414 = vsel %vm5413, %v5412, %v5411
  %vm5416 = vcmask 1042400
  %vm5417 = vcmask 125954
  %vm5418 = vmor %vm5417, %vm5416
  %5419 = vst.msk [vmem:[#allocation5 + $0x4] sm:$0xf] %vm5418, %v5414
  %s5420 = scalar_lea.vmem [#allocation4], 40
  %v5421 = vld [vmem:[%s5420] ss:$100 sm:$0x3]
  %s5422 = scalar_lea.vmem [#allocation4], 41
  %v5423 = vld [vmem:[%s5422] ss:$100 sm:$0x3]
  %v5424 = vmax.f32 %v5421, %v5423
  %v5427 = vunpack.c.l.s4 1983009808
  %v5428 = vunpack.c.0.s8 %v5427
  %v5429 = vlaneseq
  %v5430 = vshrl.u32 %v5429, 7
  %v5431 = vsub.s32 %v5428, %v5430
  %v5432 = vrot.slane %v5424, %v5431
  %5433 = vrot.lane.b32.xlu0 %v5432, 16
  %v5434 = vpop.permute.xlu0 %5433
  %vm5436 = vcmask 287872
  %5437 = vst.msk [vmem:[#allocation5 + $0x6] sm:$0x3] %vm5436, %v5434
  %s5438 = scalar_lea.vmem [#allocation4], 42
  %v5439 = vld [vmem:[%s5438] ss:$100 sm:$0x3]
  %s5440 = scalar_lea.vmem [#allocation4], 43
  %v5441 = vld [vmem:[%s5440] ss:$100 sm:$0x3]
  %v5442 = vmax.f32 %v5439, %v5441
  %v5445 = vunpack.c.l.s4 1983009808
  %v5446 = vunpack.c.0.s8 %v5445
  %v5447 = vlaneseq
  %v5448 = vshrl.u32 %v5447, 7
  %v5449 = vsub.s32 %v5446, %v5448
  %v5450 = vrot.slane %v5442, %v5449
  %5451 = vrot.lane.b32.xlu0 %v5450, 36
  %v5452 = vpop.permute.xlu0 %5451
  %vm5454 = vcmask 451872
  %5455 = vst.msk [vmem:[#allocation5 + $0x6] sm:$0x3] %vm5454, %v5452
  %s5456 = scalar_lea.vmem [#allocation4], 44
  %v5457 = vld [vmem:[%s5456] ss:$100 sm:$0x3]
  %s5458 = scalar_lea.vmem [#allocation4], 45
  %v5459 = vld [vmem:[%s5458] ss:$100 sm:$0x3]
  %v5460 = vmax.f32 %v5457, %v5459
  %v5463 = vunpack.c.l.s4 1983009808
  %v5464 = vunpack.c.0.s8 %v5463
  %v5465 = vlaneseq
  %v5466 = vshrl.u32 %v5465, 7
  %v5467 = vsub.s32 %v5464, %v5466
  %v5468 = vrot.slane %v5460, %v5467
  %5469 = vrot.lane.b32.xlu0 %v5468, 56
  %v5470 = vpop.permute.xlu0 %5469
  %vm5472 = vcmask 615872
  %5473 = vst.msk [vmem:[#allocation5 + $0x6] sm:$0x3] %vm5472, %v5470
  %s5474 = scalar_lea.vmem [#allocation4], 46
  %v5475 = vld [vmem:[%s5474] ss:$100 sm:$0x3]
  %s5476 = scalar_lea.vmem [#allocation4], 47
  %v5477 = vld [vmem:[%s5476] ss:$100 sm:$0x3]
  %v5478 = vmax.f32 %v5475, %v5477
  %v5481 = vunpack.c.l.s4 1983009808
  %v5482 = vunpack.c.0.s8 %v5481
  %v5483 = vlaneseq
  %v5484 = vshrl.u32 %v5483, 7
  %v5485 = vsub.s32 %v5482, %v5484
  %v5486 = vrot.slane %v5478, %v5485
  %5487 = vrot.lane.b32.xlu0 %v5486, 76
  %v5488 = vpop.permute.xlu0 %5487
  %vm5490 = vcmask 779872
  %5491 = vst.msk [vmem:[#allocation5 + $0x6] sm:$0x3] %vm5490, %v5488
  %s5492 = scalar_lea.vmem [#allocation4], 48
  %v5493 = vld [vmem:[%s5492] ss:$100 sm:$0x3]
  %s5494 = scalar_lea.vmem [#allocation4], 49
  %v5495 = vld [vmem:[%s5494] ss:$100 sm:$0x3]
  %v5496 = vmax.f32 %v5493, %v5495
  %v5499 = vunpack.c.l.s4 1983009808
  %v5500 = vunpack.c.0.s8 %v5499
  %v5501 = vlaneseq
  %v5502 = vshrl.u32 %v5501, 7
  %v5503 = vsub.s32 %v5500, %v5502
  %v5504 = vrot.slane %v5496, %v5503
  %5505 = vrot.lane.b32.xlu0 %v5504, 96
  %v5506 = vpop.permute.xlu0 %5505
  %vm5508 = vcmask 943872
  %5509 = vst.msk [vmem:[#allocation5 + $0x6] sm:$0x3] %vm5508, %v5506
  %s5510 = scalar_lea.vmem [#allocation4], 50
  %v5511 = vld [vmem:[%s5510] ss:$100 sm:$0x3]
  %s5512 = scalar_lea.vmem [#allocation4], 51
  %v5513 = vld [vmem:[%s5512] ss:$100 sm:$0x3]
  %v5514 = vmax.f32 %v5511, %v5513
  %v5517 = vunpack.c.l.s4 1983009808
  %v5518 = vunpack.c.0.s8 %v5517
  %v5519 = vlaneseq
  %v5520 = vshrl.u32 %v5519, 7
  %v5521 = vsub.s32 %v5518, %v5520
  %v5522 = vrot.slane %v5514, %v5521
  %5523 = vrot.lane.b32.xlu0 %v5522, 116
  %v5524 = vpop.permute.xlu0 %5523
  %v5525 = vrot.slane %v5524, 6
  %vm5526 = vcmask 949248
  %v5527 = vsel %vm5526, %v5525, %v5524
  %vm5529 = vcmask 1042336
  %vm5530 = vcmask 60418
  %vm5531 = vmor %vm5530, %vm5529
  %5532 = vst.msk [vmem:[#allocation5 + $0x6] sm:$0xf] %vm5531, %v5527
  %s5533 = scalar_lea.vmem [#allocation4], 52
  %v5534 = vld [vmem:[%s5533] ss:$100 sm:$0x3]
  %s5535 = scalar_lea.vmem [#allocation4], 53
  %v5536 = vld [vmem:[%s5535] ss:$100 sm:$0x3]
  %v5537 = vmax.f32 %v5534, %v5536
  %v5540 = vunpack.c.l.s4 1983009808
  %v5541 = vunpack.c.0.s8 %v5540
  %v5542 = vlaneseq
  %v5543 = vshrl.u32 %v5542, 7
  %v5544 = vsub.s32 %v5541, %v5543
  %v5545 = vrot.slane %v5537, %v5544
  %5546 = vrot.lane.b32.xlu0 %v5545, 8
  %v5547 = vpop.permute.xlu0 %5546
  %vm5549 = vcmask 222272
  %5550 = vst.msk [vmem:[#allocation5 + $0x8] sm:$0x3] %vm5549, %v5547
  %s5551 = scalar_lea.vmem [#allocation4], 54
  %v5552 = vld [vmem:[%s5551] ss:$100 sm:$0x3]
  %s5553 = scalar_lea.vmem [#allocation4], 55
  %v5554 = vld [vmem:[%s5553] ss:$100 sm:$0x3]
  %v5555 = vmax.f32 %v5552, %v5554
  %v5558 = vunpack.c.l.s4 1983009808
  %v5559 = vunpack.c.0.s8 %v5558
  %v5560 = vlaneseq
  %v5561 = vshrl.u32 %v5560, 7
  %v5562 = vsub.s32 %v5559, %v5561
  %v5563 = vrot.slane %v5555, %v5562
  %5564 = vrot.lane.b32.xlu0 %v5563, 28
  %v5565 = vpop.permute.xlu0 %5564
  %vm5567 = vcmask 386272
  %5568 = vst.msk [vmem:[#allocation5 + $0x8] sm:$0x3] %vm5567, %v5565
  %s5569 = scalar_lea.vmem [#allocation4], 56
  %v5570 = vld [vmem:[%s5569] ss:$100 sm:$0x3]
  %s5571 = scalar_lea.vmem [#allocation4], 57
  %v5572 = vld [vmem:[%s5571] ss:$100 sm:$0x3]
  %v5573 = vmax.f32 %v5570, %v5572
  %v5576 = vunpack.c.l.s4 1983009808
  %v5577 = vunpack.c.0.s8 %v5576
  %v5578 = vlaneseq
  %v5579 = vshrl.u32 %v5578, 7
  %v5580 = vsub.s32 %v5577, %v5579
  %v5581 = vrot.slane %v5573, %v5580
  %5582 = vrot.lane.b32.xlu0 %v5581, 48
  %v5583 = vpop.permute.xlu0 %5582
  %vm5585 = vcmask 550272
  %5586 = vst.msk [vmem:[#allocation5 + $0x8] sm:$0x3] %vm5585, %v5583
  %s5587 = scalar_lea.vmem [#allocation4], 58
  %v5588 = vld [vmem:[%s5587] ss:$100 sm:$0x3]
  %s5589 = scalar_lea.vmem [#allocation4], 59
  %v5590 = vld [vmem:[%s5589] ss:$100 sm:$0x3]
  %v5591 = vmax.f32 %v5588, %v5590
  %v5594 = vunpack.c.l.s4 1983009808
  %v5595 = vunpack.c.0.s8 %v5594
  %v5596 = vlaneseq
  %v5597 = vshrl.u32 %v5596, 7
  %v5598 = vsub.s32 %v5595, %v5597
  %v5599 = vrot.slane %v5591, %v5598
  %5600 = vrot.lane.b32.xlu0 %v5599, 68
  %v5601 = vpop.permute.xlu0 %5600
  %vm5603 = vcmask 714272
  %5604 = vst.msk [vmem:[#allocation5 + $0x8] sm:$0x3] %vm5603, %v5601
  %s5605 = scalar_lea.vmem [#allocation4], 60
  %v5606 = vld [vmem:[%s5605] ss:$100 sm:$0x3]
  %s5607 = scalar_lea.vmem [#allocation4], 61
  %v5608 = vld [vmem:[%s5607] ss:$100 sm:$0x3]
  %v5609 = vmax.f32 %v5606, %v5608
  %v5612 = vunpack.c.l.s4 1983009808
  %v5613 = vunpack.c.0.s8 %v5612
  %v5614 = vlaneseq
  %v5615 = vshrl.u32 %v5614, 7
  %v5616 = vsub.s32 %v5613, %v5615
  %v5617 = vrot.slane %v5609, %v5616
  %5618 = vrot.lane.b32.xlu0 %v5617, 88
  %v5619 = vpop.permute.xlu0 %5618
  %vm5621 = vcmask 878272
  %5622 = vst.msk [vmem:[#allocation5 + $0x8] sm:$0x3] %vm5621, %v5619
  %s5623 = scalar_lea.vmem [#allocation4], 62
  %v5624 = vld [vmem:[%s5623] ss:$100 sm:$0x3]
  %s5625 = scalar_lea.vmem [#allocation4], 63
  %v5626 = vld [vmem:[%s5625] ss:$100 sm:$0x3]
  %v5627 = vmax.f32 %v5624, %v5626
  %v5630 = vunpack.c.l.s4 1983009808
  %v5631 = vunpack.c.0.s8 %v5630
  %v5632 = vlaneseq
  %v5633 = vshrl.u32 %v5632, 7
  %v5634 = vsub.s32 %v5631, %v5633
  %v5635 = vrot.slane %v5627, %v5634
  %5636 = vrot.lane.b32.xlu0 %v5635, 108
  %v5637 = vpop.permute.xlu0 %5636
  %vm5639 = vcmask 1042272
  %5640 = vst.msk [vmem:[#allocation5 + $0x8] sm:$0x3] %vm5639, %v5637
  %s5641 = scalar_lea.vmem [#allocation4], 64
  %v5642 = vld [vmem:[%s5641] ss:$100 sm:$0x3]
  %s5643 = scalar_lea.vmem [#allocation4], 65
  %v5644 = vld [vmem:[%s5643] ss:$100 sm:$0x3]
  %v5645 = vmax.f32 %v5642, %v5644
  %5646 = vst.msk [vmem:[#allocation5 + $0xa] sm:$0x3] %vm5061, %v5645
  %s5647 = scalar_lea.vmem [#allocation4], 66
  %v5648 = vld [vmem:[%s5647] ss:$100 sm:$0x3]
  %s5649 = scalar_lea.vmem [#allocation4], 67
  %v5650 = vld [vmem:[%s5649] ss:$100 sm:$0x3]
  %v5651 = vmax.f32 %v5648, %v5650
  %v5654 = vunpack.c.l.s4 1983009808
  %v5655 = vunpack.c.0.s8 %v5654
  %v5656 = vlaneseq
  %v5657 = vshrl.u32 %v5656, 7
  %v5658 = vsub.s32 %v5655, %v5657
  %v5659 = vrot.slane %v5651, %v5658
  %5660 = vrot.lane.b32.xlu0 %v5659, 20
  %v5661 = vpop.permute.xlu0 %5660
  %5663 = vst.msk [vmem:[#allocation5 + $0xa] sm:$0x3] %vm5079, %v5661
  %s5664 = scalar_lea.vmem [#allocation4], 68
  %v5665 = vld [vmem:[%s5664] ss:$100 sm:$0x3]
  %s5666 = scalar_lea.vmem [#allocation4], 69
  %v5667 = vld [vmem:[%s5666] ss:$100 sm:$0x3]
  %v5668 = vmax.f32 %v5665, %v5667
  %v5671 = vunpack.c.l.s4 1983009808
  %v5672 = vunpack.c.0.s8 %v5671
  %v5673 = vlaneseq
  %v5674 = vshrl.u32 %v5673, 7
  %v5675 = vsub.s32 %v5672, %v5674
  %v5676 = vrot.slane %v5668, %v5675
  %5677 = vrot.lane.b32.xlu0 %v5676, 40
  %v5678 = vpop.permute.xlu0 %5677
  %5680 = vst.msk [vmem:[#allocation5 + $0xa] sm:$0x3] %vm5097, %v5678
  %s5681 = scalar_lea.vmem [#allocation4], 70
  %v5682 = vld [vmem:[%s5681] ss:$100 sm:$0x3]
  %s5683 = scalar_lea.vmem [#allocation4], 71
  %v5684 = vld [vmem:[%s5683] ss:$100 sm:$0x3]
  %v5685 = vmax.f32 %v5682, %v5684
  %v5688 = vunpack.c.l.s4 1983009808
  %v5689 = vunpack.c.0.s8 %v5688
  %v5690 = vlaneseq
  %v5691 = vshrl.u32 %v5690, 7
  %v5692 = vsub.s32 %v5689, %v5691
  %v5693 = vrot.slane %v5685, %v5692
  %5694 = vrot.lane.b32.xlu0 %v5693, 60
  %v5695 = vpop.permute.xlu0 %5694
  %5697 = vst.msk [vmem:[#allocation5 + $0xa] sm:$0x3] %vm5115, %v5695
  %s5698 = scalar_lea.vmem [#allocation4], 72
  %v5699 = vld [vmem:[%s5698] ss:$100 sm:$0x3]
  %s5700 = scalar_lea.vmem [#allocation4], 73
  %v5701 = vld [vmem:[%s5700] ss:$100 sm:$0x3]
  %v5702 = vmax.f32 %v5699, %v5701
  %v5705 = vunpack.c.l.s4 1983009808
  %v5706 = vunpack.c.0.s8 %v5705
  %v5707 = vlaneseq
  %v5708 = vshrl.u32 %v5707, 7
  %v5709 = vsub.s32 %v5706, %v5708
  %v5710 = vrot.slane %v5702, %v5709
  %5711 = vrot.lane.b32.xlu0 %v5710, 80
  %v5712 = vpop.permute.xlu0 %5711
  %5714 = vst.msk [vmem:[#allocation5 + $0xa] sm:$0x3] %vm5133, %v5712
  %s5715 = scalar_lea.vmem [#allocation4], 74
  %v5716 = vld [vmem:[%s5715] ss:$100 sm:$0x3]
  %s5717 = scalar_lea.vmem [#allocation4], 75
  %v5718 = vld [vmem:[%s5717] ss:$100 sm:$0x3]
  %v5719 = vmax.f32 %v5716, %v5718
  %v5722 = vunpack.c.l.s4 1983009808
  %v5723 = vunpack.c.0.s8 %v5722
  %v5724 = vlaneseq
  %v5725 = vshrl.u32 %v5724, 7
  %v5726 = vsub.s32 %v5723, %v5725
  %v5727 = vrot.slane %v5719, %v5726
  %5728 = vrot.lane.b32.xlu0 %v5727, 100
  %v5729 = vpop.permute.xlu0 %5728
  %5731 = vst.msk [vmem:[#allocation5 + $0xa] sm:$0x3] %vm5151, %v5729
  %s5732 = scalar_lea.vmem [#allocation4], 76
  %v5733 = vld [vmem:[%s5732] ss:$100 sm:$0x3]
  %s5734 = scalar_lea.vmem [#allocation4], 77
  %v5735 = vld [vmem:[%s5734] ss:$100 sm:$0x3]
  %v5736 = vmax.f32 %v5733, %v5735
  %v5739 = vunpack.c.l.s4 1983009808
  %v5740 = vunpack.c.0.s8 %v5739
  %v5741 = vlaneseq
  %v5742 = vshrl.u32 %v5741, 7
  %v5743 = vsub.s32 %v5740, %v5742
  %v5744 = vrot.slane %v5736, %v5743
  %5745 = vrot.lane.b32.xlu0 %v5744, 120
  %v5746 = vpop.permute.xlu0 %5745
  %v5747 = vrot.slane %v5746, 6
  %v5748 = vsel %vm5169, %v5747, %v5746
  %5750 = vst.msk [vmem:[#allocation5 + $0xa] sm:$0xf] %vm5174, %v5748
  %s5751 = scalar_lea.vmem [#allocation4], 78
  %v5752 = vld [vmem:[%s5751] ss:$100 sm:$0x3]
  %s5753 = scalar_lea.vmem [#allocation4], 79
  %v5754 = vld [vmem:[%s5753] ss:$100 sm:$0x3]
  %v5755 = vmax.f32 %v5752, %v5754
  %v5758 = vunpack.c.l.s4 1983009808
  %v5759 = vunpack.c.0.s8 %v5758
  %v5760 = vlaneseq
  %v5761 = vshrl.u32 %v5760, 7
  %v5762 = vsub.s32 %v5759, %v5761
  %v5763 = vrot.slane %v5755, %v5762
  %5764 = vrot.lane.b32.xlu0 %v5763, 12
  %v5765 = vpop.permute.xlu0 %5764
  %5767 = vst.msk [vmem:[#allocation5 + $0xc] sm:$0x3] %vm5192, %v5765
  %s5768 = scalar_lea.vmem [#allocation4], 80
  %v5769 = vld [vmem:[%s5768] ss:$100 sm:$0x3]
  %s5770 = scalar_lea.vmem [#allocation4], 81
  %v5771 = vld [vmem:[%s5770] ss:$100 sm:$0x3]
  %v5772 = vmax.f32 %v5769, %v5771
  %v5775 = vunpack.c.l.s4 1983009808
  %v5776 = vunpack.c.0.s8 %v5775
  %v5777 = vlaneseq
  %v5778 = vshrl.u32 %v5777, 7
  %v5779 = vsub.s32 %v5776, %v5778
  %v5780 = vrot.slane %v5772, %v5779
  %5781 = vrot.lane.b32.xlu0 %v5780, 32
  %v5782 = vpop.permute.xlu0 %5781
  %5784 = vst.msk [vmem:[#allocation5 + $0xc] sm:$0x3] %vm5210, %v5782
  %s5785 = scalar_lea.vmem [#allocation4], 82
  %v5786 = vld [vmem:[%s5785] ss:$100 sm:$0x3]
  %s5787 = scalar_lea.vmem [#allocation4], 83
  %v5788 = vld [vmem:[%s5787] ss:$100 sm:$0x3]
  %v5789 = vmax.f32 %v5786, %v5788
  %v5792 = vunpack.c.l.s4 1983009808
  %v5793 = vunpack.c.0.s8 %v5792
  %v5794 = vlaneseq
  %v5795 = vshrl.u32 %v5794, 7
  %v5796 = vsub.s32 %v5793, %v5795
  %v5797 = vrot.slane %v5789, %v5796
  %5798 = vrot.lane.b32.xlu0 %v5797, 52
  %v5799 = vpop.permute.xlu0 %5798
  %5801 = vst.msk [vmem:[#allocation5 + $0xc] sm:$0x3] %vm5228, %v5799
  %s5802 = scalar_lea.vmem [#allocation4], 84
  %v5803 = vld [vmem:[%s5802] ss:$100 sm:$0x3]
  %s5804 = scalar_lea.vmem [#allocation4], 85
  %v5805 = vld [vmem:[%s5804] ss:$100 sm:$0x3]
  %v5806 = vmax.f32 %v5803, %v5805
  %v5809 = vunpack.c.l.s4 1983009808
  %v5810 = vunpack.c.0.s8 %v5809
  %v5811 = vlaneseq
  %v5812 = vshrl.u32 %v5811, 7
  %v5813 = vsub.s32 %v5810, %v5812
  %v5814 = vrot.slane %v5806, %v5813
  %5815 = vrot.lane.b32.xlu0 %v5814, 72
  %v5816 = vpop.permute.xlu0 %5815
  %5818 = vst.msk [vmem:[#allocation5 + $0xc] sm:$0x3] %vm5246, %v5816
  %s5819 = scalar_lea.vmem [#allocation4], 86
  %v5820 = vld [vmem:[%s5819] ss:$100 sm:$0x3]
  %s5821 = scalar_lea.vmem [#allocation4], 87
  %v5822 = vld [vmem:[%s5821] ss:$100 sm:$0x3]
  %v5823 = vmax.f32 %v5820, %v5822
  %v5826 = vunpack.c.l.s4 1983009808
  %v5827 = vunpack.c.0.s8 %v5826
  %v5828 = vlaneseq
  %v5829 = vshrl.u32 %v5828, 7
  %v5830 = vsub.s32 %v5827, %v5829
  %v5831 = vrot.slane %v5823, %v5830
  %5832 = vrot.lane.b32.xlu0 %v5831, 92
  %v5833 = vpop.permute.xlu0 %5832
  %5835 = vst.msk [vmem:[#allocation5 + $0xc] sm:$0x3] %vm5264, %v5833
  %s5836 = scalar_lea.vmem [#allocation4], 88
  %v5837 = vld [vmem:[%s5836] ss:$100 sm:$0x3]
  %s5838 = scalar_lea.vmem [#allocation4], 89
  %v5839 = vld [vmem:[%s5838] ss:$100 sm:$0x3]
  %v5840 = vmax.f32 %v5837, %v5839
  %v5843 = vunpack.c.l.s4 1983009808
  %v5844 = vunpack.c.0.s8 %v5843
  %v5845 = vlaneseq
  %v5846 = vshrl.u32 %v5845, 7
  %v5847 = vsub.s32 %v5844, %v5846
  %v5848 = vrot.slane %v5840, %v5847
  %5849 = vrot.lane.b32.xlu0 %v5848, 112
  %v5850 = vpop.permute.xlu0 %5849
  %v5851 = vrot.slane %v5850, 6
  %v5852 = vsel %vm5282, %v5851, %v5850
  %5854 = vst.msk [vmem:[#allocation5 + $0xc] sm:$0xf] %vm5287, %v5852
  %s5855 = scalar_lea.vmem [#allocation4], 90
  %v5856 = vld [vmem:[%s5855] ss:$100 sm:$0x3]
  %s5857 = scalar_lea.vmem [#allocation4], 91
  %v5858 = vld [vmem:[%s5857] ss:$100 sm:$0x3]
  %v5859 = vmax.f32 %v5856, %v5858
  %v5862 = vunpack.c.l.s4 1983009808
  %v5863 = vunpack.c.0.s8 %v5862
  %v5864 = vlaneseq
  %v5865 = vshrl.u32 %v5864, 7
  %v5866 = vsub.s32 %v5863, %v5865
  %v5867 = vrot.slane %v5859, %v5866
  %5868 = vrot.lane.b32.xlu0 %v5867, 4
  %v5869 = vpop.permute.xlu0 %5868
  %5871 = vst.msk [vmem:[#allocation5 + $0xe] sm:$0x3] %vm5305, %v5869
  %s5872 = scalar_lea.vmem [#allocation4], 92
  %v5873 = vld [vmem:[%s5872] ss:$100 sm:$0x3]
  %s5874 = scalar_lea.vmem [#allocation4], 93
  %v5875 = vld [vmem:[%s5874] ss:$100 sm:$0x3]
  %v5876 = vmax.f32 %v5873, %v5875
  %v5879 = vunpack.c.l.s4 1983009808
  %v5880 = vunpack.c.0.s8 %v5879
  %v5881 = vlaneseq
  %v5882 = vshrl.u32 %v5881, 7
  %v5883 = vsub.s32 %v5880, %v5882
  %v5884 = vrot.slane %v5876, %v5883
  %5885 = vrot.lane.b32.xlu0 %v5884, 24
  %v5886 = vpop.permute.xlu0 %5885
  %5888 = vst.msk [vmem:[#allocation5 + $0xe] sm:$0x3] %vm5323, %v5886
  %s5889 = scalar_lea.vmem [#allocation4], 94
  %v5890 = vld [vmem:[%s5889] ss:$100 sm:$0x3]
  %s5891 = scalar_lea.vmem [#allocation4], 95
  %v5892 = vld [vmem:[%s5891] ss:$100 sm:$0x3]
  %v5893 = vmax.f32 %v5890, %v5892
  %v5896 = vunpack.c.l.s4 1983009808
  %v5897 = vunpack.c.0.s8 %v5896
  %v5898 = vlaneseq
  %v5899 = vshrl.u32 %v5898, 7
  %v5900 = vsub.s32 %v5897, %v5899
  %v5901 = vrot.slane %v5893, %v5900
  %5902 = vrot.lane.b32.xlu0 %v5901, 44
  %v5903 = vpop.permute.xlu0 %5902
  %5905 = vst.msk [vmem:[#allocation5 + $0xe] sm:$0x3] %vm5341, %v5903
  %s5906 = scalar_lea.vmem [#allocation4], 96
  %v5907 = vld [vmem:[%s5906] ss:$100 sm:$0x3]
  %s5908 = scalar_lea.vmem [#allocation4], 97
  %v5909 = vld [vmem:[%s5908] ss:$100 sm:$0x3]
  %v5910 = vmax.f32 %v5907, %v5909
  %v5913 = vunpack.c.l.s4 1983009808
  %v5914 = vunpack.c.0.s8 %v5913
  %v5915 = vlaneseq
  %v5916 = vshrl.u32 %v5915, 7
  %v5917 = vsub.s32 %v5914, %v5916
  %v5918 = vrot.slane %v5910, %v5917
  %5919 = vrot.lane.b32.xlu0 %v5918, 64
  %v5920 = vpop.permute.xlu0 %5919
  %5922 = vst.msk [vmem:[#allocation5 + $0xe] sm:$0x3] %vm5359, %v5920
  %s5923 = scalar_lea.vmem [#allocation4], 98
  %v5924 = vld [vmem:[%s5923] ss:$100 sm:$0x3]
  %s5925 = scalar_lea.vmem [#allocation4], 99
  %v5926 = vld [vmem:[%s5925] ss:$100 sm:$0x3]
  %v5927 = vmax.f32 %v5924, %v5926
  %v5930 = vunpack.c.l.s4 1983009808
  %v5931 = vunpack.c.0.s8 %v5930
  %v5932 = vlaneseq
  %v5933 = vshrl.u32 %v5932, 7
  %v5934 = vsub.s32 %v5931, %v5933
  %v5935 = vrot.slane %v5927, %v5934
  %5936 = vrot.lane.b32.xlu0 %v5935, 84
  %v5937 = vpop.permute.xlu0 %5936
  %5939 = vst.msk [vmem:[#allocation5 + $0xe] sm:$0x3] %vm5377, %v5937
  %v5940 = vld [vmem:[#allocation5] sm:$0xff]
  %v5941 = vld [vmem:[#allocation5 + $0x8] sm:$0xff]
  %v5942 = vld [vmem:[%s7] sm:$0xff]
  %v5943 = vld [vmem:[%s7 + $0x8] sm:$0xff]
  %v5944 = vld [vmem:[%s7 + $0x10] sm:$0xff]
  %v5945 = vld [vmem:[%s7 + $0x18] sm:$0xff]
  %v5946 = vld [vmem:[%s7 + $0x20] sm:$0xff]
  %v5947 = vld [vmem:[%s7 + $0x28] sm:$0xff]
  %v5948 = vld [vmem:[%s7 + $0x30] sm:$0xff]
  %v5949 = vld [vmem:[%s7 + $0x38] sm:$0xff]
  %v5950 = vld [vmem:[%s7 + $0x40] sm:$0xff]
  %v5951 = vld [vmem:[%s7 + $0x48] sm:$0xff]
  %v5952 = vld [vmem:[%s7 + $0x50] sm:$0xff]
  %v5953 = vld [vmem:[%s7 + $0x58] sm:$0xff]
  %v5954 = vld [vmem:[%s7 + $0x60] sm:$0xff]
  %v5955 = vld [vmem:[%s7 + $0x68] sm:$0xff]
  %v5956 = vld [vmem:[%s7 + $0x70] sm:$0xff]
  %v5957 = vld [vmem:[%s7 + $0x78] sm:$0xff]
  %v5958 = vld [vmem:[%s7 + $0x80] sm:$0xff]
  %v5959 = vld [vmem:[%s7 + $0x88] sm:$0xff]
  %v5960 = vld [vmem:[%s7 + $0x90] sm:$0xff]
  %v5961 = vld [vmem:[%s7 + $0x98] sm:$0xff]
  %v5962 = vld [vmem:[%s7 + $0xa0] sm:$0xff]
  %v5963 = vld [vmem:[%s7 + $0xa8] sm:$0xff]
  %v5964 = vld [vmem:[%s7 + $0xb0] sm:$0xff]
  %v5965 = vld [vmem:[%s7 + $0xb8] sm:$0xff]
  %v5966 = vld [vmem:[%s7 + $0xc0] sm:$0xff]
  %v5967 = vld [vmem:[%s7 + $0xc8] sm:$0xff]
  %v5968 = vld [vmem:[%s7 + $0xd0] sm:$0xff]
  %v5969 = vld [vmem:[%s7 + $0xd8] sm:$0xff]
  %v5970 = vld [vmem:[%s7 + $0xe0] sm:$0xff]
  %v5971 = vld [vmem:[%s7 + $0xe8] sm:$0xff]
  %v5972 = vld [vmem:[%s7 + $0xf0] sm:$0xff]
  %v5973 = vld [vmem:[%s7 + $0xf8] sm:$0xff]
  %v5974 = vld [vmem:[%s7 + $0x100] sm:$0xff]
  %v5975 = vld [vmem:[%s7 + $0x108] sm:$0xff]
  %v5976 = vld [vmem:[%s7 + $0x110] sm:$0xff]
  %v5977 = vld [vmem:[%s7 + $0x118] sm:$0xff]
  %v5978 = vld [vmem:[%s7 + $0x120] sm:$0xff]
  %v5979 = vld [vmem:[%s7 + $0x128] sm:$0xff]
  %v5980 = vld [vmem:[%s7 + $0x130] sm:$0xff]
  %v5981 = vld [vmem:[%s7 + $0x138] sm:$0xff]
  %v5982 = vld [vmem:[%s7 + $0x140] sm:$0xff]
  %v5983 = vld [vmem:[%s7 + $0x148] sm:$0xff]
  %v5984 = vld [vmem:[%s7 + $0x150] sm:$0xff]
  %v5985 = vld [vmem:[%s7 + $0x158] sm:$0xff]
  %v5986 = vld [vmem:[%s7 + $0x160] sm:$0xff]
  %v5987 = vld [vmem:[%s7 + $0x168] sm:$0xff]
  %v5988 = vld [vmem:[%s7 + $0x170] sm:$0xff]
  %v5989 = vld [vmem:[%s7 + $0x178] sm:$0xff]
  %v5990 = vld [vmem:[%s7 + $0x180] sm:$0xff]
  %v5991 = vld [vmem:[%s7 + $0x188] sm:$0xff]
  %v5992 = vld [vmem:[%s7 + $0x190] sm:$0xff]
  %v5993 = vld [vmem:[%s7 + $0x198] sm:$0xff]
  %v5994 = vld [vmem:[%s7 + $0x1a0] sm:$0xff]
  %v5995 = vld [vmem:[%s7 + $0x1a8] sm:$0xff]
  %v5996 = vld [vmem:[%s7 + $0x1b0] sm:$0xff]
  %v5997 = vld [vmem:[%s7 + $0x1b8] sm:$0xff]
  %v5998 = vld [vmem:[%s7 + $0x1c0] sm:$0xff]
  %v5999 = vld [vmem:[%s7 + $0x1c8] sm:$0xff]
  %v6000 = vld [vmem:[%s7 + $0x1d0] sm:$0xff]
  %v6001 = vld [vmem:[%s7 + $0x1d8] sm:$0xff]
  %v6002 = vld [vmem:[%s7 + $0x1e0] sm:$0xff]
  %v6003 = vld [vmem:[%s7 + $0x1e8] sm:$0xff]
  %v6004 = vld [vmem:[%s7 + $0x1f0] sm:$0xff]
  %v6005 = vld [vmem:[%s7 + $0x1f8] sm:$0xff]
  %v6006 = vld [vmem:[%s7 + $0x200] sm:$0xff]
  %v6007 = vld [vmem:[%s7 + $0x208] sm:$0xff]
  %v6008 = vld [vmem:[%s7 + $0x210] sm:$0xff]
  %v6009 = vld [vmem:[%s7 + $0x218] sm:$0xff]
  %v6010 = vld [vmem:[%s7 + $0x220] sm:$0xff]
  %v6011 = vld [vmem:[%s7 + $0x228] sm:$0xff]
  %v6012 = vld [vmem:[%s7 + $0x230] sm:$0xff]
  %v6013 = vld [vmem:[%s7 + $0x238] sm:$0xff]
  %v6014 = vld [vmem:[%s7 + $0x240] sm:$0xff]
  %v6015 = vld [vmem:[%s7 + $0x248] sm:$0xff]
  %v6016 = vld [vmem:[%s7 + $0x250] sm:$0xff]
  %v6017 = vld [vmem:[%s7 + $0x258] sm:$0xff]
  %v6018 = vld [vmem:[%s7 + $0x260] sm:$0xff]
  %v6019 = vld [vmem:[%s7 + $0x268] sm:$0xff]
  %v6020 = vld [vmem:[%s7 + $0x270] sm:$0xff]
  %v6021 = vld [vmem:[%s7 + $0x278] sm:$0xff]
  %v6022 = vld [vmem:[%s7 + $0x280] sm:$0xff]
  %v6023 = vld [vmem:[%s7 + $0x288] sm:$0xff]
  %v6024 = vld [vmem:[%s7 + $0x290] sm:$0xff]
  %v6025 = vld [vmem:[%s7 + $0x298] sm:$0xff]
  %v6026 = vld [vmem:[%s7 + $0x2a0] sm:$0xff]
  %v6027 = vld [vmem:[%s7 + $0x2a8] sm:$0xff]
  %v6028 = vld [vmem:[%s7 + $0x2b0] sm:$0xff]
  %v6029 = vld [vmem:[%s7 + $0x2b8] sm:$0xff]
  %v6030 = vld [vmem:[%s7 + $0x2c0] sm:$0xff]
  %v6031 = vld [vmem:[%s7 + $0x2c8] sm:$0xff]
  %v6032 = vld [vmem:[%s7 + $0x2d0] sm:$0xff]
  %v6033 = vld [vmem:[%s7 + $0x2d8] sm:$0xff]
  %v6034 = vld [vmem:[%s7 + $0x2e0] sm:$0xff]
  %v6035 = vld [vmem:[%s7 + $0x2e8] sm:$0xff]
  %v6036 = vld [vmem:[%s7 + $0x2f0] sm:$0xff]
  %v6037 = vld [vmem:[%s7 + $0x2f8] sm:$0xff]
  %v6038 = vld [vmem:[%s7 + $0x300] sm:$0xff]
  %v6039 = vld [vmem:[%s7 + $0x308] sm:$0xff]
  %v6040 = vld [vmem:[%s7 + $0x310] sm:$0xff]
  %v6041 = vld [vmem:[%s7 + $0x318] sm:$0xff]
  %v6042 = vld [vmem:[%s7 + $0x320] sm:$0xff]
  %v6043 = vld [vmem:[%s7 + $0x328] sm:$0xff]
  %v6044 = vld [vmem:[%s7 + $0x330] sm:$0xff]
  %v6045 = vld [vmem:[%s7 + $0x338] sm:$0xff]
  %v6046 = vld [vmem:[%s7 + $0x340] sm:$0xff]
  %v6047 = vld [vmem:[%s7 + $0x348] sm:$0xff]
  %v6048 = vld [vmem:[%s7 + $0x350] sm:$0xff]
  %v6049 = vld [vmem:[%s7 + $0x358] sm:$0xff]
  %v6050 = vld [vmem:[%s7 + $0x360] sm:$0xff]
  %v6051 = vld [vmem:[%s7 + $0x368] sm:$0xff]
  %v6052 = vld [vmem:[%s7 + $0x370] sm:$0xff]
  %v6053 = vld [vmem:[%s7 + $0x378] sm:$0xff]
  %v6054 = vld [vmem:[%s7 + $0x380] sm:$0xff]
  %v6055 = vld [vmem:[%s7 + $0x388] sm:$0xff]
  %v6056 = vld [vmem:[%s7 + $0x390] sm:$0xff]
  %v6057 = vld [vmem:[%s7 + $0x398] sm:$0xff]
  %v6058 = vld [vmem:[%s7 + $0x3a0] sm:$0xff]
  %v6059 = vld [vmem:[%s7 + $0x3a8] sm:$0xff]
  %v6060 = vld [vmem:[%s7 + $0x3b0] sm:$0xff]
  %v6061 = vld [vmem:[%s7 + $0x3b8] sm:$0xff]
  %v6062 = vld [vmem:[%s7 + $0x3c0] sm:$0xff]
  %v6063 = vld [vmem:[%s7 + $0x3c8] sm:$0xff]
  %v6064 = vld [vmem:[%s7 + $0x3d0] sm:$0xff]
  %v6065 = vld [vmem:[%s7 + $0x3d8] sm:$0xff]
  %v6066 = vld [vmem:[%s7 + $0x3e0] sm:$0xff]
  %v6067 = vld [vmem:[%s7 + $0x3e8] sm:$0xff]
  %v6068 = vld [vmem:[%s7 + $0x3f0] sm:$0xff]
  %v6069 = vld [vmem:[%s7 + $0x3f8] sm:$0xff]
  %v6070 = vld [vmem:[%s7 + $0x400] sm:$0xff]
  %v6071 = vld [vmem:[%s7 + $0x408] sm:$0xff]
  %v6072 = vld [vmem:[%s7 + $0x410] sm:$0xff]
  %v6073 = vld [vmem:[%s7 + $0x418] sm:$0xff]
  %v6074 = vld [vmem:[%s7 + $0x420] sm:$0xff]
  %v6075 = vld [vmem:[%s7 + $0x428] sm:$0xff]
  %v6076 = vld [vmem:[%s7 + $0x430] sm:$0xff]
  %v6077 = vld [vmem:[%s7 + $0x438] sm:$0xff]
  %v6078 = vld [vmem:[%s7 + $0x440] sm:$0xff]
  %v6079 = vld [vmem:[%s7 + $0x448] sm:$0xff]
  %v6080 = vld [vmem:[%s7 + $0x450] sm:$0xff]
  %v6081 = vld [vmem:[%s7 + $0x458] sm:$0xff]
  %v6082 = vld [vmem:[%s7 + $0x460] sm:$0xff]
  %v6083 = vld [vmem:[%s7 + $0x468] sm:$0xff]
  %v6084 = vld [vmem:[%s7 + $0x470] sm:$0xff]
  %v6085 = vld [vmem:[%s7 + $0x478] sm:$0xff]
  %v6086 = vld [vmem:[%s7 + $0x480] sm:$0xff]
  %v6087 = vld [vmem:[%s7 + $0x488] sm:$0xff]
  %v6088 = vld [vmem:[%s7 + $0x490] sm:$0xff]
  %v6089 = vld [vmem:[%s7 + $0x498] sm:$0xff]
  %v6090 = vld [vmem:[%s7 + $0x4a0] sm:$0xff]
  %v6091 = vld [vmem:[%s7 + $0x4a8] sm:$0xff]
  %v6092 = vld [vmem:[%s7 + $0x4b0] sm:$0xff]
  %v6093 = vld [vmem:[%s7 + $0x4b8] sm:$0xff]
  %v6094 = vld [vmem:[%s7 + $0x4c0] sm:$0xff]
  %v6095 = vld [vmem:[%s7 + $0x4c8] sm:$0xff]
  %v6096 = vld [vmem:[%s7 + $0x4d0] sm:$0xff]
  %v6097 = vld [vmem:[%s7 + $0x4d8] sm:$0xff]
  %v6098 = vld [vmem:[%s7 + $0x4e0] sm:$0xff]
  %v6099 = vld [vmem:[%s7 + $0x4e8] sm:$0xff]
  %v6100 = vld [vmem:[%s7 + $0x4f0] sm:$0xff]
  %v6101 = vld [vmem:[%s7 + $0x4f8] sm:$0xff]
  %v6102 = vld [vmem:[%s7 + $0x500] sm:$0xff]
  %v6103 = vld [vmem:[%s7 + $0x508] sm:$0xff]
  %v6104 = vld [vmem:[%s7 + $0x510] sm:$0xff]
  %v6105 = vld [vmem:[%s7 + $0x518] sm:$0xff]
  %v6106 = vld [vmem:[%s7 + $0x520] sm:$0xff]
  %v6107 = vld [vmem:[%s7 + $0x528] sm:$0xff]
  %v6108 = vld [vmem:[%s7 + $0x530] sm:$0xff]
  %v6109 = vld [vmem:[%s7 + $0x538] sm:$0xff]
  %v6110 = vld [vmem:[%s7 + $0x540] sm:$0xff]
  %v6111 = vld [vmem:[%s7 + $0x548] sm:$0xff]
  %v6112 = vld [vmem:[%s7 + $0x550] sm:$0xff]
  %v6113 = vld [vmem:[%s7 + $0x558] sm:$0xff]
  %v6114 = vld [vmem:[%s7 + $0x560] sm:$0xff]
  %v6115 = vld [vmem:[%s7 + $0x568] sm:$0xff]
  %v6116 = vld [vmem:[%s7 + $0x570] sm:$0xff]
  %v6117 = vld [vmem:[%s7 + $0x578] sm:$0xff]
  %v6118 = vld [vmem:[%s7 + $0x580] sm:$0xff]
  %v6119 = vld [vmem:[%s7 + $0x588] sm:$0xff]
  %v6120 = vld [vmem:[%s7 + $0x590] sm:$0xff]
  %v6121 = vld [vmem:[%s7 + $0x598] sm:$0xff]
  %v6122 = vld [vmem:[%s7 + $0x5a0] sm:$0xff]
  %v6123 = vld [vmem:[%s7 + $0x5a8] sm:$0xff]
  %v6124 = vld [vmem:[%s7 + $0x5b0] sm:$0xff]
  %v6125 = vld [vmem:[%s7 + $0x5b8] sm:$0xff]
  %v6126 = vld [vmem:[%s7 + $0x5c0] sm:$0xff]
  %v6127 = vld [vmem:[%s7 + $0x5c8] sm:$0xff]
  %v6128 = vld [vmem:[%s7 + $0x5d0] sm:$0xff]
  %v6129 = vld [vmem:[%s7 + $0x5d8] sm:$0xff]
  %v6130 = vld [vmem:[%s7 + $0x5e0] sm:$0xff]
  %v6131 = vld [vmem:[%s7 + $0x5e8] sm:$0xff]
  %v6132 = vld [vmem:[%s7 + $0x5f0] sm:$0xff]
  %v6133 = vld [vmem:[%s7 + $0x5f8] sm:$0xff]
  %v6134 = vld [vmem:[%s7 + $0x600] sm:$0xff]
  %v6135 = vld [vmem:[%s7 + $0x608] sm:$0xff]
  %v6136 = vld [vmem:[%s7 + $0x610] sm:$0xff]
  %v6137 = vld [vmem:[%s7 + $0x618] sm:$0xff]
  %v6138 = vld [vmem:[%s7 + $0x620] sm:$0xff]
  %v6139 = vld [vmem:[%s7 + $0x628] sm:$0xff]
  %v6140 = vld [vmem:[%s7 + $0x630] sm:$0xff]
  %v6141 = vld [vmem:[%s7 + $0x638] sm:$0xff]
  %v6142 = vld [vmem:[%s7 + $0x640] sm:$0xff]
  %v6143 = vld [vmem:[%s7 + $0x648] sm:$0xff]
  %v6144 = vld [vmem:[%s7 + $0x650] sm:$0xff]
  %v6145 = vld [vmem:[%s7 + $0x658] sm:$0xff]
  %v6146 = vld [vmem:[%s7 + $0x660] sm:$0xff]
  %v6147 = vld [vmem:[%s7 + $0x668] sm:$0xff]
  %v6148 = vld [vmem:[%s7 + $0x670] sm:$0xff]
  %v6149 = vld [vmem:[%s7 + $0x678] sm:$0xff]
  %v6150 = vld [vmem:[%s7 + $0x680] sm:$0xff]
  %v6151 = vld [vmem:[%s7 + $0x688] sm:$0xff]
  %v6152 = vld [vmem:[%s7 + $0x690] sm:$0xff]
  %v6153 = vld [vmem:[%s7 + $0x698] sm:$0xff]
  %v6154 = vld [vmem:[%s7 + $0x6a0] sm:$0xff]
  %v6155 = vld [vmem:[%s7 + $0x6a8] sm:$0xff]
  %v6156 = vld [vmem:[%s7 + $0x6b0] sm:$0xff]
  %v6157 = vld [vmem:[%s7 + $0x6b8] sm:$0xff]
  %v6158 = vld [vmem:[%s7 + $0x6c0] sm:$0xff]
  %v6159 = vld [vmem:[%s7 + $0x6c8] sm:$0xff]
  %v6160 = vld [vmem:[%s7 + $0x6d0] sm:$0xff]
  %v6161 = vld [vmem:[%s7 + $0x6d8] sm:$0xff]
  %v6162 = vld [vmem:[%s7 + $0x6e0] sm:$0xff]
  %v6163 = vld [vmem:[%s7 + $0x6e8] sm:$0xff]
  %v6164 = vld [vmem:[%s7 + $0x6f0] sm:$0xff]
  %v6165 = vld [vmem:[%s7 + $0x6f8] sm:$0xff]
  %v6166 = vld [vmem:[%s7 + $0x700] sm:$0xff]
  %v6167 = vld [vmem:[%s7 + $0x708] sm:$0xff]
  %v6168 = vld [vmem:[%s7 + $0x710] sm:$0xff]
  %v6169 = vld [vmem:[%s7 + $0x718] sm:$0xff]
  %v6170 = vld [vmem:[%s7 + $0x720] sm:$0xff]
  %v6171 = vld [vmem:[%s7 + $0x728] sm:$0xff]
  %v6172 = vld [vmem:[%s7 + $0x730] sm:$0xff]
  %v6173 = vld [vmem:[%s7 + $0x738] sm:$0xff]
  %v6174 = vld [vmem:[%s7 + $0x740] sm:$0xff]
  %v6175 = vld [vmem:[%s7 + $0x748] sm:$0xff]
  %v6176 = vld [vmem:[%s7 + $0x750] sm:$0xff]
  %v6177 = vld [vmem:[%s7 + $0x758] sm:$0xff]
  %v6178 = vld [vmem:[%s7 + $0x760] sm:$0xff]
  %v6179 = vld [vmem:[%s7 + $0x768] sm:$0xff]
  %v6180 = vld [vmem:[%s7 + $0x770] sm:$0xff]
  %v6181 = vld [vmem:[%s7 + $0x778] sm:$0xff]
  %v6182 = vld [vmem:[%s7 + $0x780] sm:$0xff]
  %v6183 = vld [vmem:[%s7 + $0x788] sm:$0xff]
  %v6184 = vld [vmem:[%s7 + $0x790] sm:$0xff]
  %v6185 = vld [vmem:[%s7 + $0x798] sm:$0xff]
  %v6186 = vld [vmem:[%s7 + $0x7a0] sm:$0xff]
  %v6187 = vld [vmem:[%s7 + $0x7a8] sm:$0xff]
  %v6188 = vld [vmem:[%s7 + $0x7b0] sm:$0xff]
  %v6189 = vld [vmem:[%s7 + $0x7b8] sm:$0xff]
  %v6190 = vld [vmem:[%s7 + $0x7c0] sm:$0xff]
  %v6191 = vld [vmem:[%s7 + $0x7c8] sm:$0xff]
  %v6192 = vld [vmem:[%s7 + $0x7d0] sm:$0xff]
  %v6193 = vld [vmem:[%s7 + $0x7d8] sm:$0xff]
  %v6194 = vld [vmem:[%s7 + $0x7e0] sm:$0xff]
  %v6195 = vld [vmem:[%s7 + $0x7e8] sm:$0xff]
  %v6196 = vld [vmem:[%s7 + $0x7f0] sm:$0xff]
  %v6197 = vld [vmem:[%s7 + $0x7f8] sm:$0xff]
  %v6198 = vld [vmem:[%s7 + $0x800] sm:$0xff]
  %v6199 = vld [vmem:[%s7 + $0x808] sm:$0xff]
  %v6200 = vld [vmem:[%s7 + $0x810] sm:$0xff]
  %v6201 = vld [vmem:[%s7 + $0x818] sm:$0xff]
  %v6202 = vld [vmem:[%s7 + $0x820] sm:$0xff]
  %v6203 = vld [vmem:[%s7 + $0x828] sm:$0xff]
  %v6204 = vld [vmem:[%s7 + $0x830] sm:$0xff]
  %v6205 = vld [vmem:[%s7 + $0x838] sm:$0xff]
  %v6206 = vld [vmem:[%s7 + $0x840] sm:$0xff]
  %v6207 = vld [vmem:[%s7 + $0x848] sm:$0xff]
  %v6208 = vld [vmem:[%s7 + $0x850] sm:$0xff]
  %v6209 = vld [vmem:[%s7 + $0x858] sm:$0xff]
  %v6210 = vld [vmem:[%s7 + $0x860] sm:$0xff]
  %v6211 = vld [vmem:[%s7 + $0x868] sm:$0xff]
  %v6212 = vld [vmem:[%s7 + $0x870] sm:$0xff]
  %v6213 = vld [vmem:[%s7 + $0x878] sm:$0xff]
  %v6214 = vld [vmem:[%s7 + $0x880] sm:$0xff]
  %v6215 = vld [vmem:[%s7 + $0x888] sm:$0xff]
  %v6216 = vld [vmem:[%s7 + $0x890] sm:$0xff]
  %v6217 = vld [vmem:[%s7 + $0x898] sm:$0xff]
  %v6218 = vld [vmem:[%s7 + $0x8a0] sm:$0xff]
  %v6219 = vld [vmem:[%s7 + $0x8a8] sm:$0xff]
  %v6220 = vld [vmem:[%s7 + $0x8b0] sm:$0xff]
  %v6221 = vld [vmem:[%s7 + $0x8b8] sm:$0xff]
  %v6222 = vld [vmem:[%s7 + $0x8c0] sm:$0xff]
  %v6223 = vld [vmem:[%s7 + $0x8c8] sm:$0xff]
  %v6224 = vld [vmem:[%s7 + $0x8d0] sm:$0xff]
  %v6225 = vld [vmem:[%s7 + $0x8d8] sm:$0xff]
  %v6226 = vld [vmem:[%s7 + $0x8e0] sm:$0xff]
  %v6227 = vld [vmem:[%s7 + $0x8e8] sm:$0xff]
  %v6228 = vld [vmem:[%s7 + $0x8f0] sm:$0xff]
  %v6229 = vld [vmem:[%s7 + $0x8f8] sm:$0xff]
  %v6230 = vld [vmem:[%s7 + $0x900] sm:$0xff]
  %v6231 = vld [vmem:[%s7 + $0x908] sm:$0xff]
  %v6232 = vld [vmem:[%s7 + $0x910] sm:$0xff]
  %v6233 = vld [vmem:[%s7 + $0x918] sm:$0xff]
  %v6234 = vld [vmem:[%s7 + $0x920] sm:$0xff]
  %v6235 = vld [vmem:[%s7 + $0x928] sm:$0xff]
  %v6236 = vld [vmem:[%s7 + $0x930] sm:$0xff]
  %v6237 = vld [vmem:[%s7 + $0x938] sm:$0xff]
  %v6238 = vld [vmem:[%s7 + $0x940] sm:$0xff]
  %v6239 = vld [vmem:[%s7 + $0x948] sm:$0xff]
  %v6240 = vld [vmem:[%s7 + $0x950] sm:$0xff]
  %v6241 = vld [vmem:[%s7 + $0x958] sm:$0xff]
  %v6242 = vld [vmem:[%s7 + $0x960] sm:$0xff]
  %v6243 = vld [vmem:[%s7 + $0x968] sm:$0xff]
  %v6244 = vld [vmem:[%s7 + $0x970] sm:$0xff]
  %v6245 = vld [vmem:[%s7 + $0x978] sm:$0xff]
  %v6246 = vld [vmem:[%s7 + $0x980] sm:$0xff]
  %v6247 = vld [vmem:[%s7 + $0x988] sm:$0xff]
  %v6248 = vld [vmem:[%s7 + $0x990] sm:$0xff]
  %v6249 = vld [vmem:[%s7 + $0x998] sm:$0xff]
  %v6250 = vld [vmem:[%s7 + $0x9a0] sm:$0xff]
  %v6251 = vld [vmem:[%s7 + $0x9a8] sm:$0xff]
  %v6252 = vld [vmem:[%s7 + $0x9b0] sm:$0xff]
  %v6253 = vld [vmem:[%s7 + $0x9b8] sm:$0xff]
  %v6254 = vld [vmem:[%s7 + $0x9c0] sm:$0xff]
  %v6255 = vld [vmem:[%s7 + $0x9c8] sm:$0xff]
  %v6256 = vld [vmem:[%s7 + $0x9d0] sm:$0xff]
  %v6257 = vld [vmem:[%s7 + $0x9d8] sm:$0xff]
  %v6258 = vld [vmem:[%s7 + $0x9e0] sm:$0xff]
  %v6259 = vld [vmem:[%s7 + $0x9e8] sm:$0xff]
  %v6260 = vld [vmem:[%s7 + $0x9f0] sm:$0xff]
  %v6261 = vld [vmem:[%s7 + $0x9f8] sm:$0xff]
  %v6262 = vld [vmem:[%s7 + $0xa00] sm:$0xff]
  %v6263 = vld [vmem:[%s7 + $0xa08] sm:$0xff]
  %v6264 = vld [vmem:[%s7 + $0xa10] sm:$0xff]
  %v6265 = vld [vmem:[%s7 + $0xa18] sm:$0xff]
  %v6266 = vld [vmem:[%s7 + $0xa20] sm:$0xff]
  %v6267 = vld [vmem:[%s7 + $0xa28] sm:$0xff]
  %v6268 = vld [vmem:[%s7 + $0xa30] sm:$0xff]
  %v6269 = vld [vmem:[%s7 + $0xa38] sm:$0xff]
  %v6270 = vld [vmem:[%s7 + $0xa40] sm:$0xff]
  %v6271 = vld [vmem:[%s7 + $0xa48] sm:$0xff]
  %v6272 = vld [vmem:[%s7 + $0xa50] sm:$0xff]
  %v6273 = vld [vmem:[%s7 + $0xa58] sm:$0xff]
  %v6274 = vld [vmem:[%s7 + $0xa60] sm:$0xff]
  %v6275 = vld [vmem:[%s7 + $0xa68] sm:$0xff]
  %v6276 = vld [vmem:[%s7 + $0xa70] sm:$0xff]
  %v6277 = vld [vmem:[%s7 + $0xa78] sm:$0xff]
  %v6278 = vld [vmem:[%s7 + $0xa80] sm:$0xff]
  %v6279 = vld [vmem:[%s7 + $0xa88] sm:$0xff]
  %v6280 = vld [vmem:[%s7 + $0xa90] sm:$0xff]
  %v6281 = vld [vmem:[%s7 + $0xa98] sm:$0xff]
  %v6282 = vld [vmem:[%s7 + $0xaa0] sm:$0xff]
  %v6283 = vld [vmem:[%s7 + $0xaa8] sm:$0xff]
  %v6284 = vld [vmem:[%s7 + $0xab0] sm:$0xff]
  %v6285 = vld [vmem:[%s7 + $0xab8] sm:$0xff]
  %v6286 = vld [vmem:[%s7 + $0xac0] sm:$0xff]
  %v6287 = vld [vmem:[%s7 + $0xac8] sm:$0xff]
  %v6288 = vld [vmem:[%s7 + $0xad0] sm:$0xff]
  %v6289 = vld [vmem:[%s7 + $0xad8] sm:$0xff]
  %v6290 = vld [vmem:[%s7 + $0xae0] sm:$0xff]
  %v6291 = vld [vmem:[%s7 + $0xae8] sm:$0xff]
  %v6292 = vld [vmem:[%s7 + $0xaf0] sm:$0xff]
  %v6293 = vld [vmem:[%s7 + $0xaf8] sm:$0xff]
  %v6294 = vld [vmem:[%s7 + $0xb00] sm:$0xff]
  %v6295 = vld [vmem:[%s7 + $0xb08] sm:$0xff]
  %v6296 = vld [vmem:[%s7 + $0xb10] sm:$0xff]
  %v6297 = vld [vmem:[%s7 + $0xb18] sm:$0xff]
  %v6298 = vld [vmem:[%s7 + $0xb20] sm:$0xff]
  %v6299 = vld [vmem:[%s7 + $0xb28] sm:$0xff]
  %v6300 = vld [vmem:[%s7 + $0xb30] sm:$0xff]
  %v6301 = vld [vmem:[%s7 + $0xb38] sm:$0xff]
  %v6302 = vld [vmem:[%s7 + $0xb40] sm:$0xff]
  %v6303 = vld [vmem:[%s7 + $0xb48] sm:$0xff]
  %v6304 = vld [vmem:[%s7 + $0xb50] sm:$0xff]
  %v6305 = vld [vmem:[%s7 + $0xb58] sm:$0xff]
  %v6306 = vld [vmem:[%s7 + $0xb60] sm:$0xff]
  %v6307 = vld [vmem:[%s7 + $0xb68] sm:$0xff]
  %v6308 = vld [vmem:[%s7 + $0xb70] sm:$0xff]
  %v6309 = vld [vmem:[%s7 + $0xb78] sm:$0xff]
  %v6310 = vld [vmem:[%s7 + $0xb80] sm:$0xff]
  %v6311 = vld [vmem:[%s7 + $0xb88] sm:$0xff]
  %v6312 = vld [vmem:[%s7 + $0xb90] sm:$0xff]
  %v6313 = vld [vmem:[%s7 + $0xb98] sm:$0xff]
  %v6314 = vld [vmem:[%s7 + $0xba0] sm:$0xff]
  %v6315 = vld [vmem:[%s7 + $0xba8] sm:$0xff]
  %v6316 = vld [vmem:[%s7 + $0xbb0] sm:$0xff]
  %v6317 = vld [vmem:[%s7 + $0xbb8] sm:$0xff]
  %v6318 = vld [vmem:[%s7 + $0xbc0] sm:$0xff]
  %v6319 = vld [vmem:[%s7 + $0xbc8] sm:$0xff]
  %v6320 = vld [vmem:[%s7 + $0xbd0] sm:$0xff]
  %v6321 = vld [vmem:[%s7 + $0xbd8] sm:$0xff]
  %v6322 = vld [vmem:[%s7 + $0xbe0] sm:$0xff]
  %v6323 = vld [vmem:[%s7 + $0xbe8] sm:$0xff]
  %v6324 = vld [vmem:[%s7 + $0xbf0] sm:$0xff]
  %v6325 = vld [vmem:[%s7 + $0xbf8] sm:$0xff]
  %v6326 = vld [vmem:[%s7 + $0xc00] sm:$0xff]
  %v6327 = vld [vmem:[%s7 + $0xc08] sm:$0xff]
  %v6328 = vld [vmem:[%s7 + $0xc10] sm:$0xff]
  %v6329 = vld [vmem:[%s7 + $0xc18] sm:$0xff]
  %v6330 = vld [vmem:[%s7 + $0xc20] sm:$0xff]
  %v6331 = vld [vmem:[%s7 + $0xc28] sm:$0xff]
  %v6332 = vld [vmem:[%s7 + $0xc30] sm:$0xff]
  %v6333 = vld [vmem:[%s7 + $0xc38] sm:$0xff]
  %v6334 = vld [vmem:[%s7 + $0xc40] sm:$0xff]
  %v6335 = vld [vmem:[%s7 + $0xc48] sm:$0xff]
  %v6336 = vld [vmem:[%s7 + $0xc50] sm:$0xff]
  %v6337 = vld [vmem:[%s7 + $0xc58] sm:$0xff]
  %v6338 = vld [vmem:[%s7 + $0xc60] sm:$0xff]
  %v6339 = vld [vmem:[%s7 + $0xc68] sm:$0xff]
  %v6340 = vld [vmem:[%s7 + $0xc70] sm:$0xff]
  %v6341 = vld [vmem:[%s7 + $0xc78] sm:$0xff]
  %v6342 = vld [vmem:[%s7 + $0xc80] sm:$0xff]
  %v6343 = vld [vmem:[%s7 + $0xc88] sm:$0xff]
  %v6344 = vld [vmem:[%s7 + $0xc90] sm:$0xff]
  %v6345 = vld [vmem:[%s7 + $0xc98] sm:$0xff]
  %v6346 = vld [vmem:[%s7 + $0xca0] sm:$0xff]
  %v6347 = vld [vmem:[%s7 + $0xca8] sm:$0xff]
  %v6348 = vld [vmem:[%s7 + $0xcb0] sm:$0xff]
  %v6349 = vld [vmem:[%s7 + $0xcb8] sm:$0xff]
  %v6350 = vld [vmem:[%s7 + $0xcc0] sm:$0xff]
  %v6351 = vld [vmem:[%s7 + $0xcc8] sm:$0xff]
  %v6352 = vld [vmem:[%s7 + $0xcd0] sm:$0xff]
  %v6353 = vld [vmem:[%s7 + $0xcd8] sm:$0xff]
  %v6354 = vld [vmem:[%s7 + $0xce0] sm:$0xff]
  %v6355 = vld [vmem:[%s7 + $0xce8] sm:$0xff]
  %v6356 = vld [vmem:[%s7 + $0xcf0] sm:$0xff]
  %v6357 = vld [vmem:[%s7 + $0xcf8] sm:$0xff]
  %v6358 = vld [vmem:[%s7 + $0xd00] sm:$0xff]
  %v6359 = vld [vmem:[%s7 + $0xd08] sm:$0xff]
  %v6360 = vld [vmem:[%s7 + $0xd10] sm:$0xff]
  %v6361 = vld [vmem:[%s7 + $0xd18] sm:$0xff]
  %v6362 = vld [vmem:[%s7 + $0xd20] sm:$0xff]
  %v6363 = vld [vmem:[%s7 + $0xd28] sm:$0xff]
  %v6364 = vld [vmem:[%s7 + $0xd30] sm:$0xff]
  %v6365 = vld [vmem:[%s7 + $0xd38] sm:$0xff]
  %v6366 = vld [vmem:[%s7 + $0xd40] sm:$0xff]
  %v6367 = vld [vmem:[%s7 + $0xd48] sm:$0xff]
  %v6368 = vld [vmem:[%s7 + $0xd50] sm:$0xff]
  %v6369 = vld [vmem:[%s7 + $0xd58] sm:$0xff]
  %v6370 = vld [vmem:[%s7 + $0xd60] sm:$0xff]
  %v6371 = vld [vmem:[%s7 + $0xd68] sm:$0xff]
  %v6372 = vld [vmem:[%s7 + $0xd70] sm:$0xff]
  %v6373 = vld [vmem:[%s7 + $0xd78] sm:$0xff]
  %v6374 = vld [vmem:[%s7 + $0xd80] sm:$0xff]
  %v6375 = vld [vmem:[%s7 + $0xd88] sm:$0xff]
  %v6376 = vld [vmem:[%s7 + $0xd90] sm:$0xff]
  %v6377 = vld [vmem:[%s7 + $0xd98] sm:$0xff]
  %v6378 = vld [vmem:[%s7 + $0xda0] sm:$0xff]
  %v6379 = vld [vmem:[%s7 + $0xda8] sm:$0xff]
  %v6380 = vld [vmem:[%s7 + $0xdb0] sm:$0xff]
  %v6381 = vld [vmem:[%s7 + $0xdb8] sm:$0xff]
  %v6382 = vld [vmem:[%s7 + $0xdc0] sm:$0xff]
  %v6383 = vld [vmem:[%s7 + $0xdc8] sm:$0xff]
  %v6384 = vld [vmem:[%s7 + $0xdd0] sm:$0xff]
  %v6385 = vld [vmem:[%s7 + $0xdd8] sm:$0xff]
  %v6386 = vld [vmem:[%s7 + $0xde0] sm:$0xff]
  %v6387 = vld [vmem:[%s7 + $0xde8] sm:$0xff]
  %v6388 = vld [vmem:[%s7 + $0xdf0] sm:$0xff]
  %v6389 = vld [vmem:[%s7 + $0xdf8] sm:$0xff]
  %v6390 = vld [vmem:[%s7 + $0xe00] sm:$0xff]
  %v6391 = vld [vmem:[%s7 + $0xe08] sm:$0xff]
  %v6392 = vld [vmem:[%s7 + $0xe10] sm:$0xff]
  %v6393 = vld [vmem:[%s7 + $0xe18] sm:$0xff]
  %v6394 = vld [vmem:[%s7 + $0xe20] sm:$0xff]
  %v6395 = vld [vmem:[%s7 + $0xe28] sm:$0xff]
  %v6396 = vld [vmem:[%s7 + $0xe30] sm:$0xff]
  %v6397 = vld [vmem:[%s7 + $0xe38] sm:$0xff]
  %v6398 = vld [vmem:[%s7 + $0xe40] sm:$0xff]
  %v6399 = vld [vmem:[%s7 + $0xe48] sm:$0xff]
  %v6400 = vld [vmem:[%s7 + $0xe50] sm:$0xff]
  %v6401 = vld [vmem:[%s7 + $0xe58] sm:$0xff]
  %v6402 = vld [vmem:[%s7 + $0xe60] sm:$0xff]
  %v6403 = vld [vmem:[%s7 + $0xe68] sm:$0xff]
  %v6404 = vld [vmem:[%s7 + $0xe70] sm:$0xff]
  %v6405 = vld [vmem:[%s7 + $0xe78] sm:$0xff]
  %v6406 = vld [vmem:[%s7 + $0xe80] sm:$0xff]
  %v6407 = vld [vmem:[%s7 + $0xe88] sm:$0xff]
  %v6408 = vld [vmem:[%s7 + $0xe90] sm:$0xff]
  %v6409 = vld [vmem:[%s7 + $0xe98] sm:$0xff]
  %v6410 = vld [vmem:[%s7 + $0xea0] sm:$0xff]
  %v6411 = vld [vmem:[%s7 + $0xea8] sm:$0xff]
  %v6412 = vld [vmem:[%s7 + $0xeb0] sm:$0xff]
  %v6413 = vld [vmem:[%s7 + $0xeb8] sm:$0xff]
  %v6414 = vld [vmem:[%s7 + $0xec0] sm:$0xff]
  %v6415 = vld [vmem:[%s7 + $0xec8] sm:$0xff]
  %v6416 = vld [vmem:[%s7 + $0xed0] sm:$0xff]
  %v6417 = vld [vmem:[%s7 + $0xed8] sm:$0xff]
  %v6418 = vld [vmem:[%s7 + $0xee0] sm:$0xff]
  %v6419 = vld [vmem:[%s7 + $0xee8] sm:$0xff]
  %v6420 = vld [vmem:[%s7 + $0xef0] sm:$0xff]
  %v6421 = vld [vmem:[%s7 + $0xef8] sm:$0xff]
  %v6422 = vld [vmem:[%s7 + $0xf00] sm:$0xff]
  %v6423 = vld [vmem:[%s7 + $0xf08] sm:$0xff]
  %v6424 = vld [vmem:[%s7 + $0xf10] sm:$0xff]
  %v6425 = vld [vmem:[%s7 + $0xf18] sm:$0xff]
  %v6426 = vld [vmem:[%s7 + $0xf20] sm:$0xff]
  %v6427 = vld [vmem:[%s7 + $0xf28] sm:$0xff]
  %v6428 = vld [vmem:[%s7 + $0xf30] sm:$0xff]
  %v6429 = vld [vmem:[%s7 + $0xf38] sm:$0xff]
  %v6430 = vld [vmem:[%s7 + $0xf40] sm:$0xff]
  %v6431 = vld [vmem:[%s7 + $0xf48] sm:$0xff]
  %v6432 = vld [vmem:[%s7 + $0xf50] sm:$0xff]
  %v6433 = vld [vmem:[%s7 + $0xf58] sm:$0xff]
  %v6434 = vld [vmem:[%s7 + $0xf60] sm:$0xff]
  %v6435 = vld [vmem:[%s7 + $0xf68] sm:$0xff]
  %v6436 = vld [vmem:[%s7 + $0xf70] sm:$0xff]
  %v6437 = vld [vmem:[%s7 + $0xf78] sm:$0xff]
  %v6438 = vld [vmem:[%s7 + $0xf80] sm:$0xff]
  %v6439 = vld [vmem:[%s7 + $0xf88] sm:$0xff]
  %v6440 = vld [vmem:[%s7 + $0xf90] sm:$0xff]
  %v6441 = vld [vmem:[%s7 + $0xf98] sm:$0xff]
  %v6442 = vld [vmem:[%s7 + $0xfa0] sm:$0xff]
  %v6443 = vld [vmem:[%s7 + $0xfa8] sm:$0xff]
  %v6444 = vld [vmem:[%s7 + $0xfb0] sm:$0xff]
  %v6445 = vld [vmem:[%s7 + $0xfb8] sm:$0xff]
  %v6446 = vld [vmem:[%s7 + $0xfc0] sm:$0xff]
  %v6447 = vld [vmem:[%s7 + $0xfc8] sm:$0xff]
  %v6448 = vld [vmem:[%s7 + $0xfd0] sm:$0xff]
  %v6449 = vld [vmem:[%s7 + $0xfd8] sm:$0xff]
  %v6450 = vld [vmem:[%s7 + $0xfe0] sm:$0xff]
  %v6451 = vld [vmem:[%s7 + $0xfe8] sm:$0xff]
  %v6452 = vld [vmem:[%s7 + $0xff0] sm:$0xff]
  %v6453 = vld [vmem:[%s7 + $0xff8] sm:$0xff]
  %v6454 = vld [vmem:[%s7 + $0x1000] sm:$0xff]
  %v6455 = vld [vmem:[%s7 + $0x1008] sm:$0xff]
  %v6456 = vld [vmem:[%s7 + $0x1010] sm:$0xff]
  %v6457 = vld [vmem:[%s7 + $0x1018] sm:$0xff]
  %v6458 = vld [vmem:[%s7 + $0x1020] sm:$0xff]
  %v6459 = vld [vmem:[%s7 + $0x1028] sm:$0xff]
  %v6460 = vld [vmem:[%s7 + $0x1030] sm:$0xff]
  %v6461 = vld [vmem:[%s7 + $0x1038] sm:$0xff]
  %v6462 = vld [vmem:[%s7 + $0x1040] sm:$0xff]
  %v6463 = vld [vmem:[%s7 + $0x1048] sm:$0xff]
  %v6464 = vld [vmem:[%s7 + $0x1050] sm:$0xff]
  %v6465 = vld [vmem:[%s7 + $0x1058] sm:$0xff]
  %v6466 = vld [vmem:[%s7 + $0x1060] sm:$0xff]
  %v6467 = vld [vmem:[%s7 + $0x1068] sm:$0xff]
  %v6468 = vld [vmem:[%s7 + $0x1070] sm:$0xff]
  %v6469 = vld [vmem:[%s7 + $0x1078] sm:$0xff]
  %v6470 = vld [vmem:[%s7 + $0x1080] sm:$0xff]
  %v6471 = vld [vmem:[%s7 + $0x1088] sm:$0xff]
  %v6472 = vld [vmem:[%s7 + $0x1090] sm:$0xff]
  %v6473 = vld [vmem:[%s7 + $0x1098] sm:$0xff]
  %v6474 = vld [vmem:[%s7 + $0x10a0] sm:$0xff]
  %v6475 = vld [vmem:[%s7 + $0x10a8] sm:$0xff]
  %v6476 = vld [vmem:[%s7 + $0x10b0] sm:$0xff]
  %v6477 = vld [vmem:[%s7 + $0x10b8] sm:$0xff]
  %v6478 = vld [vmem:[%s7 + $0x10c0] sm:$0xff]
  %v6479 = vld [vmem:[%s7 + $0x10c8] sm:$0xff]
  %v6480 = vld [vmem:[%s7 + $0x10d0] sm:$0xff]
  %v6481 = vld [vmem:[%s7 + $0x10d8] sm:$0xff]
  %v6482 = vld [vmem:[%s7 + $0x10e0] sm:$0xff]
  %v6483 = vld [vmem:[%s7 + $0x10e8] sm:$0xff]
  %v6484 = vld [vmem:[%s7 + $0x10f0] sm:$0xff]
  %v6485 = vld [vmem:[%s7 + $0x10f8] sm:$0xff]
  %v6486 = vld [vmem:[%s7 + $0x1100] sm:$0xff]
  %v6487 = vld [vmem:[%s7 + $0x1108] sm:$0xff]
  %v6488 = vld [vmem:[%s7 + $0x1110] sm:$0xff]
  %v6489 = vld [vmem:[%s7 + $0x1118] sm:$0xff]
  %v6490 = vld [vmem:[%s7 + $0x1120] sm:$0xff]
  %v6491 = vld [vmem:[%s7 + $0x1128] sm:$0xff]
  %v6492 = vld [vmem:[%s7 + $0x1130] sm:$0xff]
  %v6493 = vld [vmem:[%s7 + $0x1138] sm:$0xff]
  %v6494 = vld [vmem:[%s7 + $0x1140] sm:$0xff]
  %v6495 = vld [vmem:[%s7 + $0x1148] sm:$0xff]
  %v6496 = vld [vmem:[%s7 + $0x1150] sm:$0xff]
  %v6497 = vld [vmem:[%s7 + $0x1158] sm:$0xff]
  %v6498 = vld [vmem:[%s7 + $0x1160] sm:$0xff]
  %v6499 = vld [vmem:[%s7 + $0x1168] sm:$0xff]
  %v6500 = vld [vmem:[%s7 + $0x1170] sm:$0xff]
  %v6501 = vld [vmem:[%s7 + $0x1178] sm:$0xff]
  %v6502 = vld [vmem:[%s7 + $0x1180] sm:$0xff]
  %v6503 = vld [vmem:[%s7 + $0x1188] sm:$0xff]
  %v6504 = vld [vmem:[%s7 + $0x1190] sm:$0xff]
  %v6505 = vld [vmem:[%s7 + $0x1198] sm:$0xff]
  %v6506 = vld [vmem:[%s7 + $0x11a0] sm:$0xff]
  %v6507 = vld [vmem:[%s7 + $0x11a8] sm:$0xff]
  %v6508 = vld [vmem:[%s7 + $0x11b0] sm:$0xff]
  %v6509 = vld [vmem:[%s7 + $0x11b8] sm:$0xff]
  %v6510 = vld [vmem:[%s7 + $0x11c0] sm:$0xff]
  %v6511 = vld [vmem:[%s7 + $0x11c8] sm:$0xff]
  %v6512 = vld [vmem:[%s7 + $0x11d0] sm:$0xff]
  %v6513 = vld [vmem:[%s7 + $0x11d8] sm:$0xff]
  %v6514 = vld [vmem:[%s7 + $0x11e0] sm:$0xff]
  %v6515 = vld [vmem:[%s7 + $0x11e8] sm:$0xff]
  %v6516 = vld [vmem:[%s7 + $0x11f0] sm:$0xff]
  %v6517 = vld [vmem:[%s7 + $0x11f8] sm:$0xff]
  %v6518 = vld [vmem:[%s7 + $0x1200] sm:$0xff]
  %v6519 = vld [vmem:[%s7 + $0x1208] sm:$0xff]
  %v6520 = vld [vmem:[%s7 + $0x1210] sm:$0xff]
  %v6521 = vld [vmem:[%s7 + $0x1218] sm:$0xff]
  %v6522 = vld [vmem:[%s7 + $0x1220] sm:$0xff]
  %v6523 = vld [vmem:[%s7 + $0x1228] sm:$0xff]
  %v6524 = vld [vmem:[%s7 + $0x1230] sm:$0xff]
  %v6525 = vld [vmem:[%s7 + $0x1238] sm:$0xff]
  %v6526 = vld [vmem:[%s7 + $0x1240] sm:$0xff]
  %v6527 = vld [vmem:[%s7 + $0x1248] sm:$0xff]
  %v6528 = vld [vmem:[%s7 + $0x1250] sm:$0xff]
  %v6529 = vld [vmem:[%s7 + $0x1258] sm:$0xff]
  %v6530 = vld [vmem:[%s7 + $0x1260] sm:$0xff]
  %v6531 = vld [vmem:[%s7 + $0x1268] sm:$0xff]
  %v6532 = vld [vmem:[%s7 + $0x1270] sm:$0xff]
  %v6533 = vld [vmem:[%s7 + $0x1278] sm:$0xff]
  %v6534 = vld [vmem:[%s7 + $0x1280] sm:$0xff]
  %v6535 = vld [vmem:[%s7 + $0x1288] sm:$0xff]
  %v6536 = vld [vmem:[%s7 + $0x1290] sm:$0xff]
  %v6537 = vld [vmem:[%s7 + $0x1298] sm:$0xff]
  %v6538 = vld [vmem:[%s7 + $0x12a0] sm:$0xff]
  %v6539 = vld [vmem:[%s7 + $0x12a8] sm:$0xff]
  %v6540 = vld [vmem:[%s7 + $0x12b0] sm:$0xff]
  %v6541 = vld [vmem:[%s7 + $0x12b8] sm:$0xff]
  %v6542 = vld [vmem:[%s7 + $0x12c0] sm:$0xff]
  %v6543 = vld [vmem:[%s7 + $0x12c8] sm:$0xff]
  %v6544 = vld [vmem:[%s7 + $0x12d0] sm:$0xff]
  %v6545 = vld [vmem:[%s7 + $0x12d8] sm:$0xff]
  %v6546 = vld [vmem:[%s7 + $0x12e0] sm:$0xff]
  %v6547 = vld [vmem:[%s7 + $0x12e8] sm:$0xff]
  %v6548 = vld [vmem:[%s7 + $0x12f0] sm:$0xff]
  %v6549 = vld [vmem:[%s7 + $0x12f8] sm:$0xff]
  %v6550 = vld [vmem:[%s7 + $0x1300] sm:$0xff]
  %v6551 = vld [vmem:[%s7 + $0x1308] sm:$0xff]
  %v6552 = vld [vmem:[%s7 + $0x1310] sm:$0xff]
  %v6553 = vld [vmem:[%s7 + $0x1318] sm:$0xff]
  %v6554 = vld [vmem:[%s7 + $0x1320] sm:$0xff]
  %v6555 = vld [vmem:[%s7 + $0x1328] sm:$0xff]
  %v6556 = vld [vmem:[%s7 + $0x1330] sm:$0xff]
  %v6557 = vld [vmem:[%s7 + $0x1338] sm:$0xff]
  %v6558 = vld [vmem:[%s7 + $0x1340] sm:$0xff]
  %v6559 = vld [vmem:[%s7 + $0x1348] sm:$0xff]
  %v6560 = vld [vmem:[%s7 + $0x1350] sm:$0xff]
  %v6561 = vld [vmem:[%s7 + $0x1358] sm:$0xff]
  %v6562 = vld [vmem:[%s7 + $0x1360] sm:$0xff]
  %v6563 = vld [vmem:[%s7 + $0x1368] sm:$0xff]
  %v6564 = vld [vmem:[%s7 + $0x1370] sm:$0xff]
  %v6565 = vld [vmem:[%s7 + $0x1378] sm:$0xff]
  %v6566 = vld [vmem:[%s7 + $0x1380] sm:$0xff]
  %v6567 = vld [vmem:[%s8] sm:$0x1f]
  %v6569 = vlaneseq
  %v6570 = vshrl.u32 %v6569, 7
  %v6571 = vsub.s32 0, %v6570
  %v6572 = vrot.slane %v6567, %v6571
  %v6573 = vlaneseq
  %v6574 = vshrl.u32 %v6573, 7
  %v6575 = vsub.s32 1, %v6574
  %v6576 = vrot.slane %v6567, %v6575
  %v6577 = vlaneseq
  %v6578 = vshrl.u32 %v6577, 7
  %v6579 = vsub.s32 2, %v6578
  %v6580 = vrot.slane %v6567, %v6579
  %v6581 = vlaneseq
  %v6582 = vshrl.u32 %v6581, 7
  %v6583 = vsub.s32 3, %v6582
  %v6584 = vrot.slane %v6567, %v6583
  %v6585 = vlaneseq
  %v6586 = vshrl.u32 %v6585, 7
  %v6587 = vsub.s32 4, %v6586
  %v6588 = vrot.slane %v6567, %v6587
  %v6596 = vcombine.high %v5940, %v5940
  %v6598 = vunpack.c.l.s4 1983009808
  %v6599 = vunpack.c.0.s8 %v6598
  %v6600 = vlaneseq
  %v6601 = vshrl.u32 %v6600, 7
  %v6602 = vsub.s32 %v6599, %v6601
  %v6603 = vrot.slane %v5940, %v6602
  %v6605 = vunpack.c.l.s4 1983009808
  %v6606 = vunpack.c.0.s8 %v6605
  %v6607 = vlaneseq
  %v6608 = vshrl.u32 %v6607, 7
  %v6609 = vsub.s32 %v6606, %v6608
  %v6610 = vrot.slane %v6596, %v6609
  %v6611 = vcombine.high %v6603, %v6603
  %v6612 = vcombine.high %v6610, %v6610
  %v6613 = vcombine.high %v5941, %v5941
  %v6615 = vunpack.c.l.s4 1983009808
  %v6616 = vunpack.c.0.s8 %v6615
  %v6617 = vlaneseq
  %v6618 = vshrl.u32 %v6617, 7
  %v6619 = vsub.s32 %v6616, %v6618
  %v6620 = vrot.slane %v5941, %v6619
  %v6622 = vunpack.c.l.s4 1983009808
  %v6623 = vunpack.c.0.s8 %v6622
  %v6624 = vlaneseq
  %v6625 = vshrl.u32 %v6624, 7
  %v6626 = vsub.s32 %v6623, %v6625
  %v6627 = vrot.slane %v6613, %v6626
  %v6628 = vcombine.high %v6620, %v6620
  %v6629 = vcombine.high %v6627, %v6627
  %vm6637 = vcmask 850944
  %v6638 = vsel %vm6637, %v6629, 0
  %6640 = vmatprep.subr.mxu0 %v5943
  %6641 = vmatpush1.msra.mxu0 %v5942
  %6642 = vmatprep.subr.mxu0 %v5948
  %6643 = vmatpush1.msra.mxu0 %v5947
  %6644 = vmatprep.subr.mxu0 %v5953
  %6645 = vmatpush1.msra.mxu0 %v5952
  %6646 = vmatprep.subr.mxu0 %v5958
  %6647 = vmatpush1.msra.mxu0 %v5957
  %6648 = vmatprep.subr.mxu0 %v5963
  %6649 = vmatpush1.msra.mxu0 %v5962
  %6650 = vmatprep.subr.mxu0 %v5968
  %6651 = vmatpush1.msra.mxu0 %v5967
  %6652 = vmatprep.subr.mxu0 %v5973
  %6653 = vmatpush1.msra.mxu0 %v5972
  %6654 = vmatprep.subr.mxu0 %v5978
  %6655 = vmatpush1.msra.mxu0 %v5977
  %6656 = vmatprep.subr.mxu0 %v5983
  %6657 = vmatpush1.msra.mxu0 %v5982
  %6658 = vmatprep.subr.mxu0 %v5988
  %6659 = vmatpush1.msra.mxu0 %v5987
  %6660 = vmatprep.subr.mxu0 %v5993
  %6661 = vmatpush1.msra.mxu0 %v5992
  %6662 = vmatprep.subr.mxu0 %v5998
  %6663 = vmatpush1.msra.mxu0 %v5997
  %6664 = vmatprep.subr.mxu0 %v6003
  %6665 = vmatpush1.msra.mxu0 %v6002
  %6666 = vmatprep.subr.mxu0 %v6008
  %6667 = vmatpush1.msra.mxu0 %v6007
  %6668 = vmatprep.subr.mxu0 %v6013
  %6669 = vmatpush1.msra.mxu0 %v6012
  %6670 = vmatprep.subr.mxu0 %v6018
  %6671 = vmatpush1.msra.mxu0 %v6017
  %6672 = vmatprep.subr.mxu0 %v6023
  %6673 = vmatpush1.msra.mxu0 %v6022
  %6674 = vmatprep.subr.mxu0 %v6028
  %6675 = vmatpush1.msra.mxu0 %v6027
  %6676 = vmatprep.subr.mxu0 %v6033
  %6677 = vmatpush1.msra.mxu0 %v6032
  %6678 = vmatprep.subr.mxu0 %v6038
  %6679 = vmatpush1.msra.mxu0 %v6037
  %6680 = vmatprep.subr.mxu0 %v6043
  %6681 = vmatpush1.msra.mxu0 %v6042
  %6682 = vmatprep.subr.mxu0 %v6048
  %6683 = vmatpush1.msra.mxu0 %v6047
  %6684 = vmatprep.subr.mxu0 %v6053
  %6685 = vmatpush1.msra.mxu0 %v6052
  %6686 = vmatprep.subr.mxu0 %v6058
  %6687 = vmatpush1.msra.mxu0 %v6057
  %6688 = vmatprep.subr.mxu0 %v6063
  %6689 = vmatpush1.msra.mxu0 %v6062
  %6690 = vmatprep.subr.mxu0 %v6068
  %6691 = vmatpush1.msra.mxu0 %v6067
  %6692 = vmatprep.subr.mxu0 %v6073
  %6693 = vmatpush1.msra.mxu0 %v6072
  %6694 = vmatprep.subr.mxu0 %v6078
  %6695 = vmatpush1.msra.mxu0 %v6077
  %6696 = vmatprep.subr.mxu0 %v6083
  %6697 = vmatpush1.msra.mxu0 %v6082
  %6698 = vmatprep.subr.mxu0 %v6088
  %6699 = vmatpush1.msra.mxu0 %v6087
  %6700 = vmatprep.subr.mxu0 %v6093
  %6701 = vmatpush1.msra.mxu0 %v6092
  %6702 = vmatprep.subr.mxu0 %v6098
  %6703 = vmatpush1.msra.mxu0 %v6097
  %6704 = vmatprep.mubr.f32.mxu0 %v6611
  %6705 = vmatmul.mubr.f32.gmra.mrb[0].mxu0 %v6603
  %v6706 = vpop.f32.mrb[0].mxu0
  %v6707 = vadd.f32 %v6572, %v6706
  %v6708 = vpop.f32.mrb[0].mxu0
  %v6709 = vadd.f32 %v6576, %v6708
  %6710 = vdwg.mxu0
  %6711 = vmatprep.subr.mxu0 %v6103
  %6712 = vmatpush1.msra.mxu0 %v6102
  %6713 = vmatprep.subr.mxu0 %v6108
  %6714 = vmatpush1.msra.mxu0 %v6107
  %6715 = vmatprep.subr.mxu0 %v6113
  %6716 = vmatpush1.msra.mxu0 %v6112
  %6717 = vmatprep.subr.mxu0 %v6118
  %6718 = vmatpush1.msra.mxu0 %v6117
  %6719 = vmatprep.subr.mxu0 %v6123
  %6720 = vmatpush1.msra.mxu0 %v6122
  %6721 = vmatprep.subr.mxu0 %v6128
  %6722 = vmatpush1.msra.mxu0 %v6127
  %6723 = vmatprep.subr.mxu0 %v6133
  %6724 = vmatpush1.msra.mxu0 %v6132
  %6725 = vmatprep.subr.mxu0 %v6138
  %6726 = vmatpush1.msra.mxu0 %v6137
  %6727 = vmatprep.subr.mxu0 %v6143
  %6728 = vmatpush1.msra.mxu0 %v6142
  %6729 = vmatprep.subr.mxu0 %v6148
  %6730 = vmatpush1.msra.mxu0 %v6147
  %6731 = vmatprep.subr.mxu0 %v6153
  %6732 = vmatpush1.msra.mxu0 %v6152
  %6733 = vmatprep.subr.mxu0 %v6158
  %6734 = vmatpush1.msra.mxu0 %v6157
  %6735 = vmatprep.subr.mxu0 %v6163
  %6736 = vmatpush1.msra.mxu0 %v6162
  %6737 = vmatprep.subr.mxu0 %v6168
  %6738 = vmatpush1.msra.mxu0 %v6167
  %6739 = vmatprep.subr.mxu0 %v6173
  %6740 = vmatpush1.msra.mxu0 %v6172
  %6741 = vmatprep.subr.mxu0 %v6178
  %6742 = vmatpush1.msra.mxu0 %v6177
  %6743 = vmatprep.subr.mxu0 %v6183
  %6744 = vmatpush1.msra.mxu0 %v6182
  %6745 = vmatprep.subr.mxu0 %v6188
  %6746 = vmatpush1.msra.mxu0 %v6187
  %6747 = vmatprep.subr.mxu0 %v6193
  %6748 = vmatpush1.msra.mxu0 %v6192
  %6749 = vmatprep.subr.mxu0 %v6198
  %6750 = vmatpush1.msra.mxu0 %v6197
  %6751 = vmatprep.subr.mxu0 %v6203
  %6752 = vmatpush1.msra.mxu0 %v6202
  %6753 = vmatprep.subr.mxu0 %v6208
  %6754 = vmatpush1.msra.mxu0 %v6207
  %6755 = vmatprep.subr.mxu0 %v6213
  %6756 = vmatpush1.msra.mxu0 %v6212
  %6757 = vmatprep.subr.mxu0 %v6218
  %6758 = vmatpush1.msra.mxu0 %v6217
  %6759 = vmatprep.subr.mxu0 %v6223
  %6760 = vmatpush1.msra.mxu0 %v6222
  %6761 = vmatprep.subr.mxu0 %v6228
  %6762 = vmatpush1.msra.mxu0 %v6227
  %6763 = vmatprep.subr.mxu0 %v6233
  %6764 = vmatpush1.msra.mxu0 %v6232
  %6765 = vmatprep.subr.mxu0 %v6238
  %6766 = vmatpush1.msra.mxu0 %v6237
  %6767 = vmatprep.subr.mxu0 %v6243
  %6768 = vmatpush1.msra.mxu0 %v6242
  %6769 = vmatprep.subr.mxu0 %v6248
  %6770 = vmatpush1.msra.mxu0 %v6247
  %6771 = vmatprep.subr.mxu0 %v6253
  %6772 = vmatpush1.msra.mxu0 %v6252
  %6773 = vmatprep.subr.mxu0 %v6258
  %6774 = vmatpush1.msra.mxu0 %v6257
  %6775 = vmatprep.mubr.f32.mxu0 %v6612
  %6776 = vmatmul.mubr.f32.gmra.mrb[0].mxu0 %v6610
  %v6777 = vpop.f32.mrb[0].mxu0
  %v6778 = vadd.f32 %v6707, %v6777
  %v6779 = vpop.f32.mrb[0].mxu0
  %v6780 = vadd.f32 %v6709, %v6779
  %6781 = vdwg.mxu0
  %6782 = vmatprep.subr.mxu0 %v6263
  %6783 = vmatpush1.msra.mxu0 %v6262
  %6784 = vmatprep.subr.mxu0 %v6268
  %6785 = vmatpush1.msra.mxu0 %v6267
  %6786 = vmatprep.subr.mxu0 %v6273
  %6787 = vmatpush1.msra.mxu0 %v6272
  %6788 = vmatprep.subr.mxu0 %v6278
  %6789 = vmatpush1.msra.mxu0 %v6277
  %6790 = vmatprep.subr.mxu0 %v6283
  %6791 = vmatpush1.msra.mxu0 %v6282
  %6792 = vmatprep.subr.mxu0 %v6288
  %6793 = vmatpush1.msra.mxu0 %v6287
  %6794 = vmatprep.subr.mxu0 %v6293
  %6795 = vmatpush1.msra.mxu0 %v6292
  %6796 = vmatprep.subr.mxu0 %v6298
  %6797 = vmatpush1.msra.mxu0 %v6297
  %6798 = vmatprep.subr.mxu0 %v6303
  %6799 = vmatpush1.msra.mxu0 %v6302
  %6800 = vmatprep.subr.mxu0 %v6308
  %6801 = vmatpush1.msra.mxu0 %v6307
  %6802 = vmatprep.subr.mxu0 %v6313
  %6803 = vmatpush1.msra.mxu0 %v6312
  %6804 = vmatprep.subr.mxu0 %v6318
  %6805 = vmatpush1.msra.mxu0 %v6317
  %6806 = vmatprep.subr.mxu0 %v6323
  %6807 = vmatpush1.msra.mxu0 %v6322
  %6808 = vmatprep.subr.mxu0 %v6328
  %6809 = vmatpush1.msra.mxu0 %v6327
  %6810 = vmatprep.subr.mxu0 %v6333
  %6811 = vmatpush1.msra.mxu0 %v6332
  %6812 = vmatprep.subr.mxu0 %v6338
  %6813 = vmatpush1.msra.mxu0 %v6337
  %6814 = vmatprep.subr.mxu0 %v6343
  %6815 = vmatpush1.msra.mxu0 %v6342
  %6816 = vmatprep.subr.mxu0 %v6348
  %6817 = vmatpush1.msra.mxu0 %v6347
  %6818 = vmatprep.subr.mxu0 %v6353
  %6819 = vmatpush1.msra.mxu0 %v6352
  %6820 = vmatprep.subr.mxu0 %v6358
  %6821 = vmatpush1.msra.mxu0 %v6357
  %6822 = vmatprep.subr.mxu0 %v6363
  %6823 = vmatpush1.msra.mxu0 %v6362
  %6824 = vmatprep.subr.mxu0 %v6368
  %6825 = vmatpush1.msra.mxu0 %v6367
  %6826 = vmatprep.subr.mxu0 %v6373
  %6827 = vmatpush1.msra.mxu0 %v6372
  %6828 = vmatprep.subr.mxu0 %v6378
  %6829 = vmatpush1.msra.mxu0 %v6377
  %6830 = vmatprep.subr.mxu0 %v6383
  %6831 = vmatpush1.msra.mxu0 %v6382
  %6832 = vmatprep.subr.mxu0 %v6388
  %6833 = vmatpush1.msra.mxu0 %v6387
  %6834 = vmatprep.subr.mxu0 %v6393
  %6835 = vmatpush1.msra.mxu0 %v6392
  %6836 = vmatprep.subr.mxu0 %v6398
  %6837 = vmatpush1.msra.mxu0 %v6397
  %6838 = vmatprep.subr.mxu0 %v6403
  %6839 = vmatpush1.msra.mxu0 %v6402
  %6840 = vmatprep.subr.mxu0 %v6408
  %6841 = vmatpush1.msra.mxu0 %v6407
  %6842 = vmatprep.subr.mxu0 %v6413
  %6843 = vmatpush1.msra.mxu0 %v6412
  %6844 = vmatprep.subr.mxu0 %v6418
  %6845 = vmatpush1.msra.mxu0 %v6417
  %6846 = vmatprep.mubr.f32.mxu0 %v6628
  %6847 = vmatmul.mubr.f32.gmra.mrb[0].mxu0 %v6620
  %v6848 = vpop.f32.mrb[0].mxu0
  %v6849 = vadd.f32 %v6778, %v6848
  %v6850 = vpop.f32.mrb[0].mxu0
  %v6851 = vadd.f32 %v6780, %v6850
  %6852 = vdwg.mxu0
  %6853 = vmatprep.subr.mxu0 %v6423
  %6854 = vmatpush1.msra.mxu0 %v6422
  %6855 = vmatprep.subr.mxu0 %v6428
  %6856 = vmatpush1.msra.mxu0 %v6427
  %6857 = vmatprep.subr.mxu0 %v6433
  %6858 = vmatpush1.msra.mxu0 %v6432
  %6859 = vmatprep.subr.mxu0 %v6438
  %6860 = vmatpush1.msra.mxu0 %v6437
  %6861 = vmatprep.subr.mxu0 %v6443
  %6862 = vmatpush1.msra.mxu0 %v6442
  %6863 = vmatprep.subr.mxu0 %v6448
  %6864 = vmatpush1.msra.mxu0 %v6447
  %6865 = vmatprep.subr.mxu0 %v6453
  %6866 = vmatpush1.msra.mxu0 %v6452
  %6867 = vmatprep.subr.mxu0 %v6458
  %6868 = vmatpush1.msra.mxu0 %v6457
  %6869 = vmatprep.subr.mxu0 %v6463
  %6870 = vmatpush1.msra.mxu0 %v6462
  %6871 = vmatprep.subr.mxu0 %v6468
  %6872 = vmatpush1.msra.mxu0 %v6467
  %6873 = vmatprep.subr.mxu0 %v6473
  %6874 = vmatpush1.msra.mxu0 %v6472
  %6875 = vmatprep.subr.mxu0 %v6478
  %6876 = vmatpush1.msra.mxu0 %v6477
  %6877 = vmatprep.subr.mxu0 %v6483
  %6878 = vmatpush1.msra.mxu0 %v6482
  %6879 = vmatprep.subr.mxu0 %v6488
  %6880 = vmatpush1.msra.mxu0 %v6487
  %6881 = vmatprep.subr.mxu0 %v6493
  %6882 = vmatpush1.msra.mxu0 %v6492
  %6883 = vmatprep.subr.mxu0 %v6498
  %6884 = vmatpush1.msra.mxu0 %v6497
  %6885 = vmatprep.subr.mxu0 %v6503
  %6886 = vmatpush1.msra.mxu0 %v6502
  %6887 = vmatprep.subr.mxu0 %v6508
  %6888 = vmatpush1.msra.mxu0 %v6507
  %6889 = vmatprep.subr.mxu0 %v6513
  %6890 = vmatpush1.msra.mxu0 %v6512
  %6891 = vmatprep.subr.mxu0 %v6518
  %6892 = vmatpush1.msra.mxu0 %v6517
  %6893 = vmatprep.subr.mxu0 %v6523
  %6894 = vmatpush1.msra.mxu0 %v6522
  %6895 = vmatprep.subr.mxu0 %v6528
  %6896 = vmatpush1.msra.mxu0 %v6527
  %6897 = vmatprep.subr.mxu0 %v6533
  %6898 = vmatpush1.msra.mxu0 %v6532
  %6899 = vmatprep.subr.mxu0 %v6538
  %6900 = vmatpush1.msra.mxu0 %v6537
  %6901 = vmatprep.subr.mxu0 %v6543
  %6902 = vmatpush1.msra.mxu0 %v6542
  %6903 = vmatprep.subr.mxu0 %v6548
  %6904 = vmatpush1.msra.mxu0 %v6547
  %6905 = vmatprep.subr.mxu0 %v6553
  %6906 = vmatpush1.msra.mxu0 %v6552
  %6907 = vmatprep.subr.mxu0 %v6558
  %6908 = vmatpush1.msra.mxu0 %v6557
  %6909 = vmatprep.subr.mxu0 %v6563
  %6910 = vmatpush1.msra.mxu0 %v6562
  %6911 = vmatprep.subr.mxu0 0.0
  %6912 = vmatpush1.msra.mxu0 0.0
  %6913 = vmatprep.subr.mxu0 0.0
  %6914 = vmatpush1.msra.mxu0 0.0
  %6915 = vmatprep.subr.mxu0 0.0
  %6916 = vmatpush1.msra.mxu0 0.0
  %6917 = vmatprep.mubr.f32.mxu0 %v6638
  %6918 = vmatmul.mubr.f32.gmra.mrb[0].mxu0 %v6627
  %v6919 = vpop.f32.mrb[0].mxu0
  %v6920 = vadd.f32 %v6849, %v6919
  %v6921 = vpop.f32.mrb[0].mxu0
  %v6922 = vadd.f32 %v6851, %v6921
  %6923 = vdwg.mxu0
  %6924 = vmatprep.subr.mxu0 %v5945
  %6925 = vmatpush1.msra.mxu0 %v5944
  %6926 = vmatprep.subr.mxu0 %v5950
  %6927 = vmatpush1.msra.mxu0 %v5949
  %6928 = vmatprep.subr.mxu0 %v5955
  %6929 = vmatpush1.msra.mxu0 %v5954
  %6930 = vmatprep.subr.mxu0 %v5960
  %6931 = vmatpush1.msra.mxu0 %v5959
  %6932 = vmatprep.subr.mxu0 %v5965
  %6933 = vmatpush1.msra.mxu0 %v5964
  %6934 = vmatprep.subr.mxu0 %v5970
  %6935 = vmatpush1.msra.mxu0 %v5969
  %6936 = vmatprep.subr.mxu0 %v5975
  %6937 = vmatpush1.msra.mxu0 %v5974
  %6938 = vmatprep.subr.mxu0 %v5980
  %6939 = vmatpush1.msra.mxu0 %v5979
  %6940 = vmatprep.subr.mxu0 %v5985
  %6941 = vmatpush1.msra.mxu0 %v5984
  %6942 = vmatprep.subr.mxu0 %v5990
  %6943 = vmatpush1.msra.mxu0 %v5989
  %6944 = vmatprep.subr.mxu0 %v5995
  %6945 = vmatpush1.msra.mxu0 %v5994
  %6946 = vmatprep.subr.mxu0 %v6000
  %6947 = vmatpush1.msra.mxu0 %v5999
  %6948 = vmatprep.subr.mxu0 %v6005
  %6949 = vmatpush1.msra.mxu0 %v6004
  %6950 = vmatprep.subr.mxu0 %v6010
  %6951 = vmatpush1.msra.mxu0 %v6009
  %6952 = vmatprep.subr.mxu0 %v6015
  %6953 = vmatpush1.msra.mxu0 %v6014
  %6954 = vmatprep.subr.mxu0 %v6020
  %6955 = vmatpush1.msra.mxu0 %v6019
  %6956 = vmatprep.subr.mxu0 %v6025
  %6957 = vmatpush1.msra.mxu0 %v6024
  %6958 = vmatprep.subr.mxu0 %v6030
  %6959 = vmatpush1.msra.mxu0 %v6029
  %6960 = vmatprep.subr.mxu0 %v6035
  %6961 = vmatpush1.msra.mxu0 %v6034
  %6962 = vmatprep.subr.mxu0 %v6040
  %6963 = vmatpush1.msra.mxu0 %v6039
  %6964 = vmatprep.subr.mxu0 %v6045
  %6965 = vmatpush1.msra.mxu0 %v6044
  %6966 = vmatprep.subr.mxu0 %v6050
  %6967 = vmatpush1.msra.mxu0 %v6049
  %6968 = vmatprep.subr.mxu0 %v6055
  %6969 = vmatpush1.msra.mxu0 %v6054
  %6970 = vmatprep.subr.mxu0 %v6060
  %6971 = vmatpush1.msra.mxu0 %v6059
  %6972 = vmatprep.subr.mxu0 %v6065
  %6973 = vmatpush1.msra.mxu0 %v6064
  %6974 = vmatprep.subr.mxu0 %v6070
  %6975 = vmatpush1.msra.mxu0 %v6069
  %6976 = vmatprep.subr.mxu0 %v6075
  %6977 = vmatpush1.msra.mxu0 %v6074
  %6978 = vmatprep.subr.mxu0 %v6080
  %6979 = vmatpush1.msra.mxu0 %v6079
  %6980 = vmatprep.subr.mxu0 %v6085
  %6981 = vmatpush1.msra.mxu0 %v6084
  %6982 = vmatprep.subr.mxu0 %v6090
  %6983 = vmatpush1.msra.mxu0 %v6089
  %6984 = vmatprep.subr.mxu0 %v6095
  %6985 = vmatpush1.msra.mxu0 %v6094
  %6986 = vmatprep.subr.mxu0 %v6100
  %6987 = vmatpush1.msra.mxu0 %v6099
  %6988 = vmatprep.mubr.f32.mxu0 %v6611
  %6989 = vmatmul.mubr.f32.gmra.mrb[0].mxu0 %v6603
  %v6990 = vpop.f32.mrb[0].mxu0
  %v6991 = vadd.f32 %v6580, %v6990
  %v6992 = vpop.f32.mrb[0].mxu0
  %v6993 = vadd.f32 %v6584, %v6992
  %6994 = vdwg.mxu0
  %6995 = vmatprep.subr.mxu0 %v6105
  %6996 = vmatpush1.msra.mxu0 %v6104
  %6997 = vmatprep.subr.mxu0 %v6110
  %6998 = vmatpush1.msra.mxu0 %v6109
  %6999 = vmatprep.subr.mxu0 %v6115
  %7000 = vmatpush1.msra.mxu0 %v6114
  %7001 = vmatprep.subr.mxu0 %v6120
  %7002 = vmatpush1.msra.mxu0 %v6119
  %7003 = vmatprep.subr.mxu0 %v6125
  %7004 = vmatpush1.msra.mxu0 %v6124
  %7005 = vmatprep.subr.mxu0 %v6130
  %7006 = vmatpush1.msra.mxu0 %v6129
  %7007 = vmatprep.subr.mxu0 %v6135
  %7008 = vmatpush1.msra.mxu0 %v6134
  %7009 = vmatprep.subr.mxu0 %v6140
  %7010 = vmatpush1.msra.mxu0 %v6139
  %7011 = vmatprep.subr.mxu0 %v6145
  %7012 = vmatpush1.msra.mxu0 %v6144
  %7013 = vmatprep.subr.mxu0 %v6150
  %7014 = vmatpush1.msra.mxu0 %v6149
  %7015 = vmatprep.subr.mxu0 %v6155
  %7016 = vmatpush1.msra.mxu0 %v6154
  %7017 = vmatprep.subr.mxu0 %v6160
  %7018 = vmatpush1.msra.mxu0 %v6159
  %7019 = vmatprep.subr.mxu0 %v6165
  %7020 = vmatpush1.msra.mxu0 %v6164
  %7021 = vmatprep.subr.mxu0 %v6170
  %7022 = vmatpush1.msra.mxu0 %v6169
  %7023 = vmatprep.subr.mxu0 %v6175
  %7024 = vmatpush1.msra.mxu0 %v6174
  %7025 = vmatprep.subr.mxu0 %v6180
  %7026 = vmatpush1.msra.mxu0 %v6179
  %7027 = vmatprep.subr.mxu0 %v6185
  %7028 = vmatpush1.msra.mxu0 %v6184
  %7029 = vmatprep.subr.mxu0 %v6190
  %7030 = vmatpush1.msra.mxu0 %v6189
  %7031 = vmatprep.subr.mxu0 %v6195
  %7032 = vmatpush1.msra.mxu0 %v6194
  %7033 = vmatprep.subr.mxu0 %v6200
  %7034 = vmatpush1.msra.mxu0 %v6199
  %7035 = vmatprep.subr.mxu0 %v6205
  %7036 = vmatpush1.msra.mxu0 %v6204
  %7037 = vmatprep.subr.mxu0 %v6210
  %7038 = vmatpush1.msra.mxu0 %v6209
  %7039 = vmatprep.subr.mxu0 %v6215
  %7040 = vmatpush1.msra.mxu0 %v6214
  %7041 = vmatprep.subr.mxu0 %v6220
  %7042 = vmatpush1.msra.mxu0 %v6219
  %7043 = vmatprep.subr.mxu0 %v6225
  %7044 = vmatpush1.msra.mxu0 %v6224
  %7045 = vmatprep.subr.mxu0 %v6230
  %7046 = vmatpush1.msra.mxu0 %v6229
  %7047 = vmatprep.subr.mxu0 %v6235
  %7048 = vmatpush1.msra.mxu0 %v6234
  %7049 = vmatprep.subr.mxu0 %v6240
  %7050 = vmatpush1.msra.mxu0 %v6239
  %7051 = vmatprep.subr.mxu0 %v6245
  %7052 = vmatpush1.msra.mxu0 %v6244
  %7053 = vmatprep.subr.mxu0 %v6250
  %7054 = vmatpush1.msra.mxu0 %v6249
  %7055 = vmatprep.subr.mxu0 %v6255
  %7056 = vmatpush1.msra.mxu0 %v6254
  %7057 = vmatprep.subr.mxu0 %v6260
  %7058 = vmatpush1.msra.mxu0 %v6259
  %7059 = vmatprep.mubr.f32.mxu0 %v6612
  %7060 = vmatmul.mubr.f32.gmra.mrb[0].mxu0 %v6610
  %v7061 = vpop.f32.mrb[0].mxu0
  %v7062 = vadd.f32 %v6991, %v7061
  %v7063 = vpop.f32.mrb[0].mxu0
  %v7064 = vadd.f32 %v6993, %v7063
  %7065 = vdwg.mxu0
  %7066 = vmatprep.subr.mxu0 %v6265
  %7067 = vmatpush1.msra.mxu0 %v6264
  %7068 = vmatprep.subr.mxu0 %v6270
  %7069 = vmatpush1.msra.mxu0 %v6269
  %7070 = vmatprep.subr.mxu0 %v6275
  %7071 = vmatpush1.msra.mxu0 %v6274
  %7072 = vmatprep.subr.mxu0 %v6280
  %7073 = vmatpush1.msra.mxu0 %v6279
  %7074 = vmatprep.subr.mxu0 %v6285
  %7075 = vmatpush1.msra.mxu0 %v6284
  %7076 = vmatprep.subr.mxu0 %v6290
  %7077 = vmatpush1.msra.mxu0 %v6289
  %7078 = vmatprep.subr.mxu0 %v6295
  %7079 = vmatpush1.msra.mxu0 %v6294
  %7080 = vmatprep.subr.mxu0 %v6300
  %7081 = vmatpush1.msra.mxu0 %v6299
  %7082 = vmatprep.subr.mxu0 %v6305
  %7083 = vmatpush1.msra.mxu0 %v6304
  %7084 = vmatprep.subr.mxu0 %v6310
  %7085 = vmatpush1.msra.mxu0 %v6309
  %7086 = vmatprep.subr.mxu0 %v6315
  %7087 = vmatpush1.msra.mxu0 %v6314
  %7088 = vmatprep.subr.mxu0 %v6320
  %7089 = vmatpush1.msra.mxu0 %v6319
  %7090 = vmatprep.subr.mxu0 %v6325
  %7091 = vmatpush1.msra.mxu0 %v6324
  %7092 = vmatprep.subr.mxu0 %v6330
  %7093 = vmatpush1.msra.mxu0 %v6329
  %7094 = vmatprep.subr.mxu0 %v6335
  %7095 = vmatpush1.msra.mxu0 %v6334
  %7096 = vmatprep.subr.mxu0 %v6340
  %7097 = vmatpush1.msra.mxu0 %v6339
  %7098 = vmatprep.subr.mxu0 %v6345
  %7099 = vmatpush1.msra.mxu0 %v6344
  %7100 = vmatprep.subr.mxu0 %v6350
  %7101 = vmatpush1.msra.mxu0 %v6349
  %7102 = vmatprep.subr.mxu0 %v6355
  %7103 = vmatpush1.msra.mxu0 %v6354
  %7104 = vmatprep.subr.mxu0 %v6360
  %7105 = vmatpush1.msra.mxu0 %v6359
  %7106 = vmatprep.subr.mxu0 %v6365
  %7107 = vmatpush1.msra.mxu0 %v6364
  %7108 = vmatprep.subr.mxu0 %v6370
  %7109 = vmatpush1.msra.mxu0 %v6369
  %7110 = vmatprep.subr.mxu0 %v6375
  %7111 = vmatpush1.msra.mxu0 %v6374
  %7112 = vmatprep.subr.mxu0 %v6380
  %7113 = vmatpush1.msra.mxu0 %v6379
  %7114 = vmatprep.subr.mxu0 %v6385
  %7115 = vmatpush1.msra.mxu0 %v6384
  %7116 = vmatprep.subr.mxu0 %v6390
  %7117 = vmatpush1.msra.mxu0 %v6389
  %7118 = vmatprep.subr.mxu0 %v6395
  %7119 = vmatpush1.msra.mxu0 %v6394
  %7120 = vmatprep.subr.mxu0 %v6400
  %7121 = vmatpush1.msra.mxu0 %v6399
  %7122 = vmatprep.subr.mxu0 %v6405
  %7123 = vmatpush1.msra.mxu0 %v6404
  %7124 = vmatprep.subr.mxu0 %v6410
  %7125 = vmatpush1.msra.mxu0 %v6409
  %7126 = vmatprep.subr.mxu0 %v6415
  %7127 = vmatpush1.msra.mxu0 %v6414
  %7128 = vmatprep.subr.mxu0 %v6420
  %7129 = vmatpush1.msra.mxu0 %v6419
  %7130 = vmatprep.mubr.f32.mxu0 %v6628
  %7131 = vmatmul.mubr.f32.gmra.mrb[0].mxu0 %v6620
  %v7132 = vpop.f32.mrb[0].mxu0
  %v7133 = vadd.f32 %v7062, %v7132
  %v7134 = vpop.f32.mrb[0].mxu0
  %v7135 = vadd.f32 %v7064, %v7134
  %7136 = vdwg.mxu0
  %7137 = vmatprep.subr.mxu0 %v6425
  %7138 = vmatpush1.msra.mxu0 %v6424
  %7139 = vmatprep.subr.mxu0 %v6430
  %7140 = vmatpush1.msra.mxu0 %v6429
  %7141 = vmatprep.subr.mxu0 %v6435
  %7142 = vmatpush1.msra.mxu0 %v6434
  %7143 = vmatprep.subr.mxu0 %v6440
  %7144 = vmatpush1.msra.mxu0 %v6439
  %7145 = vmatprep.subr.mxu0 %v6445
  %7146 = vmatpush1.msra.mxu0 %v6444
  %7147 = vmatprep.subr.mxu0 %v6450
  %7148 = vmatpush1.msra.mxu0 %v6449
  %7149 = vmatprep.subr.mxu0 %v6455
  %7150 = vmatpush1.msra.mxu0 %v6454
  %7151 = vmatprep.subr.mxu0 %v6460
  %7152 = vmatpush1.msra.mxu0 %v6459
  %7153 = vmatprep.subr.mxu0 %v6465
  %7154 = vmatpush1.msra.mxu0 %v6464
  %7155 = vmatprep.subr.mxu0 %v6470
  %7156 = vmatpush1.msra.mxu0 %v6469
  %7157 = vmatprep.subr.mxu0 %v6475
  %7158 = vmatpush1.msra.mxu0 %v6474
  %7159 = vmatprep.subr.mxu0 %v6480
  %7160 = vmatpush1.msra.mxu0 %v6479
  %7161 = vmatprep.subr.mxu0 %v6485
  %7162 = vmatpush1.msra.mxu0 %v6484
  %7163 = vmatprep.subr.mxu0 %v6490
  %7164 = vmatpush1.msra.mxu0 %v6489
  %7165 = vmatprep.subr.mxu0 %v6495
  %7166 = vmatpush1.msra.mxu0 %v6494
  %7167 = vmatprep.subr.mxu0 %v6500
  %7168 = vmatpush1.msra.mxu0 %v6499
  %7169 = vmatprep.subr.mxu0 %v6505
  %7170 = vmatpush1.msra.mxu0 %v6504
  %7171 = vmatprep.subr.mxu0 %v6510
  %7172 = vmatpush1.msra.mxu0 %v6509
  %7173 = vmatprep.subr.mxu0 %v6515
  %7174 = vmatpush1.msra.mxu0 %v6514
  %7175 = vmatprep.subr.mxu0 %v6520
  %7176 = vmatpush1.msra.mxu0 %v6519
  %7177 = vmatprep.subr.mxu0 %v6525
  %7178 = vmatpush1.msra.mxu0 %v6524
  %7179 = vmatprep.subr.mxu0 %v6530
  %7180 = vmatpush1.msra.mxu0 %v6529
  %7181 = vmatprep.subr.mxu0 %v6535
  %7182 = vmatpush1.msra.mxu0 %v6534
  %7183 = vmatprep.subr.mxu0 %v6540
  %7184 = vmatpush1.msra.mxu0 %v6539
  %7185 = vmatprep.subr.mxu0 %v6545
  %7186 = vmatpush1.msra.mxu0 %v6544
  %7187 = vmatprep.subr.mxu0 %v6550
  %7188 = vmatpush1.msra.mxu0 %v6549
  %7189 = vmatprep.subr.mxu0 %v6555
  %7190 = vmatpush1.msra.mxu0 %v6554
  %7191 = vmatprep.subr.mxu0 %v6560
  %7192 = vmatpush1.msra.mxu0 %v6559
  %7193 = vmatprep.subr.mxu0 %v6565
  %7194 = vmatpush1.msra.mxu0 %v6564
  %7195 = vmatprep.subr.mxu0 0.0
  %7196 = vmatpush1.msra.mxu0 0.0
  %7197 = vmatprep.subr.mxu0 0.0
  %7198 = vmatpush1.msra.mxu0 0.0
  %7199 = vmatprep.subr.mxu0 0.0
  %7200 = vmatpush1.msra.mxu0 0.0
  %7201 = vmatprep.mubr.f32.mxu0 %v6638
  %7202 = vmatmul.mubr.f32.gmra.mrb[0].mxu0 %v6627
  %v7203 = vpop.f32.mrb[0].mxu0
  %v7204 = vadd.f32 %v7133, %v7203
  %v7205 = vpop.f32.mrb[0].mxu0
  %v7206 = vadd.f32 %v7135, %v7205
  %7207 = vdwg.mxu0
  %7208 = vmatprep.subr.mxu0 0.0
  %7209 = vmatpush1.msra.mxu0 %v5946
  %7210 = vmatprep.subr.mxu0 0.0
  %7211 = vmatpush1.msra.mxu0 %v5951
  %7212 = vmatprep.subr.mxu0 0.0
  %7213 = vmatpush1.msra.mxu0 %v5956
  %7214 = vmatprep.subr.mxu0 0.0
  %7215 = vmatpush1.msra.mxu0 %v5961
  %7216 = vmatprep.subr.mxu0 0.0
  %7217 = vmatpush1.msra.mxu0 %v5966
  %7218 = vmatprep.subr.mxu0 0.0
  %7219 = vmatpush1.msra.mxu0 %v5971
  %7220 = vmatprep.subr.mxu0 0.0
  %7221 = vmatpush1.msra.mxu0 %v5976
  %7222 = vmatprep.subr.mxu0 0.0
  %7223 = vmatpush1.msra.mxu0 %v5981
  %7224 = vmatprep.subr.mxu0 0.0
  %7225 = vmatpush1.msra.mxu0 %v5986
  %7226 = vmatprep.subr.mxu0 0.0
  %7227 = vmatpush1.msra.mxu0 %v5991
  %7228 = vmatprep.subr.mxu0 0.0
  %7229 = vmatpush1.msra.mxu0 %v5996
  %7230 = vmatprep.subr.mxu0 0.0
  %7231 = vmatpush1.msra.mxu0 %v6001
  %7232 = vmatprep.subr.mxu0 0.0
  %7233 = vmatpush1.msra.mxu0 %v6006
  %7234 = vmatprep.subr.mxu0 0.0
  %7235 = vmatpush1.msra.mxu0 %v6011
  %7236 = vmatprep.subr.mxu0 0.0
  %7237 = vmatpush1.msra.mxu0 %v6016
  %7238 = vmatprep.subr.mxu0 0.0
  %7239 = vmatpush1.msra.mxu0 %v6021
  %7240 = vmatprep.subr.mxu0 0.0
  %7241 = vmatpush1.msra.mxu0 %v6026
  %7242 = vmatprep.subr.mxu0 0.0
  %7243 = vmatpush1.msra.mxu0 %v6031
  %7244 = vmatprep.subr.mxu0 0.0
  %7245 = vmatpush1.msra.mxu0 %v6036
  %7246 = vmatprep.subr.mxu0 0.0
  %7247 = vmatpush1.msra.mxu0 %v6041
  %7248 = vmatprep.subr.mxu0 0.0
  %7249 = vmatpush1.msra.mxu0 %v6046
  %7250 = vmatprep.subr.mxu0 0.0
  %7251 = vmatpush1.msra.mxu0 %v6051
  %7252 = vmatprep.subr.mxu0 0.0
  %7253 = vmatpush1.msra.mxu0 %v6056
  %7254 = vmatprep.subr.mxu0 0.0
  %7255 = vmatpush1.msra.mxu0 %v6061
  %7256 = vmatprep.subr.mxu0 0.0
  %7257 = vmatpush1.msra.mxu0 %v6066
  %7258 = vmatprep.subr.mxu0 0.0
  %7259 = vmatpush1.msra.mxu0 %v6071
  %7260 = vmatprep.subr.mxu0 0.0
  %7261 = vmatpush1.msra.mxu0 %v6076
  %7262 = vmatprep.subr.mxu0 0.0
  %7263 = vmatpush1.msra.mxu0 %v6081
  %7264 = vmatprep.subr.mxu0 0.0
  %7265 = vmatpush1.msra.mxu0 %v6086
  %7266 = vmatprep.subr.mxu0 0.0
  %7267 = vmatpush1.msra.mxu0 %v6091
  %7268 = vmatprep.subr.mxu0 0.0
  %7269 = vmatpush1.msra.mxu0 %v6096
  %7270 = vmatprep.subr.mxu0 0.0
  %7271 = vmatpush1.msra.mxu0 %v6101
  %7272 = vmatprep.mubr.f32.mxu0 %v6611
  %7273 = vmatmul.mubr.f32.gmra.mrb[0].mxu0 %v6603
  %v7274 = vpop.f32.mrb[0].mxu0
  %v7275 = vadd.f32 %v6588, %v7274
  %v7276 = vpop.f32.mrb[0].mxu0
  %7277 = vdwg.mxu0
  %7278 = vmatprep.subr.mxu0 0.0
  %7279 = vmatpush1.msra.mxu0 %v6106
  %7280 = vmatprep.subr.mxu0 0.0
  %7281 = vmatpush1.msra.mxu0 %v6111
  %7282 = vmatprep.subr.mxu0 0.0
  %7283 = vmatpush1.msra.mxu0 %v6116
  %7284 = vmatprep.subr.mxu0 0.0
  %7285 = vmatpush1.msra.mxu0 %v6121
  %7286 = vmatprep.subr.mxu0 0.0
  %7287 = vmatpush1.msra.mxu0 %v6126
  %7288 = vmatprep.subr.mxu0 0.0
  %7289 = vmatpush1.msra.mxu0 %v6131
  %7290 = vmatprep.subr.mxu0 0.0
  %7291 = vmatpush1.msra.mxu0 %v6136
  %7292 = vmatprep.subr.mxu0 0.0
  %7293 = vmatpush1.msra.mxu0 %v6141
  %7294 = vmatprep.subr.mxu0 0.0
  %7295 = vmatpush1.msra.mxu0 %v6146
  %7296 = vmatprep.subr.mxu0 0.0
  %7297 = vmatpush1.msra.mxu0 %v6151
  %7298 = vmatprep.subr.mxu0 0.0
  %7299 = vmatpush1.msra.mxu0 %v6156
  %7300 = vmatprep.subr.mxu0 0.0
  %7301 = vmatpush1.msra.mxu0 %v6161
  %7302 = vmatprep.subr.mxu0 0.0
  %7303 = vmatpush1.msra.mxu0 %v6166
  %7304 = vmatprep.subr.mxu0 0.0
  %7305 = vmatpush1.msra.mxu0 %v6171
  %7306 = vmatprep.subr.mxu0 0.0
  %7307 = vmatpush1.msra.mxu0 %v6176
  %7308 = vmatprep.subr.mxu0 0.0
  %7309 = vmatpush1.msra.mxu0 %v6181
  %7310 = vmatprep.subr.mxu0 0.0
  %7311 = vmatpush1.msra.mxu0 %v6186
  %7312 = vmatprep.subr.mxu0 0.0
  %7313 = vmatpush1.msra.mxu0 %v6191
  %7314 = vmatprep.subr.mxu0 0.0
  %7315 = vmatpush1.msra.mxu0 %v6196
  %7316 = vmatprep.subr.mxu0 0.0
  %7317 = vmatpush1.msra.mxu0 %v6201
  %7318 = vmatprep.subr.mxu0 0.0
  %7319 = vmatpush1.msra.mxu0 %v6206
  %7320 = vmatprep.subr.mxu0 0.0
  %7321 = vmatpush1.msra.mxu0 %v6211
  %7322 = vmatprep.subr.mxu0 0.0
  %7323 = vmatpush1.msra.mxu0 %v6216
  %7324 = vmatprep.subr.mxu0 0.0
  %7325 = vmatpush1.msra.mxu0 %v6221
  %7326 = vmatprep.subr.mxu0 0.0
  %7327 = vmatpush1.msra.mxu0 %v6226
  %7328 = vmatprep.subr.mxu0 0.0
  %7329 = vmatpush1.msra.mxu0 %v6231
  %7330 = vmatprep.subr.mxu0 0.0
  %7331 = vmatpush1.msra.mxu0 %v6236
  %7332 = vmatprep.subr.mxu0 0.0
  %7333 = vmatpush1.msra.mxu0 %v6241
  %7334 = vmatprep.subr.mxu0 0.0
  %7335 = vmatpush1.msra.mxu0 %v6246
  %7336 = vmatprep.subr.mxu0 0.0
  %7337 = vmatpush1.msra.mxu0 %v6251
  %7338 = vmatprep.subr.mxu0 0.0
  %7339 = vmatpush1.msra.mxu0 %v6256
  %7340 = vmatprep.subr.mxu0 0.0
  %7341 = vmatpush1.msra.mxu0 %v6261
  %7342 = vmatprep.mubr.f32.mxu0 %v6612
  %7343 = vmatmul.mubr.f32.gmra.mrb[0].mxu0 %v6610
  %v7344 = vpop.f32.mrb[0].mxu0
  %v7345 = vadd.f32 %v7275, %v7344
  %v7346 = vpop.f32.mrb[0].mxu0
  %7347 = vdwg.mxu0
  %7348 = vmatprep.subr.mxu0 0.0
  %7349 = vmatpush1.msra.mxu0 %v6266
  %7350 = vmatprep.subr.mxu0 0.0
  %7351 = vmatpush1.msra.mxu0 %v6271
  %7352 = vmatprep.subr.mxu0 0.0
  %7353 = vmatpush1.msra.mxu0 %v6276
  %7354 = vmatprep.subr.mxu0 0.0
  %7355 = vmatpush1.msra.mxu0 %v6281
  %7356 = vmatprep.subr.mxu0 0.0
  %7357 = vmatpush1.msra.mxu0 %v6286
  %7358 = vmatprep.subr.mxu0 0.0
  %7359 = vmatpush1.msra.mxu0 %v6291
  %7360 = vmatprep.subr.mxu0 0.0
  %7361 = vmatpush1.msra.mxu0 %v6296
  %7362 = vmatprep.subr.mxu0 0.0
  %7363 = vmatpush1.msra.mxu0 %v6301
  %7364 = vmatprep.subr.mxu0 0.0
  %7365 = vmatpush1.msra.mxu0 %v6306
  %7366 = vmatprep.subr.mxu0 0.0
  %7367 = vmatpush1.msra.mxu0 %v6311
  %7368 = vmatprep.subr.mxu0 0.0
  %7369 = vmatpush1.msra.mxu0 %v6316
  %7370 = vmatprep.subr.mxu0 0.0
  %7371 = vmatpush1.msra.mxu0 %v6321
  %7372 = vmatprep.subr.mxu0 0.0
  %7373 = vmatpush1.msra.mxu0 %v6326
  %7374 = vmatprep.subr.mxu0 0.0
  %7375 = vmatpush1.msra.mxu0 %v6331
  %7376 = vmatprep.subr.mxu0 0.0
  %7377 = vmatpush1.msra.mxu0 %v6336
  %7378 = vmatprep.subr.mxu0 0.0
  %7379 = vmatpush1.msra.mxu0 %v6341
  %7380 = vmatprep.subr.mxu0 0.0
  %7381 = vmatpush1.msra.mxu0 %v6346
  %7382 = vmatprep.subr.mxu0 0.0
  %7383 = vmatpush1.msra.mxu0 %v6351
  %7384 = vmatprep.subr.mxu0 0.0
  %7385 = vmatpush1.msra.mxu0 %v6356
  %7386 = vmatprep.subr.mxu0 0.0
  %7387 = vmatpush1.msra.mxu0 %v6361
  %7388 = vmatprep.subr.mxu0 0.0
  %7389 = vmatpush1.msra.mxu0 %v6366
  %7390 = vmatprep.subr.mxu0 0.0
  %7391 = vmatpush1.msra.mxu0 %v6371
  %7392 = vmatprep.subr.mxu0 0.0
  %7393 = vmatpush1.msra.mxu0 %v6376
  %7394 = vmatprep.subr.mxu0 0.0
  %7395 = vmatpush1.msra.mxu0 %v6381
  %7396 = vmatprep.subr.mxu0 0.0
  %7397 = vmatpush1.msra.mxu0 %v6386
  %7398 = vmatprep.subr.mxu0 0.0
  %7399 = vmatpush1.msra.mxu0 %v6391
  %7400 = vmatprep.subr.mxu0 0.0
  %7401 = vmatpush1.msra.mxu0 %v6396
  %7402 = vmatprep.subr.mxu0 0.0
  %7403 = vmatpush1.msra.mxu0 %v6401
  %7404 = vmatprep.subr.mxu0 0.0
  %7405 = vmatpush1.msra.mxu0 %v6406
  %7406 = vmatprep.subr.mxu0 0.0
  %7407 = vmatpush1.msra.mxu0 %v6411
  %7408 = vmatprep.subr.mxu0 0.0
  %7409 = vmatpush1.msra.mxu0 %v6416
  %7410 = vmatprep.subr.mxu0 0.0
  %7411 = vmatpush1.msra.mxu0 %v6421
  %7412 = vmatprep.mubr.f32.mxu0 %v6628
  %7413 = vmatmul.mubr.f32.gmra.mrb[0].mxu0 %v6620
  %v7414 = vpop.f32.mrb[0].mxu0
  %v7415 = vadd.f32 %v7345, %v7414
  %v7416 = vpop.f32.mrb[0].mxu0
  %7417 = vdwg.mxu0
  %7418 = vmatprep.subr.mxu0 0.0
  %7419 = vmatpush1.msra.mxu0 %v6426
  %7420 = vmatprep.subr.mxu0 0.0
  %7421 = vmatpush1.msra.mxu0 %v6431
  %7422 = vmatprep.subr.mxu0 0.0
  %7423 = vmatpush1.msra.mxu0 %v6436
  %7424 = vmatprep.subr.mxu0 0.0
  %7425 = vmatpush1.msra.mxu0 %v6441
  %7426 = vmatprep.subr.mxu0 0.0
  %7427 = vmatpush1.msra.mxu0 %v6446
  %7428 = vmatprep.subr.mxu0 0.0
  %7429 = vmatpush1.msra.mxu0 %v6451
  %7430 = vmatprep.subr.mxu0 0.0
  %7431 = vmatpush1.msra.mxu0 %v6456
  %7432 = vmatprep.subr.mxu0 0.0
  %7433 = vmatpush1.msra.mxu0 %v6461
  %7434 = vmatprep.subr.mxu0 0.0
  %7435 = vmatpush1.msra.mxu0 %v6466
  %7436 = vmatprep.subr.mxu0 0.0
  %7437 = vmatpush1.msra.mxu0 %v6471
  %7438 = vmatprep.subr.mxu0 0.0
  %7439 = vmatpush1.msra.mxu0 %v6476
  %7440 = vmatprep.subr.mxu0 0.0
  %7441 = vmatpush1.msra.mxu0 %v6481
  %7442 = vmatprep.subr.mxu0 0.0
  %7443 = vmatpush1.msra.mxu0 %v6486
  %7444 = vmatprep.subr.mxu0 0.0
  %7445 = vmatpush1.msra.mxu0 %v6491
  %7446 = vmatprep.subr.mxu0 0.0
  %7447 = vmatpush1.msra.mxu0 %v6496
  %7448 = vmatprep.subr.mxu0 0.0
  %7449 = vmatpush1.msra.mxu0 %v6501
  %7450 = vmatprep.subr.mxu0 0.0
  %7451 = vmatpush1.msra.mxu0 %v6506
  %7452 = vmatprep.subr.mxu0 0.0
  %7453 = vmatpush1.msra.mxu0 %v6511
  %7454 = vmatprep.subr.mxu0 0.0
  %7455 = vmatpush1.msra.mxu0 %v6516
  %7456 = vmatprep.subr.mxu0 0.0
  %7457 = vmatpush1.msra.mxu0 %v6521
  %7458 = vmatprep.subr.mxu0 0.0
  %7459 = vmatpush1.msra.mxu0 %v6526
  %7460 = vmatprep.subr.mxu0 0.0
  %7461 = vmatpush1.msra.mxu0 %v6531
  %7462 = vmatprep.subr.mxu0 0.0
  %7463 = vmatpush1.msra.mxu0 %v6536
  %7464 = vmatprep.subr.mxu0 0.0
  %7465 = vmatpush1.msra.mxu0 %v6541
  %7466 = vmatprep.subr.mxu0 0.0
  %7467 = vmatpush1.msra.mxu0 %v6546
  %7468 = vmatprep.subr.mxu0 0.0
  %7469 = vmatpush1.msra.mxu0 %v6551
  %7470 = vmatprep.subr.mxu0 0.0
  %7471 = vmatpush1.msra.mxu0 %v6556
  %7472 = vmatprep.subr.mxu0 0.0
  %7473 = vmatpush1.msra.mxu0 %v6561
  %7474 = vmatprep.subr.mxu0 0.0
  %7475 = vmatpush1.msra.mxu0 %v6566
  %7476 = vmatprep.subr.mxu0 0.0
  %7477 = vmatpush1.msra.mxu0 0.0
  %7478 = vmatprep.subr.mxu0 0.0
  %7479 = vmatpush1.msra.mxu0 0.0
  %7480 = vmatprep.subr.mxu0 0.0
  %7481 = vmatpush1.msra.mxu0 0.0
  %7482 = vmatprep.mubr.f32.mxu0 %v6638
  %7483 = vmatmul.mubr.f32.gmra.mrb[0].mxu0 %v6627
  %v7484 = vpop.f32.mrb[0].mxu0
  %v7485 = vadd.f32 %v7415, %v7484
  %v7486 = vpop.f32.mrb[0].mxu0
  %7487 = vdwg.mxu0
  %v7488 = vtanh.pop %v6920
  %v7489 = vtanh.pop %v6922
  %v7490 = vtanh.pop %v7204
  %v7491 = vtanh.pop %v7206
  %v7492 = vtanh.pop %v7485
  %v7493 = vld [vmem:[%s9] sm:$0xff]
  %v7494 = vld [vmem:[%s9 + $0x8] sm:$0xff]
  %v7495 = vld [vmem:[%s9 + $0x10] sm:$0xff]
  %v7496 = vld [vmem:[%s9 + $0x18] sm:$0xff]
  %v7497 = vld [vmem:[%s9 + $0x20] sm:$0xff]
  %v7498 = vld [vmem:[%s9 + $0x28] sm:$0xff]
  %v7499 = vld [vmem:[%s9 + $0x30] sm:$0xff]
  %v7500 = vld [vmem:[%s9 + $0x38] sm:$0xff]
  %v7501 = vld [vmem:[%s9 + $0x40] sm:$0xff]
  %v7502 = vld [vmem:[%s9 + $0x48] sm:$0xff]
  %v7503 = vld [vmem:[%s9 + $0x50] sm:$0xff]
  %v7504 = vld [vmem:[%s9 + $0x58] sm:$0xff]
  %v7505 = vld [vmem:[%s9 + $0x60] sm:$0xff]
  %v7506 = vld [vmem:[%s9 + $0x68] sm:$0xff]
  %v7507 = vld [vmem:[%s9 + $0x70] sm:$0xff]
  %v7508 = vld [vmem:[%s9 + $0x78] sm:$0xff]
  %v7509 = vld [vmem:[%s9 + $0x80] sm:$0xff]
  %v7510 = vld [vmem:[%s9 + $0x88] sm:$0xff]
  %v7511 = vld [vmem:[%s9 + $0x90] sm:$0xff]
  %v7512 = vld [vmem:[%s9 + $0x98] sm:$0xff]
  %v7513 = vld [vmem:[%s9 + $0xa0] sm:$0xff]
  %v7514 = vld [vmem:[%s9 + $0xa8] sm:$0xff]
  %v7515 = vld [vmem:[%s9 + $0xb0] sm:$0xff]
  %v7516 = vld [vmem:[%s9 + $0xb8] sm:$0xff]
  %v7517 = vld [vmem:[%s9 + $0xc0] sm:$0xff]
  %v7518 = vld [vmem:[%s9 + $0xc8] sm:$0xff]
  %v7519 = vld [vmem:[%s9 + $0xd0] sm:$0xff]
  %v7520 = vld [vmem:[%s9 + $0xd8] sm:$0xff]
  %v7521 = vld [vmem:[%s9 + $0xe0] sm:$0xff]
  %v7522 = vld [vmem:[%s9 + $0xe8] sm:$0xff]
  %v7523 = vld [vmem:[%s9 + $0xf0] sm:$0xff]
  %v7524 = vld [vmem:[%s9 + $0xf8] sm:$0xff]
  %v7525 = vld [vmem:[%s9 + $0x100] sm:$0xff]
  %v7526 = vld [vmem:[%s9 + $0x108] sm:$0xff]
  %v7527 = vld [vmem:[%s9 + $0x110] sm:$0xff]
  %v7528 = vld [vmem:[%s9 + $0x118] sm:$0xff]
  %v7529 = vld [vmem:[%s9 + $0x120] sm:$0xff]
  %v7530 = vld [vmem:[%s9 + $0x128] sm:$0xff]
  %v7531 = vld [vmem:[%s9 + $0x130] sm:$0xff]
  %v7532 = vld [vmem:[%s9 + $0x138] sm:$0xff]
  %v7533 = vld [vmem:[%s9 + $0x140] sm:$0xff]
  %v7534 = vld [vmem:[%s9 + $0x148] sm:$0xff]
  %v7535 = vld [vmem:[%s9 + $0x150] sm:$0xff]
  %v7536 = vld [vmem:[%s9 + $0x158] sm:$0xff]
  %v7537 = vld [vmem:[%s9 + $0x160] sm:$0xff]
  %v7538 = vld [vmem:[%s9 + $0x168] sm:$0xff]
  %v7539 = vld [vmem:[%s9 + $0x170] sm:$0xff]
  %v7540 = vld [vmem:[%s9 + $0x178] sm:$0xff]
  %v7541 = vld [vmem:[%s9 + $0x180] sm:$0xff]
  %v7542 = vld [vmem:[%s9 + $0x188] sm:$0xff]
  %v7543 = vld [vmem:[%s9 + $0x190] sm:$0xff]
  %v7544 = vld [vmem:[%s9 + $0x198] sm:$0xff]
  %v7545 = vld [vmem:[%s9 + $0x1a0] sm:$0xff]
  %v7546 = vld [vmem:[%s9 + $0x1a8] sm:$0xff]
  %v7547 = vld [vmem:[%s9 + $0x1b0] sm:$0xff]
  %v7548 = vld [vmem:[%s9 + $0x1b8] sm:$0xff]
  %v7549 = vld [vmem:[%s9 + $0x1c0] sm:$0xff]
  %v7550 = vld [vmem:[%s9 + $0x1c8] sm:$0xff]
  %v7551 = vld [vmem:[%s9 + $0x1d0] sm:$0xff]
  %v7552 = vld [vmem:[%s9 + $0x1d8] sm:$0xff]
  %v7553 = vld [vmem:[%s9 + $0x1e0] sm:$0xff]
  %v7554 = vld [vmem:[%s9 + $0x1e8] sm:$0xff]
  %v7555 = vld [vmem:[%s9 + $0x1f0] sm:$0xff]
  %v7556 = vld [vmem:[%s9 + $0x1f8] sm:$0xff]
  %v7557 = vld [vmem:[%s9 + $0x200] sm:$0xff]
  %v7558 = vld [vmem:[%s9 + $0x208] sm:$0xff]
  %v7559 = vld [vmem:[%s9 + $0x210] sm:$0xff]
  %v7560 = vld [vmem:[%s9 + $0x218] sm:$0xff]
  %v7561 = vld [vmem:[%s9 + $0x220] sm:$0xff]
  %v7562 = vld [vmem:[%s9 + $0x228] sm:$0xff]
  %v7563 = vld [vmem:[%s9 + $0x230] sm:$0xff]
  %v7564 = vld [vmem:[%s9 + $0x238] sm:$0xff]
  %v7565 = vld [vmem:[%s9 + $0x240] sm:$0xff]
  %v7566 = vld [vmem:[%s9 + $0x248] sm:$0xff]
  %v7567 = vld [vmem:[%s9 + $0x250] sm:$0xff]
  %v7568 = vld [vmem:[%s10] sm:$0x1]
  %v7570 = vlaneseq
  %v7571 = vshrl.u32 %v7570, 7
  %v7572 = vsub.s32 0, %v7571
  %v7573 = vrot.slane %v7568, %v7572
  %vm7575 = vcmask 719872
  %v7577 = vsel %vm7575, %v7492, 0
  %7579 = vmatprep.subr.mxu0 0.0
  %7580 = vmatpush1.msra.mxu0 %v7493
  %7581 = vmatprep.subr.mxu0 0.0
  %7582 = vmatpush1.msra.mxu0 %v7494
  %7583 = vmatprep.subr.mxu0 0.0
  %7584 = vmatpush1.msra.mxu0 %v7495
  %7585 = vmatprep.subr.mxu0 0.0
  %7586 = vmatpush1.msra.mxu0 %v7496
  %7587 = vmatprep.subr.mxu0 0.0
  %7588 = vmatpush1.msra.mxu0 %v7497
  %7589 = vmatprep.subr.mxu0 0.0
  %7590 = vmatpush1.msra.mxu0 %v7498
  %7591 = vmatprep.subr.mxu0 0.0
  %7592 = vmatpush1.msra.mxu0 %v7499
  %7593 = vmatprep.subr.mxu0 0.0
  %7594 = vmatpush1.msra.mxu0 %v7500
  %7595 = vmatprep.subr.mxu0 0.0
  %7596 = vmatpush1.msra.mxu0 %v7501
  %7597 = vmatprep.subr.mxu0 0.0
  %7598 = vmatpush1.msra.mxu0 %v7502
  %7599 = vmatprep.subr.mxu0 0.0
  %7600 = vmatpush1.msra.mxu0 %v7503
  %7601 = vmatprep.subr.mxu0 0.0
  %7602 = vmatpush1.msra.mxu0 %v7504
  %7603 = vmatprep.subr.mxu0 0.0
  %7604 = vmatpush1.msra.mxu0 %v7505
  %7605 = vmatprep.subr.mxu0 0.0
  %7606 = vmatpush1.msra.mxu0 %v7506
  %7607 = vmatprep.subr.mxu0 0.0
  %7608 = vmatpush1.msra.mxu0 %v7507
  %7609 = vmatprep.subr.mxu0 0.0
  %7610 = vmatpush1.msra.mxu0 %v7508
  %7611 = vmatprep.subr.mxu0 0.0
  %7612 = vmatpush1.msra.mxu0 %v7509
  %7613 = vmatprep.subr.mxu0 0.0
  %7614 = vmatpush1.msra.mxu0 %v7510
  %7615 = vmatprep.subr.mxu0 0.0
  %7616 = vmatpush1.msra.mxu0 %v7511
  %7617 = vmatprep.subr.mxu0 0.0
  %7618 = vmatpush1.msra.mxu0 %v7512
  %7619 = vmatprep.subr.mxu0 0.0
  %7620 = vmatpush1.msra.mxu0 %v7513
  %7621 = vmatprep.subr.mxu0 0.0
  %7622 = vmatpush1.msra.mxu0 %v7514
  %7623 = vmatprep.subr.mxu0 0.0
  %7624 = vmatpush1.msra.mxu0 %v7515
  %7625 = vmatprep.subr.mxu0 0.0
  %7626 = vmatpush1.msra.mxu0 %v7516
  %7627 = vmatprep.subr.mxu0 0.0
  %7628 = vmatpush1.msra.mxu0 %v7517
  %7629 = vmatprep.subr.mxu0 0.0
  %7630 = vmatpush1.msra.mxu0 %v7518
  %7631 = vmatprep.subr.mxu0 0.0
  %7632 = vmatpush1.msra.mxu0 %v7519
  %7633 = vmatprep.subr.mxu0 0.0
  %7634 = vmatpush1.msra.mxu0 %v7520
  %7635 = vmatprep.subr.mxu0 0.0
  %7636 = vmatpush1.msra.mxu0 %v7521
  %7637 = vmatprep.subr.mxu0 0.0
  %7638 = vmatpush1.msra.mxu0 %v7522
  %7639 = vmatprep.subr.mxu0 0.0
  %7640 = vmatpush1.msra.mxu0 %v7523
  %7641 = vmatprep.subr.mxu0 0.0
  %7642 = vmatpush1.msra.mxu0 %v7524
  %7643 = vmatprep.mubr.f32.mxu0 %v7489
  %7644 = vmatmul.mubr.f32.gmra.mrb[0].mxu0 %v7488
  %v7645 = vpop.f32.mrb[0].mxu0
  %v7646 = vadd.f32 %v7573, %v7645
  %v7647 = vpop.f32.mrb[0].mxu0
  %7648 = vdwg.mxu0
  %7649 = vmatprep.subr.mxu0 0.0
  %7650 = vmatpush1.msra.mxu0 %v7525
  %7651 = vmatprep.subr.mxu0 0.0
  %7652 = vmatpush1.msra.mxu0 %v7526
  %7653 = vmatprep.subr.mxu0 0.0
  %7654 = vmatpush1.msra.mxu0 %v7527
  %7655 = vmatprep.subr.mxu0 0.0
  %7656 = vmatpush1.msra.mxu0 %v7528
  %7657 = vmatprep.subr.mxu0 0.0
  %7658 = vmatpush1.msra.mxu0 %v7529
  %7659 = vmatprep.subr.mxu0 0.0
  %7660 = vmatpush1.msra.mxu0 %v7530
  %7661 = vmatprep.subr.mxu0 0.0
  %7662 = vmatpush1.msra.mxu0 %v7531
  %7663 = vmatprep.subr.mxu0 0.0
  %7664 = vmatpush1.msra.mxu0 %v7532
  %7665 = vmatprep.subr.mxu0 0.0
  %7666 = vmatpush1.msra.mxu0 %v7533
  %7667 = vmatprep.subr.mxu0 0.0
  %7668 = vmatpush1.msra.mxu0 %v7534
  %7669 = vmatprep.subr.mxu0 0.0
  %7670 = vmatpush1.msra.mxu0 %v7535
  %7671 = vmatprep.subr.mxu0 0.0
  %7672 = vmatpush1.msra.mxu0 %v7536
  %7673 = vmatprep.subr.mxu0 0.0
  %7674 = vmatpush1.msra.mxu0 %v7537
  %7675 = vmatprep.subr.mxu0 0.0
  %7676 = vmatpush1.msra.mxu0 %v7538
  %7677 = vmatprep.subr.mxu0 0.0
  %7678 = vmatpush1.msra.mxu0 %v7539
  %7679 = vmatprep.subr.mxu0 0.0
  %7680 = vmatpush1.msra.mxu0 %v7540
  %7681 = vmatprep.subr.mxu0 0.0
  %7682 = vmatpush1.msra.mxu0 %v7541
  %7683 = vmatprep.subr.mxu0 0.0
  %7684 = vmatpush1.msra.mxu0 %v7542
  %7685 = vmatprep.subr.mxu0 0.0
  %7686 = vmatpush1.msra.mxu0 %v7543
  %7687 = vmatprep.subr.mxu0 0.0
  %7688 = vmatpush1.msra.mxu0 %v7544
  %7689 = vmatprep.subr.mxu0 0.0
  %7690 = vmatpush1.msra.mxu0 %v7545
  %7691 = vmatprep.subr.mxu0 0.0
  %7692 = vmatpush1.msra.mxu0 %v7546
  %7693 = vmatprep.subr.mxu0 0.0
  %7694 = vmatpush1.msra.mxu0 %v7547
  %7695 = vmatprep.subr.mxu0 0.0
  %7696 = vmatpush1.msra.mxu0 %v7548
  %7697 = vmatprep.subr.mxu0 0.0
  %7698 = vmatpush1.msra.mxu0 %v7549
  %7699 = vmatprep.subr.mxu0 0.0
  %7700 = vmatpush1.msra.mxu0 %v7550
  %7701 = vmatprep.subr.mxu0 0.0
  %7702 = vmatpush1.msra.mxu0 %v7551
  %7703 = vmatprep.subr.mxu0 0.0
  %7704 = vmatpush1.msra.mxu0 %v7552
  %7705 = vmatprep.subr.mxu0 0.0
  %7706 = vmatpush1.msra.mxu0 %v7553
  %7707 = vmatprep.subr.mxu0 0.0
  %7708 = vmatpush1.msra.mxu0 %v7554
  %7709 = vmatprep.subr.mxu0 0.0
  %7710 = vmatpush1.msra.mxu0 %v7555
  %7711 = vmatprep.subr.mxu0 0.0
  %7712 = vmatpush1.msra.mxu0 %v7556
  %7713 = vmatprep.mubr.f32.mxu0 %v7491
  %7714 = vmatmul.mubr.f32.gmra.mrb[0].mxu0 %v7490
  %v7715 = vpop.f32.mrb[0].mxu0
  %v7716 = vadd.f32 %v7646, %v7715
  %v7717 = vpop.f32.mrb[0].mxu0
  %7718 = vdwg.mxu0
  %7719 = vmatprep.subr.mxu0 0.0
  %7720 = vmatpush1.msra.mxu0 %v7557
  %7721 = vmatprep.subr.mxu0 0.0
  %7722 = vmatpush1.msra.mxu0 %v7558
  %7723 = vmatprep.subr.mxu0 0.0
  %7724 = vmatpush1.msra.mxu0 %v7559
  %7725 = vmatprep.subr.mxu0 0.0
  %7726 = vmatpush1.msra.mxu0 %v7560
  %7727 = vmatprep.subr.mxu0 0.0
  %7728 = vmatpush1.msra.mxu0 %v7561
  %7729 = vmatprep.subr.mxu0 0.0
  %7730 = vmatpush1.msra.mxu0 %v7562
  %7731 = vmatprep.subr.mxu0 0.0
  %7732 = vmatpush1.msra.mxu0 %v7563
  %7733 = vmatprep.subr.mxu0 0.0
  %7734 = vmatpush1.msra.mxu0 %v7564
  %7735 = vmatprep.subr.mxu0 0.0
  %7736 = vmatpush1.msra.mxu0 %v7565
  %7737 = vmatprep.subr.mxu0 0.0
  %7738 = vmatpush1.msra.mxu0 %v7566
  %7739 = vmatprep.subr.mxu0 0.0
  %7740 = vmatpush1.msra.mxu0 %v7567
  %7741 = vmatprep.subr.mxu0 0.0
  %7742 = vmatpush1.msra.mxu0 0.0
  %7743 = vmatprep.subr.mxu0 0.0
  %7744 = vmatpush1.msra.mxu0 0.0
  %7745 = vmatprep.subr.mxu0 0.0
  %7746 = vmatpush1.msra.mxu0 0.0
  %7747 = vmatprep.subr.mxu0 0.0
  %7748 = vmatpush1.msra.mxu0 0.0
  %7749 = vmatprep.subr.mxu0 0.0
  %7750 = vmatpush1.msra.mxu0 0.0
  %7751 = vmatprep.subr.mxu0 0.0
  %7752 = vmatpush1.msra.mxu0 0.0
  %7753 = vmatprep.subr.mxu0 0.0
  %7754 = vmatpush1.msra.mxu0 0.0
  %7755 = vmatprep.subr.mxu0 0.0
  %7756 = vmatpush1.msra.mxu0 0.0
  %7757 = vmatprep.subr.mxu0 0.0
  %7758 = vmatpush1.msra.mxu0 0.0
  %7759 = vmatprep.subr.mxu0 0.0
  %7760 = vmatpush1.msra.mxu0 0.0
  %7761 = vmatprep.subr.mxu0 0.0
  %7762 = vmatpush1.msra.mxu0 0.0
  %7763 = vmatprep.subr.mxu0 0.0
  %7764 = vmatpush1.msra.mxu0 0.0
  %7765 = vmatprep.subr.mxu0 0.0
  %7766 = vmatpush1.msra.mxu0 0.0
  %7767 = vmatprep.subr.mxu0 0.0
  %7768 = vmatpush1.msra.mxu0 0.0
  %7769 = vmatprep.subr.mxu0 0.0
  %7770 = vmatpush1.msra.mxu0 0.0
  %7771 = vmatprep.subr.mxu0 0.0
  %7772 = vmatpush1.msra.mxu0 0.0
  %7773 = vmatprep.subr.mxu0 0.0
  %7774 = vmatpush1.msra.mxu0 0.0
  %7775 = vmatprep.subr.mxu0 0.0
  %7776 = vmatpush1.msra.mxu0 0.0
  %7777 = vmatprep.subr.mxu0 0.0
  %7778 = vmatpush1.msra.mxu0 0.0
  %7779 = vmatprep.subr.mxu0 0.0
  %7780 = vmatpush1.msra.mxu0 0.0
  %7781 = vmatprep.subr.mxu0 0.0
  %7782 = vmatpush1.msra.mxu0 0.0
  %7783 = vmatprep.mubr.f32.mxu0 0.0
  %7784 = vmatmul.mubr.f32.gmra.mrb[0].mxu0 %v7577
  %v7785 = vpop.f32.mrb[0].mxu0
  %v7786 = vadd.f32 %v7716, %v7785
  %v7787 = vpop.f32.mrb[0].mxu0
  %7788 = vdwg.mxu0
  %vm7789 = vcmask 9216
  %7790 = vst.msk [vmem:[%s11] sm:$0x3] %vm7789, %v7786
  // Predicated region
  $region46: #{cnn_1d_mod_forward.1} parent=0 // pred_check
    _
  $region47: #{cnn_1d_mod_forward.1} parent=0 // pred_check_branch
    %7792 = sbr.rel (0) target = $region49
  $region48: #{cnn_1d_mod_forward.1} parent=0 // pred_region
    _
  $region49: #{cnn_1d_mod_forward.1} parent=0 // pred_fallthru
    _
  // Predicated region
  $region50: #{cnn_1d_mod_forward.1} parent=0 // pred_check
    _
  $region51: #{cnn_1d_mod_forward.1} parent=0 // pred_check_branch
    %7794 = sbr.rel (0) target = $region53
  $region52: #{cnn_1d_mod_forward.1} parent=0 // pred_region
    _
  $region53: #{cnn_1d_mod_forward.1} parent=0 // pred_fallthru
    _

</llo_original>
